<compile_context>
chip_gen: v7x
topology: tpu7x:2x2x1
jax: 0.10.0
libtpu: 0.0.40
codegen_flags: <defaults>
</compile_context>

<pallas_src>
import functools

import numpy as np

import jax
import jax.numpy as jnp
from jax.experimental import pallas as pl
from jax.experimental.pallas import tpu as pltpu

BN_EPS = 1e-5
# [phase][3x3 window position] -> 4x4 ConvTranspose kernel index (or -1 = no tap)
_PHASE_TAP = ((3, 1, -1), (-1, 2, 0))


# ---------------------------------------------------------------------------
# One-time parameter preparation (hoisted out of the forward path)
# ---------------------------------------------------------------------------
def _band(block, w_in, cin, ow, stride, pad):
    """Place `block` ((kw*cin, ccols)) at input-column offset (stride*o - pad)
    for every output column o.  Returns the banded matrix (w_in*cin, ow*ccols)."""
    kw = block.shape[0] // cin
    cols = []
    for o in range(ow):
        start = stride * o - pad
        lo, hi = max(0, start), min(w_in, start + kw)
        blk = block[(lo - start) * cin:(hi - start) * cin]
        cols.append(jnp.pad(blk, ((lo * cin, (w_in - hi) * cin), (0, 0))))
    return jnp.concatenate(cols, axis=1)


def _enc_wide(w, w_in):
    """Conv2d(k=4, s=2, p=1) weight (Cout,Cin,4,4) -> (4*W_in*Cin, OW*Cout)."""
    cout, cin = w.shape[0], w.shape[1]
    ow = w_in // 2
    wt = jnp.transpose(w, (2, 3, 1, 0))                       # (4, 4, Cin, Cout)
    taps = [_band(wt[i].reshape(4 * cin, cout), w_in, cin, ow, 2, 1)
            for i in range(4)]
    return jnp.concatenate(taps, axis=0)


def _conv3_wide(w, w_in):
    """Conv2d(k=3, s=1, p=1) weight (Cout,Cg,3,3) -> (3*W_in*Cg, W_in*Cout)."""
    cout, cg = w.shape[0], w.shape[1]
    wt = jnp.transpose(w, (2, 3, 1, 0))                       # (3, 3, Cg, Cout)
    taps = [_band(wt[i].reshape(3 * cg, cout), w_in, cg, w_in, 1, 1)
            for i in range(3)]
    return jnp.concatenate(taps, axis=0)


def _dec_wide(wg, w_in):
    """ConvTranspose2d(k=4, s=2, p=1) weight slice (Cg,Cout,4,4) -> sub-pixel
    3x3 wide matrix (3*W_in*Cg, W_in*4*Cout); output lanes ordered (ph,w,pw,co)."""
    cg, cout = wg.shape[0], wg.shape[1]
    zero_cc = jnp.zeros((cg, cout), wg.dtype)
    taps = []
    for di in range(3):
        halves = []
        for ph in range(2):
            kr = _PHASE_TAP[ph][di]
            if kr < 0:
                halves.append(jnp.zeros((w_in * cg, w_in * 2 * cout), wg.dtype))
                continue
            rows = []
            for dj in range(3):
                blocks = []
                for pw in range(2):
                    kc = _PHASE_TAP[pw][dj]
                    blocks.append(zero_cc if kc < 0 else wg[:, :, kr, kc])
                rows.append(jnp.concatenate(blocks, axis=1))   # (Cg, 2*Cout)
            block = jnp.concatenate(rows, axis=0)              # (3*Cg, 2*Cout)
            halves.append(_band(block, w_in, cg, w_in, 1, 1))
        taps.append(jnp.concatenate(halves, axis=1))           # (W_in*Cg, W_in*4*Cout)
    return jnp.concatenate(taps, axis=0)


def _pb_index(n, h_logical):
    """Row index of logical row (b, r) in a phase-blocked deconv output buffer."""
    half = h_logical // 2
    return lambda b, r: (r % 2) * (n * half) + b * half + (r // 2)


def _row_select(n, h_in, oh, kh, stride, pad, in_row_index=None):
    """(kh, n*oh, n*h_in) 0/1 matrices: output row (b,o), tap i selects input
    row (b, stride*o - pad + i); rows outside [0, h_in) stay all-zero (padding)."""
    if in_row_index is None:
        in_row_index = lambda b, r: b * h_in + r
    s = np.zeros((kh, n * oh, n * h_in), np.float32)
    for i in range(kh):
        for b in range(n):
            for o in range(oh):
                r = stride * o - pad + i
                if 0 <= r < h_in:
                    s[i, b * oh + o, in_row_index(b, r)] = 1.0
    return s


def prepare_params(p, n, h0):
    """Precompute matmul-layout bf16 weights, lane-tiled bias/gamma/beta rows and
    constant row-selection matrices.  Runs once, outside the jitted forward."""
    h1, h2, h3 = h0 // 2, h0 // 4, h0 // 8
    f32 = lambda a: a.astype(jnp.float32)
    bf = lambda a: a.astype(jnp.bfloat16)

    def vec3(b, g, bt, w_rep):
        return jnp.stack([jnp.tile(f32(b), w_rep),
                          jnp.tile(f32(g), w_rep),
                          jnp.tile(f32(bt), w_rep)], axis=0)

    q = {}
    # encoder
    q['w_e1'] = bf(_enc_wide(p['e1_w'], h0))
    q['w_e2'] = bf(_enc_wide(p['e2_w'], h1))
    q['w_e3'] = bf(_enc_wide(p['e3_w'], h2))
    q['v_e1'] = vec3(p['e1_b'], p['bn1_g'], p['bn1_b'], h1)
    q['v_e2'] = vec3(p['e2_b'], p['bn2_g'], p['bn2_b'], h2)
    q['v_e3'] = vec3(p['e3_b'], p['bn3_g'], p['bn3_b'], h3)
    # decoder (sub-pixel deconvs); channel-group splits fold the skip concats
    q['w_d1'] = bf(_dec_wide(p['d1_w'], h3))
    q['v_d1'] = vec3(p['d1_b'], p['bn4_g'], p['bn4_b'], h2)
    q['w_d2a'] = bf(_dec_wide(p['d2_w'][:64], h2))     # xd1 channels
    q['w_d2b'] = bf(_dec_wide(p['d2_w'][64:], h2))     # xe2 channels
    q['v_d2'] = vec3(p['d2_b'], p['bn5_g'], p['bn5_b'], h1)
    q['w_d3a'] = bf(_dec_wide(p['d3_w'][:32], h1))     # xd2 channels
    q['w_d3b'] = bf(_dec_wide(p['d3_w'][32:], h1))     # xe1 channels
    q['v_d3'] = jnp.tile(f32(p['d3_b']), h0).reshape(1, -1)
    # final 3x3 conv
    q['w_oa'] = bf(_conv3_wide(p['out_w'][:, :2], h0))   # xd3 channels
    q['w_ob'] = bf(_conv3_wide(p['out_w'][:, 2:], h0))   # x channel
    q['v_o'] = jnp.tile(f32(p['out_b']), h0).reshape(1, -1)
    # constant row-selection matrices (H taps / zero padding / phase-block permute)
    as_bf = lambda a: jnp.asarray(a, dtype=jnp.bfloat16)
    q['s_e1'] = as_bf(_row_select(n, h0, h1, 4, 2, 1))
    q['s_e2'] = as_bf(_row_select(n, h1, h2, 4, 2, 1))
    q['s_e3'] = as_bf(_row_select(n, h2, h3, 4, 2, 1))
    q['s_d1'] = as_bf(_row_select(n, h3, h3, 3, 1, 1))
    q['s_d2a'] = as_bf(_row_select(n, h2, h2, 3, 1, 1, _pb_index(n, h2)))
    q['s_d2b'] = as_bf(_row_select(n, h2, h2, 3, 1, 1))
    q['s_d3a'] = as_bf(_row_select(n, h1, h1, 3, 1, 1, _pb_index(n, h1)))
    q['s_d3b'] = as_bf(_row_select(n, h1, h1, 3, 1, 1))
    q['s_oa'] = as_bf(_row_select(n, h0, h0, 3, 1, 1, _pb_index(n, h0)))
    q['s_ob'] = as_bf(_row_select(n, h0, h0, 3, 1, 1))
    return q


# ---------------------------------------------------------------------------
# Fused whole-network Pallas kernel
# ---------------------------------------------------------------------------
def _make_kernel(n, h0):
    h1, h2, h3 = h0 // 2, h0 // 4, h0 // 8
    bf = jnp.bfloat16

    def sel_rows(s_ref, x_bf):
        """concat_i(S_i @ x): gathers the kh tap-row operands -> (R_out, kh*L) bf16."""
        parts = [jnp.dot(s_ref[i], x_bf, preferred_element_type=jnp.float32)
                 for i in range(s_ref.shape[0])]
        return jnp.concatenate(parts, axis=1).astype(bf)

    def phase_block(acc, half):
        """Deconv pixel-shuffle: (R, 2*half) lanes (ph,w,pw,c) -> (2R, half)."""
        return jnp.concatenate([acc[:, 0:half], acc[:, half:2 * half]], axis=0)

    def bn_relu(y, w_out, c, vec_ref, count):
        """bias + training-mode BatchNorm (batch stats over rows & W lane groups) + ReLU."""
        inv = 1.0 / float(count)
        y = y + vec_ref[0:1, :]
        ssum = jnp.sum(y, axis=0, keepdims=True)
        tot = ssum[:, 0:c]
        for g in range(1, w_out):
            tot = tot + ssum[:, g * c:(g + 1) * c]
        mean = jnp.concatenate([tot] * w_out, axis=1) * inv
        d = y - mean
        vsum = jnp.sum(d * d, axis=0, keepdims=True)
        vtot = vsum[:, 0:c]
        for g in range(1, w_out):
            vtot = vtot + vsum[:, g * c:(g + 1) * c]
        var = jnp.concatenate([vtot] * w_out, axis=1) * inv
        y = d * jax.lax.rsqrt(var + BN_EPS) * vec_ref[1:2, :] + vec_ref[2:3, :]
        return jnp.maximum(y, 0.0)

    def kernel(x_ref,
               s_e1, w_e1, v_e1,
               s_e2, w_e2, v_e2,
               s_e3, w_e3, v_e3,
               s_d1, w_d1, v_d1,
               s_d2a, s_d2b, w_d2a, w_d2b, v_d2,
               s_d3a, s_d3b, w_d3a, w_d3b, v_d3,
               s_oa, s_ob, w_oa, w_ob, v_o,
               o_ref):
        xb = x_ref[...].astype(bf)                                    # (n*h0, h0)

        # e1: 16x16x1 -> 8x8x32
        y = jnp.dot(sel_rows(s_e1, xb), w_e1[...],
                    preferred_element_type=jnp.float32)
        xe1 = bn_relu(y, h1, 32, v_e1, n * h1 * h1)                   # (n*h1, h1*32)

        # e2: 8x8x32 -> 4x4x64
        y = jnp.dot(sel_rows(s_e2, xe1.astype(bf)), w_e2[...],
                    preferred_element_type=jnp.float32)
        xe2 = bn_relu(y, h2, 64, v_e2, n * h2 * h2)                   # (n*h2, h2*64)

        # e3: 4x4x64 -> 2x2x128
        y = jnp.dot(sel_rows(s_e3, xe2.astype(bf)), w_e3[...],
                    preferred_element_type=jnp.float32)
        xe3 = bn_relu(y, h3, 128, v_e3, n * h3 * h3)                  # (n*h3, h3*128)

        # d1 (sub-pixel deconv): 2x2x128 -> 4x4x64
        y = jnp.dot(sel_rows(s_d1, xe3.astype(bf)), w_d1[...],
                    preferred_element_type=jnp.float32)
        xd1 = phase_block(y, h3 * 2 * 64)                             # (n*h2, h2*64)
        xd1 = bn_relu(xd1, h2, 64, v_d1, n * h2 * h2)

        # d2: (xd1 | xe2) 4x4x128 -> 8x8x32   (skip concat folded into the weights)
        y = (jnp.dot(sel_rows(s_d2a, xd1.astype(bf)), w_d2a[...],
                     preferred_element_type=jnp.float32) +
             jnp.dot(sel_rows(s_d2b, xe2.astype(bf)), w_d2b[...],
                     preferred_element_type=jnp.float32))
        xd2 = phase_block(y, h2 * 2 * 32)                             # (n*h1, h1*32)
        xd2 = bn_relu(xd2, h1, 32, v_d2, n * h1 * h1)

        # d3: (xd2 | xe1) 8x8x64 -> 16x16x2   (bias only, no BN / ReLU)
        y = (jnp.dot(sel_rows(s_d3a, xd2.astype(bf)), w_d3a[...],
                     preferred_element_type=jnp.float32) +
             jnp.dot(sel_rows(s_d3b, xe1.astype(bf)), w_d3b[...],
                     preferred_element_type=jnp.float32))
        xd3 = phase_block(y, h1 * 2 * 2) + v_d3[0:1, :]               # (n*h0, h0*2)

        # outconv: (xd3 | x) 16x16x3 -> 16x16x2
        y = (jnp.dot(sel_rows(s_oa, xd3.astype(bf)), w_oa[...],
                     preferred_element_type=jnp.float32) +
             jnp.dot(sel_rows(s_ob, xb), w_ob[...],
                     preferred_element_type=jnp.float32))
        o_ref[...] = (y + v_o[0:1, :]).astype(o_ref.dtype)

    return kernel


def unet_forward(q, x_nchw, *, n, h0):
    x2d = x_nchw.reshape(n * h0, h0).astype(jnp.float32)   # (N,1,H,W) -> (N*H, W)
    operands = (
        x2d,
        q['s_e1'], q['w_e1'], q['v_e1'],
        q['s_e2'], q['w_e2'], q['v_e2'],
        q['s_e3'], q['w_e3'], q['v_e3'],
        q['s_d1'], q['w_d1'], q['v_d1'],
        q['s_d2a'], q['s_d2b'], q['w_d2a'], q['w_d2b'], q['v_d2'],
        q['s_d3a'], q['s_d3b'], q['w_d3a'], q['w_d3b'], q['v_d3'],
        q['s_oa'], q['s_ob'], q['w_oa'], q['w_ob'], q['v_o'],
    )
    in_specs = [pl.BlockSpec(a.shape, lambda i, _nd=a.ndim: (0,) * _nd)
                for a in operands]
    out2d = pl.pallas_call(
        _make_kernel(n, h0),
        out_shape=jax.ShapeDtypeStruct((n * h0, 2 * h0), jnp.float32),
        grid=(1,),
        in_specs=in_specs,
        out_specs=pl.BlockSpec((n * h0, 2 * h0), lambda i: (0, 0)),
        compiler_params=pltpu.CompilerParams(dimension_semantics=("arbitrary",)),
    )(*operands)
    return out2d.reshape(n, h0, h0, 2).transpose(0, 3, 1, 2)  # -> NCHW


# ---------------------------------------------------------------------------
# Deterministic parameter initialization (PyTorch-like uniform bounds)
# ---------------------------------------------------------------------------
def init_params(key):
    keys = jax.random.split(key, 7)
    p = {}

    def conv_init(k, shape):       # (Cout, Cin, KH, KW)
        k1, k2 = jax.random.split(k)
        fan_in = shape[1] * shape[2] * shape[3]
        bound = 1.0 / (fan_in ** 0.5)
        w = jax.random.uniform(k1, shape, jnp.float32, -bound, bound)
        b = jax.random.uniform(k2, (shape[0],), jnp.float32, -bound, bound)
        return w, b

    def convT_init(k, shape):      # (Cin, Cout, KH, KW)
        k1, k2 = jax.random.split(k)
        fan_in = shape[1] * shape[2] * shape[3]
        bound = 1.0 / (fan_in ** 0.5)
        w = jax.random.uniform(k1, shape, jnp.float32, -bound, bound)
        b = jax.random.uniform(k2, (shape[1],), jnp.float32, -bound, bound)
        return w, b

    p['e1_w'], p['e1_b'] = conv_init(keys[0], (32, 1, 4, 4))
    p['e2_w'], p['e2_b'] = conv_init(keys[1], (64, 32, 4, 4))
    p['e3_w'], p['e3_b'] = conv_init(keys[2], (128, 64, 4, 4))
    p['d1_w'], p['d1_b'] = convT_init(keys[3], (128, 64, 4, 4))
    p['d2_w'], p['d2_b'] = convT_init(keys[4], (128, 32, 4, 4))
    p['d3_w'], p['d3_b'] = convT_init(keys[5], (64, 2, 4, 4))
    p['out_w'], p['out_b'] = conv_init(keys[6], (2, 3, 3, 3))

    for i, c in [(1, 32), (2, 64), (3, 128), (4, 64), (5, 32)]:
        p[f'bn{i}_g'] = jnp.ones((c,), jnp.float32)
        p[f'bn{i}_b'] = jnp.zeros((c,), jnp.float32)
    return p


if __name__ == "__main__":
    key = jax.random.PRNGKey(0)
    pkey, xkey = jax.random.split(key)

    N, H = 2, 16
    params = init_params(pkey)
    prepped = prepare_params(params, N, H)   # one-time weight prep, off the hot path

    # PyTorch-convention input: (N, C=1, H, W)
    x = jax.random.normal(xkey, (N, 1, H, H), jnp.float32)

    fwd = jax.jit(functools.partial(unet_forward, n=N, h0=H))
    out = jax.block_until_ready(fwd(prepped, x))

    assert out.shape == (N, 2, H, H), out.shape
    assert bool(jnp.all(jnp.isfinite(out)))
    assert float(jnp.std(out)) > 0.0
    print("KERNEL_OK")
</pallas_src>

<mosaic_0001>
module attributes {stable_mosaic.version = 11 : i64} {
  func.func @kernel(%arg0: i32, %arg1: memref<32x16xf32, #tpu.memory_space<vmem>>, %arg2: memref<4x16x32xbf16, #tpu.memory_space<vmem>>, %arg3: memref<64x256xbf16, #tpu.memory_space<vmem>>, %arg4: memref<3x256xf32, #tpu.memory_space<vmem>>, %arg5: memref<4x8x16xbf16, #tpu.memory_space<vmem>>, %arg6: memref<1024x256xbf16, #tpu.memory_space<vmem>>, %arg7: memref<3x256xf32, #tpu.memory_space<vmem>>, %arg8: memref<4x4x8xbf16, #tpu.memory_space<vmem>>, %arg9: memref<1024x256xbf16, #tpu.memory_space<vmem>>, %arg10: memref<3x256xf32, #tpu.memory_space<vmem>>, %arg11: memref<3x4x4xbf16, #tpu.memory_space<vmem>>, %arg12: memref<768x512xbf16, #tpu.memory_space<vmem>>, %arg13: memref<3x256xf32, #tpu.memory_space<vmem>>, %arg14: memref<3x8x8xbf16, #tpu.memory_space<vmem>>, %arg15: memref<3x8x8xbf16, #tpu.memory_space<vmem>>, %arg16: memref<768x512xbf16, #tpu.memory_space<vmem>>, %arg17: memref<768x512xbf16, #tpu.memory_space<vmem>>, %arg18: memref<3x256xf32, #tpu.memory_space<vmem>>, %arg19: memref<3x16x16xbf16, #tpu.memory_space<vmem>>, %arg20: memref<3x16x16xbf16, #tpu.memory_space<vmem>>, %arg21: memref<768x64xbf16, #tpu.memory_space<vmem>>, %arg22: memref<768x64xbf16, #tpu.memory_space<vmem>>, %arg23: memref<1x32xf32, #tpu.memory_space<vmem>>, %arg24: memref<3x32x32xbf16, #tpu.memory_space<vmem>>, %arg25: memref<3x32x32xbf16, #tpu.memory_space<vmem>>, %arg26: memref<96x32xbf16, #tpu.memory_space<vmem>>, %arg27: memref<48x32xbf16, #tpu.memory_space<vmem>>, %arg28: memref<1x32xf32, #tpu.memory_space<vmem>>, %arg29: memref<32x32xf32, #tpu.memory_space<vmem>>) attributes {dimension_semantics = [#tpu.dimension_semantics<arbitrary>], iteration_bounds = array<i64: 1>, scalar_prefetch = 0 : i64, scratch_operands = 0 : i64, tpu.core_type = #tpu.core_type<tc>, window_params = [{pipeline_mode = #tpu.pipeline_mode<synchronous>, transform_indices = @transform_0, window_bounds = array<i64: 32, 16>}, {pipeline_mode = #tpu.pipeline_mode<synchronous>, transform_indices = @transform_1, window_bounds = array<i64: 4, 16, 32>}, {pipeline_mode = #tpu.pipeline_mode<synchronous>, transform_indices = @transform_2, window_bounds = array<i64: 64, 256>}, {pipeline_mode = #tpu.pipeline_mode<synchronous>, transform_indices = @transform_3, window_bounds = array<i64: 3, 256>}, {pipeline_mode = #tpu.pipeline_mode<synchronous>, transform_indices = @transform_4, window_bounds = array<i64: 4, 8, 16>}, {pipeline_mode = #tpu.pipeline_mode<synchronous>, transform_indices = @transform_5, window_bounds = array<i64: 1024, 256>}, {pipeline_mode = #tpu.pipeline_mode<synchronous>, transform_indices = @transform_6, window_bounds = array<i64: 3, 256>}, {pipeline_mode = #tpu.pipeline_mode<synchronous>, transform_indices = @transform_7, window_bounds = array<i64: 4, 4, 8>}, {pipeline_mode = #tpu.pipeline_mode<synchronous>, transform_indices = @transform_8, window_bounds = array<i64: 1024, 256>}, {pipeline_mode = #tpu.pipeline_mode<synchronous>, transform_indices = @transform_9, window_bounds = array<i64: 3, 256>}, {pipeline_mode = #tpu.pipeline_mode<synchronous>, transform_indices = @transform_10, window_bounds = array<i64: 3, 4, 4>}, {pipeline_mode = #tpu.pipeline_mode<synchronous>, transform_indices = @transform_11, window_bounds = array<i64: 768, 512>}, {pipeline_mode = #tpu.pipeline_mode<synchronous>, transform_indices = @transform_12, window_bounds = array<i64: 3, 256>}, {pipeline_mode = #tpu.pipeline_mode<synchronous>, transform_indices = @transform_13, window_bounds = array<i64: 3, 8, 8>}, {pipeline_mode = #tpu.pipeline_mode<synchronous>, transform_indices = @transform_14, window_bounds = array<i64: 3, 8, 8>}, {pipeline_mode = #tpu.pipeline_mode<synchronous>, transform_indices = @transform_15, window_bounds = array<i64: 768, 512>}, {pipeline_mode = #tpu.pipeline_mode<synchronous>, transform_indices = @transform_16, window_bounds = array<i64: 768, 512>}, {pipeline_mode = #tpu.pipeline_mode<synchronous>, transform_indices = @transform_17, window_bounds = array<i64: 3, 256>}, {pipeline_mode = #tpu.pipeline_mode<synchronous>, transform_indices = @transform_18, window_bounds = array<i64: 3, 16, 16>}, {pipeline_mode = #tpu.pipeline_mode<synchronous>, transform_indices = @transform_19, window_bounds = array<i64: 3, 16, 16>}, {pipeline_mode = #tpu.pipeline_mode<synchronous>, transform_indices = @transform_20, window_bounds = array<i64: 768, 64>}, {pipeline_mode = #tpu.pipeline_mode<synchronous>, transform_indices = @transform_21, window_bounds = array<i64: 768, 64>}, {pipeline_mode = #tpu.pipeline_mode<synchronous>, transform_indices = @transform_22, window_bounds = array<i64: 1, 32>}, {pipeline_mode = #tpu.pipeline_mode<synchronous>, transform_indices = @transform_23, window_bounds = array<i64: 3, 32, 32>}, {pipeline_mode = #tpu.pipeline_mode<synchronous>, transform_indices = @transform_24, window_bounds = array<i64: 3, 32, 32>}, {pipeline_mode = #tpu.pipeline_mode<synchronous>, transform_indices = @transform_25, window_bounds = array<i64: 96, 32>}, {pipeline_mode = #tpu.pipeline_mode<synchronous>, transform_indices = @transform_26, window_bounds = array<i64: 48, 32>}, {pipeline_mode = #tpu.pipeline_mode<synchronous>, transform_indices = @transform_27, window_bounds = array<i64: 1, 32>}, {pipeline_mode = #tpu.pipeline_mode<synchronous>, transform_indices = @transform_28, window_bounds = array<i64: 32, 32>}]} {
    %c0 = arith.constant 0 : index
    %c0_0 = arith.constant 0 : index
    %0 = vector.load %arg1[%c0, %c0_0] : memref<32x16xf32, #tpu.memory_space<vmem>>, vector<32x16xf32>
    %1 = arith.truncf %0 : vector<32x16xf32> to vector<32x16xbf16>
    %c0_1 = arith.constant 0 : index
    %c0_2 = arith.constant 0 : index
    %c0_3 = arith.constant 0 : index
    %2 = vector.load %arg2[%c0_1, %c0_2, %c0_3] : memref<4x16x32xbf16, #tpu.memory_space<vmem>>, vector<1x16x32xbf16>
    %3 = vector.shape_cast %2 : vector<1x16x32xbf16> to vector<16x32xbf16>
    %cst = arith.constant dense<0.000000e+00> : vector<16x16xf32>
    %4 = tpu.matmul %3, %1, %cst {dimension_numbers = #tpu.dot_dimension_numbers<[1], [0], [0], [1], [0, 0, 1, 1], [], []>} : vector<16x32xbf16>, vector<32x16xbf16>, vector<16x16xf32> -> vector<16x16xf32>
    %c1 = arith.constant 1 : index
    %c0_4 = arith.constant 0 : index
    %c0_5 = arith.constant 0 : index
    %5 = vector.load %arg2[%c1, %c0_4, %c0_5] : memref<4x16x32xbf16, #tpu.memory_space<vmem>>, vector<1x16x32xbf16>
    %6 = vector.shape_cast %5 : vector<1x16x32xbf16> to vector<16x32xbf16>
    %cst_6 = arith.constant dense<0.000000e+00> : vector<16x16xf32>
    %7 = tpu.matmul %6, %1, %cst_6 {dimension_numbers = #tpu.dot_dimension_numbers<[1], [0], [0], [1], [0, 0, 1, 1], [], []>} : vector<16x32xbf16>, vector<32x16xbf16>, vector<16x16xf32> -> vector<16x16xf32>
    %c2 = arith.constant 2 : index
    %c0_7 = arith.constant 0 : index
    %c0_8 = arith.constant 0 : index
    %8 = vector.load %arg2[%c2, %c0_7, %c0_8] : memref<4x16x32xbf16, #tpu.memory_space<vmem>>, vector<1x16x32xbf16>
    %9 = vector.shape_cast %8 : vector<1x16x32xbf16> to vector<16x32xbf16>
    %cst_9 = arith.constant dense<0.000000e+00> : vector<16x16xf32>
    %10 = tpu.matmul %9, %1, %cst_9 {dimension_numbers = #tpu.dot_dimension_numbers<[1], [0], [0], [1], [0, 0, 1, 1], [], []>} : vector<16x32xbf16>, vector<32x16xbf16>, vector<16x16xf32> -> vector<16x16xf32>
    %c3 = arith.constant 3 : index
    %c0_10 = arith.constant 0 : index
    %c0_11 = arith.constant 0 : index
    %11 = vector.load %arg2[%c3, %c0_10, %c0_11] : memref<4x16x32xbf16, #tpu.memory_space<vmem>>, vector<1x16x32xbf16>
    %12 = vector.shape_cast %11 : vector<1x16x32xbf16> to vector<16x32xbf16>
    %cst_12 = arith.constant dense<0.000000e+00> : vector<16x16xf32>
    %13 = tpu.matmul %12, %1, %cst_12 {dimension_numbers = #tpu.dot_dimension_numbers<[1], [0], [0], [1], [0, 0, 1, 1], [], []>} : vector<16x32xbf16>, vector<32x16xbf16>, vector<16x16xf32> -> vector<16x16xf32>
    %14 = tpu.concatenate %4, %7, %10, %13 in 1 : vector<16x16xf32>, vector<16x16xf32>, vector<16x16xf32>, vector<16x16xf32> -> vector<16x64xf32>
    %15 = arith.truncf %14 : vector<16x64xf32> to vector<16x64xbf16>
    %c0_13 = arith.constant 0 : index
    %c0_14 = arith.constant 0 : index
    %16 = vector.load %arg3[%c0_13, %c0_14] : memref<64x256xbf16, #tpu.memory_space<vmem>>, vector<64x256xbf16>
    %cst_15 = arith.constant dense<0.000000e+00> : vector<16x256xf32>
    %17 = tpu.matmul %15, %16, %cst_15 {dimension_numbers = #tpu.dot_dimension_numbers<[1], [0], [0], [1], [0, 0, 1, 1], [], []>} : vector<16x64xbf16>, vector<64x256xbf16>, vector<16x256xf32> -> vector<16x256xf32>
    %c0_16 = arith.constant 0 : index
    %c0_17 = arith.constant 0 : index
    %18 = vector.load %arg4[%c0_16, %c0_17] : memref<3x256xf32, #tpu.memory_space<vmem>>, vector<1x256xf32>
    %19 = vector.broadcast %18 : vector<1x256xf32> to vector<16x256xf32>
    %20 = arith.addf %17, %19 : vector<16x256xf32>
    %cst_18 = arith.constant dense<0.000000e+00> : vector<256xf32>
    %21 = vector.multi_reduction <add>, %20, %cst_18 [0] : vector<16x256xf32> to vector<256xf32>
    %22 = vector.shape_cast %21 : vector<256xf32> to vector<1x256xf32>
    %23 = vector.extract_strided_slice %22 {offsets = [0, 0], sizes = [1, 32], strides = [1, 1]} : vector<1x256xf32> to vector<1x32xf32>
    %24 = vector.extract_strided_slice %22 {offsets = [0, 32], sizes = [1, 32], strides = [1, 1]} : vector<1x256xf32> to vector<1x32xf32>
    %25 = arith.addf %23, %24 : vector<1x32xf32>
    %26 = vector.extract_strided_slice %22 {offsets = [0, 64], sizes = [1, 32], strides = [1, 1]} : vector<1x256xf32> to vector<1x32xf32>
    %27 = arith.addf %25, %26 : vector<1x32xf32>
    %28 = vector.extract_strided_slice %22 {offsets = [0, 96], sizes = [1, 32], strides = [1, 1]} : vector<1x256xf32> to vector<1x32xf32>
    %29 = arith.addf %27, %28 : vector<1x32xf32>
    %30 = vector.extract_strided_slice %22 {offsets = [0, 128], sizes = [1, 32], strides = [1, 1]} : vector<1x256xf32> to vector<1x32xf32>
    %31 = arith.addf %29, %30 : vector<1x32xf32>
    %32 = vector.extract_strided_slice %22 {offsets = [0, 160], sizes = [1, 32], strides = [1, 1]} : vector<1x256xf32> to vector<1x32xf32>
    %33 = arith.addf %31, %32 : vector<1x32xf32>
    %34 = vector.extract_strided_slice %22 {offsets = [0, 192], sizes = [1, 32], strides = [1, 1]} : vector<1x256xf32> to vector<1x32xf32>
    %35 = arith.addf %33, %34 : vector<1x32xf32>
    %36 = vector.extract_strided_slice %22 {offsets = [0, 224], sizes = [1, 32], strides = [1, 1]} : vector<1x256xf32> to vector<1x32xf32>
    %37 = arith.addf %35, %36 : vector<1x32xf32>
    %38 = tpu.concatenate %37, %37, %37, %37, %37, %37, %37, %37 in 1 : vector<1x32xf32>, vector<1x32xf32>, vector<1x32xf32>, vector<1x32xf32>, vector<1x32xf32>, vector<1x32xf32>, vector<1x32xf32>, vector<1x32xf32> -> vector<1x256xf32>
    %cst_19 = arith.constant 7.812500e-03 : f32
    %39 = vector.broadcast %cst_19 : f32 to vector<1x256xf32>
    %40 = arith.mulf %38, %39 : vector<1x256xf32>
    %41 = vector.broadcast %40 : vector<1x256xf32> to vector<16x256xf32>
    %42 = arith.subf %20, %41 : vector<16x256xf32>
    %43 = arith.mulf %42, %42 : vector<16x256xf32>
    %cst_20 = arith.constant dense<0.000000e+00> : vector<256xf32>
    %44 = vector.multi_reduction <add>, %43, %cst_20 [0] : vector<16x256xf32> to vector<256xf32>
    %45 = vector.shape_cast %44 : vector<256xf32> to vector<1x256xf32>
    %46 = vector.extract_strided_slice %45 {offsets = [0, 0], sizes = [1, 32], strides = [1, 1]} : vector<1x256xf32> to vector<1x32xf32>
    %47 = vector.extract_strided_slice %45 {offsets = [0, 32], sizes = [1, 32], strides = [1, 1]} : vector<1x256xf32> to vector<1x32xf32>
    %48 = arith.addf %46, %47 : vector<1x32xf32>
    %49 = vector.extract_strided_slice %45 {offsets = [0, 64], sizes = [1, 32], strides = [1, 1]} : vector<1x256xf32> to vector<1x32xf32>
    %50 = arith.addf %48, %49 : vector<1x32xf32>
    %51 = vector.extract_strided_slice %45 {offsets = [0, 96], sizes = [1, 32], strides = [1, 1]} : vector<1x256xf32> to vector<1x32xf32>
    %52 = arith.addf %50, %51 : vector<1x32xf32>
    %53 = vector.extract_strided_slice %45 {offsets = [0, 128], sizes = [1, 32], strides = [1, 1]} : vector<1x256xf32> to vector<1x32xf32>
    %54 = arith.addf %52, %53 : vector<1x32xf32>
    %55 = vector.extract_strided_slice %45 {offsets = [0, 160], sizes = [1, 32], strides = [1, 1]} : vector<1x256xf32> to vector<1x32xf32>
    %56 = arith.addf %54, %55 : vector<1x32xf32>
    %57 = vector.extract_strided_slice %45 {offsets = [0, 192], sizes = [1, 32], strides = [1, 1]} : vector<1x256xf32> to vector<1x32xf32>
    %58 = arith.addf %56, %57 : vector<1x32xf32>
    %59 = vector.extract_strided_slice %45 {offsets = [0, 224], sizes = [1, 32], strides = [1, 1]} : vector<1x256xf32> to vector<1x32xf32>
    %60 = arith.addf %58, %59 : vector<1x32xf32>
    %61 = tpu.concatenate %60, %60, %60, %60, %60, %60, %60, %60 in 1 : vector<1x32xf32>, vector<1x32xf32>, vector<1x32xf32>, vector<1x32xf32>, vector<1x32xf32>, vector<1x32xf32>, vector<1x32xf32>, vector<1x32xf32> -> vector<1x256xf32>
    %cst_21 = arith.constant 7.812500e-03 : f32
    %62 = vector.broadcast %cst_21 : f32 to vector<1x256xf32>
    %63 = arith.mulf %61, %62 : vector<1x256xf32>
    %cst_22 = arith.constant 9.99999974E-6 : f32
    %64 = vector.broadcast %cst_22 : f32 to vector<1x256xf32>
    %65 = arith.addf %63, %64 : vector<1x256xf32>
    %66 = math.rsqrt %65 : vector<1x256xf32>
    %67 = vector.broadcast %66 : vector<1x256xf32> to vector<16x256xf32>
    %68 = arith.mulf %42, %67 : vector<16x256xf32>
    %c1_23 = arith.constant 1 : index
    %c0_24 = arith.constant 0 : index
    %69 = vector.load %arg4[%c1_23, %c0_24] : memref<3x256xf32, #tpu.memory_space<vmem>>, vector<1x256xf32>
    %70 = vector.broadcast %69 : vector<1x256xf32> to vector<16x256xf32>
    %71 = arith.mulf %68, %70 : vector<16x256xf32>
    %c2_25 = arith.constant 2 : index
    %c0_26 = arith.constant 0 : index
    %72 = vector.load %arg4[%c2_25, %c0_26] : memref<3x256xf32, #tpu.memory_space<vmem>>, vector<1x256xf32>
    %73 = vector.broadcast %72 : vector<1x256xf32> to vector<16x256xf32>
    %74 = arith.addf %71, %73 : vector<16x256xf32>
    %cst_27 = arith.constant 0.000000e+00 : f32
    %75 = vector.broadcast %cst_27 : f32 to vector<16x256xf32>
    %76 = arith.maximumf %74, %75 : vector<16x256xf32>
    %77 = arith.truncf %76 : vector<16x256xf32> to vector<16x256xbf16>
    %c0_28 = arith.constant 0 : index
    %c0_29 = arith.constant 0 : index
    %c0_30 = arith.constant 0 : index
    %78 = vector.load %arg5[%c0_28, %c0_29, %c0_30] : memref<4x8x16xbf16, #tpu.memory_space<vmem>>, vector<1x8x16xbf16>
    %79 = vector.shape_cast %78 : vector<1x8x16xbf16> to vector<8x16xbf16>
    %cst_31 = arith.constant dense<0.000000e+00> : vector<8x256xf32>
    %80 = tpu.matmul %79, %77, %cst_31 {dimension_numbers = #tpu.dot_dimension_numbers<[1], [0], [0], [1], [0, 0, 1, 1], [], []>} : vector<8x16xbf16>, vector<16x256xbf16>, vector<8x256xf32> -> vector<8x256xf32>
    %c1_32 = arith.constant 1 : index
    %c0_33 = arith.constant 0 : index
    %c0_34 = arith.constant 0 : index
    %81 = vector.load %arg5[%c1_32, %c0_33, %c0_34] : memref<4x8x16xbf16, #tpu.memory_space<vmem>>, vector<1x8x16xbf16>
    %82 = vector.shape_cast %81 : vector<1x8x16xbf16> to vector<8x16xbf16>
    %cst_35 = arith.constant dense<0.000000e+00> : vector<8x256xf32>
    %83 = tpu.matmul %82, %77, %cst_35 {dimension_numbers = #tpu.dot_dimension_numbers<[1], [0], [0], [1], [0, 0, 1, 1], [], []>} : vector<8x16xbf16>, vector<16x256xbf16>, vector<8x256xf32> -> vector<8x256xf32>
    %c2_36 = arith.constant 2 : index
    %c0_37 = arith.constant 0 : index
    %c0_38 = arith.constant 0 : index
    %84 = vector.load %arg5[%c2_36, %c0_37, %c0_38] : memref<4x8x16xbf16, #tpu.memory_space<vmem>>, vector<1x8x16xbf16>
    %85 = vector.shape_cast %84 : vector<1x8x16xbf16> to vector<8x16xbf16>
    %cst_39 = arith.constant dense<0.000000e+00> : vector<8x256xf32>
    %86 = tpu.matmul %85, %77, %cst_39 {dimension_numbers = #tpu.dot_dimension_numbers<[1], [0], [0], [1], [0, 0, 1, 1], [], []>} : vector<8x16xbf16>, vector<16x256xbf16>, vector<8x256xf32> -> vector<8x256xf32>
    %c3_40 = arith.constant 3 : index
    %c0_41 = arith.constant 0 : index
    %c0_42 = arith.constant 0 : index
    %87 = vector.load %arg5[%c3_40, %c0_41, %c0_42] : memref<4x8x16xbf16, #tpu.memory_space<vmem>>, vector<1x8x16xbf16>
    %88 = vector.shape_cast %87 : vector<1x8x16xbf16> to vector<8x16xbf16>
    %cst_43 = arith.constant dense<0.000000e+00> : vector<8x256xf32>
    %89 = tpu.matmul %88, %77, %cst_43 {dimension_numbers = #tpu.dot_dimension_numbers<[1], [0], [0], [1], [0, 0, 1, 1], [], []>} : vector<8x16xbf16>, vector<16x256xbf16>, vector<8x256xf32> -> vector<8x256xf32>
    %90 = tpu.concatenate %80, %83, %86, %89 in 1 : vector<8x256xf32>, vector<8x256xf32>, vector<8x256xf32>, vector<8x256xf32> -> vector<8x1024xf32>
    %91 = arith.truncf %90 : vector<8x1024xf32> to vector<8x1024xbf16>
    %c0_44 = arith.constant 0 : index
    %c0_45 = arith.constant 0 : index
    %92 = vector.load %arg6[%c0_44, %c0_45] : memref<1024x256xbf16, #tpu.memory_space<vmem>>, vector<1024x256xbf16>
    %cst_46 = arith.constant dense<0.000000e+00> : vector<8x256xf32>
    %93 = tpu.matmul %91, %92, %cst_46 {dimension_numbers = #tpu.dot_dimension_numbers<[1], [0], [0], [1], [0, 0, 1, 1], [], []>} : vector<8x1024xbf16>, vector<1024x256xbf16>, vector<8x256xf32> -> vector<8x256xf32>
    %c0_47 = arith.constant 0 : index
    %c0_48 = arith.constant 0 : index
    %94 = vector.load %arg7[%c0_47, %c0_48] : memref<3x256xf32, #tpu.memory_space<vmem>>, vector<1x256xf32>
    %95 = vector.broadcast %94 : vector<1x256xf32> to vector<8x256xf32>
    %96 = arith.addf %93, %95 : vector<8x256xf32>
    %cst_49 = arith.constant dense<0.000000e+00> : vector<256xf32>
    %97 = vector.multi_reduction <add>, %96, %cst_49 [0] : vector<8x256xf32> to vector<256xf32>
    %98 = vector.shape_cast %97 : vector<256xf32> to vector<1x256xf32>
    %99 = vector.extract_strided_slice %98 {offsets = [0, 0], sizes = [1, 64], strides = [1, 1]} : vector<1x256xf32> to vector<1x64xf32>
    %100 = vector.extract_strided_slice %98 {offsets = [0, 64], sizes = [1, 64], strides = [1, 1]} : vector<1x256xf32> to vector<1x64xf32>
    %101 = arith.addf %99, %100 : vector<1x64xf32>
    %102 = vector.extract_strided_slice %98 {offsets = [0, 128], sizes = [1, 64], strides = [1, 1]} : vector<1x256xf32> to vector<1x64xf32>
    %103 = arith.addf %101, %102 : vector<1x64xf32>
    %104 = vector.extract_strided_slice %98 {offsets = [0, 192], sizes = [1, 64], strides = [1, 1]} : vector<1x256xf32> to vector<1x64xf32>
    %105 = arith.addf %103, %104 : vector<1x64xf32>
    %106 = tpu.concatenate %105, %105, %105, %105 in 1 : vector<1x64xf32>, vector<1x64xf32>, vector<1x64xf32>, vector<1x64xf32> -> vector<1x256xf32>
    %cst_50 = arith.constant 3.125000e-02 : f32
    %107 = vector.broadcast %cst_50 : f32 to vector<1x256xf32>
    %108 = arith.mulf %106, %107 : vector<1x256xf32>
    %109 = vector.broadcast %108 : vector<1x256xf32> to vector<8x256xf32>
    %110 = arith.subf %96, %109 : vector<8x256xf32>
    %111 = arith.mulf %110, %110 : vector<8x256xf32>
    %cst_51 = arith.constant dense<0.000000e+00> : vector<256xf32>
    %112 = vector.multi_reduction <add>, %111, %cst_51 [0] : vector<8x256xf32> to vector<256xf32>
    %113 = vector.shape_cast %112 : vector<256xf32> to vector<1x256xf32>
    %114 = vector.extract_strided_slice %113 {offsets = [0, 0], sizes = [1, 64], strides = [1, 1]} : vector<1x256xf32> to vector<1x64xf32>
    %115 = vector.extract_strided_slice %113 {offsets = [0, 64], sizes = [1, 64], strides = [1, 1]} : vector<1x256xf32> to vector<1x64xf32>
    %116 = arith.addf %114, %115 : vector<1x64xf32>
    %117 = vector.extract_strided_slice %113 {offsets = [0, 128], sizes = [1, 64], strides = [1, 1]} : vector<1x256xf32> to vector<1x64xf32>
    %118 = arith.addf %116, %117 : vector<1x64xf32>
    %119 = vector.extract_strided_slice %113 {offsets = [0, 192], sizes = [1, 64], strides = [1, 1]} : vector<1x256xf32> to vector<1x64xf32>
    %120 = arith.addf %118, %119 : vector<1x64xf32>
    %121 = tpu.concatenate %120, %120, %120, %120 in 1 : vector<1x64xf32>, vector<1x64xf32>, vector<1x64xf32>, vector<1x64xf32> -> vector<1x256xf32>
    %cst_52 = arith.constant 3.125000e-02 : f32
    %122 = vector.broadcast %cst_52 : f32 to vector<1x256xf32>
    %123 = arith.mulf %121, %122 : vector<1x256xf32>
    %cst_53 = arith.constant 9.99999974E-6 : f32
    %124 = vector.broadcast %cst_53 : f32 to vector<1x256xf32>
    %125 = arith.addf %123, %124 : vector<1x256xf32>
    %126 = math.rsqrt %125 : vector<1x256xf32>
    %127 = vector.broadcast %126 : vector<1x256xf32> to vector<8x256xf32>
    %128 = arith.mulf %110, %127 : vector<8x256xf32>
    %c1_54 = arith.constant 1 : index
    %c0_55 = arith.constant 0 : index
    %129 = vector.load %arg7[%c1_54, %c0_55] : memref<3x256xf32, #tpu.memory_space<vmem>>, vector<1x256xf32>
    %130 = vector.broadcast %129 : vector<1x256xf32> to vector<8x256xf32>
    %131 = arith.mulf %128, %130 : vector<8x256xf32>
    %c2_56 = arith.constant 2 : index
    %c0_57 = arith.constant 0 : index
    %132 = vector.load %arg7[%c2_56, %c0_57] : memref<3x256xf32, #tpu.memory_space<vmem>>, vector<1x256xf32>
    %133 = vector.broadcast %132 : vector<1x256xf32> to vector<8x256xf32>
    %134 = arith.addf %131, %133 : vector<8x256xf32>
    %cst_58 = arith.constant 0.000000e+00 : f32
    %135 = vector.broadcast %cst_58 : f32 to vector<8x256xf32>
    %136 = arith.maximumf %134, %135 : vector<8x256xf32>
    %137 = arith.truncf %136 : vector<8x256xf32> to vector<8x256xbf16>
    %c0_59 = arith.constant 0 : index
    %c0_60 = arith.constant 0 : index
    %c0_61 = arith.constant 0 : index
    %138 = vector.load %arg8[%c0_59, %c0_60, %c0_61] : memref<4x4x8xbf16, #tpu.memory_space<vmem>>, vector<1x4x8xbf16>
    %139 = vector.shape_cast %138 : vector<1x4x8xbf16> to vector<4x8xbf16>
    %cst_62 = arith.constant dense<0.000000e+00> : vector<4x256xf32>
    %140 = tpu.matmul %139, %137, %cst_62 {dimension_numbers = #tpu.dot_dimension_numbers<[1], [0], [0], [1], [0, 0, 1, 1], [], []>} : vector<4x8xbf16>, vector<8x256xbf16>, vector<4x256xf32> -> vector<4x256xf32>
    %c1_63 = arith.constant 1 : index
    %c0_64 = arith.constant 0 : index
    %c0_65 = arith.constant 0 : index
    %141 = vector.load %arg8[%c1_63, %c0_64, %c0_65] : memref<4x4x8xbf16, #tpu.memory_space<vmem>>, vector<1x4x8xbf16>
    %142 = vector.shape_cast %141 : vector<1x4x8xbf16> to vector<4x8xbf16>
    %cst_66 = arith.constant dense<0.000000e+00> : vector<4x256xf32>
    %143 = tpu.matmul %142, %137, %cst_66 {dimension_numbers = #tpu.dot_dimension_numbers<[1], [0], [0], [1], [0, 0, 1, 1], [], []>} : vector<4x8xbf16>, vector<8x256xbf16>, vector<4x256xf32> -> vector<4x256xf32>
    %c2_67 = arith.constant 2 : index
    %c0_68 = arith.constant 0 : index
    %c0_69 = arith.constant 0 : index
    %144 = vector.load %arg8[%c2_67, %c0_68, %c0_69] : memref<4x4x8xbf16, #tpu.memory_space<vmem>>, vector<1x4x8xbf16>
    %145 = vector.shape_cast %144 : vector<1x4x8xbf16> to vector<4x8xbf16>
    %cst_70 = arith.constant dense<0.000000e+00> : vector<4x256xf32>
    %146 = tpu.matmul %145, %137, %cst_70 {dimension_numbers = #tpu.dot_dimension_numbers<[1], [0], [0], [1], [0, 0, 1, 1], [], []>} : vector<4x8xbf16>, vector<8x256xbf16>, vector<4x256xf32> -> vector<4x256xf32>
    %c3_71 = arith.constant 3 : index
    %c0_72 = arith.constant 0 : index
    %c0_73 = arith.constant 0 : index
    %147 = vector.load %arg8[%c3_71, %c0_72, %c0_73] : memref<4x4x8xbf16, #tpu.memory_space<vmem>>, vector<1x4x8xbf16>
    %148 = vector.shape_cast %147 : vector<1x4x8xbf16> to vector<4x8xbf16>
    %cst_74 = arith.constant dense<0.000000e+00> : vector<4x256xf32>
    %149 = tpu.matmul %148, %137, %cst_74 {dimension_numbers = #tpu.dot_dimension_numbers<[1], [0], [0], [1], [0, 0, 1, 1], [], []>} : vector<4x8xbf16>, vector<8x256xbf16>, vector<4x256xf32> -> vector<4x256xf32>
    %150 = tpu.concatenate %140, %143, %146, %149 in 1 : vector<4x256xf32>, vector<4x256xf32>, vector<4x256xf32>, vector<4x256xf32> -> vector<4x1024xf32>
    %151 = arith.truncf %150 : vector<4x1024xf32> to vector<4x1024xbf16>
    %c0_75 = arith.constant 0 : index
    %c0_76 = arith.constant 0 : index
    %152 = vector.load %arg9[%c0_75, %c0_76] : memref<1024x256xbf16, #tpu.memory_space<vmem>>, vector<1024x256xbf16>
    %cst_77 = arith.constant dense<0.000000e+00> : vector<4x256xf32>
    %153 = tpu.matmul %151, %152, %cst_77 {dimension_numbers = #tpu.dot_dimension_numbers<[1], [0], [0], [1], [0, 0, 1, 1], [], []>} : vector<4x1024xbf16>, vector<1024x256xbf16>, vector<4x256xf32> -> vector<4x256xf32>
    %c0_78 = arith.constant 0 : index
    %c0_79 = arith.constant 0 : index
    %154 = vector.load %arg10[%c0_78, %c0_79] : memref<3x256xf32, #tpu.memory_space<vmem>>, vector<1x256xf32>
    %155 = vector.broadcast %154 : vector<1x256xf32> to vector<4x256xf32>
    %156 = arith.addf %153, %155 : vector<4x256xf32>
    %cst_80 = arith.constant dense<0.000000e+00> : vector<256xf32>
    %157 = vector.multi_reduction <add>, %156, %cst_80 [0] : vector<4x256xf32> to vector<256xf32>
    %158 = vector.shape_cast %157 : vector<256xf32> to vector<1x256xf32>
    %159 = vector.extract_strided_slice %158 {offsets = [0, 0], sizes = [1, 128], strides = [1, 1]} : vector<1x256xf32> to vector<1x128xf32>
    %160 = vector.extract_strided_slice %158 {offsets = [0, 128], sizes = [1, 128], strides = [1, 1]} : vector<1x256xf32> to vector<1x128xf32>
    %161 = arith.addf %159, %160 : vector<1x128xf32>
    %162 = tpu.concatenate %161, %161 in 1 : vector<1x128xf32>, vector<1x128xf32> -> vector<1x256xf32>
    %cst_81 = arith.constant 1.250000e-01 : f32
    %163 = vector.broadcast %cst_81 : f32 to vector<1x256xf32>
    %164 = arith.mulf %162, %163 : vector<1x256xf32>
    %165 = vector.broadcast %164 : vector<1x256xf32> to vector<4x256xf32>
    %166 = arith.subf %156, %165 : vector<4x256xf32>
    %167 = arith.mulf %166, %166 : vector<4x256xf32>
    %cst_82 = arith.constant dense<0.000000e+00> : vector<256xf32>
    %168 = vector.multi_reduction <add>, %167, %cst_82 [0] : vector<4x256xf32> to vector<256xf32>
    %169 = vector.shape_cast %168 : vector<256xf32> to vector<1x256xf32>
    %170 = vector.extract_strided_slice %169 {offsets = [0, 0], sizes = [1, 128], strides = [1, 1]} : vector<1x256xf32> to vector<1x128xf32>
    %171 = vector.extract_strided_slice %169 {offsets = [0, 128], sizes = [1, 128], strides = [1, 1]} : vector<1x256xf32> to vector<1x128xf32>
    %172 = arith.addf %170, %171 : vector<1x128xf32>
    %173 = tpu.concatenate %172, %172 in 1 : vector<1x128xf32>, vector<1x128xf32> -> vector<1x256xf32>
    %cst_83 = arith.constant 1.250000e-01 : f32
    %174 = vector.broadcast %cst_83 : f32 to vector<1x256xf32>
    %175 = arith.mulf %173, %174 : vector<1x256xf32>
    %cst_84 = arith.constant 9.99999974E-6 : f32
    %176 = vector.broadcast %cst_84 : f32 to vector<1x256xf32>
    %177 = arith.addf %175, %176 : vector<1x256xf32>
    %178 = math.rsqrt %177 : vector<1x256xf32>
    %179 = vector.broadcast %178 : vector<1x256xf32> to vector<4x256xf32>
    %180 = arith.mulf %166, %179 : vector<4x256xf32>
    %c1_85 = arith.constant 1 : index
    %c0_86 = arith.constant 0 : index
    %181 = vector.load %arg10[%c1_85, %c0_86] : memref<3x256xf32, #tpu.memory_space<vmem>>, vector<1x256xf32>
    %182 = vector.broadcast %181 : vector<1x256xf32> to vector<4x256xf32>
    %183 = arith.mulf %180, %182 : vector<4x256xf32>
    %c2_87 = arith.constant 2 : index
    %c0_88 = arith.constant 0 : index
    %184 = vector.load %arg10[%c2_87, %c0_88] : memref<3x256xf32, #tpu.memory_space<vmem>>, vector<1x256xf32>
    %185 = vector.broadcast %184 : vector<1x256xf32> to vector<4x256xf32>
    %186 = arith.addf %183, %185 : vector<4x256xf32>
    %cst_89 = arith.constant 0.000000e+00 : f32
    %187 = vector.broadcast %cst_89 : f32 to vector<4x256xf32>
    %188 = arith.maximumf %186, %187 : vector<4x256xf32>
    %189 = arith.truncf %188 : vector<4x256xf32> to vector<4x256xbf16>
    %c0_90 = arith.constant 0 : index
    %c0_91 = arith.constant 0 : index
    %c0_92 = arith.constant 0 : index
    %190 = vector.load %arg11[%c0_90, %c0_91, %c0_92] : memref<3x4x4xbf16, #tpu.memory_space<vmem>>, vector<1x4x4xbf16>
    %191 = vector.shape_cast %190 : vector<1x4x4xbf16> to vector<4x4xbf16>
    %cst_93 = arith.constant dense<0.000000e+00> : vector<4x256xf32>
    %192 = tpu.matmul %191, %189, %cst_93 {dimension_numbers = #tpu.dot_dimension_numbers<[1], [0], [0], [1], [0, 0, 1, 1], [], []>} : vector<4x4xbf16>, vector<4x256xbf16>, vector<4x256xf32> -> vector<4x256xf32>
    %c1_94 = arith.constant 1 : index
    %c0_95 = arith.constant 0 : index
    %c0_96 = arith.constant 0 : index
    %193 = vector.load %arg11[%c1_94, %c0_95, %c0_96] : memref<3x4x4xbf16, #tpu.memory_space<vmem>>, vector<1x4x4xbf16>
    %194 = vector.shape_cast %193 : vector<1x4x4xbf16> to vector<4x4xbf16>
    %cst_97 = arith.constant dense<0.000000e+00> : vector<4x256xf32>
    %195 = tpu.matmul %194, %189, %cst_97 {dimension_numbers = #tpu.dot_dimension_numbers<[1], [0], [0], [1], [0, 0, 1, 1], [], []>} : vector<4x4xbf16>, vector<4x256xbf16>, vector<4x256xf32> -> vector<4x256xf32>
    %c2_98 = arith.constant 2 : index
    %c0_99 = arith.constant 0 : index
    %c0_100 = arith.constant 0 : index
    %196 = vector.load %arg11[%c2_98, %c0_99, %c0_100] : memref<3x4x4xbf16, #tpu.memory_space<vmem>>, vector<1x4x4xbf16>
    %197 = vector.shape_cast %196 : vector<1x4x4xbf16> to vector<4x4xbf16>
    %cst_101 = arith.constant dense<0.000000e+00> : vector<4x256xf32>
    %198 = tpu.matmul %197, %189, %cst_101 {dimension_numbers = #tpu.dot_dimension_numbers<[1], [0], [0], [1], [0, 0, 1, 1], [], []>} : vector<4x4xbf16>, vector<4x256xbf16>, vector<4x256xf32> -> vector<4x256xf32>
    %199 = tpu.concatenate %192, %195, %198 in 1 : vector<4x256xf32>, vector<4x256xf32>, vector<4x256xf32> -> vector<4x768xf32>
    %200 = arith.truncf %199 : vector<4x768xf32> to vector<4x768xbf16>
    %c0_102 = arith.constant 0 : index
    %c0_103 = arith.constant 0 : index
    %201 = vector.load %arg12[%c0_102, %c0_103] : memref<768x512xbf16, #tpu.memory_space<vmem>>, vector<768x512xbf16>
    %cst_104 = arith.constant dense<0.000000e+00> : vector<4x512xf32>
    %202 = tpu.matmul %200, %201, %cst_104 {dimension_numbers = #tpu.dot_dimension_numbers<[1], [0], [0], [1], [0, 0, 1, 1], [], []>} : vector<4x768xbf16>, vector<768x512xbf16>, vector<4x512xf32> -> vector<4x512xf32>
    %203 = vector.extract_strided_slice %202 {offsets = [0, 0], sizes = [4, 256], strides = [1, 1]} : vector<4x512xf32> to vector<4x256xf32>
    %204 = vector.extract_strided_slice %202 {offsets = [0, 256], sizes = [4, 256], strides = [1, 1]} : vector<4x512xf32> to vector<4x256xf32>
    %205 = tpu.concatenate %203, %204 in 0 : vector<4x256xf32>, vector<4x256xf32> -> vector<8x256xf32>
    %c0_105 = arith.constant 0 : index
    %c0_106 = arith.constant 0 : index
    %206 = vector.load %arg13[%c0_105, %c0_106] : memref<3x256xf32, #tpu.memory_space<vmem>>, vector<1x256xf32>
    %207 = vector.broadcast %206 : vector<1x256xf32> to vector<8x256xf32>
    %208 = arith.addf %205, %207 : vector<8x256xf32>
    %cst_107 = arith.constant dense<0.000000e+00> : vector<256xf32>
    %209 = vector.multi_reduction <add>, %208, %cst_107 [0] : vector<8x256xf32> to vector<256xf32>
    %210 = vector.shape_cast %209 : vector<256xf32> to vector<1x256xf32>
    %211 = vector.extract_strided_slice %210 {offsets = [0, 0], sizes = [1, 64], strides = [1, 1]} : vector<1x256xf32> to vector<1x64xf32>
    %212 = vector.extract_strided_slice %210 {offsets = [0, 64], sizes = [1, 64], strides = [1, 1]} : vector<1x256xf32> to vector<1x64xf32>
    %213 = arith.addf %211, %212 : vector<1x64xf32>
    %214 = vector.extract_strided_slice %210 {offsets = [0, 128], sizes = [1, 64], strides = [1, 1]} : vector<1x256xf32> to vector<1x64xf32>
    %215 = arith.addf %213, %214 : vector<1x64xf32>
    %216 = vector.extract_strided_slice %210 {offsets = [0, 192], sizes = [1, 64], strides = [1, 1]} : vector<1x256xf32> to vector<1x64xf32>
    %217 = arith.addf %215, %216 : vector<1x64xf32>
    %218 = tpu.concatenate %217, %217, %217, %217 in 1 : vector<1x64xf32>, vector<1x64xf32>, vector<1x64xf32>, vector<1x64xf32> -> vector<1x256xf32>
    %cst_108 = arith.constant 3.125000e-02 : f32
    %219 = vector.broadcast %cst_108 : f32 to vector<1x256xf32>
    %220 = arith.mulf %218, %219 : vector<1x256xf32>
    %221 = vector.broadcast %220 : vector<1x256xf32> to vector<8x256xf32>
    %222 = arith.subf %208, %221 : vector<8x256xf32>
    %223 = arith.mulf %222, %222 : vector<8x256xf32>
    %cst_109 = arith.constant dense<0.000000e+00> : vector<256xf32>
    %224 = vector.multi_reduction <add>, %223, %cst_109 [0] : vector<8x256xf32> to vector<256xf32>
    %225 = vector.shape_cast %224 : vector<256xf32> to vector<1x256xf32>
    %226 = vector.extract_strided_slice %225 {offsets = [0, 0], sizes = [1, 64], strides = [1, 1]} : vector<1x256xf32> to vector<1x64xf32>
    %227 = vector.extract_strided_slice %225 {offsets = [0, 64], sizes = [1, 64], strides = [1, 1]} : vector<1x256xf32> to vector<1x64xf32>
    %228 = arith.addf %226, %227 : vector<1x64xf32>
    %229 = vector.extract_strided_slice %225 {offsets = [0, 128], sizes = [1, 64], strides = [1, 1]} : vector<1x256xf32> to vector<1x64xf32>
    %230 = arith.addf %228, %229 : vector<1x64xf32>
    %231 = vector.extract_strided_slice %225 {offsets = [0, 192], sizes = [1, 64], strides = [1, 1]} : vector<1x256xf32> to vector<1x64xf32>
    %232 = arith.addf %230, %231 : vector<1x64xf32>
    %233 = tpu.concatenate %232, %232, %232, %232 in 1 : vector<1x64xf32>, vector<1x64xf32>, vector<1x64xf32>, vector<1x64xf32> -> vector<1x256xf32>
    %cst_110 = arith.constant 3.125000e-02 : f32
    %234 = vector.broadcast %cst_110 : f32 to vector<1x256xf32>
    %235 = arith.mulf %233, %234 : vector<1x256xf32>
    %cst_111 = arith.constant 9.99999974E-6 : f32
    %236 = vector.broadcast %cst_111 : f32 to vector<1x256xf32>
    %237 = arith.addf %235, %236 : vector<1x256xf32>
    %238 = math.rsqrt %237 : vector<1x256xf32>
    %239 = vector.broadcast %238 : vector<1x256xf32> to vector<8x256xf32>
    %240 = arith.mulf %222, %239 : vector<8x256xf32>
    %c1_112 = arith.constant 1 : index
    %c0_113 = arith.constant 0 : index
    %241 = vector.load %arg13[%c1_112, %c0_113] : memref<3x256xf32, #tpu.memory_space<vmem>>, vector<1x256xf32>
    %242 = vector.broadcast %241 : vector<1x256xf32> to vector<8x256xf32>
    %243 = arith.mulf %240, %242 : vector<8x256xf32>
    %c2_114 = arith.constant 2 : index
    %c0_115 = arith.constant 0 : index
    %244 = vector.load %arg13[%c2_114, %c0_115] : memref<3x256xf32, #tpu.memory_space<vmem>>, vector<1x256xf32>
    %245 = vector.broadcast %244 : vector<1x256xf32> to vector<8x256xf32>
    %246 = arith.addf %243, %245 : vector<8x256xf32>
    %cst_116 = arith.constant 0.000000e+00 : f32
    %247 = vector.broadcast %cst_116 : f32 to vector<8x256xf32>
    %248 = arith.maximumf %246, %247 : vector<8x256xf32>
    %249 = arith.truncf %248 : vector<8x256xf32> to vector<8x256xbf16>
    %c0_117 = arith.constant 0 : index
    %c0_118 = arith.constant 0 : index
    %c0_119 = arith.constant 0 : index
    %250 = vector.load %arg14[%c0_117, %c0_118, %c0_119] : memref<3x8x8xbf16, #tpu.memory_space<vmem>>, vector<1x8x8xbf16>
    %251 = vector.shape_cast %250 : vector<1x8x8xbf16> to vector<8x8xbf16>
    %cst_120 = arith.constant dense<0.000000e+00> : vector<8x256xf32>
    %252 = tpu.matmul %251, %249, %cst_120 {dimension_numbers = #tpu.dot_dimension_numbers<[1], [0], [0], [1], [0, 0, 1, 1], [], []>} : vector<8x8xbf16>, vector<8x256xbf16>, vector<8x256xf32> -> vector<8x256xf32>
    %c1_121 = arith.constant 1 : index
    %c0_122 = arith.constant 0 : index
    %c0_123 = arith.constant 0 : index
    %253 = vector.load %arg14[%c1_121, %c0_122, %c0_123] : memref<3x8x8xbf16, #tpu.memory_space<vmem>>, vector<1x8x8xbf16>
    %254 = vector.shape_cast %253 : vector<1x8x8xbf16> to vector<8x8xbf16>
    %cst_124 = arith.constant dense<0.000000e+00> : vector<8x256xf32>
    %255 = tpu.matmul %254, %249, %cst_124 {dimension_numbers = #tpu.dot_dimension_numbers<[1], [0], [0], [1], [0, 0, 1, 1], [], []>} : vector<8x8xbf16>, vector<8x256xbf16>, vector<8x256xf32> -> vector<8x256xf32>
    %c2_125 = arith.constant 2 : index
    %c0_126 = arith.constant 0 : index
    %c0_127 = arith.constant 0 : index
    %256 = vector.load %arg14[%c2_125, %c0_126, %c0_127] : memref<3x8x8xbf16, #tpu.memory_space<vmem>>, vector<1x8x8xbf16>
    %257 = vector.shape_cast %256 : vector<1x8x8xbf16> to vector<8x8xbf16>
    %cst_128 = arith.constant dense<0.000000e+00> : vector<8x256xf32>
    %258 = tpu.matmul %257, %249, %cst_128 {dimension_numbers = #tpu.dot_dimension_numbers<[1], [0], [0], [1], [0, 0, 1, 1], [], []>} : vector<8x8xbf16>, vector<8x256xbf16>, vector<8x256xf32> -> vector<8x256xf32>
    %259 = tpu.concatenate %252, %255, %258 in 1 : vector<8x256xf32>, vector<8x256xf32>, vector<8x256xf32> -> vector<8x768xf32>
    %260 = arith.truncf %259 : vector<8x768xf32> to vector<8x768xbf16>
    %c0_129 = arith.constant 0 : index
    %c0_130 = arith.constant 0 : index
    %261 = vector.load %arg16[%c0_129, %c0_130] : memref<768x512xbf16, #tpu.memory_space<vmem>>, vector<768x512xbf16>
    %cst_131 = arith.constant dense<0.000000e+00> : vector<8x512xf32>
    %262 = tpu.matmul %260, %261, %cst_131 {dimension_numbers = #tpu.dot_dimension_numbers<[1], [0], [0], [1], [0, 0, 1, 1], [], []>} : vector<8x768xbf16>, vector<768x512xbf16>, vector<8x512xf32> -> vector<8x512xf32>
    %263 = arith.truncf %136 : vector<8x256xf32> to vector<8x256xbf16>
    %c0_132 = arith.constant 0 : index
    %c0_133 = arith.constant 0 : index
    %c0_134 = arith.constant 0 : index
    %264 = vector.load %arg15[%c0_132, %c0_133, %c0_134] : memref<3x8x8xbf16, #tpu.memory_space<vmem>>, vector<1x8x8xbf16>
    %265 = vector.shape_cast %264 : vector<1x8x8xbf16> to vector<8x8xbf16>
    %cst_135 = arith.constant dense<0.000000e+00> : vector<8x256xf32>
    %266 = tpu.matmul %265, %263, %cst_135 {dimension_numbers = #tpu.dot_dimension_numbers<[1], [0], [0], [1], [0, 0, 1, 1], [], []>} : vector<8x8xbf16>, vector<8x256xbf16>, vector<8x256xf32> -> vector<8x256xf32>
    %c1_136 = arith.constant 1 : index
    %c0_137 = arith.constant 0 : index
    %c0_138 = arith.constant 0 : index
    %267 = vector.load %arg15[%c1_136, %c0_137, %c0_138] : memref<3x8x8xbf16, #tpu.memory_space<vmem>>, vector<1x8x8xbf16>
    %268 = vector.shape_cast %267 : vector<1x8x8xbf16> to vector<8x8xbf16>
    %cst_139 = arith.constant dense<0.000000e+00> : vector<8x256xf32>
    %269 = tpu.matmul %268, %263, %cst_139 {dimension_numbers = #tpu.dot_dimension_numbers<[1], [0], [0], [1], [0, 0, 1, 1], [], []>} : vector<8x8xbf16>, vector<8x256xbf16>, vector<8x256xf32> -> vector<8x256xf32>
    %c2_140 = arith.constant 2 : index
    %c0_141 = arith.constant 0 : index
    %c0_142 = arith.constant 0 : index
    %270 = vector.load %arg15[%c2_140, %c0_141, %c0_142] : memref<3x8x8xbf16, #tpu.memory_space<vmem>>, vector<1x8x8xbf16>
    %271 = vector.shape_cast %270 : vector<1x8x8xbf16> to vector<8x8xbf16>
    %cst_143 = arith.constant dense<0.000000e+00> : vector<8x256xf32>
    %272 = tpu.matmul %271, %263, %cst_143 {dimension_numbers = #tpu.dot_dimension_numbers<[1], [0], [0], [1], [0, 0, 1, 1], [], []>} : vector<8x8xbf16>, vector<8x256xbf16>, vector<8x256xf32> -> vector<8x256xf32>
    %273 = tpu.concatenate %266, %269, %272 in 1 : vector<8x256xf32>, vector<8x256xf32>, vector<8x256xf32> -> vector<8x768xf32>
    %274 = arith.truncf %273 : vector<8x768xf32> to vector<8x768xbf16>
    %c0_144 = arith.constant 0 : index
    %c0_145 = arith.constant 0 : index
    %275 = vector.load %arg17[%c0_144, %c0_145] : memref<768x512xbf16, #tpu.memory_space<vmem>>, vector<768x512xbf16>
    %cst_146 = arith.constant dense<0.000000e+00> : vector<8x512xf32>
    %276 = tpu.matmul %274, %275, %cst_146 {dimension_numbers = #tpu.dot_dimension_numbers<[1], [0], [0], [1], [0, 0, 1, 1], [], []>} : vector<8x768xbf16>, vector<768x512xbf16>, vector<8x512xf32> -> vector<8x512xf32>
    %277 = arith.addf %262, %276 : vector<8x512xf32>
    %278 = vector.extract_strided_slice %277 {offsets = [0, 0], sizes = [8, 256], strides = [1, 1]} : vector<8x512xf32> to vector<8x256xf32>
    %279 = vector.extract_strided_slice %277 {offsets = [0, 256], sizes = [8, 256], strides = [1, 1]} : vector<8x512xf32> to vector<8x256xf32>
    %280 = tpu.concatenate %278, %279 in 0 : vector<8x256xf32>, vector<8x256xf32> -> vector<16x256xf32>
    %c0_147 = arith.constant 0 : index
    %c0_148 = arith.constant 0 : index
    %281 = vector.load %arg18[%c0_147, %c0_148] : memref<3x256xf32, #tpu.memory_space<vmem>>, vector<1x256xf32>
    %282 = vector.broadcast %281 : vector<1x256xf32> to vector<16x256xf32>
    %283 = arith.addf %280, %282 : vector<16x256xf32>
    %cst_149 = arith.constant dense<0.000000e+00> : vector<256xf32>
    %284 = vector.multi_reduction <add>, %283, %cst_149 [0] : vector<16x256xf32> to vector<256xf32>
    %285 = vector.shape_cast %284 : vector<256xf32> to vector<1x256xf32>
    %286 = vector.extract_strided_slice %285 {offsets = [0, 0], sizes = [1, 32], strides = [1, 1]} : vector<1x256xf32> to vector<1x32xf32>
    %287 = vector.extract_strided_slice %285 {offsets = [0, 32], sizes = [1, 32], strides = [1, 1]} : vector<1x256xf32> to vector<1x32xf32>
    %288 = arith.addf %286, %287 : vector<1x32xf32>
    %289 = vector.extract_strided_slice %285 {offsets = [0, 64], sizes = [1, 32], strides = [1, 1]} : vector<1x256xf32> to vector<1x32xf32>
    %290 = arith.addf %288, %289 : vector<1x32xf32>
    %291 = vector.extract_strided_slice %285 {offsets = [0, 96], sizes = [1, 32], strides = [1, 1]} : vector<1x256xf32> to vector<1x32xf32>
    %292 = arith.addf %290, %291 : vector<1x32xf32>
    %293 = vector.extract_strided_slice %285 {offsets = [0, 128], sizes = [1, 32], strides = [1, 1]} : vector<1x256xf32> to vector<1x32xf32>
    %294 = arith.addf %292, %293 : vector<1x32xf32>
    %295 = vector.extract_strided_slice %285 {offsets = [0, 160], sizes = [1, 32], strides = [1, 1]} : vector<1x256xf32> to vector<1x32xf32>
    %296 = arith.addf %294, %295 : vector<1x32xf32>
    %297 = vector.extract_strided_slice %285 {offsets = [0, 192], sizes = [1, 32], strides = [1, 1]} : vector<1x256xf32> to vector<1x32xf32>
    %298 = arith.addf %296, %297 : vector<1x32xf32>
    %299 = vector.extract_strided_slice %285 {offsets = [0, 224], sizes = [1, 32], strides = [1, 1]} : vector<1x256xf32> to vector<1x32xf32>
    %300 = arith.addf %298, %299 : vector<1x32xf32>
    %301 = tpu.concatenate %300, %300, %300, %300, %300, %300, %300, %300 in 1 : vector<1x32xf32>, vector<1x32xf32>, vector<1x32xf32>, vector<1x32xf32>, vector<1x32xf32>, vector<1x32xf32>, vector<1x32xf32>, vector<1x32xf32> -> vector<1x256xf32>
    %cst_150 = arith.constant 7.812500e-03 : f32
    %302 = vector.broadcast %cst_150 : f32 to vector<1x256xf32>
    %303 = arith.mulf %301, %302 : vector<1x256xf32>
    %304 = vector.broadcast %303 : vector<1x256xf32> to vector<16x256xf32>
    %305 = arith.subf %283, %304 : vector<16x256xf32>
    %306 = arith.mulf %305, %305 : vector<16x256xf32>
    %cst_151 = arith.constant dense<0.000000e+00> : vector<256xf32>
    %307 = vector.multi_reduction <add>, %306, %cst_151 [0] : vector<16x256xf32> to vector<256xf32>
    %308 = vector.shape_cast %307 : vector<256xf32> to vector<1x256xf32>
    %309 = vector.extract_strided_slice %308 {offsets = [0, 0], sizes = [1, 32], strides = [1, 1]} : vector<1x256xf32> to vector<1x32xf32>
    %310 = vector.extract_strided_slice %308 {offsets = [0, 32], sizes = [1, 32], strides = [1, 1]} : vector<1x256xf32> to vector<1x32xf32>
    %311 = arith.addf %309, %310 : vector<1x32xf32>
    %312 = vector.extract_strided_slice %308 {offsets = [0, 64], sizes = [1, 32], strides = [1, 1]} : vector<1x256xf32> to vector<1x32xf32>
    %313 = arith.addf %311, %312 : vector<1x32xf32>
    %314 = vector.extract_strided_slice %308 {offsets = [0, 96], sizes = [1, 32], strides = [1, 1]} : vector<1x256xf32> to vector<1x32xf32>
    %315 = arith.addf %313, %314 : vector<1x32xf32>
    %316 = vector.extract_strided_slice %308 {offsets = [0, 128], sizes = [1, 32], strides = [1, 1]} : vector<1x256xf32> to vector<1x32xf32>
    %317 = arith.addf %315, %316 : vector<1x32xf32>
    %318 = vector.extract_strided_slice %308 {offsets = [0, 160], sizes = [1, 32], strides = [1, 1]} : vector<1x256xf32> to vector<1x32xf32>
    %319 = arith.addf %317, %318 : vector<1x32xf32>
    %320 = vector.extract_strided_slice %308 {offsets = [0, 192], sizes = [1, 32], strides = [1, 1]} : vector<1x256xf32> to vector<1x32xf32>
    %321 = arith.addf %319, %320 : vector<1x32xf32>
    %322 = vector.extract_strided_slice %308 {offsets = [0, 224], sizes = [1, 32], strides = [1, 1]} : vector<1x256xf32> to vector<1x32xf32>
    %323 = arith.addf %321, %322 : vector<1x32xf32>
    %324 = tpu.concatenate %323, %323, %323, %323, %323, %323, %323, %323 in 1 : vector<1x32xf32>, vector<1x32xf32>, vector<1x32xf32>, vector<1x32xf32>, vector<1x32xf32>, vector<1x32xf32>, vector<1x32xf32>, vector<1x32xf32> -> vector<1x256xf32>
    %cst_152 = arith.constant 7.812500e-03 : f32
    %325 = vector.broadcast %cst_152 : f32 to vector<1x256xf32>
    %326 = arith.mulf %324, %325 : vector<1x256xf32>
    %cst_153 = arith.constant 9.99999974E-6 : f32
    %327 = vector.broadcast %cst_153 : f32 to vector<1x256xf32>
    %328 = arith.addf %326, %327 : vector<1x256xf32>
    %329 = math.rsqrt %328 : vector<1x256xf32>
    %330 = vector.broadcast %329 : vector<1x256xf32> to vector<16x256xf32>
    %331 = arith.mulf %305, %330 : vector<16x256xf32>
    %c1_154 = arith.constant 1 : index
    %c0_155 = arith.constant 0 : index
    %332 = vector.load %arg18[%c1_154, %c0_155] : memref<3x256xf32, #tpu.memory_space<vmem>>, vector<1x256xf32>
    %333 = vector.broadcast %332 : vector<1x256xf32> to vector<16x256xf32>
    %334 = arith.mulf %331, %333 : vector<16x256xf32>
    %c2_156 = arith.constant 2 : index
    %c0_157 = arith.constant 0 : index
    %335 = vector.load %arg18[%c2_156, %c0_157] : memref<3x256xf32, #tpu.memory_space<vmem>>, vector<1x256xf32>
    %336 = vector.broadcast %335 : vector<1x256xf32> to vector<16x256xf32>
    %337 = arith.addf %334, %336 : vector<16x256xf32>
    %cst_158 = arith.constant 0.000000e+00 : f32
    %338 = vector.broadcast %cst_158 : f32 to vector<16x256xf32>
    %339 = arith.maximumf %337, %338 : vector<16x256xf32>
    %340 = arith.truncf %339 : vector<16x256xf32> to vector<16x256xbf16>
    %c0_159 = arith.constant 0 : index
    %c0_160 = arith.constant 0 : index
    %c0_161 = arith.constant 0 : index
    %341 = vector.load %arg19[%c0_159, %c0_160, %c0_161] : memref<3x16x16xbf16, #tpu.memory_space<vmem>>, vector<1x16x16xbf16>
    %342 = vector.shape_cast %341 : vector<1x16x16xbf16> to vector<16x16xbf16>
    %cst_162 = arith.constant dense<0.000000e+00> : vector<16x256xf32>
    %343 = tpu.matmul %342, %340, %cst_162 {dimension_numbers = #tpu.dot_dimension_numbers<[1], [0], [0], [1], [0, 0, 1, 1], [], []>} : vector<16x16xbf16>, vector<16x256xbf16>, vector<16x256xf32> -> vector<16x256xf32>
    %c1_163 = arith.constant 1 : index
    %c0_164 = arith.constant 0 : index
    %c0_165 = arith.constant 0 : index
    %344 = vector.load %arg19[%c1_163, %c0_164, %c0_165] : memref<3x16x16xbf16, #tpu.memory_space<vmem>>, vector<1x16x16xbf16>
    %345 = vector.shape_cast %344 : vector<1x16x16xbf16> to vector<16x16xbf16>
    %cst_166 = arith.constant dense<0.000000e+00> : vector<16x256xf32>
    %346 = tpu.matmul %345, %340, %cst_166 {dimension_numbers = #tpu.dot_dimension_numbers<[1], [0], [0], [1], [0, 0, 1, 1], [], []>} : vector<16x16xbf16>, vector<16x256xbf16>, vector<16x256xf32> -> vector<16x256xf32>
    %c2_167 = arith.constant 2 : index
    %c0_168 = arith.constant 0 : index
    %c0_169 = arith.constant 0 : index
    %347 = vector.load %arg19[%c2_167, %c0_168, %c0_169] : memref<3x16x16xbf16, #tpu.memory_space<vmem>>, vector<1x16x16xbf16>
    %348 = vector.shape_cast %347 : vector<1x16x16xbf16> to vector<16x16xbf16>
    %cst_170 = arith.constant dense<0.000000e+00> : vector<16x256xf32>
    %349 = tpu.matmul %348, %340, %cst_170 {dimension_numbers = #tpu.dot_dimension_numbers<[1], [0], [0], [1], [0, 0, 1, 1], [], []>} : vector<16x16xbf16>, vector<16x256xbf16>, vector<16x256xf32> -> vector<16x256xf32>
    %350 = tpu.concatenate %343, %346, %349 in 1 : vector<16x256xf32>, vector<16x256xf32>, vector<16x256xf32> -> vector<16x768xf32>
    %351 = arith.truncf %350 : vector<16x768xf32> to vector<16x768xbf16>
    %c0_171 = arith.constant 0 : index
    %c0_172 = arith.constant 0 : index
    %352 = vector.load %arg21[%c0_171, %c0_172] : memref<768x64xbf16, #tpu.memory_space<vmem>>, vector<768x64xbf16>
    %cst_173 = arith.constant dense<0.000000e+00> : vector<16x64xf32>
    %353 = tpu.matmul %351, %352, %cst_173 {dimension_numbers = #tpu.dot_dimension_numbers<[1], [0], [0], [1], [0, 0, 1, 1], [], []>} : vector<16x768xbf16>, vector<768x64xbf16>, vector<16x64xf32> -> vector<16x64xf32>
    %354 = arith.truncf %76 : vector<16x256xf32> to vector<16x256xbf16>
    %c0_174 = arith.constant 0 : index
    %c0_175 = arith.constant 0 : index
    %c0_176 = arith.constant 0 : index
    %355 = vector.load %arg20[%c0_174, %c0_175, %c0_176] : memref<3x16x16xbf16, #tpu.memory_space<vmem>>, vector<1x16x16xbf16>
    %356 = vector.shape_cast %355 : vector<1x16x16xbf16> to vector<16x16xbf16>
    %cst_177 = arith.constant dense<0.000000e+00> : vector<16x256xf32>
    %357 = tpu.matmul %356, %354, %cst_177 {dimension_numbers = #tpu.dot_dimension_numbers<[1], [0], [0], [1], [0, 0, 1, 1], [], []>} : vector<16x16xbf16>, vector<16x256xbf16>, vector<16x256xf32> -> vector<16x256xf32>
    %c1_178 = arith.constant 1 : index
    %c0_179 = arith.constant 0 : index
    %c0_180 = arith.constant 0 : index
    %358 = vector.load %arg20[%c1_178, %c0_179, %c0_180] : memref<3x16x16xbf16, #tpu.memory_space<vmem>>, vector<1x16x16xbf16>
    %359 = vector.shape_cast %358 : vector<1x16x16xbf16> to vector<16x16xbf16>
    %cst_181 = arith.constant dense<0.000000e+00> : vector<16x256xf32>
    %360 = tpu.matmul %359, %354, %cst_181 {dimension_numbers = #tpu.dot_dimension_numbers<[1], [0], [0], [1], [0, 0, 1, 1], [], []>} : vector<16x16xbf16>, vector<16x256xbf16>, vector<16x256xf32> -> vector<16x256xf32>
    %c2_182 = arith.constant 2 : index
    %c0_183 = arith.constant 0 : index
    %c0_184 = arith.constant 0 : index
    %361 = vector.load %arg20[%c2_182, %c0_183, %c0_184] : memref<3x16x16xbf16, #tpu.memory_space<vmem>>, vector<1x16x16xbf16>
    %362 = vector.shape_cast %361 : vector<1x16x16xbf16> to vector<16x16xbf16>
    %cst_185 = arith.constant dense<0.000000e+00> : vector<16x256xf32>
    %363 = tpu.matmul %362, %354, %cst_185 {dimension_numbers = #tpu.dot_dimension_numbers<[1], [0], [0], [1], [0, 0, 1, 1], [], []>} : vector<16x16xbf16>, vector<16x256xbf16>, vector<16x256xf32> -> vector<16x256xf32>
    %364 = tpu.concatenate %357, %360, %363 in 1 : vector<16x256xf32>, vector<16x256xf32>, vector<16x256xf32> -> vector<16x768xf32>
    %365 = arith.truncf %364 : vector<16x768xf32> to vector<16x768xbf16>
    %c0_186 = arith.constant 0 : index
    %c0_187 = arith.constant 0 : index
    %366 = vector.load %arg22[%c0_186, %c0_187] : memref<768x64xbf16, #tpu.memory_space<vmem>>, vector<768x64xbf16>
    %cst_188 = arith.constant dense<0.000000e+00> : vector<16x64xf32>
    %367 = tpu.matmul %365, %366, %cst_188 {dimension_numbers = #tpu.dot_dimension_numbers<[1], [0], [0], [1], [0, 0, 1, 1], [], []>} : vector<16x768xbf16>, vector<768x64xbf16>, vector<16x64xf32> -> vector<16x64xf32>
    %368 = arith.addf %353, %367 : vector<16x64xf32>
    %369 = vector.extract_strided_slice %368 {offsets = [0, 0], sizes = [16, 32], strides = [1, 1]} : vector<16x64xf32> to vector<16x32xf32>
    %370 = vector.extract_strided_slice %368 {offsets = [0, 32], sizes = [16, 32], strides = [1, 1]} : vector<16x64xf32> to vector<16x32xf32>
    %371 = tpu.concatenate %369, %370 in 0 : vector<16x32xf32>, vector<16x32xf32> -> vector<32x32xf32>
    %c0_189 = arith.constant 0 : index
    %c0_190 = arith.constant 0 : index
    %372 = vector.load %arg23[%c0_189, %c0_190] : memref<1x32xf32, #tpu.memory_space<vmem>>, vector<1x32xf32>
    %373 = vector.broadcast %372 : vector<1x32xf32> to vector<32x32xf32>
    %374 = arith.addf %371, %373 : vector<32x32xf32>
    %375 = arith.truncf %374 : vector<32x32xf32> to vector<32x32xbf16>
    %c0_191 = arith.constant 0 : index
    %c0_192 = arith.constant 0 : index
    %c0_193 = arith.constant 0 : index
    %376 = vector.load %arg24[%c0_191, %c0_192, %c0_193] : memref<3x32x32xbf16, #tpu.memory_space<vmem>>, vector<1x32x32xbf16>
    %377 = vector.shape_cast %376 : vector<1x32x32xbf16> to vector<32x32xbf16>
    %cst_194 = arith.constant dense<0.000000e+00> : vector<32x32xf32>
    %378 = tpu.matmul %377, %375, %cst_194 {dimension_numbers = #tpu.dot_dimension_numbers<[1], [0], [0], [1], [0, 0, 1, 1], [], []>} : vector<32x32xbf16>, vector<32x32xbf16>, vector<32x32xf32> -> vector<32x32xf32>
    %c1_195 = arith.constant 1 : index
    %c0_196 = arith.constant 0 : index
    %c0_197 = arith.constant 0 : index
    %379 = vector.load %arg24[%c1_195, %c0_196, %c0_197] : memref<3x32x32xbf16, #tpu.memory_space<vmem>>, vector<1x32x32xbf16>
    %380 = vector.shape_cast %379 : vector<1x32x32xbf16> to vector<32x32xbf16>
    %cst_198 = arith.constant dense<0.000000e+00> : vector<32x32xf32>
    %381 = tpu.matmul %380, %375, %cst_198 {dimension_numbers = #tpu.dot_dimension_numbers<[1], [0], [0], [1], [0, 0, 1, 1], [], []>} : vector<32x32xbf16>, vector<32x32xbf16>, vector<32x32xf32> -> vector<32x32xf32>
    %c2_199 = arith.constant 2 : index
    %c0_200 = arith.constant 0 : index
    %c0_201 = arith.constant 0 : index
    %382 = vector.load %arg24[%c2_199, %c0_200, %c0_201] : memref<3x32x32xbf16, #tpu.memory_space<vmem>>, vector<1x32x32xbf16>
    %383 = vector.shape_cast %382 : vector<1x32x32xbf16> to vector<32x32xbf16>
    %cst_202 = arith.constant dense<0.000000e+00> : vector<32x32xf32>
    %384 = tpu.matmul %383, %375, %cst_202 {dimension_numbers = #tpu.dot_dimension_numbers<[1], [0], [0], [1], [0, 0, 1, 1], [], []>} : vector<32x32xbf16>, vector<32x32xbf16>, vector<32x32xf32> -> vector<32x32xf32>
    %385 = tpu.concatenate %378, %381, %384 in 1 : vector<32x32xf32>, vector<32x32xf32>, vector<32x32xf32> -> vector<32x96xf32>
    %386 = arith.truncf %385 : vector<32x96xf32> to vector<32x96xbf16>
    %c0_203 = arith.constant 0 : index
    %c0_204 = arith.constant 0 : index
    %387 = vector.load %arg26[%c0_203, %c0_204] : memref<96x32xbf16, #tpu.memory_space<vmem>>, vector<96x32xbf16>
    %cst_205 = arith.constant dense<0.000000e+00> : vector<32x32xf32>
    %388 = tpu.matmul %386, %387, %cst_205 {dimension_numbers = #tpu.dot_dimension_numbers<[1], [0], [0], [1], [0, 0, 1, 1], [], []>} : vector<32x96xbf16>, vector<96x32xbf16>, vector<32x32xf32> -> vector<32x32xf32>
    %c0_206 = arith.constant 0 : index
    %c0_207 = arith.constant 0 : index
    %c0_208 = arith.constant 0 : index
    %389 = vector.load %arg25[%c0_206, %c0_207, %c0_208] : memref<3x32x32xbf16, #tpu.memory_space<vmem>>, vector<1x32x32xbf16>
    %390 = vector.shape_cast %389 : vector<1x32x32xbf16> to vector<32x32xbf16>
    %cst_209 = arith.constant dense<0.000000e+00> : vector<32x16xf32>
    %391 = tpu.matmul %390, %1, %cst_209 {dimension_numbers = #tpu.dot_dimension_numbers<[1], [0], [0], [1], [0, 0, 1, 1], [], []>} : vector<32x32xbf16>, vector<32x16xbf16>, vector<32x16xf32> -> vector<32x16xf32>
    %c1_210 = arith.constant 1 : index
    %c0_211 = arith.constant 0 : index
    %c0_212 = arith.constant 0 : index
    %392 = vector.load %arg25[%c1_210, %c0_211, %c0_212] : memref<3x32x32xbf16, #tpu.memory_space<vmem>>, vector<1x32x32xbf16>
    %393 = vector.shape_cast %392 : vector<1x32x32xbf16> to vector<32x32xbf16>
    %cst_213 = arith.constant dense<0.000000e+00> : vector<32x16xf32>
    %394 = tpu.matmul %393, %1, %cst_213 {dimension_numbers = #tpu.dot_dimension_numbers<[1], [0], [0], [1], [0, 0, 1, 1], [], []>} : vector<32x32xbf16>, vector<32x16xbf16>, vector<32x16xf32> -> vector<32x16xf32>
    %c2_214 = arith.constant 2 : index
    %c0_215 = arith.constant 0 : index
    %c0_216 = arith.constant 0 : index
    %395 = vector.load %arg25[%c2_214, %c0_215, %c0_216] : memref<3x32x32xbf16, #tpu.memory_space<vmem>>, vector<1x32x32xbf16>
    %396 = vector.shape_cast %395 : vector<1x32x32xbf16> to vector<32x32xbf16>
    %cst_217 = arith.constant dense<0.000000e+00> : vector<32x16xf32>
    %397 = tpu.matmul %396, %1, %cst_217 {dimension_numbers = #tpu.dot_dimension_numbers<[1], [0], [0], [1], [0, 0, 1, 1], [], []>} : vector<32x32xbf16>, vector<32x16xbf16>, vector<32x16xf32> -> vector<32x16xf32>
    %398 = tpu.concatenate %391, %394, %397 in 1 : vector<32x16xf32>, vector<32x16xf32>, vector<32x16xf32> -> vector<32x48xf32>
    %399 = arith.truncf %398 : vector<32x48xf32> to vector<32x48xbf16>
    %c0_218 = arith.constant 0 : index
    %c0_219 = arith.constant 0 : index
    %400 = vector.load %arg27[%c0_218, %c0_219] : memref<48x32xbf16, #tpu.memory_space<vmem>>, vector<48x32xbf16>
    %cst_220 = arith.constant dense<0.000000e+00> : vector<32x32xf32>
    %401 = tpu.matmul %399, %400, %cst_220 {dimension_numbers = #tpu.dot_dimension_numbers<[1], [0], [0], [1], [0, 0, 1, 1], [], []>} : vector<32x48xbf16>, vector<48x32xbf16>, vector<32x32xf32> -> vector<32x32xf32>
    %402 = arith.addf %388, %401 : vector<32x32xf32>
    %c0_221 = arith.constant 0 : index
    %c0_222 = arith.constant 0 : index
    %403 = vector.load %arg28[%c0_221, %c0_222] : memref<1x32xf32, #tpu.memory_space<vmem>>, vector<1x32xf32>
    %404 = vector.broadcast %403 : vector<1x32xf32> to vector<32x32xf32>
    %405 = arith.addf %402, %404 : vector<32x32xf32>
    %c0_223 = arith.constant 0 : index
    %c0_224 = arith.constant 0 : index
    %406 = vector.load %arg29[%c0_223, %c0_224] : memref<32x32xf32, #tpu.memory_space<vmem>>, vector<32x32xf32>
    tpu.vector_store %arg29[%c0_223, %c0_224], %405 {strides = array<i32>} : memref<32x32xf32, #tpu.memory_space<vmem>>, vector<32x32xf32>,
    return
  }
  func.func @transform_0(%arg0: i32) -> (i32, i32) {
    %c0_i32 = arith.constant 0 : i32
    %c0_i32_0 = arith.constant 0 : i32
    %c0_i32_1 = arith.constant 0 : i32
    return %c0_i32, %c0_i32_0 : i32, i32
  }
  func.func @transform_1(%arg0: i32) -> (i32, i32, i32) {
    %c0_i32 = arith.constant 0 : i32
    %c0_i32_0 = arith.constant 0 : i32
    %c0_i32_1 = arith.constant 0 : i32
    %c0_i32_2 = arith.constant 0 : i32
    return %c0_i32, %c0_i32_0, %c0_i32_1 : i32, i32, i32
  }
  func.func @transform_2(%arg0: i32) -> (i32, i32) {
    %c0_i32 = arith.constant 0 : i32
    %c0_i32_0 = arith.constant 0 : i32
    %c0_i32_1 = arith.constant 0 : i32
    return %c0_i32, %c0_i32_0 : i32, i32
  }
  func.func @transform_3(%arg0: i32) -> (i32, i32) {
    %c0_i32 = arith.constant 0 : i32
    %c0_i32_0 = arith.constant 0 : i32
    %c0_i32_1 = arith.constant 0 : i32
    return %c0_i32, %c0_i32_0 : i32, i32
  }
  func.func @transform_4(%arg0: i32) -> (i32, i32, i32) {
    %c0_i32 = arith.constant 0 : i32
    %c0_i32_0 = arith.constant 0 : i32
    %c0_i32_1 = arith.constant 0 : i32
    %c0_i32_2 = arith.constant 0 : i32
    return %c0_i32, %c0_i32_0, %c0_i32_1 : i32, i32, i32
  }
  func.func @transform_5(%arg0: i32) -> (i32, i32) {
    %c0_i32 = arith.constant 0 : i32
    %c0_i32_0 = arith.constant 0 : i32
    %c0_i32_1 = arith.constant 0 : i32
    return %c0_i32, %c0_i32_0 : i32, i32
  }
  func.func @transform_6(%arg0: i32) -> (i32, i32) {
    %c0_i32 = arith.constant 0 : i32
    %c0_i32_0 = arith.constant 0 : i32
    %c0_i32_1 = arith.constant 0 : i32
    return %c0_i32, %c0_i32_0 : i32, i32
  }
  func.func @transform_7(%arg0: i32) -> (i32, i32, i32) {
    %c0_i32 = arith.constant 0 : i32
    %c0_i32_0 = arith.constant 0 : i32
    %c0_i32_1 = arith.constant 0 : i32
    %c0_i32_2 = arith.constant 0 : i32
    return %c0_i32, %c0_i32_0, %c0_i32_1 : i32, i32, i32
  }
  func.func @transform_8(%arg0: i32) -> (i32, i32) {
    %c0_i32 = arith.constant 0 : i32
    %c0_i32_0 = arith.constant 0 : i32
    %c0_i32_1 = arith.constant 0 : i32
    return %c0_i32, %c0_i32_0 : i32, i32
  }
  func.func @transform_9(%arg0: i32) -> (i32, i32) {
    %c0_i32 = arith.constant 0 : i32
    %c0_i32_0 = arith.constant 0 : i32
    %c0_i32_1 = arith.constant 0 : i32
    return %c0_i32, %c0_i32_0 : i32, i32
  }
  func.func @transform_10(%arg0: i32) -> (i32, i32, i32) {
    %c0_i32 = arith.constant 0 : i32
    %c0_i32_0 = arith.constant 0 : i32
    %c0_i32_1 = arith.constant 0 : i32
    %c0_i32_2 = arith.constant 0 : i32
    return %c0_i32, %c0_i32_0, %c0_i32_1 : i32, i32, i32
  }
  func.func @transform_11(%arg0: i32) -> (i32, i32) {
    %c0_i32 = arith.constant 0 : i32
    %c0_i32_0 = arith.constant 0 : i32
    %c0_i32_1 = arith.constant 0 : i32
    return %c0_i32, %c0_i32_0 : i32, i32
  }
  func.func @transform_12(%arg0: i32) -> (i32, i32) {
    %c0_i32 = arith.constant 0 : i32
    %c0_i32_0 = arith.constant 0 : i32
    %c0_i32_1 = arith.constant 0 : i32
    return %c0_i32, %c0_i32_0 : i32, i32
  }
  func.func @transform_13(%arg0: i32) -> (i32, i32, i32) {
    %c0_i32 = arith.constant 0 : i32
    %c0_i32_0 = arith.constant 0 : i32
    %c0_i32_1 = arith.constant 0 : i32
    %c0_i32_2 = arith.constant 0 : i32
    return %c0_i32, %c0_i32_0, %c0_i32_1 : i32, i32, i32
  }
  func.func @transform_14(%arg0: i32) -> (i32, i32, i32) {
    %c0_i32 = arith.constant 0 : i32
    %c0_i32_0 = arith.constant 0 : i32
    %c0_i32_1 = arith.constant 0 : i32
    %c0_i32_2 = arith.constant 0 : i32
    return %c0_i32, %c0_i32_0, %c0_i32_1 : i32, i32, i32
  }
  func.func @transform_15(%arg0: i32) -> (i32, i32) {
    %c0_i32 = arith.constant 0 : i32
    %c0_i32_0 = arith.constant 0 : i32
    %c0_i32_1 = arith.constant 0 : i32
    return %c0_i32, %c0_i32_0 : i32, i32
  }
  func.func @transform_16(%arg0: i32) -> (i32, i32) {
    %c0_i32 = arith.constant 0 : i32
    %c0_i32_0 = arith.constant 0 : i32
    %c0_i32_1 = arith.constant 0 : i32
    return %c0_i32, %c0_i32_0 : i32, i32
  }
  func.func @transform_17(%arg0: i32) -> (i32, i32) {
    %c0_i32 = arith.constant 0 : i32
    %c0_i32_0 = arith.constant 0 : i32
    %c0_i32_1 = arith.constant 0 : i32
    return %c0_i32, %c0_i32_0 : i32, i32
  }
  func.func @transform_18(%arg0: i32) -> (i32, i32, i32) {
    %c0_i32 = arith.constant 0 : i32
    %c0_i32_0 = arith.constant 0 : i32
    %c0_i32_1 = arith.constant 0 : i32
    %c0_i32_2 = arith.constant 0 : i32
    return %c0_i32, %c0_i32_0, %c0_i32_1 : i32, i32, i32
  }
  func.func @transform_19(%arg0: i32) -> (i32, i32, i32) {
    %c0_i32 = arith.constant 0 : i32
    %c0_i32_0 = arith.constant 0 : i32
    %c0_i32_1 = arith.constant 0 : i32
    %c0_i32_2 = arith.constant 0 : i32
    return %c0_i32, %c0_i32_0, %c0_i32_1 : i32, i32, i32
  }
  func.func @transform_20(%arg0: i32) -> (i32, i32) {
    %c0_i32 = arith.constant 0 : i32
    %c0_i32_0 = arith.constant 0 : i32
    %c0_i32_1 = arith.constant 0 : i32
    return %c0_i32, %c0_i32_0 : i32, i32
  }
  func.func @transform_21(%arg0: i32) -> (i32, i32) {
    %c0_i32 = arith.constant 0 : i32
    %c0_i32_0 = arith.constant 0 : i32
    %c0_i32_1 = arith.constant 0 : i32
    return %c0_i32, %c0_i32_0 : i32, i32
  }
  func.func @transform_22(%arg0: i32) -> (i32, i32) {
    %c0_i32 = arith.constant 0 : i32
    %c0_i32_0 = arith.constant 0 : i32
    %c0_i32_1 = arith.constant 0 : i32
    return %c0_i32, %c0_i32_0 : i32, i32
  }
  func.func @transform_23(%arg0: i32) -> (i32, i32, i32) {
    %c0_i32 = arith.constant 0 : i32
    %c0_i32_0 = arith.constant 0 : i32
    %c0_i32_1 = arith.constant 0 : i32
    %c0_i32_2 = arith.constant 0 : i32
    return %c0_i32, %c0_i32_0, %c0_i32_1 : i32, i32, i32
  }
  func.func @transform_24(%arg0: i32) -> (i32, i32, i32) {
    %c0_i32 = arith.constant 0 : i32
    %c0_i32_0 = arith.constant 0 : i32
    %c0_i32_1 = arith.constant 0 : i32
    %c0_i32_2 = arith.constant 0 : i32
    return %c0_i32, %c0_i32_0, %c0_i32_1 : i32, i32, i32
  }
  func.func @transform_25(%arg0: i32) -> (i32, i32) {
    %c0_i32 = arith.constant 0 : i32
    %c0_i32_0 = arith.constant 0 : i32
    %c0_i32_1 = arith.constant 0 : i32
    return %c0_i32, %c0_i32_0 : i32, i32
  }
  func.func @transform_26(%arg0: i32) -> (i32, i32) {
    %c0_i32 = arith.constant 0 : i32
    %c0_i32_0 = arith.constant 0 : i32
    %c0_i32_1 = arith.constant 0 : i32
    return %c0_i32, %c0_i32_0 : i32, i32
  }
  func.func @transform_27(%arg0: i32) -> (i32, i32) {
    %c0_i32 = arith.constant 0 : i32
    %c0_i32_0 = arith.constant 0 : i32
    %c0_i32_1 = arith.constant 0 : i32
    return %c0_i32, %c0_i32_0 : i32, i32
  }
  func.func @transform_28(%arg0: i32) -> (i32, i32) {
    %c0_i32 = arith.constant 0 : i32
    %c0_i32_0 = arith.constant 0 : i32
    %c0_i32_1 = arith.constant 0 : i32
    return %c0_i32, %c0_i32_0 : i32, i32
  }
}

</mosaic_0001>

<llo_original>
// kernel: unet_forward.1
$region0: #{unet_forward.1}
  #allocation0 [shape = 'u32[]', space=smem, size = 0x4, offset = 0x4, fixed_abs, tag = 'smem constant byte address 0x4 - core index']
  #allocation1 [shape = 'u32[144,128]{1,0:T(1,128)}', space=vmem, size = 0x12000, scoped, tag = 'internal scratch']
  %s0 = inlined_call_operand.vmem [shape: f32[32,16], index: 0, kind: input, shape index: {}]
  %s1 = inlined_call_operand.vmem [shape: bf16[4,16,32], index: 1, kind: input, shape index: {}]
  %s2 = inlined_call_operand.vmem [shape: bf16[64,256], index: 2, kind: input, shape index: {}]
  %s3 = inlined_call_operand.hbm [shape: f32[3,256], index: 3, kind: input, shape index: {}]
  %s4 = inlined_call_operand.vmem [shape: bf16[4,8,16], index: 4, kind: input, shape index: {}]
  %s5 = inlined_call_operand.vmem [shape: bf16[1024,256], index: 5, kind: input, shape index: {}]
  %s6 = inlined_call_operand.hbm [shape: f32[3,256], index: 6, kind: input, shape index: {}]
  %s7 = inlined_call_operand.hbm [shape: bf16[4,4,8], index: 7, kind: input, shape index: {}]
  %s8 = inlined_call_operand.hbm [shape: bf16[1024,256], index: 8, kind: input, shape index: {}]
  %s9 = inlined_call_operand.hbm [shape: f32[3,256], index: 9, kind: input, shape index: {}]
  %s10 = inlined_call_operand.vmem [shape: bf16[3,4,4], index: 10, kind: input, shape index: {}]
  %s11 = inlined_call_operand.hbm [shape: bf16[768,512], index: 11, kind: input, shape index: {}]
  %s12 = inlined_call_operand.hbm [shape: f32[3,256], index: 12, kind: input, shape index: {}]
  %s13 = inlined_call_operand.hbm [shape: bf16[3,8,8], index: 13, kind: input, shape index: {}]
  %s14 = inlined_call_operand.hbm [shape: bf16[3,8,8], index: 14, kind: input, shape index: {}]
  %s15 = inlined_call_operand.hbm [shape: bf16[768,512], index: 15, kind: input, shape index: {}]
  %s16 = inlined_call_operand.hbm [shape: bf16[768,512], index: 16, kind: input, shape index: {}]
  %s17 = inlined_call_operand.hbm [shape: f32[3,256], index: 17, kind: input, shape index: {}]
  %s18 = inlined_call_operand.vmem [shape: bf16[3,16,16], index: 18, kind: input, shape index: {}]
  %s19 = inlined_call_operand.vmem [shape: bf16[3,16,16], index: 19, kind: input, shape index: {}]
  %s20 = inlined_call_operand.vmem [shape: bf16[768,64], index: 20, kind: input, shape index: {}]
  %s21 = inlined_call_operand.vmem [shape: bf16[768,64], index: 21, kind: input, shape index: {}]
  %s22 = inlined_call_operand.hbm [shape: f32[1,32], index: 22, kind: input, shape index: {}]
  %s23 = inlined_call_operand.vmem [shape: bf16[3,32,32], index: 23, kind: input, shape index: {}]
  %s24 = inlined_call_operand.vmem [shape: bf16[3,32,32], index: 24, kind: input, shape index: {}]
  %s25 = inlined_call_operand.vmem [shape: bf16[96,32], index: 25, kind: input, shape index: {}]
  %s26 = inlined_call_operand.vmem [shape: bf16[48,32], index: 26, kind: input, shape index: {}]
  %s27 = inlined_call_operand.hbm [shape: f32[1,32], index: 27, kind: input, shape index: {}]
  %s28 = inlined_call_operand.vmem [shape: f32[32,32], index: 28, kind: output, shape index: {}]
  %s29 = sld [smem:[#allocation0]]
  $region178: #{unet_forward.1} parent=0
    _
  %s31 = ssub.s32 1, %s29
  %s32 = scalar_select 0, %s31, %s29
  $region1: #{unet_forward.1} parent=0
    #allocation2 [shape = 'u8[4096]{0}', space=vmem, size = 0x1000, scoped, tag = 'input window, operand 3, single buffered']
    #allocation3 [shape = 's32[1]{0}', space=sflag, size = 0x4, scoped, tag = 'scoped memory for unet_forward.1']
    #allocation4 [shape = 'u8[4096]{0}', space=vmem, size = 0x1000, scoped, tag = 'input window, operand 6, single buffered']
    #allocation5 [shape = 's32[1]{0}', space=sflag, size = 0x4, scoped, tag = 'scoped memory for unet_forward.1']
    #allocation6 [shape = 'u8[4096]{0}', space=vmem, size = 0x1000, scoped, tag = 'input window, operand 7, single buffered']
    #allocation7 [shape = 'u8[524288]{0}', space=vmem, size = 0x80000, scoped, tag = 'input window, operand 8, single buffered']
    #allocation8 [shape = 's32[1]{0}', space=sflag, size = 0x4, scoped, tag = 'scoped memory for unet_forward.1']
    #allocation9 [shape = 'u8[4096]{0}', space=vmem, size = 0x1000, scoped, tag = 'input window, operand 9, single buffered']
    #allocation10 [shape = 'u8[786432]{0}', space=vmem, size = 0xc0000, scoped, tag = 'input window, operand 11, single buffered']
    #allocation11 [shape = 's32[1]{0}', space=sflag, size = 0x4, scoped, tag = 'scoped memory for unet_forward.1']
    #allocation12 [shape = 'u8[4096]{0}', space=vmem, size = 0x1000, scoped, tag = 'input window, operand 12, single buffered']
    #allocation13 [shape = 'u8[6144]{0}', space=vmem, size = 0x1800, scoped, tag = 'input window, operand 13, single buffered']
    #allocation14 [shape = 's32[1]{0}', space=sflag, size = 0x4, scoped, tag = 'scoped memory for unet_forward.1']
    #allocation15 [shape = 'u8[6144]{0}', space=vmem, size = 0x1800, scoped, tag = 'input window, operand 14, single buffered']
    #allocation16 [shape = 'u8[786432]{0}', space=vmem, size = 0xc0000, scoped, tag = 'input window, operand 15, single buffered']
    #allocation17 [shape = 's32[1]{0}', space=sflag, size = 0x4, scoped, tag = 'scoped memory for unet_forward.1']
    #allocation18 [shape = 'u8[786432]{0}', space=vmem, size = 0xc0000, scoped, tag = 'input window, operand 16, single buffered']
    #allocation19 [shape = 'u8[4096]{0}', space=vmem, size = 0x1000, scoped, tag = 'input window, operand 17, single buffered']
    #allocation20 [shape = 's32[1]{0}', space=sflag, size = 0x4, scoped, tag = 'scoped memory for unet_forward.1']
    #allocation21 [shape = 'u8[512]{0}', space=vmem, size = 0x400, scoped, tag = 'input window, operand 22, single buffered']
    #allocation22 [shape = 'u8[512]{0}', space=vmem, size = 0x400, scoped, tag = 'input window, operand 27, single buffered']
    #allocation23 [shape = 's32[1]{0}', space=sflag, size = 0x4, scoped, tag = 'scoped memory for unet_forward.1']
    %33 = vsyncpa [#allocation3], 0
    %34 = vsyncpa [#allocation5], 0
    %35 = vsyncpa [#allocation8], 0
    %36 = vsyncpa [#allocation11], 0
    %37 = vsyncpa [#allocation14], 0
    %38 = vsyncpa [#allocation17], 0
    %39 = vsyncpa [#allocation20], 0
    %40 = vsyncpa [#allocation23], 0
    // Predicated region
    $region2: #{unet_forward.1} parent=1 // pred_check
      _
    $region3: #{unet_forward.1} parent=1 // pred_check_branch
      %42 = sbr.rel (0) target = $region5
    $region4: #{unet_forward.1} parent=1 // pred_region
      _
    $region5: #{unet_forward.1} parent=1 // pred_fallthru
      _
    // Predicated region
    $region6: #{unet_forward.1} parent=1 // pred_check
      _
    $region7: #{unet_forward.1} parent=1 // pred_check_branch
      %44 = sbr.rel (0) target = $region9
    $region8: #{unet_forward.1} parent=1 // pred_region
      _
    $region9: #{unet_forward.1} parent=1 // pred_fallthru
      _
    // Predicated region
    $region10: #{unet_forward.1} parent=1 // pred_check
      _
    $region11: #{unet_forward.1} parent=1 // pred_check_branch
      %46 = sbr.rel (0) target = $region13
    $region12: #{unet_forward.1} parent=1 // pred_region
      _
    $region13: #{unet_forward.1} parent=1 // pred_fallthru
      _
    // Predicated region
    $region14: #{unet_forward.1} parent=1 // pred_check
      _
    $region15: #{unet_forward.1} parent=1 // pred_check_branch
      %48 = sbr.rel (0) target = $region17
    $region16: #{unet_forward.1} parent=1 // pred_region
      %s50 = ssub.s32 128, 128
      %51 = vsyncadd [#allocation3], %s50
      %s53 = sshll.u32 [#allocation2], 4
      %s54 = int_to_ptr.vmem [resolvable:$true] %s53
      %56 = dma.hbm_to_vmem [thread:$0]  %s3, 128, %s54, [#allocation3]
    $region17: #{unet_forward.1} parent=1 // pred_fallthru
      _
    // Predicated region
    $region18: #{unet_forward.1} parent=1 // pred_check
      _
    $region19: #{unet_forward.1} parent=1 // pred_check_branch
      %58 = sbr.rel (0) target = $region21
    $region20: #{unet_forward.1} parent=1 // pred_region
      _
    $region21: #{unet_forward.1} parent=1 // pred_fallthru
      _
    // Predicated region
    $region22: #{unet_forward.1} parent=1 // pred_check
      _
    $region23: #{unet_forward.1} parent=1 // pred_check_branch
      %60 = sbr.rel (0) target = $region25
    $region24: #{unet_forward.1} parent=1 // pred_region
      _
    $region25: #{unet_forward.1} parent=1 // pred_fallthru
      _
    // Predicated region
    $region26: #{unet_forward.1} parent=1 // pred_check
      _
    $region27: #{unet_forward.1} parent=1 // pred_check_branch
      %62 = sbr.rel (0) target = $region29
    $region28: #{unet_forward.1} parent=1 // pred_region
      %s64 = ssub.s32 128, 128
      %65 = vsyncadd [#allocation5], %s64
      %s67 = sshll.u32 [#allocation4], 4
      %s68 = int_to_ptr.vmem [resolvable:$true] %s67
      %70 = dma.hbm_to_vmem [thread:$0]  %s6, 128, %s68, [#allocation5]
    $region29: #{unet_forward.1} parent=1 // pred_fallthru
      _
    // Predicated region
    $region30: #{unet_forward.1} parent=1 // pred_check
      _
    $region31: #{unet_forward.1} parent=1 // pred_check_branch
      %72 = sbr.rel (0) target = $region33
    $region32: #{unet_forward.1} parent=1 // pred_region
      %s74 = ssub.s32 128, 128
      %75 = vsyncadd [#allocation5], %s74
      %s76 = sshll.u32 [#allocation6], 4
      %s77 = int_to_ptr.vmem [resolvable:$true] %s76
      %82 = dma.hbm_to_vmem [thread:$0]  %s7, 128, %s77, [#allocation5], 32, 32, 2
    $region33: #{unet_forward.1} parent=1 // pred_fallthru
      _
    // Predicated region
    $region34: #{unet_forward.1} parent=1 // pred_check
      _
    $region35: #{unet_forward.1} parent=1 // pred_check_branch
      %84 = sbr.rel (0) target = $region37
    $region36: #{unet_forward.1} parent=1 // pred_region
      %s86 = ssub.s32 16384, 16384
      %87 = vsyncadd [#allocation8], %s86
      %s88 = sshll.u32 [#allocation7], 4
      %s89 = int_to_ptr.vmem [resolvable:$true] %s88
      %94 = dma.hbm_to_vmem [thread:$0]  %s8, 16384, %s89, [#allocation8], 128, 128, 8
    $region37: #{unet_forward.1} parent=1 // pred_fallthru
      _
    // Predicated region
    $region38: #{unet_forward.1} parent=1 // pred_check
      _
    $region39: #{unet_forward.1} parent=1 // pred_check_branch
      %96 = sbr.rel (0) target = $region41
    $region40: #{unet_forward.1} parent=1 // pred_region
      %s98 = ssub.s32 128, 128
      %99 = vsyncadd [#allocation8], %s98
      %s101 = sshll.u32 [#allocation9], 4
      %s102 = int_to_ptr.vmem [resolvable:$true] %s101
      %104 = dma.hbm_to_vmem [thread:$0]  %s9, 128, %s102, [#allocation8]
    $region41: #{unet_forward.1} parent=1 // pred_fallthru
      _
    // Predicated region
    $region42: #{unet_forward.1} parent=1 // pred_check
      _
    $region43: #{unet_forward.1} parent=1 // pred_check_branch
      %106 = sbr.rel (0) target = $region45
    $region44: #{unet_forward.1} parent=1 // pred_region
      _
    $region45: #{unet_forward.1} parent=1 // pred_fallthru
      _
    // Predicated region
    $region46: #{unet_forward.1} parent=1 // pred_check
      _
    $region47: #{unet_forward.1} parent=1 // pred_check_branch
      %108 = sbr.rel (0) target = $region49
    $region48: #{unet_forward.1} parent=1 // pred_region
      %s110 = ssub.s32 24576, 24576
      %111 = vsyncadd [#allocation11], %s110
      %s112 = sshll.u32 [#allocation10], 4
      %s113 = int_to_ptr.vmem [resolvable:$true] %s112
      %118 = dma.hbm_to_vmem [thread:$0]  %s11, 24576, %s113, [#allocation11], 256, 256, 16
    $region49: #{unet_forward.1} parent=1 // pred_fallthru
      _
    // Predicated region
    $region50: #{unet_forward.1} parent=1 // pred_check
      _
    $region51: #{unet_forward.1} parent=1 // pred_check_branch
      %120 = sbr.rel (0) target = $region53
    $region52: #{unet_forward.1} parent=1 // pred_region
      %s122 = ssub.s32 128, 128
      %123 = vsyncadd [#allocation11], %s122
      %s125 = sshll.u32 [#allocation12], 4
      %s126 = int_to_ptr.vmem [resolvable:$true] %s125
      %128 = dma.hbm_to_vmem [thread:$0]  %s12, 128, %s126, [#allocation11]
    $region53: #{unet_forward.1} parent=1 // pred_fallthru
      _
    // Predicated region
    $region54: #{unet_forward.1} parent=1 // pred_check
      _
    $region55: #{unet_forward.1} parent=1 // pred_check_branch
      %130 = sbr.rel (0) target = $region57
    $region56: #{unet_forward.1} parent=1 // pred_region
      %s132 = ssub.s32 192, 192
      %133 = vsyncadd [#allocation14], %s132
      %s134 = sshll.u32 [#allocation13], 4
      %s135 = int_to_ptr.vmem [resolvable:$true] %s134
      %140 = dma.hbm_to_vmem [thread:$0]  %s13, 192, %s135, [#allocation14], 64, 64, 4
    $region57: #{unet_forward.1} parent=1 // pred_fallthru
      _
    // Predicated region
    $region58: #{unet_forward.1} parent=1 // pred_check
      _
    $region59: #{unet_forward.1} parent=1 // pred_check_branch
      %142 = sbr.rel (0) target = $region61
    $region60: #{unet_forward.1} parent=1 // pred_region
      %s144 = ssub.s32 192, 192
      %145 = vsyncadd [#allocation14], %s144
      %s146 = sshll.u32 [#allocation15], 4
      %s147 = int_to_ptr.vmem [resolvable:$true] %s146
      %152 = dma.hbm_to_vmem [thread:$0]  %s14, 192, %s147, [#allocation14], 64, 64, 4
    $region61: #{unet_forward.1} parent=1 // pred_fallthru
      _
    // Predicated region
    $region62: #{unet_forward.1} parent=1 // pred_check
      _
    $region63: #{unet_forward.1} parent=1 // pred_check_branch
      %154 = sbr.rel (0) target = $region65
    $region64: #{unet_forward.1} parent=1 // pred_region
      %s156 = ssub.s32 24576, 24576
      %157 = vsyncadd [#allocation17], %s156
      %s158 = sshll.u32 [#allocation16], 4
      %s159 = int_to_ptr.vmem [resolvable:$true] %s158
      %164 = dma.hbm_to_vmem [thread:$0]  %s15, 24576, %s159, [#allocation17], 256, 256, 16
    $region65: #{unet_forward.1} parent=1 // pred_fallthru
      _
    // Predicated region
    $region66: #{unet_forward.1} parent=1 // pred_check
      _
    $region67: #{unet_forward.1} parent=1 // pred_check_branch
      %166 = sbr.rel (0) target = $region69
    $region68: #{unet_forward.1} parent=1 // pred_region
      %s168 = ssub.s32 24576, 24576
      %169 = vsyncadd [#allocation17], %s168
      %s170 = sshll.u32 [#allocation18], 4
      %s171 = int_to_ptr.vmem [resolvable:$true] %s170
      %176 = dma.hbm_to_vmem [thread:$0]  %s16, 24576, %s171, [#allocation17], 256, 256, 16
    $region69: #{unet_forward.1} parent=1 // pred_fallthru
      _
    // Predicated region
    $region70: #{unet_forward.1} parent=1 // pred_check
      _
    $region71: #{unet_forward.1} parent=1 // pred_check_branch
      %178 = sbr.rel (0) target = $region73
    $region72: #{unet_forward.1} parent=1 // pred_region
      %s180 = ssub.s32 128, 128
      %181 = vsyncadd [#allocation20], %s180
      %s183 = sshll.u32 [#allocation19], 4
      %s184 = int_to_ptr.vmem [resolvable:$true] %s183
      %186 = dma.hbm_to_vmem [thread:$0]  %s17, 128, %s184, [#allocation20]
    $region73: #{unet_forward.1} parent=1 // pred_fallthru
      _
    // Predicated region
    $region74: #{unet_forward.1} parent=1 // pred_check
      _
    $region75: #{unet_forward.1} parent=1 // pred_check_branch
      %188 = sbr.rel (0) target = $region77
    $region76: #{unet_forward.1} parent=1 // pred_region
      _
    $region77: #{unet_forward.1} parent=1 // pred_fallthru
      _
    // Predicated region
    $region78: #{unet_forward.1} parent=1 // pred_check
      _
    $region79: #{unet_forward.1} parent=1 // pred_check_branch
      %190 = sbr.rel (0) target = $region81
    $region80: #{unet_forward.1} parent=1 // pred_region
      _
    $region81: #{unet_forward.1} parent=1 // pred_fallthru
      _
    // Predicated region
    $region82: #{unet_forward.1} parent=1 // pred_check
      _
    $region83: #{unet_forward.1} parent=1 // pred_check_branch
      %192 = sbr.rel (0) target = $region85
    $region84: #{unet_forward.1} parent=1 // pred_region
      _
    $region85: #{unet_forward.1} parent=1 // pred_fallthru
      _
    // Predicated region
    $region86: #{unet_forward.1} parent=1 // pred_check
      _
    $region87: #{unet_forward.1} parent=1 // pred_check_branch
      %194 = sbr.rel (0) target = $region89
    $region88: #{unet_forward.1} parent=1 // pred_region
      _
    $region89: #{unet_forward.1} parent=1 // pred_fallthru
      _
    // Predicated region
    $region90: #{unet_forward.1} parent=1 // pred_check
      _
    $region91: #{unet_forward.1} parent=1 // pred_check_branch
      %196 = sbr.rel (0) target = $region93
    $region92: #{unet_forward.1} parent=1 // pred_region
      %s198 = ssub.s32 16, 16
      %199 = vsyncadd [#allocation20], %s198
      %s201 = sshll.u32 [#allocation21], 4
      %s202 = int_to_ptr.vmem [resolvable:$true] %s201
      %204 = dma.hbm_to_vmem [thread:$0]  %s22, 16, %s202, [#allocation20]
    $region93: #{unet_forward.1} parent=1 // pred_fallthru
      _
    // Predicated region
    $region94: #{unet_forward.1} parent=1 // pred_check
      _
    $region95: #{unet_forward.1} parent=1 // pred_check_branch
      %206 = sbr.rel (0) target = $region97
    $region96: #{unet_forward.1} parent=1 // pred_region
      _
    $region97: #{unet_forward.1} parent=1 // pred_fallthru
      _
    // Predicated region
    $region98: #{unet_forward.1} parent=1 // pred_check
      _
    $region99: #{unet_forward.1} parent=1 // pred_check_branch
      %208 = sbr.rel (0) target = $region101
    $region100: #{unet_forward.1} parent=1 // pred_region
      _
    $region101: #{unet_forward.1} parent=1 // pred_fallthru
      _
    // Predicated region
    $region102: #{unet_forward.1} parent=1 // pred_check
      _
    $region103: #{unet_forward.1} parent=1 // pred_check_branch
      %210 = sbr.rel (0) target = $region105
    $region104: #{unet_forward.1} parent=1 // pred_region
      _
    $region105: #{unet_forward.1} parent=1 // pred_fallthru
      _
    // Predicated region
    $region106: #{unet_forward.1} parent=1 // pred_check
      _
    $region107: #{unet_forward.1} parent=1 // pred_check_branch
      %212 = sbr.rel (0) target = $region109
    $region108: #{unet_forward.1} parent=1 // pred_region
      _
    $region109: #{unet_forward.1} parent=1 // pred_fallthru
      _
    // Predicated region
    $region110: #{unet_forward.1} parent=1 // pred_check
      _
    $region111: #{unet_forward.1} parent=1 // pred_check_branch
      %214 = sbr.rel (0) target = $region113
    $region112: #{unet_forward.1} parent=1 // pred_region
      %s216 = ssub.s32 16, 16
      %217 = vsyncadd [#allocation23], %s216
      %s219 = sshll.u32 [#allocation22], 4
      %s220 = int_to_ptr.vmem [resolvable:$true] %s219
      %222 = dma.hbm_to_vmem [thread:$0]  %s27, 16, %s220, [#allocation23]
    $region113: #{unet_forward.1} parent=1 // pred_fallthru
      _
    // Predicated region
    $region114: #{unet_forward.1} parent=1 // pred_check
      _
    $region115: #{unet_forward.1} parent=1 // pred_check_branch
      %224 = sbr.rel (0) target = $region117
    $region116: #{unet_forward.1} parent=1 // pred_region
      %225 = dma.done [#allocation3], 128
    $region117: #{unet_forward.1} parent=1 // pred_fallthru
      _
    // Predicated region
    $region118: #{unet_forward.1} parent=1 // pred_check
      _
    $region119: #{unet_forward.1} parent=1 // pred_check_branch
      %227 = sbr.rel (0) target = $region121
    $region120: #{unet_forward.1} parent=1 // pred_region
      %228 = dma.done [#allocation5], 128
    $region121: #{unet_forward.1} parent=1 // pred_fallthru
      _
    // Predicated region
    $region122: #{unet_forward.1} parent=1 // pred_check
      _
    $region123: #{unet_forward.1} parent=1 // pred_check_branch
      %230 = sbr.rel (0) target = $region125
    $region124: #{unet_forward.1} parent=1 // pred_region
      %231 = dma.done [#allocation5], 128
    $region125: #{unet_forward.1} parent=1 // pred_fallthru
      _
    // Predicated region
    $region126: #{unet_forward.1} parent=1 // pred_check
      _
    $region127: #{unet_forward.1} parent=1 // pred_check_branch
      %233 = sbr.rel (0) target = $region129
    $region128: #{unet_forward.1} parent=1 // pred_region
      %234 = dma.done [#allocation8], 16384
    $region129: #{unet_forward.1} parent=1 // pred_fallthru
      _
    // Predicated region
    $region130: #{unet_forward.1} parent=1 // pred_check
      _
    $region131: #{unet_forward.1} parent=1 // pred_check_branch
      %236 = sbr.rel (0) target = $region133
    $region132: #{unet_forward.1} parent=1 // pred_region
      %237 = dma.done [#allocation8], 128
    $region133: #{unet_forward.1} parent=1 // pred_fallthru
      _
    // Predicated region
    $region134: #{unet_forward.1} parent=1 // pred_check
      _
    $region135: #{unet_forward.1} parent=1 // pred_check_branch
      %239 = sbr.rel (0) target = $region137
    $region136: #{unet_forward.1} parent=1 // pred_region
      %240 = dma.done [#allocation11], 24576
    $region137: #{unet_forward.1} parent=1 // pred_fallthru
      _
    // Predicated region
    $region138: #{unet_forward.1} parent=1 // pred_check
      _
    $region139: #{unet_forward.1} parent=1 // pred_check_branch
      %242 = sbr.rel (0) target = $region141
    $region140: #{unet_forward.1} parent=1 // pred_region
      %243 = dma.done [#allocation11], 128
    $region141: #{unet_forward.1} parent=1 // pred_fallthru
      _
    // Predicated region
    $region142: #{unet_forward.1} parent=1 // pred_check
      _
    $region143: #{unet_forward.1} parent=1 // pred_check_branch
      %245 = sbr.rel (0) target = $region145
    $region144: #{unet_forward.1} parent=1 // pred_region
      %246 = dma.done [#allocation14], 192
    $region145: #{unet_forward.1} parent=1 // pred_fallthru
      _
    // Predicated region
    $region146: #{unet_forward.1} parent=1 // pred_check
      _
    $region147: #{unet_forward.1} parent=1 // pred_check_branch
      %248 = sbr.rel (0) target = $region149
    $region148: #{unet_forward.1} parent=1 // pred_region
      %249 = dma.done [#allocation14], 192
    $region149: #{unet_forward.1} parent=1 // pred_fallthru
      _
    // Predicated region
    $region150: #{unet_forward.1} parent=1 // pred_check
      _
    $region151: #{unet_forward.1} parent=1 // pred_check_branch
      %251 = sbr.rel (0) target = $region153
    $region152: #{unet_forward.1} parent=1 // pred_region
      %252 = dma.done [#allocation17], 24576
    $region153: #{unet_forward.1} parent=1 // pred_fallthru
      _
    // Predicated region
    $region154: #{unet_forward.1} parent=1 // pred_check
      _
    $region155: #{unet_forward.1} parent=1 // pred_check_branch
      %254 = sbr.rel (0) target = $region157
    $region156: #{unet_forward.1} parent=1 // pred_region
      %255 = dma.done [#allocation17], 24576
    $region157: #{unet_forward.1} parent=1 // pred_fallthru
      _
    // Predicated region
    $region158: #{unet_forward.1} parent=1 // pred_check
      _
    $region159: #{unet_forward.1} parent=1 // pred_check_branch
      %257 = sbr.rel (0) target = $region161
    $region160: #{unet_forward.1} parent=1 // pred_region
      %258 = dma.done [#allocation20], 128
    $region161: #{unet_forward.1} parent=1 // pred_fallthru
      _
    // Predicated region
    $region162: #{unet_forward.1} parent=1 // pred_check
      _
    $region163: #{unet_forward.1} parent=1 // pred_check_branch
      %260 = sbr.rel (0) target = $region165
    $region164: #{unet_forward.1} parent=1 // pred_region
      %261 = dma.done [#allocation20], 16
    $region165: #{unet_forward.1} parent=1 // pred_fallthru
      _
    // Predicated region
    $region166: #{unet_forward.1} parent=1 // pred_check
      _
    $region167: #{unet_forward.1} parent=1 // pred_check_branch
      %263 = sbr.rel (0) target = $region169
    $region168: #{unet_forward.1} parent=1 // pred_region
      %264 = dma.done [#allocation23], 16
    $region169: #{unet_forward.1} parent=1 // pred_fallthru
      _
    %v266 = vld [vmem:[%s0] sm:$0xff]
    %v267 = vld [vmem:[%s0 + $0x8] sm:$0xff]
    %v268 = vld [vmem:[%s0 + $0x10] sm:$0xff]
    %v269 = vld [vmem:[%s0 + $0x18] sm:$0xff]
    %v270 = vpack.c.bf16 %v267, %v266
    %v271 = vpack.c.bf16 %v269, %v268
    %v272 = vld [vmem:[%s1] sm:$0xf]
    %v273 = vld [vmem:[%s1 + $0x4] sm:$0xf]
    %v276 = vunpack.c.l.b16 %v272
    %v277 = vunpack.c.l.b16 %v273
    %v278 = vpack.c.b16 %v277, %v276
    %vm279 = vcmask 261120
    %v281 = vsel %vm279, %v278, 0
    %283 = vmatprep.subr.bf16.mxu0 0
    %284 = vmatpush1.bf16.msra.mxu0 %v270
    %285 = vmatprep.subr.bf16.mxu0 0
    %286 = vmatpush1.bf16.msra.mxu0 %v271
    %287 = vmatprep.subr.bf16.mxu0 0
    %288 = vmatpush1.bf16.msra.mxu0 0
    %289 = vmatprep.subr.bf16.mxu0 0
    %290 = vmatpush1.bf16.msra.mxu0 0
    %291 = vmatprep.subr.bf16.mxu0 0
    %292 = vmatpush1.bf16.msra.mxu0 0
    %293 = vmatprep.subr.bf16.mxu0 0
    %294 = vmatpush1.bf16.msra.mxu0 0
    %295 = vmatprep.subr.bf16.mxu0 0
    %296 = vmatpush1.bf16.msra.mxu0 0
    %297 = vmatprep.subr.bf16.mxu0 0
    %298 = vmatpush1.bf16.msra.mxu0 0
    %299 = vmatprep.subr.bf16.mxu0 0
    %300 = vmatpush1.bf16.msra.mxu0 0
    %301 = vmatprep.subr.bf16.mxu0 0
    %302 = vmatpush1.bf16.msra.mxu0 0
    %303 = vmatprep.subr.bf16.mxu0 0
    %304 = vmatpush1.bf16.msra.mxu0 0
    %305 = vmatprep.subr.bf16.mxu0 0
    %306 = vmatpush1.bf16.msra.mxu0 0
    %307 = vmatprep.subr.bf16.mxu0 0
    %308 = vmatpush1.bf16.msra.mxu0 0
    %309 = vmatprep.subr.bf16.mxu0 0
    %310 = vmatpush1.bf16.msra.mxu0 0
    %311 = vmatprep.subr.bf16.mxu0 0
    %312 = vmatpush1.bf16.msra.mxu0 0
    %313 = vmatprep.subr.bf16.mxu0 0
    %314 = vmatpush1.bf16.msra.mxu0 0
    %315 = vmatprep.mubr.bf16.mxu0 0
    %316 = vmatmul.mubr.bf16.gmra.mrb[0].mxu0 %v281
    %v317 = vpop.f32.mrb[0].mxu0
    %v318 = vadd.f32 0.0, %v317
    %v319 = vpop.f32.mrb[0].mxu0
    %v320 = vpop.f32.mrb[0].mxu0
    %v321 = vadd.f32 0.0, %v320
    %v322 = vpop.f32.mrb[0].mxu0
    %323 = vdwg.mxu0
    %s324 = scalar_lea.vmem %s1, 8
    %v325 = vld [vmem:[%s324] sm:$0xf]
    %v326 = vld [vmem:[%s324 + $0x4] sm:$0xf]
    %v329 = vunpack.c.l.b16 %v325
    %v330 = vunpack.c.l.b16 %v326
    %v331 = vpack.c.b16 %v330, %v329
    %v333 = vsel %vm279, %v331, 0
    %335 = vmatprep.subr.bf16.mxu0 0
    %336 = vmatpush1.bf16.msra.mxu0 %v270
    %337 = vmatprep.subr.bf16.mxu0 0
    %338 = vmatpush1.bf16.msra.mxu0 %v271
    %339 = vmatprep.subr.bf16.mxu0 0
    %340 = vmatpush1.bf16.msra.mxu0 0
    %341 = vmatprep.subr.bf16.mxu0 0
    %342 = vmatpush1.bf16.msra.mxu0 0
    %343 = vmatprep.subr.bf16.mxu0 0
    %344 = vmatpush1.bf16.msra.mxu0 0
    %345 = vmatprep.subr.bf16.mxu0 0
    %346 = vmatpush1.bf16.msra.mxu0 0
    %347 = vmatprep.subr.bf16.mxu0 0
    %348 = vmatpush1.bf16.msra.mxu0 0
    %349 = vmatprep.subr.bf16.mxu0 0
    %350 = vmatpush1.bf16.msra.mxu0 0
    %351 = vmatprep.subr.bf16.mxu0 0
    %352 = vmatpush1.bf16.msra.mxu0 0
    %353 = vmatprep.subr.bf16.mxu0 0
    %354 = vmatpush1.bf16.msra.mxu0 0
    %355 = vmatprep.subr.bf16.mxu0 0
    %356 = vmatpush1.bf16.msra.mxu0 0
    %357 = vmatprep.subr.bf16.mxu0 0
    %358 = vmatpush1.bf16.msra.mxu0 0
    %359 = vmatprep.subr.bf16.mxu0 0
    %360 = vmatpush1.bf16.msra.mxu0 0
    %361 = vmatprep.subr.bf16.mxu0 0
    %362 = vmatpush1.bf16.msra.mxu0 0
    %363 = vmatprep.subr.bf16.mxu0 0
    %364 = vmatpush1.bf16.msra.mxu0 0
    %365 = vmatprep.subr.bf16.mxu0 0
    %366 = vmatpush1.bf16.msra.mxu0 0
    %367 = vmatprep.mubr.bf16.mxu0 0
    %368 = vmatmul.mubr.bf16.gmra.mrb[0].mxu0 %v333
    %v369 = vpop.f32.mrb[0].mxu0
    %v370 = vadd.f32 0.0, %v369
    %v371 = vpop.f32.mrb[0].mxu0
    %v372 = vpop.f32.mrb[0].mxu0
    %v373 = vadd.f32 0.0, %v372
    %v374 = vpop.f32.mrb[0].mxu0
    %375 = vdwg.mxu0
    %s376 = scalar_lea.vmem %s1, 16
    %v377 = vld [vmem:[%s376] sm:$0xf]
    %v378 = vld [vmem:[%s376 + $0x4] sm:$0xf]
    %v381 = vunpack.c.l.b16 %v377
    %v382 = vunpack.c.l.b16 %v378
    %v383 = vpack.c.b16 %v382, %v381
    %v385 = vsel %vm279, %v383, 0
    %387 = vmatprep.subr.bf16.mxu0 0
    %388 = vmatpush1.bf16.msra.mxu0 %v270
    %389 = vmatprep.subr.bf16.mxu0 0
    %390 = vmatpush1.bf16.msra.mxu0 %v271
    %391 = vmatprep.subr.bf16.mxu0 0
    %392 = vmatpush1.bf16.msra.mxu0 0
    %393 = vmatprep.subr.bf16.mxu0 0
    %394 = vmatpush1.bf16.msra.mxu0 0
    %395 = vmatprep.subr.bf16.mxu0 0
    %396 = vmatpush1.bf16.msra.mxu0 0
    %397 = vmatprep.subr.bf16.mxu0 0
    %398 = vmatpush1.bf16.msra.mxu0 0
    %399 = vmatprep.subr.bf16.mxu0 0
    %400 = vmatpush1.bf16.msra.mxu0 0
    %401 = vmatprep.subr.bf16.mxu0 0
    %402 = vmatpush1.bf16.msra.mxu0 0
    %403 = vmatprep.subr.bf16.mxu0 0
    %404 = vmatpush1.bf16.msra.mxu0 0
    %405 = vmatprep.subr.bf16.mxu0 0
    %406 = vmatpush1.bf16.msra.mxu0 0
    %407 = vmatprep.subr.bf16.mxu0 0
    %408 = vmatpush1.bf16.msra.mxu0 0
    %409 = vmatprep.subr.bf16.mxu0 0
    %410 = vmatpush1.bf16.msra.mxu0 0
    %411 = vmatprep.subr.bf16.mxu0 0
    %412 = vmatpush1.bf16.msra.mxu0 0
    %413 = vmatprep.subr.bf16.mxu0 0
    %414 = vmatpush1.bf16.msra.mxu0 0
    %415 = vmatprep.subr.bf16.mxu0 0
    %416 = vmatpush1.bf16.msra.mxu0 0
    %417 = vmatprep.subr.bf16.mxu0 0
    %418 = vmatpush1.bf16.msra.mxu0 0
    %419 = vmatprep.mubr.bf16.mxu0 0
    %420 = vmatmul.mubr.bf16.gmra.mrb[0].mxu0 %v385
    %v421 = vpop.f32.mrb[0].mxu0
    %v422 = vadd.f32 0.0, %v421
    %v423 = vpop.f32.mrb[0].mxu0
    %v424 = vpop.f32.mrb[0].mxu0
    %v425 = vadd.f32 0.0, %v424
    %v426 = vpop.f32.mrb[0].mxu0
    %427 = vdwg.mxu0
    %s428 = scalar_lea.vmem %s1, 24
    %v429 = vld [vmem:[%s428] sm:$0xf]
    %v430 = vld [vmem:[%s428 + $0x4] sm:$0xf]
    %v433 = vunpack.c.l.b16 %v429
    %v434 = vunpack.c.l.b16 %v430
    %v435 = vpack.c.b16 %v434, %v433
    %v437 = vsel %vm279, %v435, 0
    %439 = vmatprep.subr.bf16.mxu0 0
    %440 = vmatpush1.bf16.msra.mxu0 %v270
    %441 = vmatprep.subr.bf16.mxu0 0
    %442 = vmatpush1.bf16.msra.mxu0 %v271
    %443 = vmatprep.subr.bf16.mxu0 0
    %444 = vmatpush1.bf16.msra.mxu0 0
    %445 = vmatprep.subr.bf16.mxu0 0
    %446 = vmatpush1.bf16.msra.mxu0 0
    %447 = vmatprep.subr.bf16.mxu0 0
    %448 = vmatpush1.bf16.msra.mxu0 0
    %449 = vmatprep.subr.bf16.mxu0 0
    %450 = vmatpush1.bf16.msra.mxu0 0
    %451 = vmatprep.subr.bf16.mxu0 0
    %452 = vmatpush1.bf16.msra.mxu0 0
    %453 = vmatprep.subr.bf16.mxu0 0
    %454 = vmatpush1.bf16.msra.mxu0 0
    %455 = vmatprep.subr.bf16.mxu0 0
    %456 = vmatpush1.bf16.msra.mxu0 0
    %457 = vmatprep.subr.bf16.mxu0 0
    %458 = vmatpush1.bf16.msra.mxu0 0
    %459 = vmatprep.subr.bf16.mxu0 0
    %460 = vmatpush1.bf16.msra.mxu0 0
    %461 = vmatprep.subr.bf16.mxu0 0
    %462 = vmatpush1.bf16.msra.mxu0 0
    %463 = vmatprep.subr.bf16.mxu0 0
    %464 = vmatpush1.bf16.msra.mxu0 0
    %465 = vmatprep.subr.bf16.mxu0 0
    %466 = vmatpush1.bf16.msra.mxu0 0
    %467 = vmatprep.subr.bf16.mxu0 0
    %468 = vmatpush1.bf16.msra.mxu0 0
    %469 = vmatprep.subr.bf16.mxu0 0
    %470 = vmatpush1.bf16.msra.mxu0 0
    %471 = vmatprep.mubr.bf16.mxu0 0
    %472 = vmatmul.mubr.bf16.gmra.mrb[0].mxu0 %v437
    %v473 = vpop.f32.mrb[0].mxu0
    %v474 = vadd.f32 0.0, %v473
    %v475 = vpop.f32.mrb[0].mxu0
    %v476 = vpop.f32.mrb[0].mxu0
    %v477 = vadd.f32 0.0, %v476
    %v478 = vpop.f32.mrb[0].mxu0
    %479 = vdwg.mxu0
    %482 = vrot.lane.b32.xlu0 %v370, 16
    %v483 = vpop.permute.xlu0 %482
    %484 = vrot.lane.b32.xlu0 %v373, 16
    %v485 = vpop.permute.xlu0 %484
    %490 = vrot.lane.b32.xlu0 %v422, 32
    %v491 = vpop.permute.xlu0 %490
    %492 = vrot.lane.b32.xlu0 %v425, 32
    %v493 = vpop.permute.xlu0 %492
    %498 = vrot.lane.b32.xlu0 %v474, 48
    %v499 = vpop.permute.xlu0 %498
    %500 = vrot.lane.b32.xlu0 %v477, 48
    %v501 = vpop.permute.xlu0 %500
    %vm504 = vcmask 130048
    %v505 = vsel %vm504, %v318, %v483
    %v506 = vsel %vm504, %v321, %v485
    %v507 = vsel %vm279, %v505, %v491
    %v508 = vsel %vm279, %v506, %v493
    %vm509 = vcmask 392192
    %v510 = vsel %vm509, %v507, %v499
    %v511 = vsel %vm509, %v508, %v501
    %v512 = vpack.c.bf16 %v511, %v510
    %v513 = vld [vmem:[%s2] sm:$0xff]
    %v514 = vld [vmem:[%s2 + $0x8] sm:$0xff]
    %v515 = vld [vmem:[%s2 + $0x10] sm:$0xff]
    %v516 = vld [vmem:[%s2 + $0x18] sm:$0xff]
    %v517 = vld [vmem:[%s2 + $0x20] sm:$0xff]
    %v518 = vld [vmem:[%s2 + $0x28] sm:$0xff]
    %v519 = vld [vmem:[%s2 + $0x30] sm:$0xff]
    %v520 = vld [vmem:[%s2 + $0x38] sm:$0xff]
    %v521 = vld [vmem:[#allocation2] ss:$4 sm:$0x3]
    %v523 = vlaneseq
    %v524 = vshrl.u32 %v523, 7
    %v525 = vsub.s32 0, %v524
    %v526 = vrot.slane %v521, %v525
    %v527 = vlaneseq
    %v528 = vshrl.u32 %v527, 7
    %v529 = vsub.s32 1, %v528
    %v530 = vrot.slane %v521, %v529
    %v541 = vunpack.c.l.b16 %v513
    %v542 = vunpack.c.h.b16 %v513
    %v543 = vunpack.c.l.b16 %v514
    %v544 = vunpack.c.h.b16 %v514
    %v545 = vunpack.c.l.b16 %v515
    %v546 = vunpack.c.h.b16 %v515
    %v547 = vunpack.c.l.b16 %v516
    %v548 = vunpack.c.h.b16 %v516
    %v549 = vunpack.c.l.b16 %v517
    %v550 = vunpack.c.h.b16 %v517
    %v551 = vunpack.c.l.b16 %v518
    %v552 = vunpack.c.h.b16 %v518
    %v553 = vunpack.c.l.b16 %v519
    %v554 = vunpack.c.h.b16 %v519
    %v555 = vunpack.c.l.b16 %v520
    %v556 = vunpack.c.h.b16 %v520
    %v557 = vpack.c.b16 %v543, %v541
    %v558 = vpack.c.b16 %v544, %v542
    %v559 = vpack.c.b16 %v547, %v545
    %v560 = vpack.c.b16 %v548, %v546
    %v561 = vpack.c.b16 %v551, %v549
    %v562 = vpack.c.b16 %v552, %v550
    %v563 = vpack.c.b16 %v555, %v553
    %v564 = vpack.c.b16 %v556, %v554
    %vm573 = vcmask 523264
    %v575 = vsel %vm573, %v512, 0
    %577 = vmatprep.subr.bf16.mxu0 %v558
    %578 = vmatpush1.bf16.msra.mxu0 %v557
    %579 = vmatprep.subr.bf16.mxu0 %v560
    %580 = vmatpush1.bf16.msra.mxu0 %v559
    %581 = vmatprep.subr.bf16.mxu0 %v562
    %582 = vmatpush1.bf16.msra.mxu0 %v561
    %583 = vmatprep.subr.bf16.mxu0 %v564
    %584 = vmatpush1.bf16.msra.mxu0 %v563
    %585 = vmatprep.subr.bf16.mxu0 0
    %586 = vmatpush1.bf16.msra.mxu0 0
    %587 = vmatprep.subr.bf16.mxu0 0
    %588 = vmatpush1.bf16.msra.mxu0 0
    %589 = vmatprep.subr.bf16.mxu0 0
    %590 = vmatpush1.bf16.msra.mxu0 0
    %591 = vmatprep.subr.bf16.mxu0 0
    %592 = vmatpush1.bf16.msra.mxu0 0
    %593 = vmatprep.subr.bf16.mxu0 0
    %594 = vmatpush1.bf16.msra.mxu0 0
    %595 = vmatprep.subr.bf16.mxu0 0
    %596 = vmatpush1.bf16.msra.mxu0 0
    %597 = vmatprep.subr.bf16.mxu0 0
    %598 = vmatpush1.bf16.msra.mxu0 0
    %599 = vmatprep.subr.bf16.mxu0 0
    %600 = vmatpush1.bf16.msra.mxu0 0
    %601 = vmatprep.subr.bf16.mxu0 0
    %602 = vmatpush1.bf16.msra.mxu0 0
    %603 = vmatprep.subr.bf16.mxu0 0
    %604 = vmatpush1.bf16.msra.mxu0 0
    %605 = vmatprep.subr.bf16.mxu0 0
    %606 = vmatpush1.bf16.msra.mxu0 0
    %607 = vmatprep.subr.bf16.mxu0 0
    %608 = vmatpush1.bf16.msra.mxu0 0
    %609 = vmatprep.mubr.bf16.mxu0 0
    %610 = vmatmul.mubr.bf16.gmra.mrb[0].mxu0 %v575
    %v611 = vpop.f32.mrb[0].mxu0
    %v612 = vadd.f32 %v526, %v611
    %v613 = vpop.f32.mrb[0].mxu0
    %v614 = vadd.f32 %v530, %v613
    %v615 = vpop.f32.mrb[0].mxu0
    %v616 = vadd.f32 %v526, %v615
    %v617 = vpop.f32.mrb[0].mxu0
    %v618 = vadd.f32 %v530, %v617
    %619 = vdwg.mxu0
    %v620 = vadd.f32 %v612, %v616
    %v621 = vrot.slane %v620, 4
    %v622 = vadd.f32 %v620, %v621
    %v623 = vrot.slane %v622, 2
    %v624 = vadd.f32 %v622, %v623
    %v625 = vrot.slane %v624, 1
    %v626 = vadd.f32 %v624, %v625
    %v627 = vadd.f32 %v614, %v618
    %v628 = vrot.slane %v627, 4
    %v629 = vadd.f32 %v627, %v628
    %v630 = vrot.slane %v629, 2
    %v631 = vadd.f32 %v629, %v630
    %v632 = vrot.slane %v631, 1
    %v633 = vadd.f32 %v631, %v632
    %635 = vrot.lane.b32.xlu0 %v626, 96
    %v636 = vpop.permute.xlu0 %635
    %v638 = vadd.f32 %v626, %v636
    %639 = vrot.lane.b32.xlu0 %v626, 64
    %v640 = vpop.permute.xlu0 %639
    %v642 = vadd.f32 %v638, %v640
    %643 = vrot.lane.b32.xlu0 %v626, 32
    %v644 = vpop.permute.xlu0 %643
    %v646 = vadd.f32 %v642, %v644
    %v647 = vadd.f32 %v646, %v633
    %649 = vrot.lane.b32.xlu0 %v633, 96
    %v650 = vpop.permute.xlu0 %649
    %v652 = vadd.f32 %v647, %v650
    %653 = vrot.lane.b32.xlu0 %v633, 64
    %v654 = vpop.permute.xlu0 %653
    %v656 = vadd.f32 %v652, %v654
    %657 = vrot.lane.b32.xlu0 %v633, 32
    %v658 = vpop.permute.xlu0 %657
    %v660 = vadd.f32 %v656, %v658
    %662 = vrot.lane.b32.xlu0 %v660, 32
    %v663 = vpop.permute.xlu0 %662
    %665 = vrot.lane.b32.xlu0 %v660, 64
    %v666 = vpop.permute.xlu0 %665
    %668 = vrot.lane.b32.xlu0 %v660, 96
    %v669 = vpop.permute.xlu0 %668
    %v671 = vsel %vm279, %v660, %v663
    %v672 = vsel %vm573, %v671, %v666
    %vm673 = vcmask 785408
    %v674 = vsel %vm673, %v672, %v669
    %v675 = vmul.f32 %v674, 0.0078125
    %v676 = vlaneseq
    %v677 = vshrl.u32 %v676, 7
    %v678 = vsub.s32 0, %v677
    %v679 = vrot.slane %v675, %v678
    %v680 = vsub.f32 %v612, %v679
    %v681 = vsub.f32 %v614, %v679
    %v682 = vsub.f32 %v616, %v679
    %v683 = vsub.f32 %v618, %v679
    %v684 = vmul.f32 %v680, %v680
    %v685 = vmul.f32 %v681, %v681
    %v686 = vmul.f32 %v682, %v682
    %v687 = vmul.f32 %v683, %v683
    %v688 = vadd.f32 %v684, %v686
    %v689 = vrot.slane %v688, 4
    %v690 = vadd.f32 %v688, %v689
    %v691 = vrot.slane %v690, 2
    %v692 = vadd.f32 %v690, %v691
    %v693 = vrot.slane %v692, 1
    %v694 = vadd.f32 %v692, %v693
    %v695 = vadd.f32 %v685, %v687
    %v696 = vrot.slane %v695, 4
    %v697 = vadd.f32 %v695, %v696
    %v698 = vrot.slane %v697, 2
    %v699 = vadd.f32 %v697, %v698
    %v700 = vrot.slane %v699, 1
    %v701 = vadd.f32 %v699, %v700
    %703 = vrot.lane.b32.xlu0 %v694, 96
    %v704 = vpop.permute.xlu0 %703
    %v706 = vadd.f32 %v694, %v704
    %707 = vrot.lane.b32.xlu0 %v694, 64
    %v708 = vpop.permute.xlu0 %707
    %v710 = vadd.f32 %v706, %v708
    %711 = vrot.lane.b32.xlu0 %v694, 32
    %v712 = vpop.permute.xlu0 %711
    %v714 = vadd.f32 %v710, %v712
    %v715 = vadd.f32 %v714, %v701
    %717 = vrot.lane.b32.xlu0 %v701, 96
    %v718 = vpop.permute.xlu0 %717
    %v720 = vadd.f32 %v715, %v718
    %721 = vrot.lane.b32.xlu0 %v701, 64
    %v722 = vpop.permute.xlu0 %721
    %v724 = vadd.f32 %v720, %v722
    %725 = vrot.lane.b32.xlu0 %v701, 32
    %v726 = vpop.permute.xlu0 %725
    %v728 = vadd.f32 %v724, %v726
    %730 = vrot.lane.b32.xlu0 %v728, 32
    %v731 = vpop.permute.xlu0 %730
    %733 = vrot.lane.b32.xlu0 %v728, 64
    %v734 = vpop.permute.xlu0 %733
    %736 = vrot.lane.b32.xlu0 %v728, 96
    %v737 = vpop.permute.xlu0 %736
    %v739 = vsel %vm279, %v728, %v731
    %v740 = vsel %vm573, %v739, %v734
    %v741 = vsel %vm673, %v740, %v737
    %v742 = vmul.f32 %v741, 0.0078125
    %v743 = vadd.f32 %v742, 1e-05
    %v744 = vrsqrt.pop %v743
    %v745 = vlaneseq
    %v746 = vshrl.u32 %v745, 7
    %v747 = vsub.s32 0, %v746
    %v748 = vrot.slane %v744, %v747
    %v749 = vmul.f32 %v680, %v748
    %v750 = vmul.f32 %v681, %v748
    %v751 = vmul.f32 %v682, %v748
    %v752 = vmul.f32 %v683, %v748
    %s753 = scalar_lea.vmem [#allocation2], 1
    %v754 = vld [vmem:[%s753] ss:$4 sm:$0x3]
    %v756 = vlaneseq
    %v757 = vshrl.u32 %v756, 7
    %v758 = vsub.s32 0, %v757
    %v759 = vrot.slane %v754, %v758
    %v760 = vlaneseq
    %v761 = vshrl.u32 %v760, 7
    %v762 = vsub.s32 1, %v761
    %v763 = vrot.slane %v754, %v762
    %v766 = vmul.f32 %v749, %v759
    %v767 = vmul.f32 %v750, %v763
    %v768 = vmul.f32 %v751, %v759
    %v769 = vmul.f32 %v752, %v763
    %s770 = scalar_lea.vmem [#allocation2], 2
    %v771 = vld [vmem:[%s770] ss:$4 sm:$0x3]
    %v773 = vlaneseq
    %v774 = vshrl.u32 %v773, 7
    %v775 = vsub.s32 0, %v774
    %v776 = vrot.slane %v771, %v775
    %v777 = vlaneseq
    %v778 = vshrl.u32 %v777, 7
    %v779 = vsub.s32 1, %v778
    %v780 = vrot.slane %v771, %v779
    %v783 = vadd.f32 %v766, %v776
    %v784 = vadd.f32 %v767, %v780
    %v785 = vadd.f32 %v768, %v776
    %v786 = vadd.f32 %v769, %v780
    %v787 = vmax.f32 %v783, 0.0
    %v788 = vmax.f32 %v784, 0.0
    %v789 = vmax.f32 %v785, 0.0
    %v790 = vmax.f32 %v786, 0.0
    %v791 = vpack.c.bf16 %v789, %v787
    %v792 = vpack.c.bf16 %v790, %v788
    %v793 = vld [vmem:[%s4] sm:$0xf]
    %v795 = vsel %vm504, %v793, 0
    %797 = vmatprep.subr.bf16.mxu0 %v792
    %798 = vmatpush1.bf16.msra.mxu0 %v791
    %799 = vmatprep.subr.bf16.mxu0 0
    %800 = vmatpush1.bf16.msra.mxu0 0
    %801 = vmatprep.subr.bf16.mxu0 0
    %802 = vmatpush1.bf16.msra.mxu0 0
    %803 = vmatprep.subr.bf16.mxu0 0
    %804 = vmatpush1.bf16.msra.mxu0 0
    %805 = vmatprep.subr.bf16.mxu0 0
    %806 = vmatpush1.bf16.msra.mxu0 0
    %807 = vmatprep.subr.bf16.mxu0 0
    %808 = vmatpush1.bf16.msra.mxu0 0
    %809 = vmatprep.subr.bf16.mxu0 0
    %810 = vmatpush1.bf16.msra.mxu0 0
    %811 = vmatprep.subr.bf16.mxu0 0
    %812 = vmatpush1.bf16.msra.mxu0 0
    %813 = vmatprep.subr.bf16.mxu0 0
    %814 = vmatpush1.bf16.msra.mxu0 0
    %815 = vmatprep.subr.bf16.mxu0 0
    %816 = vmatpush1.bf16.msra.mxu0 0
    %817 = vmatprep.subr.bf16.mxu0 0
    %818 = vmatpush1.bf16.msra.mxu0 0
    %819 = vmatprep.subr.bf16.mxu0 0
    %820 = vmatpush1.bf16.msra.mxu0 0
    %821 = vmatprep.subr.bf16.mxu0 0
    %822 = vmatpush1.bf16.msra.mxu0 0
    %823 = vmatprep.subr.bf16.mxu0 0
    %824 = vmatpush1.bf16.msra.mxu0 0
    %825 = vmatprep.subr.bf16.mxu0 0
    %826 = vmatpush1.bf16.msra.mxu0 0
    %827 = vmatprep.subr.bf16.mxu0 0
    %828 = vmatpush1.bf16.msra.mxu0 0
    %829 = vmatprep.mubr.bf16.mxu0 0
    %830 = vmatmul.mubr.bf16.gmra.mrb[0].mxu0 %v795
    %v831 = vpop.f32.mrb[0].mxu0
    %v832 = vadd.f32 0.0, %v831
    %v833 = vpop.f32.mrb[0].mxu0
    %v834 = vadd.f32 0.0, %v833
    %v835 = vpop.f32.mrb[0].mxu0
    %v836 = vpop.f32.mrb[0].mxu0
    %837 = vdwg.mxu0
    %s838 = scalar_lea.vmem %s4, 4
    %v839 = vld [vmem:[%s838] sm:$0xf]
    %v841 = vsel %vm504, %v839, 0
    %843 = vmatprep.subr.bf16.mxu0 %v792
    %844 = vmatpush1.bf16.msra.mxu0 %v791
    %845 = vmatprep.subr.bf16.mxu0 0
    %846 = vmatpush1.bf16.msra.mxu0 0
    %847 = vmatprep.subr.bf16.mxu0 0
    %848 = vmatpush1.bf16.msra.mxu0 0
    %849 = vmatprep.subr.bf16.mxu0 0
    %850 = vmatpush1.bf16.msra.mxu0 0
    %851 = vmatprep.subr.bf16.mxu0 0
    %852 = vmatpush1.bf16.msra.mxu0 0
    %853 = vmatprep.subr.bf16.mxu0 0
    %854 = vmatpush1.bf16.msra.mxu0 0
    %855 = vmatprep.subr.bf16.mxu0 0
    %856 = vmatpush1.bf16.msra.mxu0 0
    %857 = vmatprep.subr.bf16.mxu0 0
    %858 = vmatpush1.bf16.msra.mxu0 0
    %859 = vmatprep.subr.bf16.mxu0 0
    %860 = vmatpush1.bf16.msra.mxu0 0
    %861 = vmatprep.subr.bf16.mxu0 0
    %862 = vmatpush1.bf16.msra.mxu0 0
    %863 = vmatprep.subr.bf16.mxu0 0
    %864 = vmatpush1.bf16.msra.mxu0 0
    %865 = vmatprep.subr.bf16.mxu0 0
    %866 = vmatpush1.bf16.msra.mxu0 0
    %867 = vmatprep.subr.bf16.mxu0 0
    %868 = vmatpush1.bf16.msra.mxu0 0
    %869 = vmatprep.subr.bf16.mxu0 0
    %870 = vmatpush1.bf16.msra.mxu0 0
    %871 = vmatprep.subr.bf16.mxu0 0
    %872 = vmatpush1.bf16.msra.mxu0 0
    %873 = vmatprep.subr.bf16.mxu0 0
    %874 = vmatpush1.bf16.msra.mxu0 0
    %875 = vmatprep.mubr.bf16.mxu0 0
    %876 = vmatmul.mubr.bf16.gmra.mrb[0].mxu0 %v841
    %v877 = vpop.f32.mrb[0].mxu0
    %v878 = vadd.f32 0.0, %v877
    %v879 = vpop.f32.mrb[0].mxu0
    %v880 = vadd.f32 0.0, %v879
    %v881 = vpop.f32.mrb[0].mxu0
    %v882 = vpop.f32.mrb[0].mxu0
    %883 = vdwg.mxu0
    %s884 = scalar_lea.vmem %s4, 8
    %v885 = vld [vmem:[%s884] sm:$0xf]
    %v887 = vsel %vm504, %v885, 0
    %889 = vmatprep.subr.bf16.mxu0 %v792
    %890 = vmatpush1.bf16.msra.mxu0 %v791
    %891 = vmatprep.subr.bf16.mxu0 0
    %892 = vmatpush1.bf16.msra.mxu0 0
    %893 = vmatprep.subr.bf16.mxu0 0
    %894 = vmatpush1.bf16.msra.mxu0 0
    %895 = vmatprep.subr.bf16.mxu0 0
    %896 = vmatpush1.bf16.msra.mxu0 0
    %897 = vmatprep.subr.bf16.mxu0 0
    %898 = vmatpush1.bf16.msra.mxu0 0
    %899 = vmatprep.subr.bf16.mxu0 0
    %900 = vmatpush1.bf16.msra.mxu0 0
    %901 = vmatprep.subr.bf16.mxu0 0
    %902 = vmatpush1.bf16.msra.mxu0 0
    %903 = vmatprep.subr.bf16.mxu0 0
    %904 = vmatpush1.bf16.msra.mxu0 0
    %905 = vmatprep.subr.bf16.mxu0 0
    %906 = vmatpush1.bf16.msra.mxu0 0
    %907 = vmatprep.subr.bf16.mxu0 0
    %908 = vmatpush1.bf16.msra.mxu0 0
    %909 = vmatprep.subr.bf16.mxu0 0
    %910 = vmatpush1.bf16.msra.mxu0 0
    %911 = vmatprep.subr.bf16.mxu0 0
    %912 = vmatpush1.bf16.msra.mxu0 0
    %913 = vmatprep.subr.bf16.mxu0 0
    %914 = vmatpush1.bf16.msra.mxu0 0
    %915 = vmatprep.subr.bf16.mxu0 0
    %916 = vmatpush1.bf16.msra.mxu0 0
    %917 = vmatprep.subr.bf16.mxu0 0
    %918 = vmatpush1.bf16.msra.mxu0 0
    %919 = vmatprep.subr.bf16.mxu0 0
    %920 = vmatpush1.bf16.msra.mxu0 0
    %921 = vmatprep.mubr.bf16.mxu0 0
    %922 = vmatmul.mubr.bf16.gmra.mrb[0].mxu0 %v887
    %v923 = vpop.f32.mrb[0].mxu0
    %v924 = vadd.f32 0.0, %v923
    %v925 = vpop.f32.mrb[0].mxu0
    %v926 = vadd.f32 0.0, %v925
    %v927 = vpop.f32.mrb[0].mxu0
    %v928 = vpop.f32.mrb[0].mxu0
    %929 = vdwg.mxu0
    %s930 = scalar_lea.vmem %s4, 12
    %v931 = vld [vmem:[%s930] sm:$0xf]
    %v933 = vsel %vm504, %v931, 0
    %935 = vmatprep.subr.bf16.mxu0 %v792
    %936 = vmatpush1.bf16.msra.mxu0 %v791
    %937 = vmatprep.subr.bf16.mxu0 0
    %938 = vmatpush1.bf16.msra.mxu0 0
    %939 = vmatprep.subr.bf16.mxu0 0
    %940 = vmatpush1.bf16.msra.mxu0 0
    %941 = vmatprep.subr.bf16.mxu0 0
    %942 = vmatpush1.bf16.msra.mxu0 0
    %943 = vmatprep.subr.bf16.mxu0 0
    %944 = vmatpush1.bf16.msra.mxu0 0
    %945 = vmatprep.subr.bf16.mxu0 0
    %946 = vmatpush1.bf16.msra.mxu0 0
    %947 = vmatprep.subr.bf16.mxu0 0
    %948 = vmatpush1.bf16.msra.mxu0 0
    %949 = vmatprep.subr.bf16.mxu0 0
    %950 = vmatpush1.bf16.msra.mxu0 0
    %951 = vmatprep.subr.bf16.mxu0 0
    %952 = vmatpush1.bf16.msra.mxu0 0
    %953 = vmatprep.subr.bf16.mxu0 0
    %954 = vmatpush1.bf16.msra.mxu0 0
    %955 = vmatprep.subr.bf16.mxu0 0
    %956 = vmatpush1.bf16.msra.mxu0 0
    %957 = vmatprep.subr.bf16.mxu0 0
    %958 = vmatpush1.bf16.msra.mxu0 0
    %959 = vmatprep.subr.bf16.mxu0 0
    %960 = vmatpush1.bf16.msra.mxu0 0
    %961 = vmatprep.subr.bf16.mxu0 0
    %962 = vmatpush1.bf16.msra.mxu0 0
    %963 = vmatprep.subr.bf16.mxu0 0
    %964 = vmatpush1.bf16.msra.mxu0 0
    %965 = vmatprep.subr.bf16.mxu0 0
    %966 = vmatpush1.bf16.msra.mxu0 0
    %967 = vmatprep.mubr.bf16.mxu0 0
    %968 = vmatmul.mubr.bf16.gmra.mrb[0].mxu0 %v933
    %v969 = vpop.f32.mrb[0].mxu0
    %v970 = vadd.f32 0.0, %v969
    %v971 = vpop.f32.mrb[0].mxu0
    %v972 = vadd.f32 0.0, %v971
    %v973 = vpop.f32.mrb[0].mxu0
    %v974 = vpop.f32.mrb[0].mxu0
    %975 = vdwg.mxu0
    %v976 = vpack.c.bf16 %v832, %v832
    %v977 = vpack.c.bf16 %v834, %v834
    %v978 = vpack.c.bf16 %v878, %v878
    %v979 = vpack.c.bf16 %v880, %v880
    %v980 = vpack.c.bf16 %v924, %v924
    %v981 = vpack.c.bf16 %v926, %v926
    %v982 = vpack.c.bf16 %v970, %v970
    %v983 = vpack.c.bf16 %v972, %v972
    %v984 = vld [vmem:[%s5] sm:$0xff]
    %v985 = vld [vmem:[%s5 + $0x8] sm:$0xff]
    %v986 = vld [vmem:[%s5 + $0x10] sm:$0xff]
    %v987 = vld [vmem:[%s5 + $0x18] sm:$0xff]
    %v988 = vld [vmem:[%s5 + $0x20] sm:$0xff]
    %v989 = vld [vmem:[%s5 + $0x28] sm:$0xff]
    %v990 = vld [vmem:[%s5 + $0x30] sm:$0xff]
    %v991 = vld [vmem:[%s5 + $0x38] sm:$0xff]
    %v992 = vld [vmem:[%s5 + $0x40] sm:$0xff]
    %v993 = vld [vmem:[%s5 + $0x48] sm:$0xff]
    %v994 = vld [vmem:[%s5 + $0x50] sm:$0xff]
    %v995 = vld [vmem:[%s5 + $0x58] sm:$0xff]
    %v996 = vld [vmem:[%s5 + $0x60] sm:$0xff]
    %v997 = vld [vmem:[%s5 + $0x68] sm:$0xff]
    %v998 = vld [vmem:[%s5 + $0x70] sm:$0xff]
    %v999 = vld [vmem:[%s5 + $0x78] sm:$0xff]
    %v1000 = vld [vmem:[%s5 + $0x80] sm:$0xff]
    %v1001 = vld [vmem:[%s5 + $0x88] sm:$0xff]
    %v1002 = vld [vmem:[%s5 + $0x90] sm:$0xff]
    %v1003 = vld [vmem:[%s5 + $0x98] sm:$0xff]
    %v1004 = vld [vmem:[%s5 + $0xa0] sm:$0xff]
    %v1005 = vld [vmem:[%s5 + $0xa8] sm:$0xff]
    %v1006 = vld [vmem:[%s5 + $0xb0] sm:$0xff]
    %v1007 = vld [vmem:[%s5 + $0xb8] sm:$0xff]
    %v1008 = vld [vmem:[%s5 + $0xc0] sm:$0xff]
    %v1009 = vld [vmem:[%s5 + $0xc8] sm:$0xff]
    %v1010 = vld [vmem:[%s5 + $0xd0] sm:$0xff]
    %v1011 = vld [vmem:[%s5 + $0xd8] sm:$0xff]
    %v1012 = vld [vmem:[%s5 + $0xe0] sm:$0xff]
    %v1013 = vld [vmem:[%s5 + $0xe8] sm:$0xff]
    %v1014 = vld [vmem:[%s5 + $0xf0] sm:$0xff]
    %v1015 = vld [vmem:[%s5 + $0xf8] sm:$0xff]
    %v1016 = vld [vmem:[%s5 + $0x100] sm:$0xff]
    %v1017 = vld [vmem:[%s5 + $0x108] sm:$0xff]
    %v1018 = vld [vmem:[%s5 + $0x110] sm:$0xff]
    %v1019 = vld [vmem:[%s5 + $0x118] sm:$0xff]
    %v1020 = vld [vmem:[%s5 + $0x120] sm:$0xff]
    %v1021 = vld [vmem:[%s5 + $0x128] sm:$0xff]
    %v1022 = vld [vmem:[%s5 + $0x130] sm:$0xff]
    %v1023 = vld [vmem:[%s5 + $0x138] sm:$0xff]
    %v1024 = vld [vmem:[%s5 + $0x140] sm:$0xff]
    %v1025 = vld [vmem:[%s5 + $0x148] sm:$0xff]
    %v1026 = vld [vmem:[%s5 + $0x150] sm:$0xff]
    %v1027 = vld [vmem:[%s5 + $0x158] sm:$0xff]
    %v1028 = vld [vmem:[%s5 + $0x160] sm:$0xff]
    %v1029 = vld [vmem:[%s5 + $0x168] sm:$0xff]
    %v1030 = vld [vmem:[%s5 + $0x170] sm:$0xff]
    %v1031 = vld [vmem:[%s5 + $0x178] sm:$0xff]
    %v1032 = vld [vmem:[%s5 + $0x180] sm:$0xff]
    %v1033 = vld [vmem:[%s5 + $0x188] sm:$0xff]
    %v1034 = vld [vmem:[%s5 + $0x190] sm:$0xff]
    %v1035 = vld [vmem:[%s5 + $0x198] sm:$0xff]
    %v1036 = vld [vmem:[%s5 + $0x1a0] sm:$0xff]
    %v1037 = vld [vmem:[%s5 + $0x1a8] sm:$0xff]
    %v1038 = vld [vmem:[%s5 + $0x1b0] sm:$0xff]
    %v1039 = vld [vmem:[%s5 + $0x1b8] sm:$0xff]
    %v1040 = vld [vmem:[%s5 + $0x1c0] sm:$0xff]
    %v1041 = vld [vmem:[%s5 + $0x1c8] sm:$0xff]
    %v1042 = vld [vmem:[%s5 + $0x1d0] sm:$0xff]
    %v1043 = vld [vmem:[%s5 + $0x1d8] sm:$0xff]
    %v1044 = vld [vmem:[%s5 + $0x1e0] sm:$0xff]
    %v1045 = vld [vmem:[%s5 + $0x1e8] sm:$0xff]
    %v1046 = vld [vmem:[%s5 + $0x1f0] sm:$0xff]
    %v1047 = vld [vmem:[%s5 + $0x1f8] sm:$0xff]
    %v1048 = vld [vmem:[%s5 + $0x200] sm:$0xff]
    %v1049 = vld [vmem:[%s5 + $0x208] sm:$0xff]
    %v1050 = vld [vmem:[%s5 + $0x210] sm:$0xff]
    %v1051 = vld [vmem:[%s5 + $0x218] sm:$0xff]
    %v1052 = vld [vmem:[%s5 + $0x220] sm:$0xff]
    %v1053 = vld [vmem:[%s5 + $0x228] sm:$0xff]
    %v1054 = vld [vmem:[%s5 + $0x230] sm:$0xff]
    %v1055 = vld [vmem:[%s5 + $0x238] sm:$0xff]
    %v1056 = vld [vmem:[%s5 + $0x240] sm:$0xff]
    %v1057 = vld [vmem:[%s5 + $0x248] sm:$0xff]
    %v1058 = vld [vmem:[%s5 + $0x250] sm:$0xff]
    %v1059 = vld [vmem:[%s5 + $0x258] sm:$0xff]
    %v1060 = vld [vmem:[%s5 + $0x260] sm:$0xff]
    %v1061 = vld [vmem:[%s5 + $0x268] sm:$0xff]
    %v1062 = vld [vmem:[%s5 + $0x270] sm:$0xff]
    %v1063 = vld [vmem:[%s5 + $0x278] sm:$0xff]
    %v1064 = vld [vmem:[%s5 + $0x280] sm:$0xff]
    %v1065 = vld [vmem:[%s5 + $0x288] sm:$0xff]
    %v1066 = vld [vmem:[%s5 + $0x290] sm:$0xff]
    %v1067 = vld [vmem:[%s5 + $0x298] sm:$0xff]
    %v1068 = vld [vmem:[%s5 + $0x2a0] sm:$0xff]
    %v1069 = vld [vmem:[%s5 + $0x2a8] sm:$0xff]
    %v1070 = vld [vmem:[%s5 + $0x2b0] sm:$0xff]
    %v1071 = vld [vmem:[%s5 + $0x2b8] sm:$0xff]
    %v1072 = vld [vmem:[%s5 + $0x2c0] sm:$0xff]
    %v1073 = vld [vmem:[%s5 + $0x2c8] sm:$0xff]
    %v1074 = vld [vmem:[%s5 + $0x2d0] sm:$0xff]
    %v1075 = vld [vmem:[%s5 + $0x2d8] sm:$0xff]
    %v1076 = vld [vmem:[%s5 + $0x2e0] sm:$0xff]
    %v1077 = vld [vmem:[%s5 + $0x2e8] sm:$0xff]
    %v1078 = vld [vmem:[%s5 + $0x2f0] sm:$0xff]
    %v1079 = vld [vmem:[%s5 + $0x2f8] sm:$0xff]
    %v1080 = vld [vmem:[%s5 + $0x300] sm:$0xff]
    %v1081 = vld [vmem:[%s5 + $0x308] sm:$0xff]
    %v1082 = vld [vmem:[%s5 + $0x310] sm:$0xff]
    %v1083 = vld [vmem:[%s5 + $0x318] sm:$0xff]
    %v1084 = vld [vmem:[%s5 + $0x320] sm:$0xff]
    %v1085 = vld [vmem:[%s5 + $0x328] sm:$0xff]
    %v1086 = vld [vmem:[%s5 + $0x330] sm:$0xff]
    %v1087 = vld [vmem:[%s5 + $0x338] sm:$0xff]
    %v1088 = vld [vmem:[%s5 + $0x340] sm:$0xff]
    %v1089 = vld [vmem:[%s5 + $0x348] sm:$0xff]
    %v1090 = vld [vmem:[%s5 + $0x350] sm:$0xff]
    %v1091 = vld [vmem:[%s5 + $0x358] sm:$0xff]
    %v1092 = vld [vmem:[%s5 + $0x360] sm:$0xff]
    %v1093 = vld [vmem:[%s5 + $0x368] sm:$0xff]
    %v1094 = vld [vmem:[%s5 + $0x370] sm:$0xff]
    %v1095 = vld [vmem:[%s5 + $0x378] sm:$0xff]
    %v1096 = vld [vmem:[%s5 + $0x380] sm:$0xff]
    %v1097 = vld [vmem:[%s5 + $0x388] sm:$0xff]
    %v1098 = vld [vmem:[%s5 + $0x390] sm:$0xff]
    %v1099 = vld [vmem:[%s5 + $0x398] sm:$0xff]
    %v1100 = vld [vmem:[%s5 + $0x3a0] sm:$0xff]
    %v1101 = vld [vmem:[%s5 + $0x3a8] sm:$0xff]
    %v1102 = vld [vmem:[%s5 + $0x3b0] sm:$0xff]
    %v1103 = vld [vmem:[%s5 + $0x3b8] sm:$0xff]
    %v1104 = vld [vmem:[%s5 + $0x3c0] sm:$0xff]
    %v1105 = vld [vmem:[%s5 + $0x3c8] sm:$0xff]
    %v1106 = vld [vmem:[%s5 + $0x3d0] sm:$0xff]
    %v1107 = vld [vmem:[%s5 + $0x3d8] sm:$0xff]
    %v1108 = vld [vmem:[%s5 + $0x3e0] sm:$0xff]
    %v1109 = vld [vmem:[%s5 + $0x3e8] sm:$0xff]
    %v1110 = vld [vmem:[%s5 + $0x3f0] sm:$0xff]
    %v1111 = vld [vmem:[%s5 + $0x3f8] sm:$0xff]
    %v1112 = vld [vmem:[#allocation4] ss:$4 sm:$0x3]
    %v1114 = vlaneseq
    %v1115 = vshrl.u32 %v1114, 7
    %v1116 = vsub.s32 0, %v1115
    %v1117 = vrot.slane %v1112, %v1116
    %v1118 = vlaneseq
    %v1119 = vshrl.u32 %v1118, 7
    %v1120 = vsub.s32 1, %v1119
    %v1121 = vrot.slane %v1112, %v1120
    %v1252 = vunpack.c.l.b16 %v984
    %v1253 = vunpack.c.h.b16 %v984
    %v1254 = vunpack.c.l.b16 %v985
    %v1255 = vunpack.c.h.b16 %v985
    %v1256 = vunpack.c.l.b16 %v986
    %v1257 = vunpack.c.h.b16 %v986
    %v1258 = vunpack.c.l.b16 %v987
    %v1259 = vunpack.c.h.b16 %v987
    %v1260 = vunpack.c.l.b16 %v988
    %v1261 = vunpack.c.h.b16 %v988
    %v1262 = vunpack.c.l.b16 %v989
    %v1263 = vunpack.c.h.b16 %v989
    %v1264 = vunpack.c.l.b16 %v990
    %v1265 = vunpack.c.h.b16 %v990
    %v1266 = vunpack.c.l.b16 %v991
    %v1267 = vunpack.c.h.b16 %v991
    %v1268 = vunpack.c.l.b16 %v992
    %v1269 = vunpack.c.h.b16 %v992
    %v1270 = vunpack.c.l.b16 %v993
    %v1271 = vunpack.c.h.b16 %v993
    %v1272 = vunpack.c.l.b16 %v994
    %v1273 = vunpack.c.h.b16 %v994
    %v1274 = vunpack.c.l.b16 %v995
    %v1275 = vunpack.c.h.b16 %v995
    %v1276 = vunpack.c.l.b16 %v996
    %v1277 = vunpack.c.h.b16 %v996
    %v1278 = vunpack.c.l.b16 %v997
    %v1279 = vunpack.c.h.b16 %v997
    %v1280 = vunpack.c.l.b16 %v998
    %v1281 = vunpack.c.h.b16 %v998
    %v1282 = vunpack.c.l.b16 %v999
    %v1283 = vunpack.c.h.b16 %v999
    %v1284 = vunpack.c.l.b16 %v1000
    %v1285 = vunpack.c.h.b16 %v1000
    %v1286 = vunpack.c.l.b16 %v1001
    %v1287 = vunpack.c.h.b16 %v1001
    %v1288 = vunpack.c.l.b16 %v1002
    %v1289 = vunpack.c.h.b16 %v1002
    %v1290 = vunpack.c.l.b16 %v1003
    %v1291 = vunpack.c.h.b16 %v1003
    %v1292 = vunpack.c.l.b16 %v1004
    %v1293 = vunpack.c.h.b16 %v1004
    %v1294 = vunpack.c.l.b16 %v1005
    %v1295 = vunpack.c.h.b16 %v1005
    %v1296 = vunpack.c.l.b16 %v1006
    %v1297 = vunpack.c.h.b16 %v1006
    %v1298 = vunpack.c.l.b16 %v1007
    %v1299 = vunpack.c.h.b16 %v1007
    %v1300 = vunpack.c.l.b16 %v1008
    %v1301 = vunpack.c.h.b16 %v1008
    %v1302 = vunpack.c.l.b16 %v1009
    %v1303 = vunpack.c.h.b16 %v1009
    %v1304 = vunpack.c.l.b16 %v1010
    %v1305 = vunpack.c.h.b16 %v1010
    %v1306 = vunpack.c.l.b16 %v1011
    %v1307 = vunpack.c.h.b16 %v1011
    %v1308 = vunpack.c.l.b16 %v1012
    %v1309 = vunpack.c.h.b16 %v1012
    %v1310 = vunpack.c.l.b16 %v1013
    %v1311 = vunpack.c.h.b16 %v1013
    %v1312 = vunpack.c.l.b16 %v1014
    %v1313 = vunpack.c.h.b16 %v1014
    %v1314 = vunpack.c.l.b16 %v1015
    %v1315 = vunpack.c.h.b16 %v1015
    %v1316 = vunpack.c.l.b16 %v1016
    %v1317 = vunpack.c.h.b16 %v1016
    %v1318 = vunpack.c.l.b16 %v1017
    %v1319 = vunpack.c.h.b16 %v1017
    %v1320 = vunpack.c.l.b16 %v1018
    %v1321 = vunpack.c.h.b16 %v1018
    %v1322 = vunpack.c.l.b16 %v1019
    %v1323 = vunpack.c.h.b16 %v1019
    %v1324 = vunpack.c.l.b16 %v1020
    %v1325 = vunpack.c.h.b16 %v1020
    %v1326 = vunpack.c.l.b16 %v1021
    %v1327 = vunpack.c.h.b16 %v1021
    %v1328 = vunpack.c.l.b16 %v1022
    %v1329 = vunpack.c.h.b16 %v1022
    %v1330 = vunpack.c.l.b16 %v1023
    %v1331 = vunpack.c.h.b16 %v1023
    %v1332 = vunpack.c.l.b16 %v1024
    %v1333 = vunpack.c.h.b16 %v1024
    %v1334 = vunpack.c.l.b16 %v1025
    %v1335 = vunpack.c.h.b16 %v1025
    %v1336 = vunpack.c.l.b16 %v1026
    %v1337 = vunpack.c.h.b16 %v1026
    %v1338 = vunpack.c.l.b16 %v1027
    %v1339 = vunpack.c.h.b16 %v1027
    %v1340 = vunpack.c.l.b16 %v1028
    %v1341 = vunpack.c.h.b16 %v1028
    %v1342 = vunpack.c.l.b16 %v1029
    %v1343 = vunpack.c.h.b16 %v1029
    %v1344 = vunpack.c.l.b16 %v1030
    %v1345 = vunpack.c.h.b16 %v1030
    %v1346 = vunpack.c.l.b16 %v1031
    %v1347 = vunpack.c.h.b16 %v1031
    %v1348 = vunpack.c.l.b16 %v1032
    %v1349 = vunpack.c.h.b16 %v1032
    %v1350 = vunpack.c.l.b16 %v1033
    %v1351 = vunpack.c.h.b16 %v1033
    %v1352 = vunpack.c.l.b16 %v1034
    %v1353 = vunpack.c.h.b16 %v1034
    %v1354 = vunpack.c.l.b16 %v1035
    %v1355 = vunpack.c.h.b16 %v1035
    %v1356 = vunpack.c.l.b16 %v1036
    %v1357 = vunpack.c.h.b16 %v1036
    %v1358 = vunpack.c.l.b16 %v1037
    %v1359 = vunpack.c.h.b16 %v1037
    %v1360 = vunpack.c.l.b16 %v1038
    %v1361 = vunpack.c.h.b16 %v1038
    %v1362 = vunpack.c.l.b16 %v1039
    %v1363 = vunpack.c.h.b16 %v1039
    %v1364 = vunpack.c.l.b16 %v1040
    %v1365 = vunpack.c.h.b16 %v1040
    %v1366 = vunpack.c.l.b16 %v1041
    %v1367 = vunpack.c.h.b16 %v1041
    %v1368 = vunpack.c.l.b16 %v1042
    %v1369 = vunpack.c.h.b16 %v1042
    %v1370 = vunpack.c.l.b16 %v1043
    %v1371 = vunpack.c.h.b16 %v1043
    %v1372 = vunpack.c.l.b16 %v1044
    %v1373 = vunpack.c.h.b16 %v1044
    %v1374 = vunpack.c.l.b16 %v1045
    %v1375 = vunpack.c.h.b16 %v1045
    %v1376 = vunpack.c.l.b16 %v1046
    %v1377 = vunpack.c.h.b16 %v1046
    %v1378 = vunpack.c.l.b16 %v1047
    %v1379 = vunpack.c.h.b16 %v1047
    %v1380 = vunpack.c.l.b16 %v1048
    %v1381 = vunpack.c.h.b16 %v1048
    %v1382 = vunpack.c.l.b16 %v1049
    %v1383 = vunpack.c.h.b16 %v1049
    %v1384 = vunpack.c.l.b16 %v1050
    %v1385 = vunpack.c.h.b16 %v1050
    %v1386 = vunpack.c.l.b16 %v1051
    %v1387 = vunpack.c.h.b16 %v1051
    %v1388 = vunpack.c.l.b16 %v1052
    %v1389 = vunpack.c.h.b16 %v1052
    %v1390 = vunpack.c.l.b16 %v1053
    %v1391 = vunpack.c.h.b16 %v1053
    %v1392 = vunpack.c.l.b16 %v1054
    %v1393 = vunpack.c.h.b16 %v1054
    %v1394 = vunpack.c.l.b16 %v1055
    %v1395 = vunpack.c.h.b16 %v1055
    %v1396 = vunpack.c.l.b16 %v1056
    %v1397 = vunpack.c.h.b16 %v1056
    %v1398 = vunpack.c.l.b16 %v1057
    %v1399 = vunpack.c.h.b16 %v1057
    %v1400 = vunpack.c.l.b16 %v1058
    %v1401 = vunpack.c.h.b16 %v1058
    %v1402 = vunpack.c.l.b16 %v1059
    %v1403 = vunpack.c.h.b16 %v1059
    %v1404 = vunpack.c.l.b16 %v1060
    %v1405 = vunpack.c.h.b16 %v1060
    %v1406 = vunpack.c.l.b16 %v1061
    %v1407 = vunpack.c.h.b16 %v1061
    %v1408 = vunpack.c.l.b16 %v1062
    %v1409 = vunpack.c.h.b16 %v1062
    %v1410 = vunpack.c.l.b16 %v1063
    %v1411 = vunpack.c.h.b16 %v1063
    %v1412 = vunpack.c.l.b16 %v1064
    %v1413 = vunpack.c.h.b16 %v1064
    %v1414 = vunpack.c.l.b16 %v1065
    %v1415 = vunpack.c.h.b16 %v1065
    %v1416 = vunpack.c.l.b16 %v1066
    %v1417 = vunpack.c.h.b16 %v1066
    %v1418 = vunpack.c.l.b16 %v1067
    %v1419 = vunpack.c.h.b16 %v1067
    %v1420 = vunpack.c.l.b16 %v1068
    %v1421 = vunpack.c.h.b16 %v1068
    %v1422 = vunpack.c.l.b16 %v1069
    %v1423 = vunpack.c.h.b16 %v1069
    %v1424 = vunpack.c.l.b16 %v1070
    %v1425 = vunpack.c.h.b16 %v1070
    %v1426 = vunpack.c.l.b16 %v1071
    %v1427 = vunpack.c.h.b16 %v1071
    %v1428 = vunpack.c.l.b16 %v1072
    %v1429 = vunpack.c.h.b16 %v1072
    %v1430 = vunpack.c.l.b16 %v1073
    %v1431 = vunpack.c.h.b16 %v1073
    %v1432 = vunpack.c.l.b16 %v1074
    %v1433 = vunpack.c.h.b16 %v1074
    %v1434 = vunpack.c.l.b16 %v1075
    %v1435 = vunpack.c.h.b16 %v1075
    %v1436 = vunpack.c.l.b16 %v1076
    %v1437 = vunpack.c.h.b16 %v1076
    %v1438 = vunpack.c.l.b16 %v1077
    %v1439 = vunpack.c.h.b16 %v1077
    %v1440 = vunpack.c.l.b16 %v1078
    %v1441 = vunpack.c.h.b16 %v1078
    %v1442 = vunpack.c.l.b16 %v1079
    %v1443 = vunpack.c.h.b16 %v1079
    %v1444 = vunpack.c.l.b16 %v1080
    %v1445 = vunpack.c.h.b16 %v1080
    %v1446 = vunpack.c.l.b16 %v1081
    %v1447 = vunpack.c.h.b16 %v1081
    %v1448 = vunpack.c.l.b16 %v1082
    %v1449 = vunpack.c.h.b16 %v1082
    %v1450 = vunpack.c.l.b16 %v1083
    %v1451 = vunpack.c.h.b16 %v1083
    %v1452 = vunpack.c.l.b16 %v1084
    %v1453 = vunpack.c.h.b16 %v1084
    %v1454 = vunpack.c.l.b16 %v1085
    %v1455 = vunpack.c.h.b16 %v1085
    %v1456 = vunpack.c.l.b16 %v1086
    %v1457 = vunpack.c.h.b16 %v1086
    %v1458 = vunpack.c.l.b16 %v1087
    %v1459 = vunpack.c.h.b16 %v1087
    %v1460 = vunpack.c.l.b16 %v1088
    %v1461 = vunpack.c.h.b16 %v1088
    %v1462 = vunpack.c.l.b16 %v1089
    %v1463 = vunpack.c.h.b16 %v1089
    %v1464 = vunpack.c.l.b16 %v1090
    %v1465 = vunpack.c.h.b16 %v1090
    %v1466 = vunpack.c.l.b16 %v1091
    %v1467 = vunpack.c.h.b16 %v1091
    %v1468 = vunpack.c.l.b16 %v1092
    %v1469 = vunpack.c.h.b16 %v1092
    %v1470 = vunpack.c.l.b16 %v1093
    %v1471 = vunpack.c.h.b16 %v1093
    %v1472 = vunpack.c.l.b16 %v1094
    %v1473 = vunpack.c.h.b16 %v1094
    %v1474 = vunpack.c.l.b16 %v1095
    %v1475 = vunpack.c.h.b16 %v1095
    %v1476 = vunpack.c.l.b16 %v1096
    %v1477 = vunpack.c.h.b16 %v1096
    %v1478 = vunpack.c.l.b16 %v1097
    %v1479 = vunpack.c.h.b16 %v1097
    %v1480 = vunpack.c.l.b16 %v1098
    %v1481 = vunpack.c.h.b16 %v1098
    %v1482 = vunpack.c.l.b16 %v1099
    %v1483 = vunpack.c.h.b16 %v1099
    %v1484 = vunpack.c.l.b16 %v1100
    %v1485 = vunpack.c.h.b16 %v1100
    %v1486 = vunpack.c.l.b16 %v1101
    %v1487 = vunpack.c.h.b16 %v1101
    %v1488 = vunpack.c.l.b16 %v1102
    %v1489 = vunpack.c.h.b16 %v1102
    %v1490 = vunpack.c.l.b16 %v1103
    %v1491 = vunpack.c.h.b16 %v1103
    %v1492 = vunpack.c.l.b16 %v1104
    %v1493 = vunpack.c.h.b16 %v1104
    %v1494 = vunpack.c.l.b16 %v1105
    %v1495 = vunpack.c.h.b16 %v1105
    %v1496 = vunpack.c.l.b16 %v1106
    %v1497 = vunpack.c.h.b16 %v1106
    %v1498 = vunpack.c.l.b16 %v1107
    %v1499 = vunpack.c.h.b16 %v1107
    %v1500 = vunpack.c.l.b16 %v1108
    %v1501 = vunpack.c.h.b16 %v1108
    %v1502 = vunpack.c.l.b16 %v1109
    %v1503 = vunpack.c.h.b16 %v1109
    %v1504 = vunpack.c.l.b16 %v1110
    %v1505 = vunpack.c.h.b16 %v1110
    %v1506 = vunpack.c.l.b16 %v1111
    %v1507 = vunpack.c.h.b16 %v1111
    %v1508 = vpack.c.b16 %v1254, %v1252
    %v1509 = vpack.c.b16 %v1255, %v1253
    %v1510 = vpack.c.b16 %v1258, %v1256
    %v1511 = vpack.c.b16 %v1259, %v1257
    %v1512 = vpack.c.b16 %v1262, %v1260
    %v1513 = vpack.c.b16 %v1263, %v1261
    %v1514 = vpack.c.b16 %v1266, %v1264
    %v1515 = vpack.c.b16 %v1267, %v1265
    %v1516 = vpack.c.b16 %v1270, %v1268
    %v1517 = vpack.c.b16 %v1271, %v1269
    %v1518 = vpack.c.b16 %v1274, %v1272
    %v1519 = vpack.c.b16 %v1275, %v1273
    %v1520 = vpack.c.b16 %v1278, %v1276
    %v1521 = vpack.c.b16 %v1279, %v1277
    %v1522 = vpack.c.b16 %v1282, %v1280
    %v1523 = vpack.c.b16 %v1283, %v1281
    %v1524 = vpack.c.b16 %v1286, %v1284
    %v1525 = vpack.c.b16 %v1287, %v1285
    %v1526 = vpack.c.b16 %v1290, %v1288
    %v1527 = vpack.c.b16 %v1291, %v1289
    %v1528 = vpack.c.b16 %v1294, %v1292
    %v1529 = vpack.c.b16 %v1295, %v1293
    %v1530 = vpack.c.b16 %v1298, %v1296
    %v1531 = vpack.c.b16 %v1299, %v1297
    %v1532 = vpack.c.b16 %v1302, %v1300
    %v1533 = vpack.c.b16 %v1303, %v1301
    %v1534 = vpack.c.b16 %v1306, %v1304
    %v1535 = vpack.c.b16 %v1307, %v1305
    %v1536 = vpack.c.b16 %v1310, %v1308
    %v1537 = vpack.c.b16 %v1311, %v1309
    %v1538 = vpack.c.b16 %v1314, %v1312
    %v1539 = vpack.c.b16 %v1315, %v1313
    %v1540 = vpack.c.b16 %v1318, %v1316
    %v1541 = vpack.c.b16 %v1319, %v1317
    %v1542 = vpack.c.b16 %v1322, %v1320
    %v1543 = vpack.c.b16 %v1323, %v1321
    %v1544 = vpack.c.b16 %v1326, %v1324
    %v1545 = vpack.c.b16 %v1327, %v1325
    %v1546 = vpack.c.b16 %v1330, %v1328
    %v1547 = vpack.c.b16 %v1331, %v1329
    %v1548 = vpack.c.b16 %v1334, %v1332
    %v1549 = vpack.c.b16 %v1335, %v1333
    %v1550 = vpack.c.b16 %v1338, %v1336
    %v1551 = vpack.c.b16 %v1339, %v1337
    %v1552 = vpack.c.b16 %v1342, %v1340
    %v1553 = vpack.c.b16 %v1343, %v1341
    %v1554 = vpack.c.b16 %v1346, %v1344
    %v1555 = vpack.c.b16 %v1347, %v1345
    %v1556 = vpack.c.b16 %v1350, %v1348
    %v1557 = vpack.c.b16 %v1351, %v1349
    %v1558 = vpack.c.b16 %v1354, %v1352
    %v1559 = vpack.c.b16 %v1355, %v1353
    %v1560 = vpack.c.b16 %v1358, %v1356
    %v1561 = vpack.c.b16 %v1359, %v1357
    %v1562 = vpack.c.b16 %v1362, %v1360
    %v1563 = vpack.c.b16 %v1363, %v1361
    %v1564 = vpack.c.b16 %v1366, %v1364
    %v1565 = vpack.c.b16 %v1367, %v1365
    %v1566 = vpack.c.b16 %v1370, %v1368
    %v1567 = vpack.c.b16 %v1371, %v1369
    %v1568 = vpack.c.b16 %v1374, %v1372
    %v1569 = vpack.c.b16 %v1375, %v1373
    %v1570 = vpack.c.b16 %v1378, %v1376
    %v1571 = vpack.c.b16 %v1379, %v1377
    %v1572 = vpack.c.b16 %v1382, %v1380
    %v1573 = vpack.c.b16 %v1383, %v1381
    %v1574 = vpack.c.b16 %v1386, %v1384
    %v1575 = vpack.c.b16 %v1387, %v1385
    %v1576 = vpack.c.b16 %v1390, %v1388
    %v1577 = vpack.c.b16 %v1391, %v1389
    %v1578 = vpack.c.b16 %v1394, %v1392
    %v1579 = vpack.c.b16 %v1395, %v1393
    %v1580 = vpack.c.b16 %v1398, %v1396
    %v1581 = vpack.c.b16 %v1399, %v1397
    %v1582 = vpack.c.b16 %v1402, %v1400
    %v1583 = vpack.c.b16 %v1403, %v1401
    %v1584 = vpack.c.b16 %v1406, %v1404
    %v1585 = vpack.c.b16 %v1407, %v1405
    %v1586 = vpack.c.b16 %v1410, %v1408
    %v1587 = vpack.c.b16 %v1411, %v1409
    %v1588 = vpack.c.b16 %v1414, %v1412
    %v1589 = vpack.c.b16 %v1415, %v1413
    %v1590 = vpack.c.b16 %v1418, %v1416
    %v1591 = vpack.c.b16 %v1419, %v1417
    %v1592 = vpack.c.b16 %v1422, %v1420
    %v1593 = vpack.c.b16 %v1423, %v1421
    %v1594 = vpack.c.b16 %v1426, %v1424
    %v1595 = vpack.c.b16 %v1427, %v1425
    %v1596 = vpack.c.b16 %v1430, %v1428
    %v1597 = vpack.c.b16 %v1431, %v1429
    %v1598 = vpack.c.b16 %v1434, %v1432
    %v1599 = vpack.c.b16 %v1435, %v1433
    %v1600 = vpack.c.b16 %v1438, %v1436
    %v1601 = vpack.c.b16 %v1439, %v1437
    %v1602 = vpack.c.b16 %v1442, %v1440
    %v1603 = vpack.c.b16 %v1443, %v1441
    %v1604 = vpack.c.b16 %v1446, %v1444
    %v1605 = vpack.c.b16 %v1447, %v1445
    %v1606 = vpack.c.b16 %v1450, %v1448
    %v1607 = vpack.c.b16 %v1451, %v1449
    %v1608 = vpack.c.b16 %v1454, %v1452
    %v1609 = vpack.c.b16 %v1455, %v1453
    %v1610 = vpack.c.b16 %v1458, %v1456
    %v1611 = vpack.c.b16 %v1459, %v1457
    %v1612 = vpack.c.b16 %v1462, %v1460
    %v1613 = vpack.c.b16 %v1463, %v1461
    %v1614 = vpack.c.b16 %v1466, %v1464
    %v1615 = vpack.c.b16 %v1467, %v1465
    %v1616 = vpack.c.b16 %v1470, %v1468
    %v1617 = vpack.c.b16 %v1471, %v1469
    %v1618 = vpack.c.b16 %v1474, %v1472
    %v1619 = vpack.c.b16 %v1475, %v1473
    %v1620 = vpack.c.b16 %v1478, %v1476
    %v1621 = vpack.c.b16 %v1479, %v1477
    %v1622 = vpack.c.b16 %v1482, %v1480
    %v1623 = vpack.c.b16 %v1483, %v1481
    %v1624 = vpack.c.b16 %v1486, %v1484
    %v1625 = vpack.c.b16 %v1487, %v1485
    %v1626 = vpack.c.b16 %v1490, %v1488
    %v1627 = vpack.c.b16 %v1491, %v1489
    %v1628 = vpack.c.b16 %v1494, %v1492
    %v1629 = vpack.c.b16 %v1495, %v1493
    %v1630 = vpack.c.b16 %v1498, %v1496
    %v1631 = vpack.c.b16 %v1499, %v1497
    %v1632 = vpack.c.b16 %v1502, %v1500
    %v1633 = vpack.c.b16 %v1503, %v1501
    %v1634 = vpack.c.b16 %v1506, %v1504
    %v1635 = vpack.c.b16 %v1507, %v1505
    %1764 = vmatprep.subr.bf16.mxu0 %v1509
    %1765 = vmatpush1.bf16.msra.mxu0 %v1508
    %1766 = vmatprep.subr.bf16.mxu0 %v1511
    %1767 = vmatpush1.bf16.msra.mxu0 %v1510
    %1768 = vmatprep.subr.bf16.mxu0 %v1513
    %1769 = vmatpush1.bf16.msra.mxu0 %v1512
    %1770 = vmatprep.subr.bf16.mxu0 %v1515
    %1771 = vmatpush1.bf16.msra.mxu0 %v1514
    %1772 = vmatprep.subr.bf16.mxu0 %v1517
    %1773 = vmatpush1.bf16.msra.mxu0 %v1516
    %1774 = vmatprep.subr.bf16.mxu0 %v1519
    %1775 = vmatpush1.bf16.msra.mxu0 %v1518
    %1776 = vmatprep.subr.bf16.mxu0 %v1521
    %1777 = vmatpush1.bf16.msra.mxu0 %v1520
    %1778 = vmatprep.subr.bf16.mxu0 %v1523
    %1779 = vmatpush1.bf16.msra.mxu0 %v1522
    %1780 = vmatprep.subr.bf16.mxu0 %v1525
    %1781 = vmatpush1.bf16.msra.mxu0 %v1524
    %1782 = vmatprep.subr.bf16.mxu0 %v1527
    %1783 = vmatpush1.bf16.msra.mxu0 %v1526
    %1784 = vmatprep.subr.bf16.mxu0 %v1529
    %1785 = vmatpush1.bf16.msra.mxu0 %v1528
    %1786 = vmatprep.subr.bf16.mxu0 %v1531
    %1787 = vmatpush1.bf16.msra.mxu0 %v1530
    %1788 = vmatprep.subr.bf16.mxu0 %v1533
    %1789 = vmatpush1.bf16.msra.mxu0 %v1532
    %1790 = vmatprep.subr.bf16.mxu0 %v1535
    %1791 = vmatpush1.bf16.msra.mxu0 %v1534
    %1792 = vmatprep.subr.bf16.mxu0 %v1537
    %1793 = vmatpush1.bf16.msra.mxu0 %v1536
    %1794 = vmatprep.subr.bf16.mxu0 %v1539
    %1795 = vmatpush1.bf16.msra.mxu0 %v1538
    %1796 = vmatprep.mubr.bf16.mxu0 %v977
    %1797 = vmatmul.mubr.bf16.gmra.mrb[0].mxu0 %v976
    %v1798 = vpop.f32.mrb[0].mxu0
    %v1799 = vadd.f32 %v1117, %v1798
    %v1800 = vpop.f32.mrb[0].mxu0
    %v1801 = vadd.f32 %v1121, %v1800
    %v1802 = vpop.f32.mrb[0].mxu0
    %v1803 = vpop.f32.mrb[0].mxu0
    %1804 = vdwg.mxu0
    %1805 = vmatprep.subr.bf16.mxu0 %v1541
    %1806 = vmatpush1.bf16.msra.mxu0 %v1540
    %1807 = vmatprep.subr.bf16.mxu0 %v1543
    %1808 = vmatpush1.bf16.msra.mxu0 %v1542
    %1809 = vmatprep.subr.bf16.mxu0 %v1545
    %1810 = vmatpush1.bf16.msra.mxu0 %v1544
    %1811 = vmatprep.subr.bf16.mxu0 %v1547
    %1812 = vmatpush1.bf16.msra.mxu0 %v1546
    %1813 = vmatprep.subr.bf16.mxu0 %v1549
    %1814 = vmatpush1.bf16.msra.mxu0 %v1548
    %1815 = vmatprep.subr.bf16.mxu0 %v1551
    %1816 = vmatpush1.bf16.msra.mxu0 %v1550
    %1817 = vmatprep.subr.bf16.mxu0 %v1553
    %1818 = vmatpush1.bf16.msra.mxu0 %v1552
    %1819 = vmatprep.subr.bf16.mxu0 %v1555
    %1820 = vmatpush1.bf16.msra.mxu0 %v1554
    %1821 = vmatprep.subr.bf16.mxu0 %v1557
    %1822 = vmatpush1.bf16.msra.mxu0 %v1556
    %1823 = vmatprep.subr.bf16.mxu0 %v1559
    %1824 = vmatpush1.bf16.msra.mxu0 %v1558
    %1825 = vmatprep.subr.bf16.mxu0 %v1561
    %1826 = vmatpush1.bf16.msra.mxu0 %v1560
    %1827 = vmatprep.subr.bf16.mxu0 %v1563
    %1828 = vmatpush1.bf16.msra.mxu0 %v1562
    %1829 = vmatprep.subr.bf16.mxu0 %v1565
    %1830 = vmatpush1.bf16.msra.mxu0 %v1564
    %1831 = vmatprep.subr.bf16.mxu0 %v1567
    %1832 = vmatpush1.bf16.msra.mxu0 %v1566
    %1833 = vmatprep.subr.bf16.mxu0 %v1569
    %1834 = vmatpush1.bf16.msra.mxu0 %v1568
    %1835 = vmatprep.subr.bf16.mxu0 %v1571
    %1836 = vmatpush1.bf16.msra.mxu0 %v1570
    %1837 = vmatprep.mubr.bf16.mxu0 %v979
    %1838 = vmatmul.mubr.bf16.gmra.mrb[0].mxu0 %v978
    %v1839 = vpop.f32.mrb[0].mxu0
    %v1840 = vadd.f32 %v1799, %v1839
    %v1841 = vpop.f32.mrb[0].mxu0
    %v1842 = vadd.f32 %v1801, %v1841
    %v1843 = vpop.f32.mrb[0].mxu0
    %v1844 = vpop.f32.mrb[0].mxu0
    %1845 = vdwg.mxu0
    %1846 = vmatprep.subr.bf16.mxu0 %v1573
    %1847 = vmatpush1.bf16.msra.mxu0 %v1572
    %1848 = vmatprep.subr.bf16.mxu0 %v1575
    %1849 = vmatpush1.bf16.msra.mxu0 %v1574
    %1850 = vmatprep.subr.bf16.mxu0 %v1577
    %1851 = vmatpush1.bf16.msra.mxu0 %v1576
    %1852 = vmatprep.subr.bf16.mxu0 %v1579
    %1853 = vmatpush1.bf16.msra.mxu0 %v1578
    %1854 = vmatprep.subr.bf16.mxu0 %v1581
    %1855 = vmatpush1.bf16.msra.mxu0 %v1580
    %1856 = vmatprep.subr.bf16.mxu0 %v1583
    %1857 = vmatpush1.bf16.msra.mxu0 %v1582
    %1858 = vmatprep.subr.bf16.mxu0 %v1585
    %1859 = vmatpush1.bf16.msra.mxu0 %v1584
    %1860 = vmatprep.subr.bf16.mxu0 %v1587
    %1861 = vmatpush1.bf16.msra.mxu0 %v1586
    %1862 = vmatprep.subr.bf16.mxu0 %v1589
    %1863 = vmatpush1.bf16.msra.mxu0 %v1588
    %1864 = vmatprep.subr.bf16.mxu0 %v1591
    %1865 = vmatpush1.bf16.msra.mxu0 %v1590
    %1866 = vmatprep.subr.bf16.mxu0 %v1593
    %1867 = vmatpush1.bf16.msra.mxu0 %v1592
    %1868 = vmatprep.subr.bf16.mxu0 %v1595
    %1869 = vmatpush1.bf16.msra.mxu0 %v1594
    %1870 = vmatprep.subr.bf16.mxu0 %v1597
    %1871 = vmatpush1.bf16.msra.mxu0 %v1596
    %1872 = vmatprep.subr.bf16.mxu0 %v1599
    %1873 = vmatpush1.bf16.msra.mxu0 %v1598
    %1874 = vmatprep.subr.bf16.mxu0 %v1601
    %1875 = vmatpush1.bf16.msra.mxu0 %v1600
    %1876 = vmatprep.subr.bf16.mxu0 %v1603
    %1877 = vmatpush1.bf16.msra.mxu0 %v1602
    %1878 = vmatprep.mubr.bf16.mxu0 %v981
    %1879 = vmatmul.mubr.bf16.gmra.mrb[0].mxu0 %v980
    %v1880 = vpop.f32.mrb[0].mxu0
    %v1881 = vadd.f32 %v1840, %v1880
    %v1882 = vpop.f32.mrb[0].mxu0
    %v1883 = vadd.f32 %v1842, %v1882
    %v1884 = vpop.f32.mrb[0].mxu0
    %v1885 = vpop.f32.mrb[0].mxu0
    %1886 = vdwg.mxu0
    %1887 = vmatprep.subr.bf16.mxu0 %v1605
    %1888 = vmatpush1.bf16.msra.mxu0 %v1604
    %1889 = vmatprep.subr.bf16.mxu0 %v1607
    %1890 = vmatpush1.bf16.msra.mxu0 %v1606
    %1891 = vmatprep.subr.bf16.mxu0 %v1609
    %1892 = vmatpush1.bf16.msra.mxu0 %v1608
    %1893 = vmatprep.subr.bf16.mxu0 %v1611
    %1894 = vmatpush1.bf16.msra.mxu0 %v1610
    %1895 = vmatprep.subr.bf16.mxu0 %v1613
    %1896 = vmatpush1.bf16.msra.mxu0 %v1612
    %1897 = vmatprep.subr.bf16.mxu0 %v1615
    %1898 = vmatpush1.bf16.msra.mxu0 %v1614
    %1899 = vmatprep.subr.bf16.mxu0 %v1617
    %1900 = vmatpush1.bf16.msra.mxu0 %v1616
    %1901 = vmatprep.subr.bf16.mxu0 %v1619
    %1902 = vmatpush1.bf16.msra.mxu0 %v1618
    %1903 = vmatprep.subr.bf16.mxu0 %v1621
    %1904 = vmatpush1.bf16.msra.mxu0 %v1620
    %1905 = vmatprep.subr.bf16.mxu0 %v1623
    %1906 = vmatpush1.bf16.msra.mxu0 %v1622
    %1907 = vmatprep.subr.bf16.mxu0 %v1625
    %1908 = vmatpush1.bf16.msra.mxu0 %v1624
    %1909 = vmatprep.subr.bf16.mxu0 %v1627
    %1910 = vmatpush1.bf16.msra.mxu0 %v1626
    %1911 = vmatprep.subr.bf16.mxu0 %v1629
    %1912 = vmatpush1.bf16.msra.mxu0 %v1628
    %1913 = vmatprep.subr.bf16.mxu0 %v1631
    %1914 = vmatpush1.bf16.msra.mxu0 %v1630
    %1915 = vmatprep.subr.bf16.mxu0 %v1633
    %1916 = vmatpush1.bf16.msra.mxu0 %v1632
    %1917 = vmatprep.subr.bf16.mxu0 %v1635
    %1918 = vmatpush1.bf16.msra.mxu0 %v1634
    %1919 = vmatprep.mubr.bf16.mxu0 %v983
    %1920 = vmatmul.mubr.bf16.gmra.mrb[0].mxu0 %v982
    %v1921 = vpop.f32.mrb[0].mxu0
    %v1922 = vadd.f32 %v1881, %v1921
    %v1923 = vpop.f32.mrb[0].mxu0
    %v1924 = vadd.f32 %v1883, %v1923
    %v1925 = vpop.f32.mrb[0].mxu0
    %v1926 = vpop.f32.mrb[0].mxu0
    %1927 = vdwg.mxu0
    %v1928 = vrot.slane %v1922, 4
    %v1929 = vadd.f32 %v1922, %v1928
    %v1930 = vrot.slane %v1929, 2
    %v1931 = vadd.f32 %v1929, %v1930
    %v1932 = vrot.slane %v1931, 1
    %v1933 = vadd.f32 %v1931, %v1932
    %v1934 = vrot.slane %v1924, 4
    %v1935 = vadd.f32 %v1924, %v1934
    %v1936 = vrot.slane %v1935, 2
    %v1937 = vadd.f32 %v1935, %v1936
    %v1938 = vrot.slane %v1937, 1
    %v1939 = vadd.f32 %v1937, %v1938
    %1941 = vrot.lane.b32.xlu0 %v1933, 64
    %v1942 = vpop.permute.xlu0 %1941
    %v1944 = vadd.f32 %v1933, %v1942
    %v1945 = vadd.f32 %v1944, %v1939
    %1947 = vrot.lane.b32.xlu0 %v1939, 64
    %v1948 = vpop.permute.xlu0 %1947
    %v1950 = vadd.f32 %v1945, %v1948
    %1952 = vrot.lane.b32.xlu0 %v1950, 64
    %v1953 = vpop.permute.xlu0 %1952
    %v1955 = vsel %vm573, %v1950, %v1953
    %v1956 = vmul.f32 %v1955, 0.03125
    %v1957 = vlaneseq
    %v1958 = vshrl.u32 %v1957, 7
    %v1959 = vsub.s32 0, %v1958
    %v1960 = vrot.slane %v1956, %v1959
    %v1961 = vsub.f32 %v1922, %v1960
    %v1962 = vsub.f32 %v1924, %v1960
    %v1963 = vmul.f32 %v1961, %v1961
    %v1964 = vmul.f32 %v1962, %v1962
    %v1965 = vrot.slane %v1963, 4
    %v1966 = vadd.f32 %v1963, %v1965
    %v1967 = vrot.slane %v1966, 2
    %v1968 = vadd.f32 %v1966, %v1967
    %v1969 = vrot.slane %v1968, 1
    %v1970 = vadd.f32 %v1968, %v1969
    %v1971 = vrot.slane %v1964, 4
    %v1972 = vadd.f32 %v1964, %v1971
    %v1973 = vrot.slane %v1972, 2
    %v1974 = vadd.f32 %v1972, %v1973
    %v1975 = vrot.slane %v1974, 1
    %v1976 = vadd.f32 %v1974, %v1975
    %1978 = vrot.lane.b32.xlu0 %v1970, 64
    %v1979 = vpop.permute.xlu0 %1978
    %v1981 = vadd.f32 %v1970, %v1979
    %v1982 = vadd.f32 %v1981, %v1976
    %1984 = vrot.lane.b32.xlu0 %v1976, 64
    %v1985 = vpop.permute.xlu0 %1984
    %v1987 = vadd.f32 %v1982, %v1985
    %1989 = vrot.lane.b32.xlu0 %v1987, 64
    %v1990 = vpop.permute.xlu0 %1989
    %v1992 = vsel %vm573, %v1987, %v1990
    %v1993 = vmul.f32 %v1992, 0.03125
    %v1994 = vadd.f32 %v1993, 1e-05
    %v1995 = vrsqrt.pop %v1994
    %v1996 = vlaneseq
    %v1997 = vshrl.u32 %v1996, 7
    %v1998 = vsub.s32 0, %v1997
    %v1999 = vrot.slane %v1995, %v1998
    %v2000 = vmul.f32 %v1961, %v1999
    %v2001 = vmul.f32 %v1962, %v1999
    %s2002 = scalar_lea.vmem [#allocation4], 1
    %v2003 = vld [vmem:[%s2002] ss:$4 sm:$0x3]
    %v2005 = vlaneseq
    %v2006 = vshrl.u32 %v2005, 7
    %v2007 = vsub.s32 0, %v2006
    %v2008 = vrot.slane %v2003, %v2007
    %v2009 = vlaneseq
    %v2010 = vshrl.u32 %v2009, 7
    %v2011 = vsub.s32 1, %v2010
    %v2012 = vrot.slane %v2003, %v2011
    %v2015 = vmul.f32 %v2000, %v2008
    %v2016 = vmul.f32 %v2001, %v2012
    %s2017 = scalar_lea.vmem [#allocation4], 2
    %v2018 = vld [vmem:[%s2017] ss:$4 sm:$0x3]
    %v2020 = vlaneseq
    %v2021 = vshrl.u32 %v2020, 7
    %v2022 = vsub.s32 0, %v2021
    %v2023 = vrot.slane %v2018, %v2022
    %v2024 = vlaneseq
    %v2025 = vshrl.u32 %v2024, 7
    %v2026 = vsub.s32 1, %v2025
    %v2027 = vrot.slane %v2018, %v2026
    %v2030 = vadd.f32 %v2015, %v2023
    %v2031 = vadd.f32 %v2016, %v2027
    %v2032 = vmax.f32 %v2030, 0.0
    %v2033 = vmax.f32 %v2031, 0.0
    %v2034 = vpack.c.bf16 %v2032, %v2032
    %v2035 = vpack.c.bf16 %v2033, %v2033
    %v2036 = vld [vmem:[#allocation6] sm:$0x3]
    %vm2037 = vcmask 64512
    %v2039 = vsel %vm2037, %v2036, 0
    %vm2041 = vcmask 1043456
    %v2043 = vsel %vm2041, %v2034, 0
    %v2046 = vsel %vm2041, %v2035, 0
    %2048 = vmatprep.subr.bf16.mxu0 %v2046
    %2049 = vmatpush1.bf16.msra.mxu0 %v2043
    %2050 = vmatprep.subr.bf16.mxu0 0
    %2051 = vmatpush1.bf16.msra.mxu0 0
    %2052 = vmatprep.subr.bf16.mxu0 0
    %2053 = vmatpush1.bf16.msra.mxu0 0
    %2054 = vmatprep.subr.bf16.mxu0 0
    %2055 = vmatpush1.bf16.msra.mxu0 0
    %2056 = vmatprep.subr.bf16.mxu0 0
    %2057 = vmatpush1.bf16.msra.mxu0 0
    %2058 = vmatprep.subr.bf16.mxu0 0
    %2059 = vmatpush1.bf16.msra.mxu0 0
    %2060 = vmatprep.subr.bf16.mxu0 0
    %2061 = vmatpush1.bf16.msra.mxu0 0
    %2062 = vmatprep.subr.bf16.mxu0 0
    %2063 = vmatpush1.bf16.msra.mxu0 0
    %2064 = vmatprep.subr.bf16.mxu0 0
    %2065 = vmatpush1.bf16.msra.mxu0 0
    %2066 = vmatprep.subr.bf16.mxu0 0
    %2067 = vmatpush1.bf16.msra.mxu0 0
    %2068 = vmatprep.subr.bf16.mxu0 0
    %2069 = vmatpush1.bf16.msra.mxu0 0
    %2070 = vmatprep.subr.bf16.mxu0 0
    %2071 = vmatpush1.bf16.msra.mxu0 0
    %2072 = vmatprep.subr.bf16.mxu0 0
    %2073 = vmatpush1.bf16.msra.mxu0 0
    %2074 = vmatprep.subr.bf16.mxu0 0
    %2075 = vmatpush1.bf16.msra.mxu0 0
    %2076 = vmatprep.subr.bf16.mxu0 0
    %2077 = vmatpush1.bf16.msra.mxu0 0
    %2078 = vmatprep.subr.bf16.mxu0 0
    %2079 = vmatpush1.bf16.msra.mxu0 0
    %2080 = vmatprep.mubr.bf16.mxu0 0
    %2081 = vmatmul.mubr.bf16.gmra.mrb[0].mxu0 %v2039
    %v2082 = vpop.f32.mrb[0].mxu0
    %v2083 = vadd.f32 0.0, %v2082
    %v2084 = vpop.f32.mrb[0].mxu0
    %v2085 = vadd.f32 0.0, %v2084
    %v2086 = vpop.f32.mrb[0].mxu0
    %v2087 = vpop.f32.mrb[0].mxu0
    %2088 = vdwg.mxu0
    %s2089 = scalar_lea.vmem [#allocation6], 2
    %v2090 = vld [vmem:[%s2089] sm:$0x3]
    %v2092 = vsel %vm2037, %v2090, 0
    %2094 = vmatprep.subr.bf16.mxu0 %v2046
    %2095 = vmatpush1.bf16.msra.mxu0 %v2043
    %2096 = vmatprep.subr.bf16.mxu0 0
    %2097 = vmatpush1.bf16.msra.mxu0 0
    %2098 = vmatprep.subr.bf16.mxu0 0
    %2099 = vmatpush1.bf16.msra.mxu0 0
    %2100 = vmatprep.subr.bf16.mxu0 0
    %2101 = vmatpush1.bf16.msra.mxu0 0
    %2102 = vmatprep.subr.bf16.mxu0 0
    %2103 = vmatpush1.bf16.msra.mxu0 0
    %2104 = vmatprep.subr.bf16.mxu0 0
    %2105 = vmatpush1.bf16.msra.mxu0 0
    %2106 = vmatprep.subr.bf16.mxu0 0
    %2107 = vmatpush1.bf16.msra.mxu0 0
    %2108 = vmatprep.subr.bf16.mxu0 0
    %2109 = vmatpush1.bf16.msra.mxu0 0
    %2110 = vmatprep.subr.bf16.mxu0 0
    %2111 = vmatpush1.bf16.msra.mxu0 0
    %2112 = vmatprep.subr.bf16.mxu0 0
    %2113 = vmatpush1.bf16.msra.mxu0 0
    %2114 = vmatprep.subr.bf16.mxu0 0
    %2115 = vmatpush1.bf16.msra.mxu0 0
    %2116 = vmatprep.subr.bf16.mxu0 0
    %2117 = vmatpush1.bf16.msra.mxu0 0
    %2118 = vmatprep.subr.bf16.mxu0 0
    %2119 = vmatpush1.bf16.msra.mxu0 0
    %2120 = vmatprep.subr.bf16.mxu0 0
    %2121 = vmatpush1.bf16.msra.mxu0 0
    %2122 = vmatprep.subr.bf16.mxu0 0
    %2123 = vmatpush1.bf16.msra.mxu0 0
    %2124 = vmatprep.subr.bf16.mxu0 0
    %2125 = vmatpush1.bf16.msra.mxu0 0
    %2126 = vmatprep.mubr.bf16.mxu0 0
    %2127 = vmatmul.mubr.bf16.gmra.mrb[0].mxu0 %v2092
    %v2128 = vpop.f32.mrb[0].mxu0
    %v2129 = vadd.f32 0.0, %v2128
    %v2130 = vpop.f32.mrb[0].mxu0
    %v2131 = vadd.f32 0.0, %v2130
    %v2132 = vpop.f32.mrb[0].mxu0
    %v2133 = vpop.f32.mrb[0].mxu0
    %2134 = vdwg.mxu0
    %s2135 = scalar_lea.vmem [#allocation6], 4
    %v2136 = vld [vmem:[%s2135] sm:$0x3]
    %v2138 = vsel %vm2037, %v2136, 0
    %2140 = vmatprep.subr.bf16.mxu0 %v2046
    %2141 = vmatpush1.bf16.msra.mxu0 %v2043
    %2142 = vmatprep.subr.bf16.mxu0 0
    %2143 = vmatpush1.bf16.msra.mxu0 0
    %2144 = vmatprep.subr.bf16.mxu0 0
    %2145 = vmatpush1.bf16.msra.mxu0 0
    %2146 = vmatprep.subr.bf16.mxu0 0
    %2147 = vmatpush1.bf16.msra.mxu0 0
    %2148 = vmatprep.subr.bf16.mxu0 0
    %2149 = vmatpush1.bf16.msra.mxu0 0
    %2150 = vmatprep.subr.bf16.mxu0 0
    %2151 = vmatpush1.bf16.msra.mxu0 0
    %2152 = vmatprep.subr.bf16.mxu0 0
    %2153 = vmatpush1.bf16.msra.mxu0 0
    %2154 = vmatprep.subr.bf16.mxu0 0
    %2155 = vmatpush1.bf16.msra.mxu0 0
    %2156 = vmatprep.subr.bf16.mxu0 0
    %2157 = vmatpush1.bf16.msra.mxu0 0
    %2158 = vmatprep.subr.bf16.mxu0 0
    %2159 = vmatpush1.bf16.msra.mxu0 0
    %2160 = vmatprep.subr.bf16.mxu0 0
    %2161 = vmatpush1.bf16.msra.mxu0 0
    %2162 = vmatprep.subr.bf16.mxu0 0
    %2163 = vmatpush1.bf16.msra.mxu0 0
    %2164 = vmatprep.subr.bf16.mxu0 0
    %2165 = vmatpush1.bf16.msra.mxu0 0
    %2166 = vmatprep.subr.bf16.mxu0 0
    %2167 = vmatpush1.bf16.msra.mxu0 0
    %2168 = vmatprep.subr.bf16.mxu0 0
    %2169 = vmatpush1.bf16.msra.mxu0 0
    %2170 = vmatprep.subr.bf16.mxu0 0
    %2171 = vmatpush1.bf16.msra.mxu0 0
    %2172 = vmatprep.mubr.bf16.mxu0 0
    %2173 = vmatmul.mubr.bf16.gmra.mrb[0].mxu0 %v2138
    %v2174 = vpop.f32.mrb[0].mxu0
    %v2175 = vadd.f32 0.0, %v2174
    %v2176 = vpop.f32.mrb[0].mxu0
    %v2177 = vadd.f32 0.0, %v2176
    %v2178 = vpop.f32.mrb[0].mxu0
    %v2179 = vpop.f32.mrb[0].mxu0
    %2180 = vdwg.mxu0
    %s2181 = scalar_lea.vmem [#allocation6], 6
    %v2182 = vld [vmem:[%s2181] sm:$0x3]
    %v2184 = vsel %vm2037, %v2182, 0
    %2186 = vmatprep.subr.bf16.mxu0 %v2046
    %2187 = vmatpush1.bf16.msra.mxu0 %v2043
    %2188 = vmatprep.subr.bf16.mxu0 0
    %2189 = vmatpush1.bf16.msra.mxu0 0
    %2190 = vmatprep.subr.bf16.mxu0 0
    %2191 = vmatpush1.bf16.msra.mxu0 0
    %2192 = vmatprep.subr.bf16.mxu0 0
    %2193 = vmatpush1.bf16.msra.mxu0 0
    %2194 = vmatprep.subr.bf16.mxu0 0
    %2195 = vmatpush1.bf16.msra.mxu0 0
    %2196 = vmatprep.subr.bf16.mxu0 0
    %2197 = vmatpush1.bf16.msra.mxu0 0
    %2198 = vmatprep.subr.bf16.mxu0 0
    %2199 = vmatpush1.bf16.msra.mxu0 0
    %2200 = vmatprep.subr.bf16.mxu0 0
    %2201 = vmatpush1.bf16.msra.mxu0 0
    %2202 = vmatprep.subr.bf16.mxu0 0
    %2203 = vmatpush1.bf16.msra.mxu0 0
    %2204 = vmatprep.subr.bf16.mxu0 0
    %2205 = vmatpush1.bf16.msra.mxu0 0
    %2206 = vmatprep.subr.bf16.mxu0 0
    %2207 = vmatpush1.bf16.msra.mxu0 0
    %2208 = vmatprep.subr.bf16.mxu0 0
    %2209 = vmatpush1.bf16.msra.mxu0 0
    %2210 = vmatprep.subr.bf16.mxu0 0
    %2211 = vmatpush1.bf16.msra.mxu0 0
    %2212 = vmatprep.subr.bf16.mxu0 0
    %2213 = vmatpush1.bf16.msra.mxu0 0
    %2214 = vmatprep.subr.bf16.mxu0 0
    %2215 = vmatpush1.bf16.msra.mxu0 0
    %2216 = vmatprep.subr.bf16.mxu0 0
    %2217 = vmatpush1.bf16.msra.mxu0 0
    %2218 = vmatprep.mubr.bf16.mxu0 0
    %2219 = vmatmul.mubr.bf16.gmra.mrb[0].mxu0 %v2184
    %v2220 = vpop.f32.mrb[0].mxu0
    %v2221 = vadd.f32 0.0, %v2220
    %v2222 = vpop.f32.mrb[0].mxu0
    %v2223 = vadd.f32 0.0, %v2222
    %v2224 = vpop.f32.mrb[0].mxu0
    %v2225 = vpop.f32.mrb[0].mxu0
    %2226 = vdwg.mxu0
    %v2227 = vpack.c.bf16 %v2083, %v2083
    %v2228 = vpack.c.bf16 %v2085, %v2085
    %v2229 = vpack.c.bf16 %v2129, %v2129
    %v2230 = vpack.c.bf16 %v2131, %v2131
    %v2231 = vpack.c.bf16 %v2175, %v2175
    %v2232 = vpack.c.bf16 %v2177, %v2177
    %v2233 = vpack.c.bf16 %v2221, %v2221
    %v2234 = vpack.c.bf16 %v2223, %v2223
    %v2235 = vld [vmem:[#allocation7] sm:$0xff]
    %v2236 = vld [vmem:[#allocation7 + $0x8] sm:$0xff]
    %v2237 = vld [vmem:[#allocation7 + $0x10] sm:$0xff]
    %v2238 = vld [vmem:[#allocation7 + $0x18] sm:$0xff]
    %v2239 = vld [vmem:[#allocation7 + $0x20] sm:$0xff]
    %v2240 = vld [vmem:[#allocation7 + $0x28] sm:$0xff]
    %v2241 = vld [vmem:[#allocation7 + $0x30] sm:$0xff]
    %v2242 = vld [vmem:[#allocation7 + $0x38] sm:$0xff]
    %v2243 = vld [vmem:[#allocation7 + $0x40] sm:$0xff]
    %v2244 = vld [vmem:[#allocation7 + $0x48] sm:$0xff]
    %v2245 = vld [vmem:[#allocation7 + $0x50] sm:$0xff]
    %v2246 = vld [vmem:[#allocation7 + $0x58] sm:$0xff]
    %v2247 = vld [vmem:[#allocation7 + $0x60] sm:$0xff]
    %v2248 = vld [vmem:[#allocation7 + $0x68] sm:$0xff]
    %v2249 = vld [vmem:[#allocation7 + $0x70] sm:$0xff]
    %v2250 = vld [vmem:[#allocation7 + $0x78] sm:$0xff]
    %v2251 = vld [vmem:[#allocation7 + $0x80] sm:$0xff]
    %v2252 = vld [vmem:[#allocation7 + $0x88] sm:$0xff]
    %v2253 = vld [vmem:[#allocation7 + $0x90] sm:$0xff]
    %v2254 = vld [vmem:[#allocation7 + $0x98] sm:$0xff]
    %v2255 = vld [vmem:[#allocation7 + $0xa0] sm:$0xff]
    %v2256 = vld [vmem:[#allocation7 + $0xa8] sm:$0xff]
    %v2257 = vld [vmem:[#allocation7 + $0xb0] sm:$0xff]
    %v2258 = vld [vmem:[#allocation7 + $0xb8] sm:$0xff]
    %v2259 = vld [vmem:[#allocation7 + $0xc0] sm:$0xff]
    %v2260 = vld [vmem:[#allocation7 + $0xc8] sm:$0xff]
    %v2261 = vld [vmem:[#allocation7 + $0xd0] sm:$0xff]
    %v2262 = vld [vmem:[#allocation7 + $0xd8] sm:$0xff]
    %v2263 = vld [vmem:[#allocation7 + $0xe0] sm:$0xff]
    %v2264 = vld [vmem:[#allocation7 + $0xe8] sm:$0xff]
    %v2265 = vld [vmem:[#allocation7 + $0xf0] sm:$0xff]
    %v2266 = vld [vmem:[#allocation7 + $0xf8] sm:$0xff]
    %v2267 = vld [vmem:[#allocation7 + $0x100] sm:$0xff]
    %v2268 = vld [vmem:[#allocation7 + $0x108] sm:$0xff]
    %v2269 = vld [vmem:[#allocation7 + $0x110] sm:$0xff]
    %v2270 = vld [vmem:[#allocation7 + $0x118] sm:$0xff]
    %v2271 = vld [vmem:[#allocation7 + $0x120] sm:$0xff]
    %v2272 = vld [vmem:[#allocation7 + $0x128] sm:$0xff]
    %v2273 = vld [vmem:[#allocation7 + $0x130] sm:$0xff]
    %v2274 = vld [vmem:[#allocation7 + $0x138] sm:$0xff]
    %v2275 = vld [vmem:[#allocation7 + $0x140] sm:$0xff]
    %v2276 = vld [vmem:[#allocation7 + $0x148] sm:$0xff]
    %v2277 = vld [vmem:[#allocation7 + $0x150] sm:$0xff]
    %v2278 = vld [vmem:[#allocation7 + $0x158] sm:$0xff]
    %v2279 = vld [vmem:[#allocation7 + $0x160] sm:$0xff]
    %v2280 = vld [vmem:[#allocation7 + $0x168] sm:$0xff]
    %v2281 = vld [vmem:[#allocation7 + $0x170] sm:$0xff]
    %v2282 = vld [vmem:[#allocation7 + $0x178] sm:$0xff]
    %v2283 = vld [vmem:[#allocation7 + $0x180] sm:$0xff]
    %v2284 = vld [vmem:[#allocation7 + $0x188] sm:$0xff]
    %v2285 = vld [vmem:[#allocation7 + $0x190] sm:$0xff]
    %v2286 = vld [vmem:[#allocation7 + $0x198] sm:$0xff]
    %v2287 = vld [vmem:[#allocation7 + $0x1a0] sm:$0xff]
    %v2288 = vld [vmem:[#allocation7 + $0x1a8] sm:$0xff]
    %v2289 = vld [vmem:[#allocation7 + $0x1b0] sm:$0xff]
    %v2290 = vld [vmem:[#allocation7 + $0x1b8] sm:$0xff]
    %v2291 = vld [vmem:[#allocation7 + $0x1c0] sm:$0xff]
    %v2292 = vld [vmem:[#allocation7 + $0x1c8] sm:$0xff]
    %v2293 = vld [vmem:[#allocation7 + $0x1d0] sm:$0xff]
    %v2294 = vld [vmem:[#allocation7 + $0x1d8] sm:$0xff]
    %v2295 = vld [vmem:[#allocation7 + $0x1e0] sm:$0xff]
    %v2296 = vld [vmem:[#allocation7 + $0x1e8] sm:$0xff]
    %v2297 = vld [vmem:[#allocation7 + $0x1f0] sm:$0xff]
    %v2298 = vld [vmem:[#allocation7 + $0x1f8] sm:$0xff]
    %v2299 = vld [vmem:[#allocation7 + $0x200] sm:$0xff]
    %v2300 = vld [vmem:[#allocation7 + $0x208] sm:$0xff]
    %v2301 = vld [vmem:[#allocation7 + $0x210] sm:$0xff]
    %v2302 = vld [vmem:[#allocation7 + $0x218] sm:$0xff]
    %v2303 = vld [vmem:[#allocation7 + $0x220] sm:$0xff]
    %v2304 = vld [vmem:[#allocation7 + $0x228] sm:$0xff]
    %v2305 = vld [vmem:[#allocation7 + $0x230] sm:$0xff]
    %v2306 = vld [vmem:[#allocation7 + $0x238] sm:$0xff]
    %v2307 = vld [vmem:[#allocation7 + $0x240] sm:$0xff]
    %v2308 = vld [vmem:[#allocation7 + $0x248] sm:$0xff]
    %v2309 = vld [vmem:[#allocation7 + $0x250] sm:$0xff]
    %v2310 = vld [vmem:[#allocation7 + $0x258] sm:$0xff]
    %v2311 = vld [vmem:[#allocation7 + $0x260] sm:$0xff]
    %v2312 = vld [vmem:[#allocation7 + $0x268] sm:$0xff]
    %v2313 = vld [vmem:[#allocation7 + $0x270] sm:$0xff]
    %v2314 = vld [vmem:[#allocation7 + $0x278] sm:$0xff]
    %v2315 = vld [vmem:[#allocation7 + $0x280] sm:$0xff]
    %v2316 = vld [vmem:[#allocation7 + $0x288] sm:$0xff]
    %v2317 = vld [vmem:[#allocation7 + $0x290] sm:$0xff]
    %v2318 = vld [vmem:[#allocation7 + $0x298] sm:$0xff]
    %v2319 = vld [vmem:[#allocation7 + $0x2a0] sm:$0xff]
    %v2320 = vld [vmem:[#allocation7 + $0x2a8] sm:$0xff]
    %v2321 = vld [vmem:[#allocation7 + $0x2b0] sm:$0xff]
    %v2322 = vld [vmem:[#allocation7 + $0x2b8] sm:$0xff]
    %v2323 = vld [vmem:[#allocation7 + $0x2c0] sm:$0xff]
    %v2324 = vld [vmem:[#allocation7 + $0x2c8] sm:$0xff]
    %v2325 = vld [vmem:[#allocation7 + $0x2d0] sm:$0xff]
    %v2326 = vld [vmem:[#allocation7 + $0x2d8] sm:$0xff]
    %v2327 = vld [vmem:[#allocation7 + $0x2e0] sm:$0xff]
    %v2328 = vld [vmem:[#allocation7 + $0x2e8] sm:$0xff]
    %v2329 = vld [vmem:[#allocation7 + $0x2f0] sm:$0xff]
    %v2330 = vld [vmem:[#allocation7 + $0x2f8] sm:$0xff]
    %v2331 = vld [vmem:[#allocation7 + $0x300] sm:$0xff]
    %v2332 = vld [vmem:[#allocation7 + $0x308] sm:$0xff]
    %v2333 = vld [vmem:[#allocation7 + $0x310] sm:$0xff]
    %v2334 = vld [vmem:[#allocation7 + $0x318] sm:$0xff]
    %v2335 = vld [vmem:[#allocation7 + $0x320] sm:$0xff]
    %v2336 = vld [vmem:[#allocation7 + $0x328] sm:$0xff]
    %v2337 = vld [vmem:[#allocation7 + $0x330] sm:$0xff]
    %v2338 = vld [vmem:[#allocation7 + $0x338] sm:$0xff]
    %v2339 = vld [vmem:[#allocation7 + $0x340] sm:$0xff]
    %v2340 = vld [vmem:[#allocation7 + $0x348] sm:$0xff]
    %v2341 = vld [vmem:[#allocation7 + $0x350] sm:$0xff]
    %v2342 = vld [vmem:[#allocation7 + $0x358] sm:$0xff]
    %v2343 = vld [vmem:[#allocation7 + $0x360] sm:$0xff]
    %v2344 = vld [vmem:[#allocation7 + $0x368] sm:$0xff]
    %v2345 = vld [vmem:[#allocation7 + $0x370] sm:$0xff]
    %v2346 = vld [vmem:[#allocation7 + $0x378] sm:$0xff]
    %v2347 = vld [vmem:[#allocation7 + $0x380] sm:$0xff]
    %v2348 = vld [vmem:[#allocation7 + $0x388] sm:$0xff]
    %v2349 = vld [vmem:[#allocation7 + $0x390] sm:$0xff]
    %v2350 = vld [vmem:[#allocation7 + $0x398] sm:$0xff]
    %v2351 = vld [vmem:[#allocation7 + $0x3a0] sm:$0xff]
    %v2352 = vld [vmem:[#allocation7 + $0x3a8] sm:$0xff]
    %v2353 = vld [vmem:[#allocation7 + $0x3b0] sm:$0xff]
    %v2354 = vld [vmem:[#allocation7 + $0x3b8] sm:$0xff]
    %v2355 = vld [vmem:[#allocation7 + $0x3c0] sm:$0xff]
    %v2356 = vld [vmem:[#allocation7 + $0x3c8] sm:$0xff]
    %v2357 = vld [vmem:[#allocation7 + $0x3d0] sm:$0xff]
    %v2358 = vld [vmem:[#allocation7 + $0x3d8] sm:$0xff]
    %v2359 = vld [vmem:[#allocation7 + $0x3e0] sm:$0xff]
    %v2360 = vld [vmem:[#allocation7 + $0x3e8] sm:$0xff]
    %v2361 = vld [vmem:[#allocation7 + $0x3f0] sm:$0xff]
    %v2362 = vld [vmem:[#allocation7 + $0x3f8] sm:$0xff]
    %v2363 = vld [vmem:[#allocation9] ss:$4 sm:$0x3]
    %v2365 = vlaneseq
    %v2366 = vshrl.u32 %v2365, 7
    %v2367 = vsub.s32 0, %v2366
    %v2368 = vrot.slane %v2363, %v2367
    %v2369 = vlaneseq
    %v2370 = vshrl.u32 %v2369, 7
    %v2371 = vsub.s32 1, %v2370
    %v2372 = vrot.slane %v2363, %v2371
    %v2503 = vunpack.c.l.b16 %v2235
    %v2504 = vunpack.c.h.b16 %v2235
    %v2505 = vunpack.c.l.b16 %v2236
    %v2506 = vunpack.c.h.b16 %v2236
    %v2507 = vunpack.c.l.b16 %v2237
    %v2508 = vunpack.c.h.b16 %v2237
    %v2509 = vunpack.c.l.b16 %v2238
    %v2510 = vunpack.c.h.b16 %v2238
    %v2511 = vunpack.c.l.b16 %v2239
    %v2512 = vunpack.c.h.b16 %v2239
    %v2513 = vunpack.c.l.b16 %v2240
    %v2514 = vunpack.c.h.b16 %v2240
    %v2515 = vunpack.c.l.b16 %v2241
    %v2516 = vunpack.c.h.b16 %v2241
    %v2517 = vunpack.c.l.b16 %v2242
    %v2518 = vunpack.c.h.b16 %v2242
    %v2519 = vunpack.c.l.b16 %v2243
    %v2520 = vunpack.c.h.b16 %v2243
    %v2521 = vunpack.c.l.b16 %v2244
    %v2522 = vunpack.c.h.b16 %v2244
    %v2523 = vunpack.c.l.b16 %v2245
    %v2524 = vunpack.c.h.b16 %v2245
    %v2525 = vunpack.c.l.b16 %v2246
    %v2526 = vunpack.c.h.b16 %v2246
    %v2527 = vunpack.c.l.b16 %v2247
    %v2528 = vunpack.c.h.b16 %v2247
    %v2529 = vunpack.c.l.b16 %v2248
    %v2530 = vunpack.c.h.b16 %v2248
    %v2531 = vunpack.c.l.b16 %v2249
    %v2532 = vunpack.c.h.b16 %v2249
    %v2533 = vunpack.c.l.b16 %v2250
    %v2534 = vunpack.c.h.b16 %v2250
    %v2535 = vunpack.c.l.b16 %v2251
    %v2536 = vunpack.c.h.b16 %v2251
    %v2537 = vunpack.c.l.b16 %v2252
    %v2538 = vunpack.c.h.b16 %v2252
    %v2539 = vunpack.c.l.b16 %v2253
    %v2540 = vunpack.c.h.b16 %v2253
    %v2541 = vunpack.c.l.b16 %v2254
    %v2542 = vunpack.c.h.b16 %v2254
    %v2543 = vunpack.c.l.b16 %v2255
    %v2544 = vunpack.c.h.b16 %v2255
    %v2545 = vunpack.c.l.b16 %v2256
    %v2546 = vunpack.c.h.b16 %v2256
    %v2547 = vunpack.c.l.b16 %v2257
    %v2548 = vunpack.c.h.b16 %v2257
    %v2549 = vunpack.c.l.b16 %v2258
    %v2550 = vunpack.c.h.b16 %v2258
    %v2551 = vunpack.c.l.b16 %v2259
    %v2552 = vunpack.c.h.b16 %v2259
    %v2553 = vunpack.c.l.b16 %v2260
    %v2554 = vunpack.c.h.b16 %v2260
    %v2555 = vunpack.c.l.b16 %v2261
    %v2556 = vunpack.c.h.b16 %v2261
    %v2557 = vunpack.c.l.b16 %v2262
    %v2558 = vunpack.c.h.b16 %v2262
    %v2559 = vunpack.c.l.b16 %v2263
    %v2560 = vunpack.c.h.b16 %v2263
    %v2561 = vunpack.c.l.b16 %v2264
    %v2562 = vunpack.c.h.b16 %v2264
    %v2563 = vunpack.c.l.b16 %v2265
    %v2564 = vunpack.c.h.b16 %v2265
    %v2565 = vunpack.c.l.b16 %v2266
    %v2566 = vunpack.c.h.b16 %v2266
    %v2567 = vunpack.c.l.b16 %v2267
    %v2568 = vunpack.c.h.b16 %v2267
    %v2569 = vunpack.c.l.b16 %v2268
    %v2570 = vunpack.c.h.b16 %v2268
    %v2571 = vunpack.c.l.b16 %v2269
    %v2572 = vunpack.c.h.b16 %v2269
    %v2573 = vunpack.c.l.b16 %v2270
    %v2574 = vunpack.c.h.b16 %v2270
    %v2575 = vunpack.c.l.b16 %v2271
    %v2576 = vunpack.c.h.b16 %v2271
    %v2577 = vunpack.c.l.b16 %v2272
    %v2578 = vunpack.c.h.b16 %v2272
    %v2579 = vunpack.c.l.b16 %v2273
    %v2580 = vunpack.c.h.b16 %v2273
    %v2581 = vunpack.c.l.b16 %v2274
    %v2582 = vunpack.c.h.b16 %v2274
    %v2583 = vunpack.c.l.b16 %v2275
    %v2584 = vunpack.c.h.b16 %v2275
    %v2585 = vunpack.c.l.b16 %v2276
    %v2586 = vunpack.c.h.b16 %v2276
    %v2587 = vunpack.c.l.b16 %v2277
    %v2588 = vunpack.c.h.b16 %v2277
    %v2589 = vunpack.c.l.b16 %v2278
    %v2590 = vunpack.c.h.b16 %v2278
    %v2591 = vunpack.c.l.b16 %v2279
    %v2592 = vunpack.c.h.b16 %v2279
    %v2593 = vunpack.c.l.b16 %v2280
    %v2594 = vunpack.c.h.b16 %v2280
    %v2595 = vunpack.c.l.b16 %v2281
    %v2596 = vunpack.c.h.b16 %v2281
    %v2597 = vunpack.c.l.b16 %v2282
    %v2598 = vunpack.c.h.b16 %v2282
    %v2599 = vunpack.c.l.b16 %v2283
    %v2600 = vunpack.c.h.b16 %v2283
    %v2601 = vunpack.c.l.b16 %v2284
    %v2602 = vunpack.c.h.b16 %v2284
    %v2603 = vunpack.c.l.b16 %v2285
    %v2604 = vunpack.c.h.b16 %v2285
    %v2605 = vunpack.c.l.b16 %v2286
    %v2606 = vunpack.c.h.b16 %v2286
    %v2607 = vunpack.c.l.b16 %v2287
    %v2608 = vunpack.c.h.b16 %v2287
    %v2609 = vunpack.c.l.b16 %v2288
    %v2610 = vunpack.c.h.b16 %v2288
    %v2611 = vunpack.c.l.b16 %v2289
    %v2612 = vunpack.c.h.b16 %v2289
    %v2613 = vunpack.c.l.b16 %v2290
    %v2614 = vunpack.c.h.b16 %v2290
    %v2615 = vunpack.c.l.b16 %v2291
    %v2616 = vunpack.c.h.b16 %v2291
    %v2617 = vunpack.c.l.b16 %v2292
    %v2618 = vunpack.c.h.b16 %v2292
    %v2619 = vunpack.c.l.b16 %v2293
    %v2620 = vunpack.c.h.b16 %v2293
    %v2621 = vunpack.c.l.b16 %v2294
    %v2622 = vunpack.c.h.b16 %v2294
    %v2623 = vunpack.c.l.b16 %v2295
    %v2624 = vunpack.c.h.b16 %v2295
    %v2625 = vunpack.c.l.b16 %v2296
    %v2626 = vunpack.c.h.b16 %v2296
    %v2627 = vunpack.c.l.b16 %v2297
    %v2628 = vunpack.c.h.b16 %v2297
    %v2629 = vunpack.c.l.b16 %v2298
    %v2630 = vunpack.c.h.b16 %v2298
    %v2631 = vunpack.c.l.b16 %v2299
    %v2632 = vunpack.c.h.b16 %v2299
    %v2633 = vunpack.c.l.b16 %v2300
    %v2634 = vunpack.c.h.b16 %v2300
    %v2635 = vunpack.c.l.b16 %v2301
    %v2636 = vunpack.c.h.b16 %v2301
    %v2637 = vunpack.c.l.b16 %v2302
    %v2638 = vunpack.c.h.b16 %v2302
    %v2639 = vunpack.c.l.b16 %v2303
    %v2640 = vunpack.c.h.b16 %v2303
    %v2641 = vunpack.c.l.b16 %v2304
    %v2642 = vunpack.c.h.b16 %v2304
    %v2643 = vunpack.c.l.b16 %v2305
    %v2644 = vunpack.c.h.b16 %v2305
    %v2645 = vunpack.c.l.b16 %v2306
    %v2646 = vunpack.c.h.b16 %v2306
    %v2647 = vunpack.c.l.b16 %v2307
    %v2648 = vunpack.c.h.b16 %v2307
    %v2649 = vunpack.c.l.b16 %v2308
    %v2650 = vunpack.c.h.b16 %v2308
    %v2651 = vunpack.c.l.b16 %v2309
    %v2652 = vunpack.c.h.b16 %v2309
    %v2653 = vunpack.c.l.b16 %v2310
    %v2654 = vunpack.c.h.b16 %v2310
    %v2655 = vunpack.c.l.b16 %v2311
    %v2656 = vunpack.c.h.b16 %v2311
    %v2657 = vunpack.c.l.b16 %v2312
    %v2658 = vunpack.c.h.b16 %v2312
    %v2659 = vunpack.c.l.b16 %v2313
    %v2660 = vunpack.c.h.b16 %v2313
    %v2661 = vunpack.c.l.b16 %v2314
    %v2662 = vunpack.c.h.b16 %v2314
    %v2663 = vunpack.c.l.b16 %v2315
    %v2664 = vunpack.c.h.b16 %v2315
    %v2665 = vunpack.c.l.b16 %v2316
    %v2666 = vunpack.c.h.b16 %v2316
    %v2667 = vunpack.c.l.b16 %v2317
    %v2668 = vunpack.c.h.b16 %v2317
    %v2669 = vunpack.c.l.b16 %v2318
    %v2670 = vunpack.c.h.b16 %v2318
    %v2671 = vunpack.c.l.b16 %v2319
    %v2672 = vunpack.c.h.b16 %v2319
    %v2673 = vunpack.c.l.b16 %v2320
    %v2674 = vunpack.c.h.b16 %v2320
    %v2675 = vunpack.c.l.b16 %v2321
    %v2676 = vunpack.c.h.b16 %v2321
    %v2677 = vunpack.c.l.b16 %v2322
    %v2678 = vunpack.c.h.b16 %v2322
    %v2679 = vunpack.c.l.b16 %v2323
    %v2680 = vunpack.c.h.b16 %v2323
    %v2681 = vunpack.c.l.b16 %v2324
    %v2682 = vunpack.c.h.b16 %v2324
    %v2683 = vunpack.c.l.b16 %v2325
    %v2684 = vunpack.c.h.b16 %v2325
    %v2685 = vunpack.c.l.b16 %v2326
    %v2686 = vunpack.c.h.b16 %v2326
    %v2687 = vunpack.c.l.b16 %v2327
    %v2688 = vunpack.c.h.b16 %v2327
    %v2689 = vunpack.c.l.b16 %v2328
    %v2690 = vunpack.c.h.b16 %v2328
    %v2691 = vunpack.c.l.b16 %v2329
    %v2692 = vunpack.c.h.b16 %v2329
    %v2693 = vunpack.c.l.b16 %v2330
    %v2694 = vunpack.c.h.b16 %v2330
    %v2695 = vunpack.c.l.b16 %v2331
    %v2696 = vunpack.c.h.b16 %v2331
    %v2697 = vunpack.c.l.b16 %v2332
    %v2698 = vunpack.c.h.b16 %v2332
    %v2699 = vunpack.c.l.b16 %v2333
    %v2700 = vunpack.c.h.b16 %v2333
    %v2701 = vunpack.c.l.b16 %v2334
    %v2702 = vunpack.c.h.b16 %v2334
    %v2703 = vunpack.c.l.b16 %v2335
    %v2704 = vunpack.c.h.b16 %v2335
    %v2705 = vunpack.c.l.b16 %v2336
    %v2706 = vunpack.c.h.b16 %v2336
    %v2707 = vunpack.c.l.b16 %v2337
    %v2708 = vunpack.c.h.b16 %v2337
    %v2709 = vunpack.c.l.b16 %v2338
    %v2710 = vunpack.c.h.b16 %v2338
    %v2711 = vunpack.c.l.b16 %v2339
    %v2712 = vunpack.c.h.b16 %v2339
    %v2713 = vunpack.c.l.b16 %v2340
    %v2714 = vunpack.c.h.b16 %v2340
    %v2715 = vunpack.c.l.b16 %v2341
    %v2716 = vunpack.c.h.b16 %v2341
    %v2717 = vunpack.c.l.b16 %v2342
    %v2718 = vunpack.c.h.b16 %v2342
    %v2719 = vunpack.c.l.b16 %v2343
    %v2720 = vunpack.c.h.b16 %v2343
    %v2721 = vunpack.c.l.b16 %v2344
    %v2722 = vunpack.c.h.b16 %v2344
    %v2723 = vunpack.c.l.b16 %v2345
    %v2724 = vunpack.c.h.b16 %v2345
    %v2725 = vunpack.c.l.b16 %v2346
    %v2726 = vunpack.c.h.b16 %v2346
    %v2727 = vunpack.c.l.b16 %v2347
    %v2728 = vunpack.c.h.b16 %v2347
    %v2729 = vunpack.c.l.b16 %v2348
    %v2730 = vunpack.c.h.b16 %v2348
    %v2731 = vunpack.c.l.b16 %v2349
    %v2732 = vunpack.c.h.b16 %v2349
    %v2733 = vunpack.c.l.b16 %v2350
    %v2734 = vunpack.c.h.b16 %v2350
    %v2735 = vunpack.c.l.b16 %v2351
    %v2736 = vunpack.c.h.b16 %v2351
    %v2737 = vunpack.c.l.b16 %v2352
    %v2738 = vunpack.c.h.b16 %v2352
    %v2739 = vunpack.c.l.b16 %v2353
    %v2740 = vunpack.c.h.b16 %v2353
    %v2741 = vunpack.c.l.b16 %v2354
    %v2742 = vunpack.c.h.b16 %v2354
    %v2743 = vunpack.c.l.b16 %v2355
    %v2744 = vunpack.c.h.b16 %v2355
    %v2745 = vunpack.c.l.b16 %v2356
    %v2746 = vunpack.c.h.b16 %v2356
    %v2747 = vunpack.c.l.b16 %v2357
    %v2748 = vunpack.c.h.b16 %v2357
    %v2749 = vunpack.c.l.b16 %v2358
    %v2750 = vunpack.c.h.b16 %v2358
    %v2751 = vunpack.c.l.b16 %v2359
    %v2752 = vunpack.c.h.b16 %v2359
    %v2753 = vunpack.c.l.b16 %v2360
    %v2754 = vunpack.c.h.b16 %v2360
    %v2755 = vunpack.c.l.b16 %v2361
    %v2756 = vunpack.c.h.b16 %v2361
    %v2757 = vunpack.c.l.b16 %v2362
    %v2758 = vunpack.c.h.b16 %v2362
    %v2759 = vpack.c.b16 %v2505, %v2503
    %v2760 = vpack.c.b16 %v2506, %v2504
    %v2761 = vpack.c.b16 %v2509, %v2507
    %v2762 = vpack.c.b16 %v2510, %v2508
    %v2763 = vpack.c.b16 %v2513, %v2511
    %v2764 = vpack.c.b16 %v2514, %v2512
    %v2765 = vpack.c.b16 %v2517, %v2515
    %v2766 = vpack.c.b16 %v2518, %v2516
    %v2767 = vpack.c.b16 %v2521, %v2519
    %v2768 = vpack.c.b16 %v2522, %v2520
    %v2769 = vpack.c.b16 %v2525, %v2523
    %v2770 = vpack.c.b16 %v2526, %v2524
    %v2771 = vpack.c.b16 %v2529, %v2527
    %v2772 = vpack.c.b16 %v2530, %v2528
    %v2773 = vpack.c.b16 %v2533, %v2531
    %v2774 = vpack.c.b16 %v2534, %v2532
    %v2775 = vpack.c.b16 %v2537, %v2535
    %v2776 = vpack.c.b16 %v2538, %v2536
    %v2777 = vpack.c.b16 %v2541, %v2539
    %v2778 = vpack.c.b16 %v2542, %v2540
    %v2779 = vpack.c.b16 %v2545, %v2543
    %v2780 = vpack.c.b16 %v2546, %v2544
    %v2781 = vpack.c.b16 %v2549, %v2547
    %v2782 = vpack.c.b16 %v2550, %v2548
    %v2783 = vpack.c.b16 %v2553, %v2551
    %v2784 = vpack.c.b16 %v2554, %v2552
    %v2785 = vpack.c.b16 %v2557, %v2555
    %v2786 = vpack.c.b16 %v2558, %v2556
    %v2787 = vpack.c.b16 %v2561, %v2559
    %v2788 = vpack.c.b16 %v2562, %v2560
    %v2789 = vpack.c.b16 %v2565, %v2563
    %v2790 = vpack.c.b16 %v2566, %v2564
    %v2791 = vpack.c.b16 %v2569, %v2567
    %v2792 = vpack.c.b16 %v2570, %v2568
    %v2793 = vpack.c.b16 %v2573, %v2571
    %v2794 = vpack.c.b16 %v2574, %v2572
    %v2795 = vpack.c.b16 %v2577, %v2575
    %v2796 = vpack.c.b16 %v2578, %v2576
    %v2797 = vpack.c.b16 %v2581, %v2579
    %v2798 = vpack.c.b16 %v2582, %v2580
    %v2799 = vpack.c.b16 %v2585, %v2583
    %v2800 = vpack.c.b16 %v2586, %v2584
    %v2801 = vpack.c.b16 %v2589, %v2587
    %v2802 = vpack.c.b16 %v2590, %v2588
    %v2803 = vpack.c.b16 %v2593, %v2591
    %v2804 = vpack.c.b16 %v2594, %v2592
    %v2805 = vpack.c.b16 %v2597, %v2595
    %v2806 = vpack.c.b16 %v2598, %v2596
    %v2807 = vpack.c.b16 %v2601, %v2599
    %v2808 = vpack.c.b16 %v2602, %v2600
    %v2809 = vpack.c.b16 %v2605, %v2603
    %v2810 = vpack.c.b16 %v2606, %v2604
    %v2811 = vpack.c.b16 %v2609, %v2607
    %v2812 = vpack.c.b16 %v2610, %v2608
    %v2813 = vpack.c.b16 %v2613, %v2611
    %v2814 = vpack.c.b16 %v2614, %v2612
    %v2815 = vpack.c.b16 %v2617, %v2615
    %v2816 = vpack.c.b16 %v2618, %v2616
    %v2817 = vpack.c.b16 %v2621, %v2619
    %v2818 = vpack.c.b16 %v2622, %v2620
    %v2819 = vpack.c.b16 %v2625, %v2623
    %v2820 = vpack.c.b16 %v2626, %v2624
    %v2821 = vpack.c.b16 %v2629, %v2627
    %v2822 = vpack.c.b16 %v2630, %v2628
    %v2823 = vpack.c.b16 %v2633, %v2631
    %v2824 = vpack.c.b16 %v2634, %v2632
    %v2825 = vpack.c.b16 %v2637, %v2635
    %v2826 = vpack.c.b16 %v2638, %v2636
    %v2827 = vpack.c.b16 %v2641, %v2639
    %v2828 = vpack.c.b16 %v2642, %v2640
    %v2829 = vpack.c.b16 %v2645, %v2643
    %v2830 = vpack.c.b16 %v2646, %v2644
    %v2831 = vpack.c.b16 %v2649, %v2647
    %v2832 = vpack.c.b16 %v2650, %v2648
    %v2833 = vpack.c.b16 %v2653, %v2651
    %v2834 = vpack.c.b16 %v2654, %v2652
    %v2835 = vpack.c.b16 %v2657, %v2655
    %v2836 = vpack.c.b16 %v2658, %v2656
    %v2837 = vpack.c.b16 %v2661, %v2659
    %v2838 = vpack.c.b16 %v2662, %v2660
    %v2839 = vpack.c.b16 %v2665, %v2663
    %v2840 = vpack.c.b16 %v2666, %v2664
    %v2841 = vpack.c.b16 %v2669, %v2667
    %v2842 = vpack.c.b16 %v2670, %v2668
    %v2843 = vpack.c.b16 %v2673, %v2671
    %v2844 = vpack.c.b16 %v2674, %v2672
    %v2845 = vpack.c.b16 %v2677, %v2675
    %v2846 = vpack.c.b16 %v2678, %v2676
    %v2847 = vpack.c.b16 %v2681, %v2679
    %v2848 = vpack.c.b16 %v2682, %v2680
    %v2849 = vpack.c.b16 %v2685, %v2683
    %v2850 = vpack.c.b16 %v2686, %v2684
    %v2851 = vpack.c.b16 %v2689, %v2687
    %v2852 = vpack.c.b16 %v2690, %v2688
    %v2853 = vpack.c.b16 %v2693, %v2691
    %v2854 = vpack.c.b16 %v2694, %v2692
    %v2855 = vpack.c.b16 %v2697, %v2695
    %v2856 = vpack.c.b16 %v2698, %v2696
    %v2857 = vpack.c.b16 %v2701, %v2699
    %v2858 = vpack.c.b16 %v2702, %v2700
    %v2859 = vpack.c.b16 %v2705, %v2703
    %v2860 = vpack.c.b16 %v2706, %v2704
    %v2861 = vpack.c.b16 %v2709, %v2707
    %v2862 = vpack.c.b16 %v2710, %v2708
    %v2863 = vpack.c.b16 %v2713, %v2711
    %v2864 = vpack.c.b16 %v2714, %v2712
    %v2865 = vpack.c.b16 %v2717, %v2715
    %v2866 = vpack.c.b16 %v2718, %v2716
    %v2867 = vpack.c.b16 %v2721, %v2719
    %v2868 = vpack.c.b16 %v2722, %v2720
    %v2869 = vpack.c.b16 %v2725, %v2723
    %v2870 = vpack.c.b16 %v2726, %v2724
    %v2871 = vpack.c.b16 %v2729, %v2727
    %v2872 = vpack.c.b16 %v2730, %v2728
    %v2873 = vpack.c.b16 %v2733, %v2731
    %v2874 = vpack.c.b16 %v2734, %v2732
    %v2875 = vpack.c.b16 %v2737, %v2735
    %v2876 = vpack.c.b16 %v2738, %v2736
    %v2877 = vpack.c.b16 %v2741, %v2739
    %v2878 = vpack.c.b16 %v2742, %v2740
    %v2879 = vpack.c.b16 %v2745, %v2743
    %v2880 = vpack.c.b16 %v2746, %v2744
    %v2881 = vpack.c.b16 %v2749, %v2747
    %v2882 = vpack.c.b16 %v2750, %v2748
    %v2883 = vpack.c.b16 %v2753, %v2751
    %v2884 = vpack.c.b16 %v2754, %v2752
    %v2885 = vpack.c.b16 %v2757, %v2755
    %v2886 = vpack.c.b16 %v2758, %v2756
    %3015 = vmatprep.subr.bf16.mxu0 %v2760
    %3016 = vmatpush1.bf16.msra.mxu0 %v2759
    %3017 = vmatprep.subr.bf16.mxu0 %v2762
    %3018 = vmatpush1.bf16.msra.mxu0 %v2761
    %3019 = vmatprep.subr.bf16.mxu0 %v2764
    %3020 = vmatpush1.bf16.msra.mxu0 %v2763
    %3021 = vmatprep.subr.bf16.mxu0 %v2766
    %3022 = vmatpush1.bf16.msra.mxu0 %v2765
    %3023 = vmatprep.subr.bf16.mxu0 %v2768
    %3024 = vmatpush1.bf16.msra.mxu0 %v2767
    %3025 = vmatprep.subr.bf16.mxu0 %v2770
    %3026 = vmatpush1.bf16.msra.mxu0 %v2769
    %3027 = vmatprep.subr.bf16.mxu0 %v2772
    %3028 = vmatpush1.bf16.msra.mxu0 %v2771
    %3029 = vmatprep.subr.bf16.mxu0 %v2774
    %3030 = vmatpush1.bf16.msra.mxu0 %v2773
    %3031 = vmatprep.subr.bf16.mxu0 %v2776
    %3032 = vmatpush1.bf16.msra.mxu0 %v2775
    %3033 = vmatprep.subr.bf16.mxu0 %v2778
    %3034 = vmatpush1.bf16.msra.mxu0 %v2777
    %3035 = vmatprep.subr.bf16.mxu0 %v2780
    %3036 = vmatpush1.bf16.msra.mxu0 %v2779
    %3037 = vmatprep.subr.bf16.mxu0 %v2782
    %3038 = vmatpush1.bf16.msra.mxu0 %v2781
    %3039 = vmatprep.subr.bf16.mxu0 %v2784
    %3040 = vmatpush1.bf16.msra.mxu0 %v2783
    %3041 = vmatprep.subr.bf16.mxu0 %v2786
    %3042 = vmatpush1.bf16.msra.mxu0 %v2785
    %3043 = vmatprep.subr.bf16.mxu0 %v2788
    %3044 = vmatpush1.bf16.msra.mxu0 %v2787
    %3045 = vmatprep.subr.bf16.mxu0 %v2790
    %3046 = vmatpush1.bf16.msra.mxu0 %v2789
    %3047 = vmatprep.mubr.bf16.mxu0 %v2228
    %3048 = vmatmul.mubr.bf16.gmra.mrb[0].mxu0 %v2227
    %v3049 = vpop.f32.mrb[0].mxu0
    %v3050 = vadd.f32 %v2368, %v3049
    %v3051 = vpop.f32.mrb[0].mxu0
    %v3052 = vadd.f32 %v2372, %v3051
    %v3053 = vpop.f32.mrb[0].mxu0
    %v3054 = vpop.f32.mrb[0].mxu0
    %3055 = vdwg.mxu0
    %3056 = vmatprep.subr.bf16.mxu0 %v2792
    %3057 = vmatpush1.bf16.msra.mxu0 %v2791
    %3058 = vmatprep.subr.bf16.mxu0 %v2794
    %3059 = vmatpush1.bf16.msra.mxu0 %v2793
    %3060 = vmatprep.subr.bf16.mxu0 %v2796
    %3061 = vmatpush1.bf16.msra.mxu0 %v2795
    %3062 = vmatprep.subr.bf16.mxu0 %v2798
    %3063 = vmatpush1.bf16.msra.mxu0 %v2797
    %3064 = vmatprep.subr.bf16.mxu0 %v2800
    %3065 = vmatpush1.bf16.msra.mxu0 %v2799
    %3066 = vmatprep.subr.bf16.mxu0 %v2802
    %3067 = vmatpush1.bf16.msra.mxu0 %v2801
    %3068 = vmatprep.subr.bf16.mxu0 %v2804
    %3069 = vmatpush1.bf16.msra.mxu0 %v2803
    %3070 = vmatprep.subr.bf16.mxu0 %v2806
    %3071 = vmatpush1.bf16.msra.mxu0 %v2805
    %3072 = vmatprep.subr.bf16.mxu0 %v2808
    %3073 = vmatpush1.bf16.msra.mxu0 %v2807
    %3074 = vmatprep.subr.bf16.mxu0 %v2810
    %3075 = vmatpush1.bf16.msra.mxu0 %v2809
    %3076 = vmatprep.subr.bf16.mxu0 %v2812
    %3077 = vmatpush1.bf16.msra.mxu0 %v2811
    %3078 = vmatprep.subr.bf16.mxu0 %v2814
    %3079 = vmatpush1.bf16.msra.mxu0 %v2813
    %3080 = vmatprep.subr.bf16.mxu0 %v2816
    %3081 = vmatpush1.bf16.msra.mxu0 %v2815
    %3082 = vmatprep.subr.bf16.mxu0 %v2818
    %3083 = vmatpush1.bf16.msra.mxu0 %v2817
    %3084 = vmatprep.subr.bf16.mxu0 %v2820
    %3085 = vmatpush1.bf16.msra.mxu0 %v2819
    %3086 = vmatprep.subr.bf16.mxu0 %v2822
    %3087 = vmatpush1.bf16.msra.mxu0 %v2821
    %3088 = vmatprep.mubr.bf16.mxu0 %v2230
    %3089 = vmatmul.mubr.bf16.gmra.mrb[0].mxu0 %v2229
    %v3090 = vpop.f32.mrb[0].mxu0
    %v3091 = vadd.f32 %v3050, %v3090
    %v3092 = vpop.f32.mrb[0].mxu0
    %v3093 = vadd.f32 %v3052, %v3092
    %v3094 = vpop.f32.mrb[0].mxu0
    %v3095 = vpop.f32.mrb[0].mxu0
    %3096 = vdwg.mxu0
    %3097 = vmatprep.subr.bf16.mxu0 %v2824
    %3098 = vmatpush1.bf16.msra.mxu0 %v2823
    %3099 = vmatprep.subr.bf16.mxu0 %v2826
    %3100 = vmatpush1.bf16.msra.mxu0 %v2825
    %3101 = vmatprep.subr.bf16.mxu0 %v2828
    %3102 = vmatpush1.bf16.msra.mxu0 %v2827
    %3103 = vmatprep.subr.bf16.mxu0 %v2830
    %3104 = vmatpush1.bf16.msra.mxu0 %v2829
    %3105 = vmatprep.subr.bf16.mxu0 %v2832
    %3106 = vmatpush1.bf16.msra.mxu0 %v2831
    %3107 = vmatprep.subr.bf16.mxu0 %v2834
    %3108 = vmatpush1.bf16.msra.mxu0 %v2833
    %3109 = vmatprep.subr.bf16.mxu0 %v2836
    %3110 = vmatpush1.bf16.msra.mxu0 %v2835
    %3111 = vmatprep.subr.bf16.mxu0 %v2838
    %3112 = vmatpush1.bf16.msra.mxu0 %v2837
    %3113 = vmatprep.subr.bf16.mxu0 %v2840
    %3114 = vmatpush1.bf16.msra.mxu0 %v2839
    %3115 = vmatprep.subr.bf16.mxu0 %v2842
    %3116 = vmatpush1.bf16.msra.mxu0 %v2841
    %3117 = vmatprep.subr.bf16.mxu0 %v2844
    %3118 = vmatpush1.bf16.msra.mxu0 %v2843
    %3119 = vmatprep.subr.bf16.mxu0 %v2846
    %3120 = vmatpush1.bf16.msra.mxu0 %v2845
    %3121 = vmatprep.subr.bf16.mxu0 %v2848
    %3122 = vmatpush1.bf16.msra.mxu0 %v2847
    %3123 = vmatprep.subr.bf16.mxu0 %v2850
    %3124 = vmatpush1.bf16.msra.mxu0 %v2849
    %3125 = vmatprep.subr.bf16.mxu0 %v2852
    %3126 = vmatpush1.bf16.msra.mxu0 %v2851
    %3127 = vmatprep.subr.bf16.mxu0 %v2854
    %3128 = vmatpush1.bf16.msra.mxu0 %v2853
    %3129 = vmatprep.mubr.bf16.mxu0 %v2232
    %3130 = vmatmul.mubr.bf16.gmra.mrb[0].mxu0 %v2231
    %v3131 = vpop.f32.mrb[0].mxu0
    %v3132 = vadd.f32 %v3091, %v3131
    %v3133 = vpop.f32.mrb[0].mxu0
    %v3134 = vadd.f32 %v3093, %v3133
    %v3135 = vpop.f32.mrb[0].mxu0
    %v3136 = vpop.f32.mrb[0].mxu0
    %3137 = vdwg.mxu0
    %3138 = vmatprep.subr.bf16.mxu0 %v2856
    %3139 = vmatpush1.bf16.msra.mxu0 %v2855
    %3140 = vmatprep.subr.bf16.mxu0 %v2858
    %3141 = vmatpush1.bf16.msra.mxu0 %v2857
    %3142 = vmatprep.subr.bf16.mxu0 %v2860
    %3143 = vmatpush1.bf16.msra.mxu0 %v2859
    %3144 = vmatprep.subr.bf16.mxu0 %v2862
    %3145 = vmatpush1.bf16.msra.mxu0 %v2861
    %3146 = vmatprep.subr.bf16.mxu0 %v2864
    %3147 = vmatpush1.bf16.msra.mxu0 %v2863
    %3148 = vmatprep.subr.bf16.mxu0 %v2866
    %3149 = vmatpush1.bf16.msra.mxu0 %v2865
    %3150 = vmatprep.subr.bf16.mxu0 %v2868
    %3151 = vmatpush1.bf16.msra.mxu0 %v2867
    %3152 = vmatprep.subr.bf16.mxu0 %v2870
    %3153 = vmatpush1.bf16.msra.mxu0 %v2869
    %3154 = vmatprep.subr.bf16.mxu0 %v2872
    %3155 = vmatpush1.bf16.msra.mxu0 %v2871
    %3156 = vmatprep.subr.bf16.mxu0 %v2874
    %3157 = vmatpush1.bf16.msra.mxu0 %v2873
    %3158 = vmatprep.subr.bf16.mxu0 %v2876
    %3159 = vmatpush1.bf16.msra.mxu0 %v2875
    %3160 = vmatprep.subr.bf16.mxu0 %v2878
    %3161 = vmatpush1.bf16.msra.mxu0 %v2877
    %3162 = vmatprep.subr.bf16.mxu0 %v2880
    %3163 = vmatpush1.bf16.msra.mxu0 %v2879
    %3164 = vmatprep.subr.bf16.mxu0 %v2882
    %3165 = vmatpush1.bf16.msra.mxu0 %v2881
    %3166 = vmatprep.subr.bf16.mxu0 %v2884
    %3167 = vmatpush1.bf16.msra.mxu0 %v2883
    %3168 = vmatprep.subr.bf16.mxu0 %v2886
    %3169 = vmatpush1.bf16.msra.mxu0 %v2885
    %3170 = vmatprep.mubr.bf16.mxu0 %v2234
    %3171 = vmatmul.mubr.bf16.gmra.mrb[0].mxu0 %v2233
    %v3172 = vpop.f32.mrb[0].mxu0
    %v3173 = vadd.f32 %v3132, %v3172
    %v3174 = vpop.f32.mrb[0].mxu0
    %v3175 = vadd.f32 %v3134, %v3174
    %v3176 = vpop.f32.mrb[0].mxu0
    %v3177 = vpop.f32.mrb[0].mxu0
    %3178 = vdwg.mxu0
    %v3179 = vsel %vm2041, %v3173, 0.0
    %v3180 = vrot.slane %v3179, 4
    %v3181 = vadd.f32 %v3179, %v3180
    %v3182 = vrot.slane %v3181, 2
    %v3183 = vadd.f32 %v3181, %v3182
    %v3184 = vrot.slane %v3183, 1
    %v3185 = vadd.f32 %v3183, %v3184
    %v3186 = vsel %vm2041, %v3175, 0.0
    %v3187 = vrot.slane %v3186, 4
    %v3188 = vadd.f32 %v3186, %v3187
    %v3189 = vrot.slane %v3188, 2
    %v3190 = vadd.f32 %v3188, %v3189
    %v3191 = vrot.slane %v3190, 1
    %v3192 = vadd.f32 %v3190, %v3191
    %v3193 = vadd.f32 %v3185, %v3192
    %v3194 = vmul.f32 %v3193, 0.125
    %v3195 = vlaneseq
    %v3196 = vshrl.u32 %v3195, 7
    %v3197 = vsub.s32 0, %v3196
    %v3198 = vrot.slane %v3194, %v3197
    %v3199 = vsub.f32 %v3173, %v3198
    %v3200 = vsub.f32 %v3175, %v3198
    %v3201 = vmul.f32 %v3199, %v3199
    %v3202 = vmul.f32 %v3200, %v3200
    %v3203 = vsel %vm2041, %v3201, 0.0
    %v3204 = vrot.slane %v3203, 4
    %v3205 = vadd.f32 %v3203, %v3204
    %v3206 = vrot.slane %v3205, 2
    %v3207 = vadd.f32 %v3205, %v3206
    %v3208 = vrot.slane %v3207, 1
    %v3209 = vadd.f32 %v3207, %v3208
    %v3210 = vsel %vm2041, %v3202, 0.0
    %v3211 = vrot.slane %v3210, 4
    %v3212 = vadd.f32 %v3210, %v3211
    %v3213 = vrot.slane %v3212, 2
    %v3214 = vadd.f32 %v3212, %v3213
    %v3215 = vrot.slane %v3214, 1
    %v3216 = vadd.f32 %v3214, %v3215
    %v3217 = vadd.f32 %v3209, %v3216
    %v3218 = vmul.f32 %v3217, 0.125
    %v3219 = vadd.f32 %v3218, 1e-05
    %v3220 = vrsqrt.pop %v3219
    %v3221 = vlaneseq
    %v3222 = vshrl.u32 %v3221, 7
    %v3223 = vsub.s32 0, %v3222
    %v3224 = vrot.slane %v3220, %v3223
    %v3225 = vmul.f32 %v3199, %v3224
    %v3226 = vmul.f32 %v3200, %v3224
    %s3227 = scalar_lea.vmem [#allocation9], 1
    %v3228 = vld [vmem:[%s3227] ss:$4 sm:$0x3]
    %v3230 = vlaneseq
    %v3231 = vshrl.u32 %v3230, 7
    %v3232 = vsub.s32 0, %v3231
    %v3233 = vrot.slane %v3228, %v3232
    %v3234 = vlaneseq
    %v3235 = vshrl.u32 %v3234, 7
    %v3236 = vsub.s32 1, %v3235
    %v3237 = vrot.slane %v3228, %v3236
    %v3240 = vmul.f32 %v3225, %v3233
    %v3241 = vmul.f32 %v3226, %v3237
    %s3242 = scalar_lea.vmem [#allocation9], 2
    %v3243 = vld [vmem:[%s3242] ss:$4 sm:$0x3]
    %v3245 = vlaneseq
    %v3246 = vshrl.u32 %v3245, 7
    %v3247 = vsub.s32 0, %v3246
    %v3248 = vrot.slane %v3243, %v3247
    %v3249 = vlaneseq
    %v3250 = vshrl.u32 %v3249, 7
    %v3251 = vsub.s32 1, %v3250
    %v3252 = vrot.slane %v3243, %v3251
    %v3255 = vadd.f32 %v3240, %v3248
    %v3256 = vadd.f32 %v3241, %v3252
    %v3257 = vmax.f32 %v3255, 0.0
    %v3258 = vmax.f32 %v3256, 0.0
    %v3259 = vpack.c.bf16 %v3257, %v3257
    %v3260 = vpack.c.bf16 %v3258, %v3258
    %v3261 = vld [vmem:[%s10] sm:$0x3]
    %vm3262 = vcmask 31744
    %v3264 = vsel %vm3262, %v3261, 0
    %vm3266 = vcmask 1041408
    %v3268 = vsel %vm3266, %v3259, 0
    %v3271 = vsel %vm3266, %v3260, 0
    %3273 = vmatprep.subr.bf16.mxu0 %v3271
    %3274 = vmatpush1.bf16.msra.mxu0 %v3268
    %3275 = vmatprep.subr.bf16.mxu0 0
    %3276 = vmatpush1.bf16.msra.mxu0 0
    %3277 = vmatprep.subr.bf16.mxu0 0
    %3278 = vmatpush1.bf16.msra.mxu0 0
    %3279 = vmatprep.subr.bf16.mxu0 0
    %3280 = vmatpush1.bf16.msra.mxu0 0
    %3281 = vmatprep.subr.bf16.mxu0 0
    %3282 = vmatpush1.bf16.msra.mxu0 0
    %3283 = vmatprep.subr.bf16.mxu0 0
    %3284 = vmatpush1.bf16.msra.mxu0 0
    %3285 = vmatprep.subr.bf16.mxu0 0
    %3286 = vmatpush1.bf16.msra.mxu0 0
    %3287 = vmatprep.subr.bf16.mxu0 0
    %3288 = vmatpush1.bf16.msra.mxu0 0
    %3289 = vmatprep.subr.bf16.mxu0 0
    %3290 = vmatpush1.bf16.msra.mxu0 0
    %3291 = vmatprep.subr.bf16.mxu0 0
    %3292 = vmatpush1.bf16.msra.mxu0 0
    %3293 = vmatprep.subr.bf16.mxu0 0
    %3294 = vmatpush1.bf16.msra.mxu0 0
    %3295 = vmatprep.subr.bf16.mxu0 0
    %3296 = vmatpush1.bf16.msra.mxu0 0
    %3297 = vmatprep.subr.bf16.mxu0 0
    %3298 = vmatpush1.bf16.msra.mxu0 0
    %3299 = vmatprep.subr.bf16.mxu0 0
    %3300 = vmatpush1.bf16.msra.mxu0 0
    %3301 = vmatprep.subr.bf16.mxu0 0
    %3302 = vmatpush1.bf16.msra.mxu0 0
    %3303 = vmatprep.subr.bf16.mxu0 0
    %3304 = vmatpush1.bf16.msra.mxu0 0
    %3305 = vmatprep.mubr.bf16.mxu0 0
    %3306 = vmatmul.mubr.bf16.gmra.mrb[0].mxu0 %v3264
    %v3307 = vpop.f32.mrb[0].mxu0
    %v3308 = vadd.f32 0.0, %v3307
    %v3309 = vpop.f32.mrb[0].mxu0
    %v3310 = vadd.f32 0.0, %v3309
    %v3311 = vpop.f32.mrb[0].mxu0
    %v3312 = vpop.f32.mrb[0].mxu0
    %3313 = vdwg.mxu0
    %s3314 = scalar_lea.vmem %s10, 2
    %v3315 = vld [vmem:[%s3314] sm:$0x3]
    %v3317 = vsel %vm3262, %v3315, 0
    %3319 = vmatprep.subr.bf16.mxu0 %v3271
    %3320 = vmatpush1.bf16.msra.mxu0 %v3268
    %3321 = vmatprep.subr.bf16.mxu0 0
    %3322 = vmatpush1.bf16.msra.mxu0 0
    %3323 = vmatprep.subr.bf16.mxu0 0
    %3324 = vmatpush1.bf16.msra.mxu0 0
    %3325 = vmatprep.subr.bf16.mxu0 0
    %3326 = vmatpush1.bf16.msra.mxu0 0
    %3327 = vmatprep.subr.bf16.mxu0 0
    %3328 = vmatpush1.bf16.msra.mxu0 0
    %3329 = vmatprep.subr.bf16.mxu0 0
    %3330 = vmatpush1.bf16.msra.mxu0 0
    %3331 = vmatprep.subr.bf16.mxu0 0
    %3332 = vmatpush1.bf16.msra.mxu0 0
    %3333 = vmatprep.subr.bf16.mxu0 0
    %3334 = vmatpush1.bf16.msra.mxu0 0
    %3335 = vmatprep.subr.bf16.mxu0 0
    %3336 = vmatpush1.bf16.msra.mxu0 0
    %3337 = vmatprep.subr.bf16.mxu0 0
    %3338 = vmatpush1.bf16.msra.mxu0 0
    %3339 = vmatprep.subr.bf16.mxu0 0
    %3340 = vmatpush1.bf16.msra.mxu0 0
    %3341 = vmatprep.subr.bf16.mxu0 0
    %3342 = vmatpush1.bf16.msra.mxu0 0
    %3343 = vmatprep.subr.bf16.mxu0 0
    %3344 = vmatpush1.bf16.msra.mxu0 0
    %3345 = vmatprep.subr.bf16.mxu0 0
    %3346 = vmatpush1.bf16.msra.mxu0 0
    %3347 = vmatprep.subr.bf16.mxu0 0
    %3348 = vmatpush1.bf16.msra.mxu0 0
    %3349 = vmatprep.subr.bf16.mxu0 0
    %3350 = vmatpush1.bf16.msra.mxu0 0
    %3351 = vmatprep.mubr.bf16.mxu0 0
    %3352 = vmatmul.mubr.bf16.gmra.mrb[0].mxu0 %v3317
    %v3353 = vpop.f32.mrb[0].mxu0
    %v3354 = vadd.f32 0.0, %v3353
    %v3355 = vpop.f32.mrb[0].mxu0
    %v3356 = vadd.f32 0.0, %v3355
    %v3357 = vpop.f32.mrb[0].mxu0
    %v3358 = vpop.f32.mrb[0].mxu0
    %3359 = vdwg.mxu0
    %s3360 = scalar_lea.vmem %s10, 4
    %v3361 = vld [vmem:[%s3360] sm:$0x3]
    %v3363 = vsel %vm3262, %v3361, 0
    %3365 = vmatprep.subr.bf16.mxu0 %v3271
    %3366 = vmatpush1.bf16.msra.mxu0 %v3268
    %3367 = vmatprep.subr.bf16.mxu0 0
    %3368 = vmatpush1.bf16.msra.mxu0 0
    %3369 = vmatprep.subr.bf16.mxu0 0
    %3370 = vmatpush1.bf16.msra.mxu0 0
    %3371 = vmatprep.subr.bf16.mxu0 0
    %3372 = vmatpush1.bf16.msra.mxu0 0
    %3373 = vmatprep.subr.bf16.mxu0 0
    %3374 = vmatpush1.bf16.msra.mxu0 0
    %3375 = vmatprep.subr.bf16.mxu0 0
    %3376 = vmatpush1.bf16.msra.mxu0 0
    %3377 = vmatprep.subr.bf16.mxu0 0
    %3378 = vmatpush1.bf16.msra.mxu0 0
    %3379 = vmatprep.subr.bf16.mxu0 0
    %3380 = vmatpush1.bf16.msra.mxu0 0
    %3381 = vmatprep.subr.bf16.mxu0 0
    %3382 = vmatpush1.bf16.msra.mxu0 0
    %3383 = vmatprep.subr.bf16.mxu0 0
    %3384 = vmatpush1.bf16.msra.mxu0 0
    %3385 = vmatprep.subr.bf16.mxu0 0
    %3386 = vmatpush1.bf16.msra.mxu0 0
    %3387 = vmatprep.subr.bf16.mxu0 0
    %3388 = vmatpush1.bf16.msra.mxu0 0
    %3389 = vmatprep.subr.bf16.mxu0 0
    %3390 = vmatpush1.bf16.msra.mxu0 0
    %3391 = vmatprep.subr.bf16.mxu0 0
    %3392 = vmatpush1.bf16.msra.mxu0 0
    %3393 = vmatprep.subr.bf16.mxu0 0
    %3394 = vmatpush1.bf16.msra.mxu0 0
    %3395 = vmatprep.subr.bf16.mxu0 0
    %3396 = vmatpush1.bf16.msra.mxu0 0
    %3397 = vmatprep.mubr.bf16.mxu0 0
    %3398 = vmatmul.mubr.bf16.gmra.mrb[0].mxu0 %v3363
    %v3399 = vpop.f32.mrb[0].mxu0
    %v3400 = vadd.f32 0.0, %v3399
    %v3401 = vpop.f32.mrb[0].mxu0
    %v3402 = vadd.f32 0.0, %v3401
    %v3403 = vpop.f32.mrb[0].mxu0
    %v3404 = vpop.f32.mrb[0].mxu0
    %3405 = vdwg.mxu0
    %v3406 = vpack.c.bf16 %v3308, %v3308
    %v3407 = vpack.c.bf16 %v3310, %v3310
    %v3408 = vpack.c.bf16 %v3354, %v3354
    %v3409 = vpack.c.bf16 %v3356, %v3356
    %v3410 = vpack.c.bf16 %v3400, %v3400
    %v3411 = vpack.c.bf16 %v3402, %v3402
    %v3412 = vld [vmem:[#allocation10] sm:$0xff]
    %v3413 = vld [vmem:[#allocation10 + $0x8] sm:$0xff]
    %v3414 = vld [vmem:[#allocation10 + $0x10] sm:$0xff]
    %v3415 = vld [vmem:[#allocation10 + $0x18] sm:$0xff]
    %v3416 = vld [vmem:[#allocation10 + $0x20] sm:$0xff]
    %v3417 = vld [vmem:[#allocation10 + $0x28] sm:$0xff]
    %v3418 = vld [vmem:[#allocation10 + $0x30] sm:$0xff]
    %v3419 = vld [vmem:[#allocation10 + $0x38] sm:$0xff]
    %v3420 = vld [vmem:[#allocation10 + $0x40] sm:$0xff]
    %v3421 = vld [vmem:[#allocation10 + $0x48] sm:$0xff]
    %v3422 = vld [vmem:[#allocation10 + $0x50] sm:$0xff]
    %v3423 = vld [vmem:[#allocation10 + $0x58] sm:$0xff]
    %v3424 = vld [vmem:[#allocation10 + $0x60] sm:$0xff]
    %v3425 = vld [vmem:[#allocation10 + $0x68] sm:$0xff]
    %v3426 = vld [vmem:[#allocation10 + $0x70] sm:$0xff]
    %v3427 = vld [vmem:[#allocation10 + $0x78] sm:$0xff]
    %v3428 = vld [vmem:[#allocation10 + $0x80] sm:$0xff]
    %v3429 = vld [vmem:[#allocation10 + $0x88] sm:$0xff]
    %v3430 = vld [vmem:[#allocation10 + $0x90] sm:$0xff]
    %v3431 = vld [vmem:[#allocation10 + $0x98] sm:$0xff]
    %v3432 = vld [vmem:[#allocation10 + $0xa0] sm:$0xff]
    %v3433 = vld [vmem:[#allocation10 + $0xa8] sm:$0xff]
    %v3434 = vld [vmem:[#allocation10 + $0xb0] sm:$0xff]
    %v3435 = vld [vmem:[#allocation10 + $0xb8] sm:$0xff]
    %v3436 = vld [vmem:[#allocation10 + $0xc0] sm:$0xff]
    %v3437 = vld [vmem:[#allocation10 + $0xc8] sm:$0xff]
    %v3438 = vld [vmem:[#allocation10 + $0xd0] sm:$0xff]
    %v3439 = vld [vmem:[#allocation10 + $0xd8] sm:$0xff]
    %v3440 = vld [vmem:[#allocation10 + $0xe0] sm:$0xff]
    %v3441 = vld [vmem:[#allocation10 + $0xe8] sm:$0xff]
    %v3442 = vld [vmem:[#allocation10 + $0xf0] sm:$0xff]
    %v3443 = vld [vmem:[#allocation10 + $0xf8] sm:$0xff]
    %v3444 = vld [vmem:[#allocation10 + $0x100] sm:$0xff]
    %v3445 = vld [vmem:[#allocation10 + $0x108] sm:$0xff]
    %v3446 = vld [vmem:[#allocation10 + $0x110] sm:$0xff]
    %v3447 = vld [vmem:[#allocation10 + $0x118] sm:$0xff]
    %v3448 = vld [vmem:[#allocation10 + $0x120] sm:$0xff]
    %v3449 = vld [vmem:[#allocation10 + $0x128] sm:$0xff]
    %v3450 = vld [vmem:[#allocation10 + $0x130] sm:$0xff]
    %v3451 = vld [vmem:[#allocation10 + $0x138] sm:$0xff]
    %v3452 = vld [vmem:[#allocation10 + $0x140] sm:$0xff]
    %v3453 = vld [vmem:[#allocation10 + $0x148] sm:$0xff]
    %v3454 = vld [vmem:[#allocation10 + $0x150] sm:$0xff]
    %v3455 = vld [vmem:[#allocation10 + $0x158] sm:$0xff]
    %v3456 = vld [vmem:[#allocation10 + $0x160] sm:$0xff]
    %v3457 = vld [vmem:[#allocation10 + $0x168] sm:$0xff]
    %v3458 = vld [vmem:[#allocation10 + $0x170] sm:$0xff]
    %v3459 = vld [vmem:[#allocation10 + $0x178] sm:$0xff]
    %v3460 = vld [vmem:[#allocation10 + $0x180] sm:$0xff]
    %v3461 = vld [vmem:[#allocation10 + $0x188] sm:$0xff]
    %v3462 = vld [vmem:[#allocation10 + $0x190] sm:$0xff]
    %v3463 = vld [vmem:[#allocation10 + $0x198] sm:$0xff]
    %v3464 = vld [vmem:[#allocation10 + $0x1a0] sm:$0xff]
    %v3465 = vld [vmem:[#allocation10 + $0x1a8] sm:$0xff]
    %v3466 = vld [vmem:[#allocation10 + $0x1b0] sm:$0xff]
    %v3467 = vld [vmem:[#allocation10 + $0x1b8] sm:$0xff]
    %v3468 = vld [vmem:[#allocation10 + $0x1c0] sm:$0xff]
    %v3469 = vld [vmem:[#allocation10 + $0x1c8] sm:$0xff]
    %v3470 = vld [vmem:[#allocation10 + $0x1d0] sm:$0xff]
    %v3471 = vld [vmem:[#allocation10 + $0x1d8] sm:$0xff]
    %v3472 = vld [vmem:[#allocation10 + $0x1e0] sm:$0xff]
    %v3473 = vld [vmem:[#allocation10 + $0x1e8] sm:$0xff]
    %v3474 = vld [vmem:[#allocation10 + $0x1f0] sm:$0xff]
    %v3475 = vld [vmem:[#allocation10 + $0x1f8] sm:$0xff]
    %v3476 = vld [vmem:[#allocation10 + $0x200] sm:$0xff]
    %v3477 = vld [vmem:[#allocation10 + $0x208] sm:$0xff]
    %v3478 = vld [vmem:[#allocation10 + $0x210] sm:$0xff]
    %v3479 = vld [vmem:[#allocation10 + $0x218] sm:$0xff]
    %v3480 = vld [vmem:[#allocation10 + $0x220] sm:$0xff]
    %v3481 = vld [vmem:[#allocation10 + $0x228] sm:$0xff]
    %v3482 = vld [vmem:[#allocation10 + $0x230] sm:$0xff]
    %v3483 = vld [vmem:[#allocation10 + $0x238] sm:$0xff]
    %v3484 = vld [vmem:[#allocation10 + $0x240] sm:$0xff]
    %v3485 = vld [vmem:[#allocation10 + $0x248] sm:$0xff]
    %v3486 = vld [vmem:[#allocation10 + $0x250] sm:$0xff]
    %v3487 = vld [vmem:[#allocation10 + $0x258] sm:$0xff]
    %v3488 = vld [vmem:[#allocation10 + $0x260] sm:$0xff]
    %v3489 = vld [vmem:[#allocation10 + $0x268] sm:$0xff]
    %v3490 = vld [vmem:[#allocation10 + $0x270] sm:$0xff]
    %v3491 = vld [vmem:[#allocation10 + $0x278] sm:$0xff]
    %v3492 = vld [vmem:[#allocation10 + $0x280] sm:$0xff]
    %v3493 = vld [vmem:[#allocation10 + $0x288] sm:$0xff]
    %v3494 = vld [vmem:[#allocation10 + $0x290] sm:$0xff]
    %v3495 = vld [vmem:[#allocation10 + $0x298] sm:$0xff]
    %v3496 = vld [vmem:[#allocation10 + $0x2a0] sm:$0xff]
    %v3497 = vld [vmem:[#allocation10 + $0x2a8] sm:$0xff]
    %v3498 = vld [vmem:[#allocation10 + $0x2b0] sm:$0xff]
    %v3499 = vld [vmem:[#allocation10 + $0x2b8] sm:$0xff]
    %v3500 = vld [vmem:[#allocation10 + $0x2c0] sm:$0xff]
    %v3501 = vld [vmem:[#allocation10 + $0x2c8] sm:$0xff]
    %v3502 = vld [vmem:[#allocation10 + $0x2d0] sm:$0xff]
    %v3503 = vld [vmem:[#allocation10 + $0x2d8] sm:$0xff]
    %v3504 = vld [vmem:[#allocation10 + $0x2e0] sm:$0xff]
    %v3505 = vld [vmem:[#allocation10 + $0x2e8] sm:$0xff]
    %v3506 = vld [vmem:[#allocation10 + $0x2f0] sm:$0xff]
    %v3507 = vld [vmem:[#allocation10 + $0x2f8] sm:$0xff]
    %v3508 = vld [vmem:[#allocation10 + $0x300] sm:$0xff]
    %v3509 = vld [vmem:[#allocation10 + $0x308] sm:$0xff]
    %v3510 = vld [vmem:[#allocation10 + $0x310] sm:$0xff]
    %v3511 = vld [vmem:[#allocation10 + $0x318] sm:$0xff]
    %v3512 = vld [vmem:[#allocation10 + $0x320] sm:$0xff]
    %v3513 = vld [vmem:[#allocation10 + $0x328] sm:$0xff]
    %v3514 = vld [vmem:[#allocation10 + $0x330] sm:$0xff]
    %v3515 = vld [vmem:[#allocation10 + $0x338] sm:$0xff]
    %v3516 = vld [vmem:[#allocation10 + $0x340] sm:$0xff]
    %v3517 = vld [vmem:[#allocation10 + $0x348] sm:$0xff]
    %v3518 = vld [vmem:[#allocation10 + $0x350] sm:$0xff]
    %v3519 = vld [vmem:[#allocation10 + $0x358] sm:$0xff]
    %v3520 = vld [vmem:[#allocation10 + $0x360] sm:$0xff]
    %v3521 = vld [vmem:[#allocation10 + $0x368] sm:$0xff]
    %v3522 = vld [vmem:[#allocation10 + $0x370] sm:$0xff]
    %v3523 = vld [vmem:[#allocation10 + $0x378] sm:$0xff]
    %v3524 = vld [vmem:[#allocation10 + $0x380] sm:$0xff]
    %v3525 = vld [vmem:[#allocation10 + $0x388] sm:$0xff]
    %v3526 = vld [vmem:[#allocation10 + $0x390] sm:$0xff]
    %v3527 = vld [vmem:[#allocation10 + $0x398] sm:$0xff]
    %v3528 = vld [vmem:[#allocation10 + $0x3a0] sm:$0xff]
    %v3529 = vld [vmem:[#allocation10 + $0x3a8] sm:$0xff]
    %v3530 = vld [vmem:[#allocation10 + $0x3b0] sm:$0xff]
    %v3531 = vld [vmem:[#allocation10 + $0x3b8] sm:$0xff]
    %v3532 = vld [vmem:[#allocation10 + $0x3c0] sm:$0xff]
    %v3533 = vld [vmem:[#allocation10 + $0x3c8] sm:$0xff]
    %v3534 = vld [vmem:[#allocation10 + $0x3d0] sm:$0xff]
    %v3535 = vld [vmem:[#allocation10 + $0x3d8] sm:$0xff]
    %v3536 = vld [vmem:[#allocation10 + $0x3e0] sm:$0xff]
    %v3537 = vld [vmem:[#allocation10 + $0x3e8] sm:$0xff]
    %v3538 = vld [vmem:[#allocation10 + $0x3f0] sm:$0xff]
    %v3539 = vld [vmem:[#allocation10 + $0x3f8] sm:$0xff]
    %v3540 = vld [vmem:[#allocation10 + $0x400] sm:$0xff]
    %v3541 = vld [vmem:[#allocation10 + $0x408] sm:$0xff]
    %v3542 = vld [vmem:[#allocation10 + $0x410] sm:$0xff]
    %v3543 = vld [vmem:[#allocation10 + $0x418] sm:$0xff]
    %v3544 = vld [vmem:[#allocation10 + $0x420] sm:$0xff]
    %v3545 = vld [vmem:[#allocation10 + $0x428] sm:$0xff]
    %v3546 = vld [vmem:[#allocation10 + $0x430] sm:$0xff]
    %v3547 = vld [vmem:[#allocation10 + $0x438] sm:$0xff]
    %v3548 = vld [vmem:[#allocation10 + $0x440] sm:$0xff]
    %v3549 = vld [vmem:[#allocation10 + $0x448] sm:$0xff]
    %v3550 = vld [vmem:[#allocation10 + $0x450] sm:$0xff]
    %v3551 = vld [vmem:[#allocation10 + $0x458] sm:$0xff]
    %v3552 = vld [vmem:[#allocation10 + $0x460] sm:$0xff]
    %v3553 = vld [vmem:[#allocation10 + $0x468] sm:$0xff]
    %v3554 = vld [vmem:[#allocation10 + $0x470] sm:$0xff]
    %v3555 = vld [vmem:[#allocation10 + $0x478] sm:$0xff]
    %v3556 = vld [vmem:[#allocation10 + $0x480] sm:$0xff]
    %v3557 = vld [vmem:[#allocation10 + $0x488] sm:$0xff]
    %v3558 = vld [vmem:[#allocation10 + $0x490] sm:$0xff]
    %v3559 = vld [vmem:[#allocation10 + $0x498] sm:$0xff]
    %v3560 = vld [vmem:[#allocation10 + $0x4a0] sm:$0xff]
    %v3561 = vld [vmem:[#allocation10 + $0x4a8] sm:$0xff]
    %v3562 = vld [vmem:[#allocation10 + $0x4b0] sm:$0xff]
    %v3563 = vld [vmem:[#allocation10 + $0x4b8] sm:$0xff]
    %v3564 = vld [vmem:[#allocation10 + $0x4c0] sm:$0xff]
    %v3565 = vld [vmem:[#allocation10 + $0x4c8] sm:$0xff]
    %v3566 = vld [vmem:[#allocation10 + $0x4d0] sm:$0xff]
    %v3567 = vld [vmem:[#allocation10 + $0x4d8] sm:$0xff]
    %v3568 = vld [vmem:[#allocation10 + $0x4e0] sm:$0xff]
    %v3569 = vld [vmem:[#allocation10 + $0x4e8] sm:$0xff]
    %v3570 = vld [vmem:[#allocation10 + $0x4f0] sm:$0xff]
    %v3571 = vld [vmem:[#allocation10 + $0x4f8] sm:$0xff]
    %v3572 = vld [vmem:[#allocation10 + $0x500] sm:$0xff]
    %v3573 = vld [vmem:[#allocation10 + $0x508] sm:$0xff]
    %v3574 = vld [vmem:[#allocation10 + $0x510] sm:$0xff]
    %v3575 = vld [vmem:[#allocation10 + $0x518] sm:$0xff]
    %v3576 = vld [vmem:[#allocation10 + $0x520] sm:$0xff]
    %v3577 = vld [vmem:[#allocation10 + $0x528] sm:$0xff]
    %v3578 = vld [vmem:[#allocation10 + $0x530] sm:$0xff]
    %v3579 = vld [vmem:[#allocation10 + $0x538] sm:$0xff]
    %v3580 = vld [vmem:[#allocation10 + $0x540] sm:$0xff]
    %v3581 = vld [vmem:[#allocation10 + $0x548] sm:$0xff]
    %v3582 = vld [vmem:[#allocation10 + $0x550] sm:$0xff]
    %v3583 = vld [vmem:[#allocation10 + $0x558] sm:$0xff]
    %v3584 = vld [vmem:[#allocation10 + $0x560] sm:$0xff]
    %v3585 = vld [vmem:[#allocation10 + $0x568] sm:$0xff]
    %v3586 = vld [vmem:[#allocation10 + $0x570] sm:$0xff]
    %v3587 = vld [vmem:[#allocation10 + $0x578] sm:$0xff]
    %v3588 = vld [vmem:[#allocation10 + $0x580] sm:$0xff]
    %v3589 = vld [vmem:[#allocation10 + $0x588] sm:$0xff]
    %v3590 = vld [vmem:[#allocation10 + $0x590] sm:$0xff]
    %v3591 = vld [vmem:[#allocation10 + $0x598] sm:$0xff]
    %v3592 = vld [vmem:[#allocation10 + $0x5a0] sm:$0xff]
    %v3593 = vld [vmem:[#allocation10 + $0x5a8] sm:$0xff]
    %v3594 = vld [vmem:[#allocation10 + $0x5b0] sm:$0xff]
    %v3595 = vld [vmem:[#allocation10 + $0x5b8] sm:$0xff]
    %v3596 = vld [vmem:[#allocation10 + $0x5c0] sm:$0xff]
    %v3597 = vld [vmem:[#allocation10 + $0x5c8] sm:$0xff]
    %v3598 = vld [vmem:[#allocation10 + $0x5d0] sm:$0xff]
    %v3599 = vld [vmem:[#allocation10 + $0x5d8] sm:$0xff]
    %v3600 = vld [vmem:[#allocation10 + $0x5e0] sm:$0xff]
    %v3601 = vld [vmem:[#allocation10 + $0x5e8] sm:$0xff]
    %v3602 = vld [vmem:[#allocation10 + $0x5f0] sm:$0xff]
    %v3603 = vld [vmem:[#allocation10 + $0x5f8] sm:$0xff]
    %v3796 = vunpack.c.l.b16 %v3412
    %v3797 = vunpack.c.h.b16 %v3412
    %v3798 = vunpack.c.l.b16 %v3413
    %v3799 = vunpack.c.h.b16 %v3413
    %v3800 = vunpack.c.l.b16 %v3414
    %v3801 = vunpack.c.h.b16 %v3414
    %v3802 = vunpack.c.l.b16 %v3415
    %v3803 = vunpack.c.h.b16 %v3415
    %v3804 = vunpack.c.l.b16 %v3416
    %v3805 = vunpack.c.h.b16 %v3416
    %v3806 = vunpack.c.l.b16 %v3417
    %v3807 = vunpack.c.h.b16 %v3417
    %v3808 = vunpack.c.l.b16 %v3418
    %v3809 = vunpack.c.h.b16 %v3418
    %v3810 = vunpack.c.l.b16 %v3419
    %v3811 = vunpack.c.h.b16 %v3419
    %v3812 = vunpack.c.l.b16 %v3420
    %v3813 = vunpack.c.h.b16 %v3420
    %v3814 = vunpack.c.l.b16 %v3421
    %v3815 = vunpack.c.h.b16 %v3421
    %v3816 = vunpack.c.l.b16 %v3422
    %v3817 = vunpack.c.h.b16 %v3422
    %v3818 = vunpack.c.l.b16 %v3423
    %v3819 = vunpack.c.h.b16 %v3423
    %v3820 = vunpack.c.l.b16 %v3424
    %v3821 = vunpack.c.h.b16 %v3424
    %v3822 = vunpack.c.l.b16 %v3425
    %v3823 = vunpack.c.h.b16 %v3425
    %v3824 = vunpack.c.l.b16 %v3426
    %v3825 = vunpack.c.h.b16 %v3426
    %v3826 = vunpack.c.l.b16 %v3427
    %v3827 = vunpack.c.h.b16 %v3427
    %v3828 = vunpack.c.l.b16 %v3428
    %v3829 = vunpack.c.h.b16 %v3428
    %v3830 = vunpack.c.l.b16 %v3429
    %v3831 = vunpack.c.h.b16 %v3429
    %v3832 = vunpack.c.l.b16 %v3430
    %v3833 = vunpack.c.h.b16 %v3430
    %v3834 = vunpack.c.l.b16 %v3431
    %v3835 = vunpack.c.h.b16 %v3431
    %v3836 = vunpack.c.l.b16 %v3432
    %v3837 = vunpack.c.h.b16 %v3432
    %v3838 = vunpack.c.l.b16 %v3433
    %v3839 = vunpack.c.h.b16 %v3433
    %v3840 = vunpack.c.l.b16 %v3434
    %v3841 = vunpack.c.h.b16 %v3434
    %v3842 = vunpack.c.l.b16 %v3435
    %v3843 = vunpack.c.h.b16 %v3435
    %v3844 = vunpack.c.l.b16 %v3436
    %v3845 = vunpack.c.h.b16 %v3436
    %v3846 = vunpack.c.l.b16 %v3437
    %v3847 = vunpack.c.h.b16 %v3437
    %v3848 = vunpack.c.l.b16 %v3438
    %v3849 = vunpack.c.h.b16 %v3438
    %v3850 = vunpack.c.l.b16 %v3439
    %v3851 = vunpack.c.h.b16 %v3439
    %v3852 = vunpack.c.l.b16 %v3440
    %v3853 = vunpack.c.h.b16 %v3440
    %v3854 = vunpack.c.l.b16 %v3441
    %v3855 = vunpack.c.h.b16 %v3441
    %v3856 = vunpack.c.l.b16 %v3442
    %v3857 = vunpack.c.h.b16 %v3442
    %v3858 = vunpack.c.l.b16 %v3443
    %v3859 = vunpack.c.h.b16 %v3443
    %v3860 = vunpack.c.l.b16 %v3444
    %v3861 = vunpack.c.h.b16 %v3444
    %v3862 = vunpack.c.l.b16 %v3445
    %v3863 = vunpack.c.h.b16 %v3445
    %v3864 = vunpack.c.l.b16 %v3446
    %v3865 = vunpack.c.h.b16 %v3446
    %v3866 = vunpack.c.l.b16 %v3447
    %v3867 = vunpack.c.h.b16 %v3447
    %v3868 = vunpack.c.l.b16 %v3448
    %v3869 = vunpack.c.h.b16 %v3448
    %v3870 = vunpack.c.l.b16 %v3449
    %v3871 = vunpack.c.h.b16 %v3449
    %v3872 = vunpack.c.l.b16 %v3450
    %v3873 = vunpack.c.h.b16 %v3450
    %v3874 = vunpack.c.l.b16 %v3451
    %v3875 = vunpack.c.h.b16 %v3451
    %v3876 = vunpack.c.l.b16 %v3452
    %v3877 = vunpack.c.h.b16 %v3452
    %v3878 = vunpack.c.l.b16 %v3453
    %v3879 = vunpack.c.h.b16 %v3453
    %v3880 = vunpack.c.l.b16 %v3454
    %v3881 = vunpack.c.h.b16 %v3454
    %v3882 = vunpack.c.l.b16 %v3455
    %v3883 = vunpack.c.h.b16 %v3455
    %v3884 = vunpack.c.l.b16 %v3456
    %v3885 = vunpack.c.h.b16 %v3456
    %v3886 = vunpack.c.l.b16 %v3457
    %v3887 = vunpack.c.h.b16 %v3457
    %v3888 = vunpack.c.l.b16 %v3458
    %v3889 = vunpack.c.h.b16 %v3458
    %v3890 = vunpack.c.l.b16 %v3459
    %v3891 = vunpack.c.h.b16 %v3459
    %v3892 = vunpack.c.l.b16 %v3460
    %v3893 = vunpack.c.h.b16 %v3460
    %v3894 = vunpack.c.l.b16 %v3461
    %v3895 = vunpack.c.h.b16 %v3461
    %v3896 = vunpack.c.l.b16 %v3462
    %v3897 = vunpack.c.h.b16 %v3462
    %v3898 = vunpack.c.l.b16 %v3463
    %v3899 = vunpack.c.h.b16 %v3463
    %v3900 = vunpack.c.l.b16 %v3464
    %v3901 = vunpack.c.h.b16 %v3464
    %v3902 = vunpack.c.l.b16 %v3465
    %v3903 = vunpack.c.h.b16 %v3465
    %v3904 = vunpack.c.l.b16 %v3466
    %v3905 = vunpack.c.h.b16 %v3466
    %v3906 = vunpack.c.l.b16 %v3467
    %v3907 = vunpack.c.h.b16 %v3467
    %v3908 = vunpack.c.l.b16 %v3468
    %v3909 = vunpack.c.h.b16 %v3468
    %v3910 = vunpack.c.l.b16 %v3469
    %v3911 = vunpack.c.h.b16 %v3469
    %v3912 = vunpack.c.l.b16 %v3470
    %v3913 = vunpack.c.h.b16 %v3470
    %v3914 = vunpack.c.l.b16 %v3471
    %v3915 = vunpack.c.h.b16 %v3471
    %v3916 = vunpack.c.l.b16 %v3472
    %v3917 = vunpack.c.h.b16 %v3472
    %v3918 = vunpack.c.l.b16 %v3473
    %v3919 = vunpack.c.h.b16 %v3473
    %v3920 = vunpack.c.l.b16 %v3474
    %v3921 = vunpack.c.h.b16 %v3474
    %v3922 = vunpack.c.l.b16 %v3475
    %v3923 = vunpack.c.h.b16 %v3475
    %v3924 = vunpack.c.l.b16 %v3476
    %v3925 = vunpack.c.h.b16 %v3476
    %v3926 = vunpack.c.l.b16 %v3477
    %v3927 = vunpack.c.h.b16 %v3477
    %v3928 = vunpack.c.l.b16 %v3478
    %v3929 = vunpack.c.h.b16 %v3478
    %v3930 = vunpack.c.l.b16 %v3479
    %v3931 = vunpack.c.h.b16 %v3479
    %v3932 = vunpack.c.l.b16 %v3480
    %v3933 = vunpack.c.h.b16 %v3480
    %v3934 = vunpack.c.l.b16 %v3481
    %v3935 = vunpack.c.h.b16 %v3481
    %v3936 = vunpack.c.l.b16 %v3482
    %v3937 = vunpack.c.h.b16 %v3482
    %v3938 = vunpack.c.l.b16 %v3483
    %v3939 = vunpack.c.h.b16 %v3483
    %v3940 = vunpack.c.l.b16 %v3484
    %v3941 = vunpack.c.h.b16 %v3484
    %v3942 = vunpack.c.l.b16 %v3485
    %v3943 = vunpack.c.h.b16 %v3485
    %v3944 = vunpack.c.l.b16 %v3486
    %v3945 = vunpack.c.h.b16 %v3486
    %v3946 = vunpack.c.l.b16 %v3487
    %v3947 = vunpack.c.h.b16 %v3487
    %v3948 = vunpack.c.l.b16 %v3488
    %v3949 = vunpack.c.h.b16 %v3488
    %v3950 = vunpack.c.l.b16 %v3489
    %v3951 = vunpack.c.h.b16 %v3489
    %v3952 = vunpack.c.l.b16 %v3490
    %v3953 = vunpack.c.h.b16 %v3490
    %v3954 = vunpack.c.l.b16 %v3491
    %v3955 = vunpack.c.h.b16 %v3491
    %v3956 = vunpack.c.l.b16 %v3492
    %v3957 = vunpack.c.h.b16 %v3492
    %v3958 = vunpack.c.l.b16 %v3493
    %v3959 = vunpack.c.h.b16 %v3493
    %v3960 = vunpack.c.l.b16 %v3494
    %v3961 = vunpack.c.h.b16 %v3494
    %v3962 = vunpack.c.l.b16 %v3495
    %v3963 = vunpack.c.h.b16 %v3495
    %v3964 = vunpack.c.l.b16 %v3496
    %v3965 = vunpack.c.h.b16 %v3496
    %v3966 = vunpack.c.l.b16 %v3497
    %v3967 = vunpack.c.h.b16 %v3497
    %v3968 = vunpack.c.l.b16 %v3498
    %v3969 = vunpack.c.h.b16 %v3498
    %v3970 = vunpack.c.l.b16 %v3499
    %v3971 = vunpack.c.h.b16 %v3499
    %v3972 = vunpack.c.l.b16 %v3500
    %v3973 = vunpack.c.h.b16 %v3500
    %v3974 = vunpack.c.l.b16 %v3501
    %v3975 = vunpack.c.h.b16 %v3501
    %v3976 = vunpack.c.l.b16 %v3502
    %v3977 = vunpack.c.h.b16 %v3502
    %v3978 = vunpack.c.l.b16 %v3503
    %v3979 = vunpack.c.h.b16 %v3503
    %v3980 = vunpack.c.l.b16 %v3504
    %v3981 = vunpack.c.h.b16 %v3504
    %v3982 = vunpack.c.l.b16 %v3505
    %v3983 = vunpack.c.h.b16 %v3505
    %v3984 = vunpack.c.l.b16 %v3506
    %v3985 = vunpack.c.h.b16 %v3506
    %v3986 = vunpack.c.l.b16 %v3507
    %v3987 = vunpack.c.h.b16 %v3507
    %v3988 = vunpack.c.l.b16 %v3508
    %v3989 = vunpack.c.h.b16 %v3508
    %v3990 = vunpack.c.l.b16 %v3509
    %v3991 = vunpack.c.h.b16 %v3509
    %v3992 = vunpack.c.l.b16 %v3510
    %v3993 = vunpack.c.h.b16 %v3510
    %v3994 = vunpack.c.l.b16 %v3511
    %v3995 = vunpack.c.h.b16 %v3511
    %v3996 = vunpack.c.l.b16 %v3512
    %v3997 = vunpack.c.h.b16 %v3512
    %v3998 = vunpack.c.l.b16 %v3513
    %v3999 = vunpack.c.h.b16 %v3513
    %v4000 = vunpack.c.l.b16 %v3514
    %v4001 = vunpack.c.h.b16 %v3514
    %v4002 = vunpack.c.l.b16 %v3515
    %v4003 = vunpack.c.h.b16 %v3515
    %v4004 = vunpack.c.l.b16 %v3516
    %v4005 = vunpack.c.h.b16 %v3516
    %v4006 = vunpack.c.l.b16 %v3517
    %v4007 = vunpack.c.h.b16 %v3517
    %v4008 = vunpack.c.l.b16 %v3518
    %v4009 = vunpack.c.h.b16 %v3518
    %v4010 = vunpack.c.l.b16 %v3519
    %v4011 = vunpack.c.h.b16 %v3519
    %v4012 = vunpack.c.l.b16 %v3520
    %v4013 = vunpack.c.h.b16 %v3520
    %v4014 = vunpack.c.l.b16 %v3521
    %v4015 = vunpack.c.h.b16 %v3521
    %v4016 = vunpack.c.l.b16 %v3522
    %v4017 = vunpack.c.h.b16 %v3522
    %v4018 = vunpack.c.l.b16 %v3523
    %v4019 = vunpack.c.h.b16 %v3523
    %v4020 = vunpack.c.l.b16 %v3524
    %v4021 = vunpack.c.h.b16 %v3524
    %v4022 = vunpack.c.l.b16 %v3525
    %v4023 = vunpack.c.h.b16 %v3525
    %v4024 = vunpack.c.l.b16 %v3526
    %v4025 = vunpack.c.h.b16 %v3526
    %v4026 = vunpack.c.l.b16 %v3527
    %v4027 = vunpack.c.h.b16 %v3527
    %v4028 = vunpack.c.l.b16 %v3528
    %v4029 = vunpack.c.h.b16 %v3528
    %v4030 = vunpack.c.l.b16 %v3529
    %v4031 = vunpack.c.h.b16 %v3529
    %v4032 = vunpack.c.l.b16 %v3530
    %v4033 = vunpack.c.h.b16 %v3530
    %v4034 = vunpack.c.l.b16 %v3531
    %v4035 = vunpack.c.h.b16 %v3531
    %v4036 = vunpack.c.l.b16 %v3532
    %v4037 = vunpack.c.h.b16 %v3532
    %v4038 = vunpack.c.l.b16 %v3533
    %v4039 = vunpack.c.h.b16 %v3533
    %v4040 = vunpack.c.l.b16 %v3534
    %v4041 = vunpack.c.h.b16 %v3534
    %v4042 = vunpack.c.l.b16 %v3535
    %v4043 = vunpack.c.h.b16 %v3535
    %v4044 = vunpack.c.l.b16 %v3536
    %v4045 = vunpack.c.h.b16 %v3536
    %v4046 = vunpack.c.l.b16 %v3537
    %v4047 = vunpack.c.h.b16 %v3537
    %v4048 = vunpack.c.l.b16 %v3538
    %v4049 = vunpack.c.h.b16 %v3538
    %v4050 = vunpack.c.l.b16 %v3539
    %v4051 = vunpack.c.h.b16 %v3539
    %v4052 = vunpack.c.l.b16 %v3540
    %v4053 = vunpack.c.h.b16 %v3540
    %v4054 = vunpack.c.l.b16 %v3541
    %v4055 = vunpack.c.h.b16 %v3541
    %v4056 = vunpack.c.l.b16 %v3542
    %v4057 = vunpack.c.h.b16 %v3542
    %v4058 = vunpack.c.l.b16 %v3543
    %v4059 = vunpack.c.h.b16 %v3543
    %v4060 = vunpack.c.l.b16 %v3544
    %v4061 = vunpack.c.h.b16 %v3544
    %v4062 = vunpack.c.l.b16 %v3545
    %v4063 = vunpack.c.h.b16 %v3545
    %v4064 = vunpack.c.l.b16 %v3546
    %v4065 = vunpack.c.h.b16 %v3546
    %v4066 = vunpack.c.l.b16 %v3547
    %v4067 = vunpack.c.h.b16 %v3547
    %v4068 = vunpack.c.l.b16 %v3548
    %v4069 = vunpack.c.h.b16 %v3548
    %v4070 = vunpack.c.l.b16 %v3549
    %v4071 = vunpack.c.h.b16 %v3549
    %v4072 = vunpack.c.l.b16 %v3550
    %v4073 = vunpack.c.h.b16 %v3550
    %v4074 = vunpack.c.l.b16 %v3551
    %v4075 = vunpack.c.h.b16 %v3551
    %v4076 = vunpack.c.l.b16 %v3552
    %v4077 = vunpack.c.h.b16 %v3552
    %v4078 = vunpack.c.l.b16 %v3553
    %v4079 = vunpack.c.h.b16 %v3553
    %v4080 = vunpack.c.l.b16 %v3554
    %v4081 = vunpack.c.h.b16 %v3554
    %v4082 = vunpack.c.l.b16 %v3555
    %v4083 = vunpack.c.h.b16 %v3555
    %v4084 = vunpack.c.l.b16 %v3556
    %v4085 = vunpack.c.h.b16 %v3556
    %v4086 = vunpack.c.l.b16 %v3557
    %v4087 = vunpack.c.h.b16 %v3557
    %v4088 = vunpack.c.l.b16 %v3558
    %v4089 = vunpack.c.h.b16 %v3558
    %v4090 = vunpack.c.l.b16 %v3559
    %v4091 = vunpack.c.h.b16 %v3559
    %v4092 = vunpack.c.l.b16 %v3560
    %v4093 = vunpack.c.h.b16 %v3560
    %v4094 = vunpack.c.l.b16 %v3561
    %v4095 = vunpack.c.h.b16 %v3561
    %v4096 = vunpack.c.l.b16 %v3562
    %v4097 = vunpack.c.h.b16 %v3562
    %v4098 = vunpack.c.l.b16 %v3563
    %v4099 = vunpack.c.h.b16 %v3563
    %v4100 = vunpack.c.l.b16 %v3564
    %v4101 = vunpack.c.h.b16 %v3564
    %v4102 = vunpack.c.l.b16 %v3565
    %v4103 = vunpack.c.h.b16 %v3565
    %v4104 = vunpack.c.l.b16 %v3566
    %v4105 = vunpack.c.h.b16 %v3566
    %v4106 = vunpack.c.l.b16 %v3567
    %v4107 = vunpack.c.h.b16 %v3567
    %v4108 = vunpack.c.l.b16 %v3568
    %v4109 = vunpack.c.h.b16 %v3568
    %v4110 = vunpack.c.l.b16 %v3569
    %v4111 = vunpack.c.h.b16 %v3569
    %v4112 = vunpack.c.l.b16 %v3570
    %v4113 = vunpack.c.h.b16 %v3570
    %v4114 = vunpack.c.l.b16 %v3571
    %v4115 = vunpack.c.h.b16 %v3571
    %v4116 = vunpack.c.l.b16 %v3572
    %v4117 = vunpack.c.h.b16 %v3572
    %v4118 = vunpack.c.l.b16 %v3573
    %v4119 = vunpack.c.h.b16 %v3573
    %v4120 = vunpack.c.l.b16 %v3574
    %v4121 = vunpack.c.h.b16 %v3574
    %v4122 = vunpack.c.l.b16 %v3575
    %v4123 = vunpack.c.h.b16 %v3575
    %v4124 = vunpack.c.l.b16 %v3576
    %v4125 = vunpack.c.h.b16 %v3576
    %v4126 = vunpack.c.l.b16 %v3577
    %v4127 = vunpack.c.h.b16 %v3577
    %v4128 = vunpack.c.l.b16 %v3578
    %v4129 = vunpack.c.h.b16 %v3578
    %v4130 = vunpack.c.l.b16 %v3579
    %v4131 = vunpack.c.h.b16 %v3579
    %v4132 = vunpack.c.l.b16 %v3580
    %v4133 = vunpack.c.h.b16 %v3580
    %v4134 = vunpack.c.l.b16 %v3581
    %v4135 = vunpack.c.h.b16 %v3581
    %v4136 = vunpack.c.l.b16 %v3582
    %v4137 = vunpack.c.h.b16 %v3582
    %v4138 = vunpack.c.l.b16 %v3583
    %v4139 = vunpack.c.h.b16 %v3583
    %v4140 = vunpack.c.l.b16 %v3584
    %v4141 = vunpack.c.h.b16 %v3584
    %v4142 = vunpack.c.l.b16 %v3585
    %v4143 = vunpack.c.h.b16 %v3585
    %v4144 = vunpack.c.l.b16 %v3586
    %v4145 = vunpack.c.h.b16 %v3586
    %v4146 = vunpack.c.l.b16 %v3587
    %v4147 = vunpack.c.h.b16 %v3587
    %v4148 = vunpack.c.l.b16 %v3588
    %v4149 = vunpack.c.h.b16 %v3588
    %v4150 = vunpack.c.l.b16 %v3589
    %v4151 = vunpack.c.h.b16 %v3589
    %v4152 = vunpack.c.l.b16 %v3590
    %v4153 = vunpack.c.h.b16 %v3590
    %v4154 = vunpack.c.l.b16 %v3591
    %v4155 = vunpack.c.h.b16 %v3591
    %v4156 = vunpack.c.l.b16 %v3592
    %v4157 = vunpack.c.h.b16 %v3592
    %v4158 = vunpack.c.l.b16 %v3593
    %v4159 = vunpack.c.h.b16 %v3593
    %v4160 = vunpack.c.l.b16 %v3594
    %v4161 = vunpack.c.h.b16 %v3594
    %v4162 = vunpack.c.l.b16 %v3595
    %v4163 = vunpack.c.h.b16 %v3595
    %v4164 = vunpack.c.l.b16 %v3596
    %v4165 = vunpack.c.h.b16 %v3596
    %v4166 = vunpack.c.l.b16 %v3597
    %v4167 = vunpack.c.h.b16 %v3597
    %v4168 = vunpack.c.l.b16 %v3598
    %v4169 = vunpack.c.h.b16 %v3598
    %v4170 = vunpack.c.l.b16 %v3599
    %v4171 = vunpack.c.h.b16 %v3599
    %v4172 = vunpack.c.l.b16 %v3600
    %v4173 = vunpack.c.h.b16 %v3600
    %v4174 = vunpack.c.l.b16 %v3601
    %v4175 = vunpack.c.h.b16 %v3601
    %v4176 = vunpack.c.l.b16 %v3602
    %v4177 = vunpack.c.h.b16 %v3602
    %v4178 = vunpack.c.l.b16 %v3603
    %v4179 = vunpack.c.h.b16 %v3603
    %v4180 = vpack.c.b16 %v3800, %v3796
    %v4181 = vpack.c.b16 %v3801, %v3797
    %v4182 = vpack.c.b16 %v3802, %v3798
    %v4183 = vpack.c.b16 %v3803, %v3799
    %v4184 = vpack.c.b16 %v3808, %v3804
    %v4185 = vpack.c.b16 %v3809, %v3805
    %v4186 = vpack.c.b16 %v3810, %v3806
    %v4187 = vpack.c.b16 %v3811, %v3807
    %v4188 = vpack.c.b16 %v3816, %v3812
    %v4189 = vpack.c.b16 %v3817, %v3813
    %v4190 = vpack.c.b16 %v3818, %v3814
    %v4191 = vpack.c.b16 %v3819, %v3815
    %v4192 = vpack.c.b16 %v3824, %v3820
    %v4193 = vpack.c.b16 %v3825, %v3821
    %v4194 = vpack.c.b16 %v3826, %v3822
    %v4195 = vpack.c.b16 %v3827, %v3823
    %v4196 = vpack.c.b16 %v3832, %v3828
    %v4197 = vpack.c.b16 %v3833, %v3829
    %v4198 = vpack.c.b16 %v3834, %v3830
    %v4199 = vpack.c.b16 %v3835, %v3831
    %v4200 = vpack.c.b16 %v3840, %v3836
    %v4201 = vpack.c.b16 %v3841, %v3837
    %v4202 = vpack.c.b16 %v3842, %v3838
    %v4203 = vpack.c.b16 %v3843, %v3839
    %v4204 = vpack.c.b16 %v3848, %v3844
    %v4205 = vpack.c.b16 %v3849, %v3845
    %v4206 = vpack.c.b16 %v3850, %v3846
    %v4207 = vpack.c.b16 %v3851, %v3847
    %v4208 = vpack.c.b16 %v3856, %v3852
    %v4209 = vpack.c.b16 %v3857, %v3853
    %v4210 = vpack.c.b16 %v3858, %v3854
    %v4211 = vpack.c.b16 %v3859, %v3855
    %v4212 = vpack.c.b16 %v3864, %v3860
    %v4213 = vpack.c.b16 %v3865, %v3861
    %v4214 = vpack.c.b16 %v3866, %v3862
    %v4215 = vpack.c.b16 %v3867, %v3863
    %v4216 = vpack.c.b16 %v3872, %v3868
    %v4217 = vpack.c.b16 %v3873, %v3869
    %v4218 = vpack.c.b16 %v3874, %v3870
    %v4219 = vpack.c.b16 %v3875, %v3871
    %v4220 = vpack.c.b16 %v3880, %v3876
    %v4221 = vpack.c.b16 %v3881, %v3877
    %v4222 = vpack.c.b16 %v3882, %v3878
    %v4223 = vpack.c.b16 %v3883, %v3879
    %v4224 = vpack.c.b16 %v3888, %v3884
    %v4225 = vpack.c.b16 %v3889, %v3885
    %v4226 = vpack.c.b16 %v3890, %v3886
    %v4227 = vpack.c.b16 %v3891, %v3887
    %v4228 = vpack.c.b16 %v3896, %v3892
    %v4229 = vpack.c.b16 %v3897, %v3893
    %v4230 = vpack.c.b16 %v3898, %v3894
    %v4231 = vpack.c.b16 %v3899, %v3895
    %v4232 = vpack.c.b16 %v3904, %v3900
    %v4233 = vpack.c.b16 %v3905, %v3901
    %v4234 = vpack.c.b16 %v3906, %v3902
    %v4235 = vpack.c.b16 %v3907, %v3903
    %v4236 = vpack.c.b16 %v3912, %v3908
    %v4237 = vpack.c.b16 %v3913, %v3909
    %v4238 = vpack.c.b16 %v3914, %v3910
    %v4239 = vpack.c.b16 %v3915, %v3911
    %v4240 = vpack.c.b16 %v3920, %v3916
    %v4241 = vpack.c.b16 %v3921, %v3917
    %v4242 = vpack.c.b16 %v3922, %v3918
    %v4243 = vpack.c.b16 %v3923, %v3919
    %v4244 = vpack.c.b16 %v3928, %v3924
    %v4245 = vpack.c.b16 %v3929, %v3925
    %v4246 = vpack.c.b16 %v3930, %v3926
    %v4247 = vpack.c.b16 %v3931, %v3927
    %v4248 = vpack.c.b16 %v3936, %v3932
    %v4249 = vpack.c.b16 %v3937, %v3933
    %v4250 = vpack.c.b16 %v3938, %v3934
    %v4251 = vpack.c.b16 %v3939, %v3935
    %v4252 = vpack.c.b16 %v3944, %v3940
    %v4253 = vpack.c.b16 %v3945, %v3941
    %v4254 = vpack.c.b16 %v3946, %v3942
    %v4255 = vpack.c.b16 %v3947, %v3943
    %v4256 = vpack.c.b16 %v3952, %v3948
    %v4257 = vpack.c.b16 %v3953, %v3949
    %v4258 = vpack.c.b16 %v3954, %v3950
    %v4259 = vpack.c.b16 %v3955, %v3951
    %v4260 = vpack.c.b16 %v3960, %v3956
    %v4261 = vpack.c.b16 %v3961, %v3957
    %v4262 = vpack.c.b16 %v3962, %v3958
    %v4263 = vpack.c.b16 %v3963, %v3959
    %v4264 = vpack.c.b16 %v3968, %v3964
    %v4265 = vpack.c.b16 %v3969, %v3965
    %v4266 = vpack.c.b16 %v3970, %v3966
    %v4267 = vpack.c.b16 %v3971, %v3967
    %v4268 = vpack.c.b16 %v3976, %v3972
    %v4269 = vpack.c.b16 %v3977, %v3973
    %v4270 = vpack.c.b16 %v3978, %v3974
    %v4271 = vpack.c.b16 %v3979, %v3975
    %v4272 = vpack.c.b16 %v3984, %v3980
    %v4273 = vpack.c.b16 %v3985, %v3981
    %v4274 = vpack.c.b16 %v3986, %v3982
    %v4275 = vpack.c.b16 %v3987, %v3983
    %v4276 = vpack.c.b16 %v3992, %v3988
    %v4277 = vpack.c.b16 %v3993, %v3989
    %v4278 = vpack.c.b16 %v3994, %v3990
    %v4279 = vpack.c.b16 %v3995, %v3991
    %v4280 = vpack.c.b16 %v4000, %v3996
    %v4281 = vpack.c.b16 %v4001, %v3997
    %v4282 = vpack.c.b16 %v4002, %v3998
    %v4283 = vpack.c.b16 %v4003, %v3999
    %v4284 = vpack.c.b16 %v4008, %v4004
    %v4285 = vpack.c.b16 %v4009, %v4005
    %v4286 = vpack.c.b16 %v4010, %v4006
    %v4287 = vpack.c.b16 %v4011, %v4007
    %v4288 = vpack.c.b16 %v4016, %v4012
    %v4289 = vpack.c.b16 %v4017, %v4013
    %v4290 = vpack.c.b16 %v4018, %v4014
    %v4291 = vpack.c.b16 %v4019, %v4015
    %v4292 = vpack.c.b16 %v4024, %v4020
    %v4293 = vpack.c.b16 %v4025, %v4021
    %v4294 = vpack.c.b16 %v4026, %v4022
    %v4295 = vpack.c.b16 %v4027, %v4023
    %v4296 = vpack.c.b16 %v4032, %v4028
    %v4297 = vpack.c.b16 %v4033, %v4029
    %v4298 = vpack.c.b16 %v4034, %v4030
    %v4299 = vpack.c.b16 %v4035, %v4031
    %v4300 = vpack.c.b16 %v4040, %v4036
    %v4301 = vpack.c.b16 %v4041, %v4037
    %v4302 = vpack.c.b16 %v4042, %v4038
    %v4303 = vpack.c.b16 %v4043, %v4039
    %v4304 = vpack.c.b16 %v4048, %v4044
    %v4305 = vpack.c.b16 %v4049, %v4045
    %v4306 = vpack.c.b16 %v4050, %v4046
    %v4307 = vpack.c.b16 %v4051, %v4047
    %v4308 = vpack.c.b16 %v4056, %v4052
    %v4309 = vpack.c.b16 %v4057, %v4053
    %v4310 = vpack.c.b16 %v4058, %v4054
    %v4311 = vpack.c.b16 %v4059, %v4055
    %v4312 = vpack.c.b16 %v4064, %v4060
    %v4313 = vpack.c.b16 %v4065, %v4061
    %v4314 = vpack.c.b16 %v4066, %v4062
    %v4315 = vpack.c.b16 %v4067, %v4063
    %v4316 = vpack.c.b16 %v4072, %v4068
    %v4317 = vpack.c.b16 %v4073, %v4069
    %v4318 = vpack.c.b16 %v4074, %v4070
    %v4319 = vpack.c.b16 %v4075, %v4071
    %v4320 = vpack.c.b16 %v4080, %v4076
    %v4321 = vpack.c.b16 %v4081, %v4077
    %v4322 = vpack.c.b16 %v4082, %v4078
    %v4323 = vpack.c.b16 %v4083, %v4079
    %v4324 = vpack.c.b16 %v4088, %v4084
    %v4325 = vpack.c.b16 %v4089, %v4085
    %v4326 = vpack.c.b16 %v4090, %v4086
    %v4327 = vpack.c.b16 %v4091, %v4087
    %v4328 = vpack.c.b16 %v4096, %v4092
    %v4329 = vpack.c.b16 %v4097, %v4093
    %v4330 = vpack.c.b16 %v4098, %v4094
    %v4331 = vpack.c.b16 %v4099, %v4095
    %v4332 = vpack.c.b16 %v4104, %v4100
    %v4333 = vpack.c.b16 %v4105, %v4101
    %v4334 = vpack.c.b16 %v4106, %v4102
    %v4335 = vpack.c.b16 %v4107, %v4103
    %v4336 = vpack.c.b16 %v4112, %v4108
    %v4337 = vpack.c.b16 %v4113, %v4109
    %v4338 = vpack.c.b16 %v4114, %v4110
    %v4339 = vpack.c.b16 %v4115, %v4111
    %v4340 = vpack.c.b16 %v4120, %v4116
    %v4341 = vpack.c.b16 %v4121, %v4117
    %v4342 = vpack.c.b16 %v4122, %v4118
    %v4343 = vpack.c.b16 %v4123, %v4119
    %v4344 = vpack.c.b16 %v4128, %v4124
    %v4345 = vpack.c.b16 %v4129, %v4125
    %v4346 = vpack.c.b16 %v4130, %v4126
    %v4347 = vpack.c.b16 %v4131, %v4127
    %v4348 = vpack.c.b16 %v4136, %v4132
    %v4349 = vpack.c.b16 %v4137, %v4133
    %v4350 = vpack.c.b16 %v4138, %v4134
    %v4351 = vpack.c.b16 %v4139, %v4135
    %v4352 = vpack.c.b16 %v4144, %v4140
    %v4353 = vpack.c.b16 %v4145, %v4141
    %v4354 = vpack.c.b16 %v4146, %v4142
    %v4355 = vpack.c.b16 %v4147, %v4143
    %v4356 = vpack.c.b16 %v4152, %v4148
    %v4357 = vpack.c.b16 %v4153, %v4149
    %v4358 = vpack.c.b16 %v4154, %v4150
    %v4359 = vpack.c.b16 %v4155, %v4151
    %v4360 = vpack.c.b16 %v4160, %v4156
    %v4361 = vpack.c.b16 %v4161, %v4157
    %v4362 = vpack.c.b16 %v4162, %v4158
    %v4363 = vpack.c.b16 %v4163, %v4159
    %v4364 = vpack.c.b16 %v4168, %v4164
    %v4365 = vpack.c.b16 %v4169, %v4165
    %v4366 = vpack.c.b16 %v4170, %v4166
    %v4367 = vpack.c.b16 %v4171, %v4167
    %v4368 = vpack.c.b16 %v4176, %v4172
    %v4369 = vpack.c.b16 %v4177, %v4173
    %v4370 = vpack.c.b16 %v4178, %v4174
    %v4371 = vpack.c.b16 %v4179, %v4175
    %4564 = vmatprep.subr.bf16.mxu0 %v4181
    %4565 = vmatpush1.bf16.msra.mxu0 %v4180
    %4566 = vmatprep.subr.bf16.mxu0 %v4185
    %4567 = vmatpush1.bf16.msra.mxu0 %v4184
    %4568 = vmatprep.subr.bf16.mxu0 %v4189
    %4569 = vmatpush1.bf16.msra.mxu0 %v4188
    %4570 = vmatprep.subr.bf16.mxu0 %v4193
    %4571 = vmatpush1.bf16.msra.mxu0 %v4192
    %4572 = vmatprep.subr.bf16.mxu0 %v4197
    %4573 = vmatpush1.bf16.msra.mxu0 %v4196
    %4574 = vmatprep.subr.bf16.mxu0 %v4201
    %4575 = vmatpush1.bf16.msra.mxu0 %v4200
    %4576 = vmatprep.subr.bf16.mxu0 %v4205
    %4577 = vmatpush1.bf16.msra.mxu0 %v4204
    %4578 = vmatprep.subr.bf16.mxu0 %v4209
    %4579 = vmatpush1.bf16.msra.mxu0 %v4208
    %4580 = vmatprep.subr.bf16.mxu0 %v4213
    %4581 = vmatpush1.bf16.msra.mxu0 %v4212
    %4582 = vmatprep.subr.bf16.mxu0 %v4217
    %4583 = vmatpush1.bf16.msra.mxu0 %v4216
    %4584 = vmatprep.subr.bf16.mxu0 %v4221
    %4585 = vmatpush1.bf16.msra.mxu0 %v4220
    %4586 = vmatprep.subr.bf16.mxu0 %v4225
    %4587 = vmatpush1.bf16.msra.mxu0 %v4224
    %4588 = vmatprep.subr.bf16.mxu0 %v4229
    %4589 = vmatpush1.bf16.msra.mxu0 %v4228
    %4590 = vmatprep.subr.bf16.mxu0 %v4233
    %4591 = vmatpush1.bf16.msra.mxu0 %v4232
    %4592 = vmatprep.subr.bf16.mxu0 %v4237
    %4593 = vmatpush1.bf16.msra.mxu0 %v4236
    %4594 = vmatprep.subr.bf16.mxu0 %v4241
    %4595 = vmatpush1.bf16.msra.mxu0 %v4240
    %4596 = vmatprep.mubr.bf16.mxu0 %v3407
    %4597 = vmatmul.mubr.bf16.gmra.mrb[0].mxu0 %v3406
    %v4598 = vpop.f32.mrb[0].mxu0
    %v4599 = vadd.f32 0.0, %v4598
    %v4600 = vpop.f32.mrb[0].mxu0
    %v4601 = vadd.f32 0.0, %v4600
    %v4602 = vpop.f32.mrb[0].mxu0
    %v4603 = vpop.f32.mrb[0].mxu0
    %4604 = vdwg.mxu0
    %4605 = vmatprep.subr.bf16.mxu0 %v4245
    %4606 = vmatpush1.bf16.msra.mxu0 %v4244
    %4607 = vmatprep.subr.bf16.mxu0 %v4249
    %4608 = vmatpush1.bf16.msra.mxu0 %v4248
    %4609 = vmatprep.subr.bf16.mxu0 %v4253
    %4610 = vmatpush1.bf16.msra.mxu0 %v4252
    %4611 = vmatprep.subr.bf16.mxu0 %v4257
    %4612 = vmatpush1.bf16.msra.mxu0 %v4256
    %4613 = vmatprep.subr.bf16.mxu0 %v4261
    %4614 = vmatpush1.bf16.msra.mxu0 %v4260
    %4615 = vmatprep.subr.bf16.mxu0 %v4265
    %4616 = vmatpush1.bf16.msra.mxu0 %v4264
    %4617 = vmatprep.subr.bf16.mxu0 %v4269
    %4618 = vmatpush1.bf16.msra.mxu0 %v4268
    %4619 = vmatprep.subr.bf16.mxu0 %v4273
    %4620 = vmatpush1.bf16.msra.mxu0 %v4272
    %4621 = vmatprep.subr.bf16.mxu0 %v4277
    %4622 = vmatpush1.bf16.msra.mxu0 %v4276
    %4623 = vmatprep.subr.bf16.mxu0 %v4281
    %4624 = vmatpush1.bf16.msra.mxu0 %v4280
    %4625 = vmatprep.subr.bf16.mxu0 %v4285
    %4626 = vmatpush1.bf16.msra.mxu0 %v4284
    %4627 = vmatprep.subr.bf16.mxu0 %v4289
    %4628 = vmatpush1.bf16.msra.mxu0 %v4288
    %4629 = vmatprep.subr.bf16.mxu0 %v4293
    %4630 = vmatpush1.bf16.msra.mxu0 %v4292
    %4631 = vmatprep.subr.bf16.mxu0 %v4297
    %4632 = vmatpush1.bf16.msra.mxu0 %v4296
    %4633 = vmatprep.subr.bf16.mxu0 %v4301
    %4634 = vmatpush1.bf16.msra.mxu0 %v4300
    %4635 = vmatprep.subr.bf16.mxu0 %v4305
    %4636 = vmatpush1.bf16.msra.mxu0 %v4304
    %4637 = vmatprep.mubr.bf16.mxu0 %v3409
    %4638 = vmatmul.mubr.bf16.gmra.mrb[0].mxu0 %v3408
    %v4639 = vpop.f32.mrb[0].mxu0
    %v4640 = vadd.f32 %v4599, %v4639
    %v4641 = vpop.f32.mrb[0].mxu0
    %v4642 = vadd.f32 %v4601, %v4641
    %v4643 = vpop.f32.mrb[0].mxu0
    %v4644 = vpop.f32.mrb[0].mxu0
    %4645 = vdwg.mxu0
    %4646 = vmatprep.subr.bf16.mxu0 %v4309
    %4647 = vmatpush1.bf16.msra.mxu0 %v4308
    %4648 = vmatprep.subr.bf16.mxu0 %v4313
    %4649 = vmatpush1.bf16.msra.mxu0 %v4312
    %4650 = vmatprep.subr.bf16.mxu0 %v4317
    %4651 = vmatpush1.bf16.msra.mxu0 %v4316
    %4652 = vmatprep.subr.bf16.mxu0 %v4321
    %4653 = vmatpush1.bf16.msra.mxu0 %v4320
    %4654 = vmatprep.subr.bf16.mxu0 %v4325
    %4655 = vmatpush1.bf16.msra.mxu0 %v4324
    %4656 = vmatprep.subr.bf16.mxu0 %v4329
    %4657 = vmatpush1.bf16.msra.mxu0 %v4328
    %4658 = vmatprep.subr.bf16.mxu0 %v4333
    %4659 = vmatpush1.bf16.msra.mxu0 %v4332
    %4660 = vmatprep.subr.bf16.mxu0 %v4337
    %4661 = vmatpush1.bf16.msra.mxu0 %v4336
    %4662 = vmatprep.subr.bf16.mxu0 %v4341
    %4663 = vmatpush1.bf16.msra.mxu0 %v4340
    %4664 = vmatprep.subr.bf16.mxu0 %v4345
    %4665 = vmatpush1.bf16.msra.mxu0 %v4344
    %4666 = vmatprep.subr.bf16.mxu0 %v4349
    %4667 = vmatpush1.bf16.msra.mxu0 %v4348
    %4668 = vmatprep.subr.bf16.mxu0 %v4353
    %4669 = vmatpush1.bf16.msra.mxu0 %v4352
    %4670 = vmatprep.subr.bf16.mxu0 %v4357
    %4671 = vmatpush1.bf16.msra.mxu0 %v4356
    %4672 = vmatprep.subr.bf16.mxu0 %v4361
    %4673 = vmatpush1.bf16.msra.mxu0 %v4360
    %4674 = vmatprep.subr.bf16.mxu0 %v4365
    %4675 = vmatpush1.bf16.msra.mxu0 %v4364
    %4676 = vmatprep.subr.bf16.mxu0 %v4369
    %4677 = vmatpush1.bf16.msra.mxu0 %v4368
    %4678 = vmatprep.mubr.bf16.mxu0 %v3411
    %4679 = vmatmul.mubr.bf16.gmra.mrb[0].mxu0 %v3410
    %v4680 = vpop.f32.mrb[0].mxu0
    %v4681 = vadd.f32 %v4640, %v4680
    %v4682 = vpop.f32.mrb[0].mxu0
    %v4683 = vadd.f32 %v4642, %v4682
    %v4684 = vpop.f32.mrb[0].mxu0
    %v4685 = vpop.f32.mrb[0].mxu0
    %4686 = vdwg.mxu0
    %4687 = vmatprep.subr.bf16.mxu0 %v4183
    %4688 = vmatpush1.bf16.msra.mxu0 %v4182
    %4689 = vmatprep.subr.bf16.mxu0 %v4187
    %4690 = vmatpush1.bf16.msra.mxu0 %v4186
    %4691 = vmatprep.subr.bf16.mxu0 %v4191
    %4692 = vmatpush1.bf16.msra.mxu0 %v4190
    %4693 = vmatprep.subr.bf16.mxu0 %v4195
    %4694 = vmatpush1.bf16.msra.mxu0 %v4194
    %4695 = vmatprep.subr.bf16.mxu0 %v4199
    %4696 = vmatpush1.bf16.msra.mxu0 %v4198
    %4697 = vmatprep.subr.bf16.mxu0 %v4203
    %4698 = vmatpush1.bf16.msra.mxu0 %v4202
    %4699 = vmatprep.subr.bf16.mxu0 %v4207
    %4700 = vmatpush1.bf16.msra.mxu0 %v4206
    %4701 = vmatprep.subr.bf16.mxu0 %v4211
    %4702 = vmatpush1.bf16.msra.mxu0 %v4210
    %4703 = vmatprep.subr.bf16.mxu0 %v4215
    %4704 = vmatpush1.bf16.msra.mxu0 %v4214
    %4705 = vmatprep.subr.bf16.mxu0 %v4219
    %4706 = vmatpush1.bf16.msra.mxu0 %v4218
    %4707 = vmatprep.subr.bf16.mxu0 %v4223
    %4708 = vmatpush1.bf16.msra.mxu0 %v4222
    %4709 = vmatprep.subr.bf16.mxu0 %v4227
    %4710 = vmatpush1.bf16.msra.mxu0 %v4226
    %4711 = vmatprep.subr.bf16.mxu0 %v4231
    %4712 = vmatpush1.bf16.msra.mxu0 %v4230
    %4713 = vmatprep.subr.bf16.mxu0 %v4235
    %4714 = vmatpush1.bf16.msra.mxu0 %v4234
    %4715 = vmatprep.subr.bf16.mxu0 %v4239
    %4716 = vmatpush1.bf16.msra.mxu0 %v4238
    %4717 = vmatprep.subr.bf16.mxu0 %v4243
    %4718 = vmatpush1.bf16.msra.mxu0 %v4242
    %4719 = vmatprep.mubr.bf16.mxu0 %v3407
    %4720 = vmatmul.mubr.bf16.gmra.mrb[0].mxu0 %v3406
    %v4721 = vpop.f32.mrb[0].mxu0
    %v4722 = vadd.f32 0.0, %v4721
    %v4723 = vpop.f32.mrb[0].mxu0
    %v4724 = vadd.f32 0.0, %v4723
    %v4725 = vpop.f32.mrb[0].mxu0
    %v4726 = vpop.f32.mrb[0].mxu0
    %4727 = vdwg.mxu0
    %4728 = vmatprep.subr.bf16.mxu0 %v4247
    %4729 = vmatpush1.bf16.msra.mxu0 %v4246
    %4730 = vmatprep.subr.bf16.mxu0 %v4251
    %4731 = vmatpush1.bf16.msra.mxu0 %v4250
    %4732 = vmatprep.subr.bf16.mxu0 %v4255
    %4733 = vmatpush1.bf16.msra.mxu0 %v4254
    %4734 = vmatprep.subr.bf16.mxu0 %v4259
    %4735 = vmatpush1.bf16.msra.mxu0 %v4258
    %4736 = vmatprep.subr.bf16.mxu0 %v4263
    %4737 = vmatpush1.bf16.msra.mxu0 %v4262
    %4738 = vmatprep.subr.bf16.mxu0 %v4267
    %4739 = vmatpush1.bf16.msra.mxu0 %v4266
    %4740 = vmatprep.subr.bf16.mxu0 %v4271
    %4741 = vmatpush1.bf16.msra.mxu0 %v4270
    %4742 = vmatprep.subr.bf16.mxu0 %v4275
    %4743 = vmatpush1.bf16.msra.mxu0 %v4274
    %4744 = vmatprep.subr.bf16.mxu0 %v4279
    %4745 = vmatpush1.bf16.msra.mxu0 %v4278
    %4746 = vmatprep.subr.bf16.mxu0 %v4283
    %4747 = vmatpush1.bf16.msra.mxu0 %v4282
    %4748 = vmatprep.subr.bf16.mxu0 %v4287
    %4749 = vmatpush1.bf16.msra.mxu0 %v4286
    %4750 = vmatprep.subr.bf16.mxu0 %v4291
    %4751 = vmatpush1.bf16.msra.mxu0 %v4290
    %4752 = vmatprep.subr.bf16.mxu0 %v4295
    %4753 = vmatpush1.bf16.msra.mxu0 %v4294
    %4754 = vmatprep.subr.bf16.mxu0 %v4299
    %4755 = vmatpush1.bf16.msra.mxu0 %v4298
    %4756 = vmatprep.subr.bf16.mxu0 %v4303
    %4757 = vmatpush1.bf16.msra.mxu0 %v4302
    %4758 = vmatprep.subr.bf16.mxu0 %v4307
    %4759 = vmatpush1.bf16.msra.mxu0 %v4306
    %4760 = vmatprep.mubr.bf16.mxu0 %v3409
    %4761 = vmatmul.mubr.bf16.gmra.mrb[0].mxu0 %v3408
    %v4762 = vpop.f32.mrb[0].mxu0
    %v4763 = vadd.f32 %v4722, %v4762
    %v4764 = vpop.f32.mrb[0].mxu0
    %v4765 = vadd.f32 %v4724, %v4764
    %v4766 = vpop.f32.mrb[0].mxu0
    %v4767 = vpop.f32.mrb[0].mxu0
    %4768 = vdwg.mxu0
    %4769 = vmatprep.subr.bf16.mxu0 %v4311
    %4770 = vmatpush1.bf16.msra.mxu0 %v4310
    %4771 = vmatprep.subr.bf16.mxu0 %v4315
    %4772 = vmatpush1.bf16.msra.mxu0 %v4314
    %4773 = vmatprep.subr.bf16.mxu0 %v4319
    %4774 = vmatpush1.bf16.msra.mxu0 %v4318
    %4775 = vmatprep.subr.bf16.mxu0 %v4323
    %4776 = vmatpush1.bf16.msra.mxu0 %v4322
    %4777 = vmatprep.subr.bf16.mxu0 %v4327
    %4778 = vmatpush1.bf16.msra.mxu0 %v4326
    %4779 = vmatprep.subr.bf16.mxu0 %v4331
    %4780 = vmatpush1.bf16.msra.mxu0 %v4330
    %4781 = vmatprep.subr.bf16.mxu0 %v4335
    %4782 = vmatpush1.bf16.msra.mxu0 %v4334
    %4783 = vmatprep.subr.bf16.mxu0 %v4339
    %4784 = vmatpush1.bf16.msra.mxu0 %v4338
    %4785 = vmatprep.subr.bf16.mxu0 %v4343
    %4786 = vmatpush1.bf16.msra.mxu0 %v4342
    %4787 = vmatprep.subr.bf16.mxu0 %v4347
    %4788 = vmatpush1.bf16.msra.mxu0 %v4346
    %4789 = vmatprep.subr.bf16.mxu0 %v4351
    %4790 = vmatpush1.bf16.msra.mxu0 %v4350
    %4791 = vmatprep.subr.bf16.mxu0 %v4355
    %4792 = vmatpush1.bf16.msra.mxu0 %v4354
    %4793 = vmatprep.subr.bf16.mxu0 %v4359
    %4794 = vmatpush1.bf16.msra.mxu0 %v4358
    %4795 = vmatprep.subr.bf16.mxu0 %v4363
    %4796 = vmatpush1.bf16.msra.mxu0 %v4362
    %4797 = vmatprep.subr.bf16.mxu0 %v4367
    %4798 = vmatpush1.bf16.msra.mxu0 %v4366
    %4799 = vmatprep.subr.bf16.mxu0 %v4371
    %4800 = vmatpush1.bf16.msra.mxu0 %v4370
    %4801 = vmatprep.mubr.bf16.mxu0 %v3411
    %4802 = vmatmul.mubr.bf16.gmra.mrb[0].mxu0 %v3410
    %v4803 = vpop.f32.mrb[0].mxu0
    %v4804 = vadd.f32 %v4763, %v4803
    %v4805 = vpop.f32.mrb[0].mxu0
    %v4806 = vadd.f32 %v4765, %v4805
    %v4807 = vpop.f32.mrb[0].mxu0
    %v4808 = vpop.f32.mrb[0].mxu0
    %4809 = vdwg.mxu0
    %v4812 = vrot.slane %v4804, 4
    %v4813 = vrot.slane %v4806, 4
    %v4816 = vsel %vm2041, %v4681, %v4812
    %v4817 = vsel %vm2041, %v4683, %v4813
    %v4818 = vld [vmem:[#allocation12] ss:$4 sm:$0x3]
    %v4820 = vlaneseq
    %v4821 = vshrl.u32 %v4820, 7
    %v4822 = vsub.s32 0, %v4821
    %v4823 = vrot.slane %v4818, %v4822
    %v4824 = vlaneseq
    %v4825 = vshrl.u32 %v4824, 7
    %v4826 = vsub.s32 1, %v4825
    %v4827 = vrot.slane %v4818, %v4826
    %v4830 = vadd.f32 %v4816, %v4823
    %v4831 = vadd.f32 %v4817, %v4827
    %v4832 = vrot.slane %v4830, 4
    %v4833 = vadd.f32 %v4830, %v4832
    %v4834 = vrot.slane %v4833, 2
    %v4835 = vadd.f32 %v4833, %v4834
    %v4836 = vrot.slane %v4835, 1
    %v4837 = vadd.f32 %v4835, %v4836
    %v4838 = vrot.slane %v4831, 4
    %v4839 = vadd.f32 %v4831, %v4838
    %v4840 = vrot.slane %v4839, 2
    %v4841 = vadd.f32 %v4839, %v4840
    %v4842 = vrot.slane %v4841, 1
    %v4843 = vadd.f32 %v4841, %v4842
    %4845 = vrot.lane.b32.xlu0 %v4837, 64
    %v4846 = vpop.permute.xlu0 %4845
    %v4848 = vadd.f32 %v4837, %v4846
    %v4849 = vadd.f32 %v4848, %v4843
    %4851 = vrot.lane.b32.xlu0 %v4843, 64
    %v4852 = vpop.permute.xlu0 %4851
    %v4854 = vadd.f32 %v4849, %v4852
    %4856 = vrot.lane.b32.xlu0 %v4854, 64
    %v4857 = vpop.permute.xlu0 %4856
    %v4859 = vsel %vm573, %v4854, %v4857
    %v4860 = vmul.f32 %v4859, 0.03125
    %v4861 = vlaneseq
    %v4862 = vshrl.u32 %v4861, 7
    %v4863 = vsub.s32 0, %v4862
    %v4864 = vrot.slane %v4860, %v4863
    %v4865 = vsub.f32 %v4830, %v4864
    %v4866 = vsub.f32 %v4831, %v4864
    %v4867 = vmul.f32 %v4865, %v4865
    %v4868 = vmul.f32 %v4866, %v4866
    %v4869 = vrot.slane %v4867, 4
    %v4870 = vadd.f32 %v4867, %v4869
    %v4871 = vrot.slane %v4870, 2
    %v4872 = vadd.f32 %v4870, %v4871
    %v4873 = vrot.slane %v4872, 1
    %v4874 = vadd.f32 %v4872, %v4873
    %v4875 = vrot.slane %v4868, 4
    %v4876 = vadd.f32 %v4868, %v4875
    %v4877 = vrot.slane %v4876, 2
    %v4878 = vadd.f32 %v4876, %v4877
    %v4879 = vrot.slane %v4878, 1
    %v4880 = vadd.f32 %v4878, %v4879
    %4882 = vrot.lane.b32.xlu0 %v4874, 64
    %v4883 = vpop.permute.xlu0 %4882
    %v4885 = vadd.f32 %v4874, %v4883
    %v4886 = vadd.f32 %v4885, %v4880
    %4888 = vrot.lane.b32.xlu0 %v4880, 64
    %v4889 = vpop.permute.xlu0 %4888
    %v4891 = vadd.f32 %v4886, %v4889
    %4893 = vrot.lane.b32.xlu0 %v4891, 64
    %v4894 = vpop.permute.xlu0 %4893
    %v4896 = vsel %vm573, %v4891, %v4894
    %v4897 = vmul.f32 %v4896, 0.03125
    %v4898 = vadd.f32 %v4897, 1e-05
    %v4899 = vrsqrt.pop %v4898
    %v4900 = vlaneseq
    %v4901 = vshrl.u32 %v4900, 7
    %v4902 = vsub.s32 0, %v4901
    %v4903 = vrot.slane %v4899, %v4902
    %v4904 = vmul.f32 %v4865, %v4903
    %v4905 = vmul.f32 %v4866, %v4903
    %s4906 = scalar_lea.vmem [#allocation12], 1
    %v4907 = vld [vmem:[%s4906] ss:$4 sm:$0x3]
    %v4909 = vlaneseq
    %v4910 = vshrl.u32 %v4909, 7
    %v4911 = vsub.s32 0, %v4910
    %v4912 = vrot.slane %v4907, %v4911
    %v4913 = vlaneseq
    %v4914 = vshrl.u32 %v4913, 7
    %v4915 = vsub.s32 1, %v4914
    %v4916 = vrot.slane %v4907, %v4915
    %v4919 = vmul.f32 %v4904, %v4912
    %v4920 = vmul.f32 %v4905, %v4916
    %s4921 = scalar_lea.vmem [#allocation12], 2
    %v4922 = vld [vmem:[%s4921] ss:$4 sm:$0x3]
    %v4924 = vlaneseq
    %v4925 = vshrl.u32 %v4924, 7
    %v4926 = vsub.s32 0, %v4925
    %v4927 = vrot.slane %v4922, %v4926
    %v4928 = vlaneseq
    %v4929 = vshrl.u32 %v4928, 7
    %v4930 = vsub.s32 1, %v4929
    %v4931 = vrot.slane %v4922, %v4930
    %v4934 = vadd.f32 %v4919, %v4927
    %v4935 = vadd.f32 %v4920, %v4931
    %v4936 = vmax.f32 %v4934, 0.0
    %v4937 = vmax.f32 %v4935, 0.0
    %v4938 = vpack.c.bf16 %v4936, %v4936
    %v4939 = vpack.c.bf16 %v4937, %v4937
    %v4940 = vld [vmem:[#allocation13] sm:$0xf]
    %v4942 = vsel %vm2037, %v4940, 0
    %v4945 = vsel %vm2041, %v4938, 0
    %v4948 = vsel %vm2041, %v4939, 0
    %4950 = vmatprep.subr.bf16.mxu0 %v4948
    %4951 = vmatpush1.bf16.msra.mxu0 %v4945
    %4952 = vmatprep.subr.bf16.mxu0 0
    %4953 = vmatpush1.bf16.msra.mxu0 0
    %4954 = vmatprep.subr.bf16.mxu0 0
    %4955 = vmatpush1.bf16.msra.mxu0 0
    %4956 = vmatprep.subr.bf16.mxu0 0
    %4957 = vmatpush1.bf16.msra.mxu0 0
    %4958 = vmatprep.subr.bf16.mxu0 0
    %4959 = vmatpush1.bf16.msra.mxu0 0
    %4960 = vmatprep.subr.bf16.mxu0 0
    %4961 = vmatpush1.bf16.msra.mxu0 0
    %4962 = vmatprep.subr.bf16.mxu0 0
    %4963 = vmatpush1.bf16.msra.mxu0 0
    %4964 = vmatprep.subr.bf16.mxu0 0
    %4965 = vmatpush1.bf16.msra.mxu0 0
    %4966 = vmatprep.subr.bf16.mxu0 0
    %4967 = vmatpush1.bf16.msra.mxu0 0
    %4968 = vmatprep.subr.bf16.mxu0 0
    %4969 = vmatpush1.bf16.msra.mxu0 0
    %4970 = vmatprep.subr.bf16.mxu0 0
    %4971 = vmatpush1.bf16.msra.mxu0 0
    %4972 = vmatprep.subr.bf16.mxu0 0
    %4973 = vmatpush1.bf16.msra.mxu0 0
    %4974 = vmatprep.subr.bf16.mxu0 0
    %4975 = vmatpush1.bf16.msra.mxu0 0
    %4976 = vmatprep.subr.bf16.mxu0 0
    %4977 = vmatpush1.bf16.msra.mxu0 0
    %4978 = vmatprep.subr.bf16.mxu0 0
    %4979 = vmatpush1.bf16.msra.mxu0 0
    %4980 = vmatprep.subr.bf16.mxu0 0
    %4981 = vmatpush1.bf16.msra.mxu0 0
    %4982 = vmatprep.mubr.bf16.mxu0 0
    %4983 = vmatmul.mubr.bf16.gmra.mrb[0].mxu0 %v4942
    %v4984 = vpop.f32.mrb[0].mxu0
    %v4985 = vadd.f32 0.0, %v4984
    %v4986 = vpop.f32.mrb[0].mxu0
    %v4987 = vadd.f32 0.0, %v4986
    %v4988 = vpop.f32.mrb[0].mxu0
    %v4989 = vpop.f32.mrb[0].mxu0
    %4990 = vdwg.mxu0
    %s4991 = scalar_lea.vmem [#allocation13], 4
    %v4992 = vld [vmem:[%s4991] sm:$0xf]
    %v4994 = vsel %vm2037, %v4992, 0
    %4996 = vmatprep.subr.bf16.mxu0 %v4948
    %4997 = vmatpush1.bf16.msra.mxu0 %v4945
    %4998 = vmatprep.subr.bf16.mxu0 0
    %4999 = vmatpush1.bf16.msra.mxu0 0
    %5000 = vmatprep.subr.bf16.mxu0 0
    %5001 = vmatpush1.bf16.msra.mxu0 0
    %5002 = vmatprep.subr.bf16.mxu0 0
    %5003 = vmatpush1.bf16.msra.mxu0 0
    %5004 = vmatprep.subr.bf16.mxu0 0
    %5005 = vmatpush1.bf16.msra.mxu0 0
    %5006 = vmatprep.subr.bf16.mxu0 0
    %5007 = vmatpush1.bf16.msra.mxu0 0
    %5008 = vmatprep.subr.bf16.mxu0 0
    %5009 = vmatpush1.bf16.msra.mxu0 0
    %5010 = vmatprep.subr.bf16.mxu0 0
    %5011 = vmatpush1.bf16.msra.mxu0 0
    %5012 = vmatprep.subr.bf16.mxu0 0
    %5013 = vmatpush1.bf16.msra.mxu0 0
    %5014 = vmatprep.subr.bf16.mxu0 0
    %5015 = vmatpush1.bf16.msra.mxu0 0
    %5016 = vmatprep.subr.bf16.mxu0 0
    %5017 = vmatpush1.bf16.msra.mxu0 0
    %5018 = vmatprep.subr.bf16.mxu0 0
    %5019 = vmatpush1.bf16.msra.mxu0 0
    %5020 = vmatprep.subr.bf16.mxu0 0
    %5021 = vmatpush1.bf16.msra.mxu0 0
    %5022 = vmatprep.subr.bf16.mxu0 0
    %5023 = vmatpush1.bf16.msra.mxu0 0
    %5024 = vmatprep.subr.bf16.mxu0 0
    %5025 = vmatpush1.bf16.msra.mxu0 0
    %5026 = vmatprep.subr.bf16.mxu0 0
    %5027 = vmatpush1.bf16.msra.mxu0 0
    %5028 = vmatprep.mubr.bf16.mxu0 0
    %5029 = vmatmul.mubr.bf16.gmra.mrb[0].mxu0 %v4994
    %v5030 = vpop.f32.mrb[0].mxu0
    %v5031 = vadd.f32 0.0, %v5030
    %v5032 = vpop.f32.mrb[0].mxu0
    %v5033 = vadd.f32 0.0, %v5032
    %v5034 = vpop.f32.mrb[0].mxu0
    %v5035 = vpop.f32.mrb[0].mxu0
    %5036 = vdwg.mxu0
    %s5037 = scalar_lea.vmem [#allocation13], 8
    %v5038 = vld [vmem:[%s5037] sm:$0xf]
    %v5040 = vsel %vm2037, %v5038, 0
    %5042 = vmatprep.subr.bf16.mxu0 %v4948
    %5043 = vmatpush1.bf16.msra.mxu0 %v4945
    %5044 = vmatprep.subr.bf16.mxu0 0
    %5045 = vmatpush1.bf16.msra.mxu0 0
    %5046 = vmatprep.subr.bf16.mxu0 0
    %5047 = vmatpush1.bf16.msra.mxu0 0
    %5048 = vmatprep.subr.bf16.mxu0 0
    %5049 = vmatpush1.bf16.msra.mxu0 0
    %5050 = vmatprep.subr.bf16.mxu0 0
    %5051 = vmatpush1.bf16.msra.mxu0 0
    %5052 = vmatprep.subr.bf16.mxu0 0
    %5053 = vmatpush1.bf16.msra.mxu0 0
    %5054 = vmatprep.subr.bf16.mxu0 0
    %5055 = vmatpush1.bf16.msra.mxu0 0
    %5056 = vmatprep.subr.bf16.mxu0 0
    %5057 = vmatpush1.bf16.msra.mxu0 0
    %5058 = vmatprep.subr.bf16.mxu0 0
    %5059 = vmatpush1.bf16.msra.mxu0 0
    %5060 = vmatprep.subr.bf16.mxu0 0
    %5061 = vmatpush1.bf16.msra.mxu0 0
    %5062 = vmatprep.subr.bf16.mxu0 0
    %5063 = vmatpush1.bf16.msra.mxu0 0
    %5064 = vmatprep.subr.bf16.mxu0 0
    %5065 = vmatpush1.bf16.msra.mxu0 0
    %5066 = vmatprep.subr.bf16.mxu0 0
    %5067 = vmatpush1.bf16.msra.mxu0 0
    %5068 = vmatprep.subr.bf16.mxu0 0
    %5069 = vmatpush1.bf16.msra.mxu0 0
    %5070 = vmatprep.subr.bf16.mxu0 0
    %5071 = vmatpush1.bf16.msra.mxu0 0
    %5072 = vmatprep.subr.bf16.mxu0 0
    %5073 = vmatpush1.bf16.msra.mxu0 0
    %5074 = vmatprep.mubr.bf16.mxu0 0
    %5075 = vmatmul.mubr.bf16.gmra.mrb[0].mxu0 %v5040
    %v5076 = vpop.f32.mrb[0].mxu0
    %v5077 = vadd.f32 0.0, %v5076
    %v5078 = vpop.f32.mrb[0].mxu0
    %v5079 = vadd.f32 0.0, %v5078
    %v5080 = vpop.f32.mrb[0].mxu0
    %v5081 = vpop.f32.mrb[0].mxu0
    %5082 = vdwg.mxu0
    %v5083 = vpack.c.bf16 %v4985, %v4985
    %v5084 = vpack.c.bf16 %v4987, %v4987
    %v5085 = vpack.c.bf16 %v5031, %v5031
    %v5086 = vpack.c.bf16 %v5033, %v5033
    %v5087 = vpack.c.bf16 %v5077, %v5077
    %v5088 = vpack.c.bf16 %v5079, %v5079
    %v5089 = vld [vmem:[#allocation16] sm:$0xff]
    %v5090 = vld [vmem:[#allocation16 + $0x8] sm:$0xff]
    %v5091 = vld [vmem:[#allocation16 + $0x10] sm:$0xff]
    %v5092 = vld [vmem:[#allocation16 + $0x18] sm:$0xff]
    %v5093 = vld [vmem:[#allocation16 + $0x20] sm:$0xff]
    %v5094 = vld [vmem:[#allocation16 + $0x28] sm:$0xff]
    %v5095 = vld [vmem:[#allocation16 + $0x30] sm:$0xff]
    %v5096 = vld [vmem:[#allocation16 + $0x38] sm:$0xff]
    %v5097 = vld [vmem:[#allocation16 + $0x40] sm:$0xff]
    %v5098 = vld [vmem:[#allocation16 + $0x48] sm:$0xff]
    %v5099 = vld [vmem:[#allocation16 + $0x50] sm:$0xff]
    %v5100 = vld [vmem:[#allocation16 + $0x58] sm:$0xff]
    %v5101 = vld [vmem:[#allocation16 + $0x60] sm:$0xff]
    %v5102 = vld [vmem:[#allocation16 + $0x68] sm:$0xff]
    %v5103 = vld [vmem:[#allocation16 + $0x70] sm:$0xff]
    %v5104 = vld [vmem:[#allocation16 + $0x78] sm:$0xff]
    %v5105 = vld [vmem:[#allocation16 + $0x80] sm:$0xff]
    %v5106 = vld [vmem:[#allocation16 + $0x88] sm:$0xff]
    %v5107 = vld [vmem:[#allocation16 + $0x90] sm:$0xff]
    %v5108 = vld [vmem:[#allocation16 + $0x98] sm:$0xff]
    %v5109 = vld [vmem:[#allocation16 + $0xa0] sm:$0xff]
    %v5110 = vld [vmem:[#allocation16 + $0xa8] sm:$0xff]
    %v5111 = vld [vmem:[#allocation16 + $0xb0] sm:$0xff]
    %v5112 = vld [vmem:[#allocation16 + $0xb8] sm:$0xff]
    %v5113 = vld [vmem:[#allocation16 + $0xc0] sm:$0xff]
    %v5114 = vld [vmem:[#allocation16 + $0xc8] sm:$0xff]
    %v5115 = vld [vmem:[#allocation16 + $0xd0] sm:$0xff]
    %v5116 = vld [vmem:[#allocation16 + $0xd8] sm:$0xff]
    %v5117 = vld [vmem:[#allocation16 + $0xe0] sm:$0xff]
    %v5118 = vld [vmem:[#allocation16 + $0xe8] sm:$0xff]
    %v5119 = vld [vmem:[#allocation16 + $0xf0] sm:$0xff]
    %v5120 = vld [vmem:[#allocation16 + $0xf8] sm:$0xff]
    %v5121 = vld [vmem:[#allocation16 + $0x100] sm:$0xff]
    %v5122 = vld [vmem:[#allocation16 + $0x108] sm:$0xff]
    %v5123 = vld [vmem:[#allocation16 + $0x110] sm:$0xff]
    %v5124 = vld [vmem:[#allocation16 + $0x118] sm:$0xff]
    %v5125 = vld [vmem:[#allocation16 + $0x120] sm:$0xff]
    %v5126 = vld [vmem:[#allocation16 + $0x128] sm:$0xff]
    %v5127 = vld [vmem:[#allocation16 + $0x130] sm:$0xff]
    %v5128 = vld [vmem:[#allocation16 + $0x138] sm:$0xff]
    %v5129 = vld [vmem:[#allocation16 + $0x140] sm:$0xff]
    %v5130 = vld [vmem:[#allocation16 + $0x148] sm:$0xff]
    %v5131 = vld [vmem:[#allocation16 + $0x150] sm:$0xff]
    %v5132 = vld [vmem:[#allocation16 + $0x158] sm:$0xff]
    %v5133 = vld [vmem:[#allocation16 + $0x160] sm:$0xff]
    %v5134 = vld [vmem:[#allocation16 + $0x168] sm:$0xff]
    %v5135 = vld [vmem:[#allocation16 + $0x170] sm:$0xff]
    %v5136 = vld [vmem:[#allocation16 + $0x178] sm:$0xff]
    %v5137 = vld [vmem:[#allocation16 + $0x180] sm:$0xff]
    %v5138 = vld [vmem:[#allocation16 + $0x188] sm:$0xff]
    %v5139 = vld [vmem:[#allocation16 + $0x190] sm:$0xff]
    %v5140 = vld [vmem:[#allocation16 + $0x198] sm:$0xff]
    %v5141 = vld [vmem:[#allocation16 + $0x1a0] sm:$0xff]
    %v5142 = vld [vmem:[#allocation16 + $0x1a8] sm:$0xff]
    %v5143 = vld [vmem:[#allocation16 + $0x1b0] sm:$0xff]
    %v5144 = vld [vmem:[#allocation16 + $0x1b8] sm:$0xff]
    %v5145 = vld [vmem:[#allocation16 + $0x1c0] sm:$0xff]
    %v5146 = vld [vmem:[#allocation16 + $0x1c8] sm:$0xff]
    %v5147 = vld [vmem:[#allocation16 + $0x1d0] sm:$0xff]
    %v5148 = vld [vmem:[#allocation16 + $0x1d8] sm:$0xff]
    %v5149 = vld [vmem:[#allocation16 + $0x1e0] sm:$0xff]
    %v5150 = vld [vmem:[#allocation16 + $0x1e8] sm:$0xff]
    %v5151 = vld [vmem:[#allocation16 + $0x1f0] sm:$0xff]
    %v5152 = vld [vmem:[#allocation16 + $0x1f8] sm:$0xff]
    %v5153 = vld [vmem:[#allocation16 + $0x200] sm:$0xff]
    %v5154 = vld [vmem:[#allocation16 + $0x208] sm:$0xff]
    %v5155 = vld [vmem:[#allocation16 + $0x210] sm:$0xff]
    %v5156 = vld [vmem:[#allocation16 + $0x218] sm:$0xff]
    %v5157 = vld [vmem:[#allocation16 + $0x220] sm:$0xff]
    %v5158 = vld [vmem:[#allocation16 + $0x228] sm:$0xff]
    %v5159 = vld [vmem:[#allocation16 + $0x230] sm:$0xff]
    %v5160 = vld [vmem:[#allocation16 + $0x238] sm:$0xff]
    %v5161 = vld [vmem:[#allocation16 + $0x240] sm:$0xff]
    %v5162 = vld [vmem:[#allocation16 + $0x248] sm:$0xff]
    %v5163 = vld [vmem:[#allocation16 + $0x250] sm:$0xff]
    %v5164 = vld [vmem:[#allocation16 + $0x258] sm:$0xff]
    %v5165 = vld [vmem:[#allocation16 + $0x260] sm:$0xff]
    %v5166 = vld [vmem:[#allocation16 + $0x268] sm:$0xff]
    %v5167 = vld [vmem:[#allocation16 + $0x270] sm:$0xff]
    %v5168 = vld [vmem:[#allocation16 + $0x278] sm:$0xff]
    %v5169 = vld [vmem:[#allocation16 + $0x280] sm:$0xff]
    %v5170 = vld [vmem:[#allocation16 + $0x288] sm:$0xff]
    %v5171 = vld [vmem:[#allocation16 + $0x290] sm:$0xff]
    %v5172 = vld [vmem:[#allocation16 + $0x298] sm:$0xff]
    %v5173 = vld [vmem:[#allocation16 + $0x2a0] sm:$0xff]
    %v5174 = vld [vmem:[#allocation16 + $0x2a8] sm:$0xff]
    %v5175 = vld [vmem:[#allocation16 + $0x2b0] sm:$0xff]
    %v5176 = vld [vmem:[#allocation16 + $0x2b8] sm:$0xff]
    %v5177 = vld [vmem:[#allocation16 + $0x2c0] sm:$0xff]
    %v5178 = vld [vmem:[#allocation16 + $0x2c8] sm:$0xff]
    %v5179 = vld [vmem:[#allocation16 + $0x2d0] sm:$0xff]
    %v5180 = vld [vmem:[#allocation16 + $0x2d8] sm:$0xff]
    %v5181 = vld [vmem:[#allocation16 + $0x2e0] sm:$0xff]
    %v5182 = vld [vmem:[#allocation16 + $0x2e8] sm:$0xff]
    %v5183 = vld [vmem:[#allocation16 + $0x2f0] sm:$0xff]
    %v5184 = vld [vmem:[#allocation16 + $0x2f8] sm:$0xff]
    %v5185 = vld [vmem:[#allocation16 + $0x300] sm:$0xff]
    %v5186 = vld [vmem:[#allocation16 + $0x308] sm:$0xff]
    %v5187 = vld [vmem:[#allocation16 + $0x310] sm:$0xff]
    %v5188 = vld [vmem:[#allocation16 + $0x318] sm:$0xff]
    %v5189 = vld [vmem:[#allocation16 + $0x320] sm:$0xff]
    %v5190 = vld [vmem:[#allocation16 + $0x328] sm:$0xff]
    %v5191 = vld [vmem:[#allocation16 + $0x330] sm:$0xff]
    %v5192 = vld [vmem:[#allocation16 + $0x338] sm:$0xff]
    %v5193 = vld [vmem:[#allocation16 + $0x340] sm:$0xff]
    %v5194 = vld [vmem:[#allocation16 + $0x348] sm:$0xff]
    %v5195 = vld [vmem:[#allocation16 + $0x350] sm:$0xff]
    %v5196 = vld [vmem:[#allocation16 + $0x358] sm:$0xff]
    %v5197 = vld [vmem:[#allocation16 + $0x360] sm:$0xff]
    %v5198 = vld [vmem:[#allocation16 + $0x368] sm:$0xff]
    %v5199 = vld [vmem:[#allocation16 + $0x370] sm:$0xff]
    %v5200 = vld [vmem:[#allocation16 + $0x378] sm:$0xff]
    %v5201 = vld [vmem:[#allocation16 + $0x380] sm:$0xff]
    %v5202 = vld [vmem:[#allocation16 + $0x388] sm:$0xff]
    %v5203 = vld [vmem:[#allocation16 + $0x390] sm:$0xff]
    %v5204 = vld [vmem:[#allocation16 + $0x398] sm:$0xff]
    %v5205 = vld [vmem:[#allocation16 + $0x3a0] sm:$0xff]
    %v5206 = vld [vmem:[#allocation16 + $0x3a8] sm:$0xff]
    %v5207 = vld [vmem:[#allocation16 + $0x3b0] sm:$0xff]
    %v5208 = vld [vmem:[#allocation16 + $0x3b8] sm:$0xff]
    %v5209 = vld [vmem:[#allocation16 + $0x3c0] sm:$0xff]
    %v5210 = vld [vmem:[#allocation16 + $0x3c8] sm:$0xff]
    %v5211 = vld [vmem:[#allocation16 + $0x3d0] sm:$0xff]
    %v5212 = vld [vmem:[#allocation16 + $0x3d8] sm:$0xff]
    %v5213 = vld [vmem:[#allocation16 + $0x3e0] sm:$0xff]
    %v5214 = vld [vmem:[#allocation16 + $0x3e8] sm:$0xff]
    %v5215 = vld [vmem:[#allocation16 + $0x3f0] sm:$0xff]
    %v5216 = vld [vmem:[#allocation16 + $0x3f8] sm:$0xff]
    %v5217 = vld [vmem:[#allocation16 + $0x400] sm:$0xff]
    %v5218 = vld [vmem:[#allocation16 + $0x408] sm:$0xff]
    %v5219 = vld [vmem:[#allocation16 + $0x410] sm:$0xff]
    %v5220 = vld [vmem:[#allocation16 + $0x418] sm:$0xff]
    %v5221 = vld [vmem:[#allocation16 + $0x420] sm:$0xff]
    %v5222 = vld [vmem:[#allocation16 + $0x428] sm:$0xff]
    %v5223 = vld [vmem:[#allocation16 + $0x430] sm:$0xff]
    %v5224 = vld [vmem:[#allocation16 + $0x438] sm:$0xff]
    %v5225 = vld [vmem:[#allocation16 + $0x440] sm:$0xff]
    %v5226 = vld [vmem:[#allocation16 + $0x448] sm:$0xff]
    %v5227 = vld [vmem:[#allocation16 + $0x450] sm:$0xff]
    %v5228 = vld [vmem:[#allocation16 + $0x458] sm:$0xff]
    %v5229 = vld [vmem:[#allocation16 + $0x460] sm:$0xff]
    %v5230 = vld [vmem:[#allocation16 + $0x468] sm:$0xff]
    %v5231 = vld [vmem:[#allocation16 + $0x470] sm:$0xff]
    %v5232 = vld [vmem:[#allocation16 + $0x478] sm:$0xff]
    %v5233 = vld [vmem:[#allocation16 + $0x480] sm:$0xff]
    %v5234 = vld [vmem:[#allocation16 + $0x488] sm:$0xff]
    %v5235 = vld [vmem:[#allocation16 + $0x490] sm:$0xff]
    %v5236 = vld [vmem:[#allocation16 + $0x498] sm:$0xff]
    %v5237 = vld [vmem:[#allocation16 + $0x4a0] sm:$0xff]
    %v5238 = vld [vmem:[#allocation16 + $0x4a8] sm:$0xff]
    %v5239 = vld [vmem:[#allocation16 + $0x4b0] sm:$0xff]
    %v5240 = vld [vmem:[#allocation16 + $0x4b8] sm:$0xff]
    %v5241 = vld [vmem:[#allocation16 + $0x4c0] sm:$0xff]
    %v5242 = vld [vmem:[#allocation16 + $0x4c8] sm:$0xff]
    %v5243 = vld [vmem:[#allocation16 + $0x4d0] sm:$0xff]
    %v5244 = vld [vmem:[#allocation16 + $0x4d8] sm:$0xff]
    %v5245 = vld [vmem:[#allocation16 + $0x4e0] sm:$0xff]
    %v5246 = vld [vmem:[#allocation16 + $0x4e8] sm:$0xff]
    %v5247 = vld [vmem:[#allocation16 + $0x4f0] sm:$0xff]
    %v5248 = vld [vmem:[#allocation16 + $0x4f8] sm:$0xff]
    %v5249 = vld [vmem:[#allocation16 + $0x500] sm:$0xff]
    %v5250 = vld [vmem:[#allocation16 + $0x508] sm:$0xff]
    %v5251 = vld [vmem:[#allocation16 + $0x510] sm:$0xff]
    %v5252 = vld [vmem:[#allocation16 + $0x518] sm:$0xff]
    %v5253 = vld [vmem:[#allocation16 + $0x520] sm:$0xff]
    %v5254 = vld [vmem:[#allocation16 + $0x528] sm:$0xff]
    %v5255 = vld [vmem:[#allocation16 + $0x530] sm:$0xff]
    %v5256 = vld [vmem:[#allocation16 + $0x538] sm:$0xff]
    %v5257 = vld [vmem:[#allocation16 + $0x540] sm:$0xff]
    %v5258 = vld [vmem:[#allocation16 + $0x548] sm:$0xff]
    %v5259 = vld [vmem:[#allocation16 + $0x550] sm:$0xff]
    %v5260 = vld [vmem:[#allocation16 + $0x558] sm:$0xff]
    %v5261 = vld [vmem:[#allocation16 + $0x560] sm:$0xff]
    %v5262 = vld [vmem:[#allocation16 + $0x568] sm:$0xff]
    %v5263 = vld [vmem:[#allocation16 + $0x570] sm:$0xff]
    %v5264 = vld [vmem:[#allocation16 + $0x578] sm:$0xff]
    %v5265 = vld [vmem:[#allocation16 + $0x580] sm:$0xff]
    %v5266 = vld [vmem:[#allocation16 + $0x588] sm:$0xff]
    %v5267 = vld [vmem:[#allocation16 + $0x590] sm:$0xff]
    %v5268 = vld [vmem:[#allocation16 + $0x598] sm:$0xff]
    %v5269 = vld [vmem:[#allocation16 + $0x5a0] sm:$0xff]
    %v5270 = vld [vmem:[#allocation16 + $0x5a8] sm:$0xff]
    %v5271 = vld [vmem:[#allocation16 + $0x5b0] sm:$0xff]
    %v5272 = vld [vmem:[#allocation16 + $0x5b8] sm:$0xff]
    %v5273 = vld [vmem:[#allocation16 + $0x5c0] sm:$0xff]
    %v5274 = vld [vmem:[#allocation16 + $0x5c8] sm:$0xff]
    %v5275 = vld [vmem:[#allocation16 + $0x5d0] sm:$0xff]
    %v5276 = vld [vmem:[#allocation16 + $0x5d8] sm:$0xff]
    %v5277 = vld [vmem:[#allocation16 + $0x5e0] sm:$0xff]
    %v5278 = vld [vmem:[#allocation16 + $0x5e8] sm:$0xff]
    %v5279 = vld [vmem:[#allocation16 + $0x5f0] sm:$0xff]
    %v5280 = vld [vmem:[#allocation16 + $0x5f8] sm:$0xff]
    %v5281 = vld [vmem:[#allocation15] sm:$0xf]
    %v5283 = vsel %vm2037, %v5281, 0
    %5285 = vmatprep.subr.bf16.mxu0 %v2046
    %5286 = vmatpush1.bf16.msra.mxu0 %v2043
    %5287 = vmatprep.subr.bf16.mxu0 0
    %5288 = vmatpush1.bf16.msra.mxu0 0
    %5289 = vmatprep.subr.bf16.mxu0 0
    %5290 = vmatpush1.bf16.msra.mxu0 0
    %5291 = vmatprep.subr.bf16.mxu0 0
    %5292 = vmatpush1.bf16.msra.mxu0 0
    %5293 = vmatprep.subr.bf16.mxu0 0
    %5294 = vmatpush1.bf16.msra.mxu0 0
    %5295 = vmatprep.subr.bf16.mxu0 0
    %5296 = vmatpush1.bf16.msra.mxu0 0
    %5297 = vmatprep.subr.bf16.mxu0 0
    %5298 = vmatpush1.bf16.msra.mxu0 0
    %5299 = vmatprep.subr.bf16.mxu0 0
    %5300 = vmatpush1.bf16.msra.mxu0 0
    %5301 = vmatprep.subr.bf16.mxu0 0
    %5302 = vmatpush1.bf16.msra.mxu0 0
    %5303 = vmatprep.subr.bf16.mxu0 0
    %5304 = vmatpush1.bf16.msra.mxu0 0
    %5305 = vmatprep.subr.bf16.mxu0 0
    %5306 = vmatpush1.bf16.msra.mxu0 0
    %5307 = vmatprep.subr.bf16.mxu0 0
    %5308 = vmatpush1.bf16.msra.mxu0 0
    %5309 = vmatprep.subr.bf16.mxu0 0
    %5310 = vmatpush1.bf16.msra.mxu0 0
    %5311 = vmatprep.subr.bf16.mxu0 0
    %5312 = vmatpush1.bf16.msra.mxu0 0
    %5313 = vmatprep.subr.bf16.mxu0 0
    %5314 = vmatpush1.bf16.msra.mxu0 0
    %5315 = vmatprep.subr.bf16.mxu0 0
    %5316 = vmatpush1.bf16.msra.mxu0 0
    %5317 = vmatprep.mubr.bf16.mxu0 0
    %5318 = vmatmul.mubr.bf16.gmra.mrb[0].mxu0 %v5283
    %v5319 = vpop.f32.mrb[0].mxu0
    %v5320 = vadd.f32 0.0, %v5319
    %v5321 = vpop.f32.mrb[0].mxu0
    %v5322 = vadd.f32 0.0, %v5321
    %v5323 = vpop.f32.mrb[0].mxu0
    %v5324 = vpop.f32.mrb[0].mxu0
    %5325 = vdwg.mxu0
    %s5326 = scalar_lea.vmem [#allocation15], 4
    %v5327 = vld [vmem:[%s5326] sm:$0xf]
    %v5329 = vsel %vm2037, %v5327, 0
    %5331 = vmatprep.subr.bf16.mxu0 %v2046
    %5332 = vmatpush1.bf16.msra.mxu0 %v2043
    %5333 = vmatprep.subr.bf16.mxu0 0
    %5334 = vmatpush1.bf16.msra.mxu0 0
    %5335 = vmatprep.subr.bf16.mxu0 0
    %5336 = vmatpush1.bf16.msra.mxu0 0
    %5337 = vmatprep.subr.bf16.mxu0 0
    %5338 = vmatpush1.bf16.msra.mxu0 0
    %5339 = vmatprep.subr.bf16.mxu0 0
    %5340 = vmatpush1.bf16.msra.mxu0 0
    %5341 = vmatprep.subr.bf16.mxu0 0
    %5342 = vmatpush1.bf16.msra.mxu0 0
    %5343 = vmatprep.subr.bf16.mxu0 0
    %5344 = vmatpush1.bf16.msra.mxu0 0
    %5345 = vmatprep.subr.bf16.mxu0 0
    %5346 = vmatpush1.bf16.msra.mxu0 0
    %5347 = vmatprep.subr.bf16.mxu0 0
    %5348 = vmatpush1.bf16.msra.mxu0 0
    %5349 = vmatprep.subr.bf16.mxu0 0
    %5350 = vmatpush1.bf16.msra.mxu0 0
    %5351 = vmatprep.subr.bf16.mxu0 0
    %5352 = vmatpush1.bf16.msra.mxu0 0
    %5353 = vmatprep.subr.bf16.mxu0 0
    %5354 = vmatpush1.bf16.msra.mxu0 0
    %5355 = vmatprep.subr.bf16.mxu0 0
    %5356 = vmatpush1.bf16.msra.mxu0 0
    %5357 = vmatprep.subr.bf16.mxu0 0
    %5358 = vmatpush1.bf16.msra.mxu0 0
    %5359 = vmatprep.subr.bf16.mxu0 0
    %5360 = vmatpush1.bf16.msra.mxu0 0
    %5361 = vmatprep.subr.bf16.mxu0 0
    %5362 = vmatpush1.bf16.msra.mxu0 0
    %5363 = vmatprep.mubr.bf16.mxu0 0
    %5364 = vmatmul.mubr.bf16.gmra.mrb[0].mxu0 %v5329
    %v5365 = vpop.f32.mrb[0].mxu0
    %v5366 = vadd.f32 0.0, %v5365
    %v5367 = vpop.f32.mrb[0].mxu0
    %v5368 = vadd.f32 0.0, %v5367
    %v5369 = vpop.f32.mrb[0].mxu0
    %v5370 = vpop.f32.mrb[0].mxu0
    %5371 = vdwg.mxu0
    %s5372 = scalar_lea.vmem [#allocation15], 8
    %v5373 = vld [vmem:[%s5372] sm:$0xf]
    %v5375 = vsel %vm2037, %v5373, 0
    %5377 = vmatprep.subr.bf16.mxu0 %v2046
    %5378 = vmatpush1.bf16.msra.mxu0 %v2043
    %5379 = vmatprep.subr.bf16.mxu0 0
    %5380 = vmatpush1.bf16.msra.mxu0 0
    %5381 = vmatprep.subr.bf16.mxu0 0
    %5382 = vmatpush1.bf16.msra.mxu0 0
    %5383 = vmatprep.subr.bf16.mxu0 0
    %5384 = vmatpush1.bf16.msra.mxu0 0
    %5385 = vmatprep.subr.bf16.mxu0 0
    %5386 = vmatpush1.bf16.msra.mxu0 0
    %5387 = vmatprep.subr.bf16.mxu0 0
    %5388 = vmatpush1.bf16.msra.mxu0 0
    %5389 = vmatprep.subr.bf16.mxu0 0
    %5390 = vmatpush1.bf16.msra.mxu0 0
    %5391 = vmatprep.subr.bf16.mxu0 0
    %5392 = vmatpush1.bf16.msra.mxu0 0
    %5393 = vmatprep.subr.bf16.mxu0 0
    %5394 = vmatpush1.bf16.msra.mxu0 0
    %5395 = vmatprep.subr.bf16.mxu0 0
    %5396 = vmatpush1.bf16.msra.mxu0 0
    %5397 = vmatprep.subr.bf16.mxu0 0
    %5398 = vmatpush1.bf16.msra.mxu0 0
    %5399 = vmatprep.subr.bf16.mxu0 0
    %5400 = vmatpush1.bf16.msra.mxu0 0
    %5401 = vmatprep.subr.bf16.mxu0 0
    %5402 = vmatpush1.bf16.msra.mxu0 0
    %5403 = vmatprep.subr.bf16.mxu0 0
    %5404 = vmatpush1.bf16.msra.mxu0 0
    %5405 = vmatprep.subr.bf16.mxu0 0
    %5406 = vmatpush1.bf16.msra.mxu0 0
    %5407 = vmatprep.subr.bf16.mxu0 0
    %5408 = vmatpush1.bf16.msra.mxu0 0
    %5409 = vmatprep.mubr.bf16.mxu0 0
    %5410 = vmatmul.mubr.bf16.gmra.mrb[0].mxu0 %v5375
    %v5411 = vpop.f32.mrb[0].mxu0
    %v5412 = vadd.f32 0.0, %v5411
    %v5413 = vpop.f32.mrb[0].mxu0
    %v5414 = vadd.f32 0.0, %v5413
    %v5415 = vpop.f32.mrb[0].mxu0
    %v5416 = vpop.f32.mrb[0].mxu0
    %5417 = vdwg.mxu0
    %v5418 = vpack.c.bf16 %v5320, %v5320
    %v5419 = vpack.c.bf16 %v5322, %v5322
    %v5420 = vpack.c.bf16 %v5366, %v5366
    %v5421 = vpack.c.bf16 %v5368, %v5368
    %v5422 = vpack.c.bf16 %v5412, %v5412
    %v5423 = vpack.c.bf16 %v5414, %v5414
    %v5424 = vld [vmem:[#allocation18] sm:$0xff]
    %v5425 = vld [vmem:[#allocation18 + $0x8] sm:$0xff]
    %v5426 = vld [vmem:[#allocation18 + $0x10] sm:$0xff]
    %v5427 = vld [vmem:[#allocation18 + $0x18] sm:$0xff]
    %v5428 = vld [vmem:[#allocation18 + $0x20] sm:$0xff]
    %v5429 = vld [vmem:[#allocation18 + $0x28] sm:$0xff]
    %v5430 = vld [vmem:[#allocation18 + $0x30] sm:$0xff]
    %v5431 = vld [vmem:[#allocation18 + $0x38] sm:$0xff]
    %v5432 = vld [vmem:[#allocation18 + $0x40] sm:$0xff]
    %v5433 = vld [vmem:[#allocation18 + $0x48] sm:$0xff]
    %v5434 = vld [vmem:[#allocation18 + $0x50] sm:$0xff]
    %v5435 = vld [vmem:[#allocation18 + $0x58] sm:$0xff]
    %v5436 = vld [vmem:[#allocation18 + $0x60] sm:$0xff]
    %v5437 = vld [vmem:[#allocation18 + $0x68] sm:$0xff]
    %v5438 = vld [vmem:[#allocation18 + $0x70] sm:$0xff]
    %v5439 = vld [vmem:[#allocation18 + $0x78] sm:$0xff]
    %v5440 = vld [vmem:[#allocation18 + $0x80] sm:$0xff]
    %v5441 = vld [vmem:[#allocation18 + $0x88] sm:$0xff]
    %v5442 = vld [vmem:[#allocation18 + $0x90] sm:$0xff]
    %v5443 = vld [vmem:[#allocation18 + $0x98] sm:$0xff]
    %v5444 = vld [vmem:[#allocation18 + $0xa0] sm:$0xff]
    %v5445 = vld [vmem:[#allocation18 + $0xa8] sm:$0xff]
    %v5446 = vld [vmem:[#allocation18 + $0xb0] sm:$0xff]
    %v5447 = vld [vmem:[#allocation18 + $0xb8] sm:$0xff]
    %v5448 = vld [vmem:[#allocation18 + $0xc0] sm:$0xff]
    %v5449 = vld [vmem:[#allocation18 + $0xc8] sm:$0xff]
    %v5450 = vld [vmem:[#allocation18 + $0xd0] sm:$0xff]
    %v5451 = vld [vmem:[#allocation18 + $0xd8] sm:$0xff]
    %v5452 = vld [vmem:[#allocation18 + $0xe0] sm:$0xff]
    %v5453 = vld [vmem:[#allocation18 + $0xe8] sm:$0xff]
    %v5454 = vld [vmem:[#allocation18 + $0xf0] sm:$0xff]
    %v5455 = vld [vmem:[#allocation18 + $0xf8] sm:$0xff]
    %v5456 = vld [vmem:[#allocation18 + $0x100] sm:$0xff]
    %v5457 = vld [vmem:[#allocation18 + $0x108] sm:$0xff]
    %v5458 = vld [vmem:[#allocation18 + $0x110] sm:$0xff]
    %v5459 = vld [vmem:[#allocation18 + $0x118] sm:$0xff]
    %v5460 = vld [vmem:[#allocation18 + $0x120] sm:$0xff]
    %v5461 = vld [vmem:[#allocation18 + $0x128] sm:$0xff]
    %v5462 = vld [vmem:[#allocation18 + $0x130] sm:$0xff]
    %v5463 = vld [vmem:[#allocation18 + $0x138] sm:$0xff]
    %v5464 = vld [vmem:[#allocation18 + $0x140] sm:$0xff]
    %v5465 = vld [vmem:[#allocation18 + $0x148] sm:$0xff]
    %v5466 = vld [vmem:[#allocation18 + $0x150] sm:$0xff]
    %v5467 = vld [vmem:[#allocation18 + $0x158] sm:$0xff]
    %v5468 = vld [vmem:[#allocation18 + $0x160] sm:$0xff]
    %v5469 = vld [vmem:[#allocation18 + $0x168] sm:$0xff]
    %v5470 = vld [vmem:[#allocation18 + $0x170] sm:$0xff]
    %v5471 = vld [vmem:[#allocation18 + $0x178] sm:$0xff]
    %v5472 = vld [vmem:[#allocation18 + $0x180] sm:$0xff]
    %v5473 = vld [vmem:[#allocation18 + $0x188] sm:$0xff]
    %v5474 = vld [vmem:[#allocation18 + $0x190] sm:$0xff]
    %v5475 = vld [vmem:[#allocation18 + $0x198] sm:$0xff]
    %v5476 = vld [vmem:[#allocation18 + $0x1a0] sm:$0xff]
    %v5477 = vld [vmem:[#allocation18 + $0x1a8] sm:$0xff]
    %v5478 = vld [vmem:[#allocation18 + $0x1b0] sm:$0xff]
    %v5479 = vld [vmem:[#allocation18 + $0x1b8] sm:$0xff]
    %v5480 = vld [vmem:[#allocation18 + $0x1c0] sm:$0xff]
    %v5481 = vld [vmem:[#allocation18 + $0x1c8] sm:$0xff]
    %v5482 = vld [vmem:[#allocation18 + $0x1d0] sm:$0xff]
    %v5483 = vld [vmem:[#allocation18 + $0x1d8] sm:$0xff]
    %v5484 = vld [vmem:[#allocation18 + $0x1e0] sm:$0xff]
    %v5485 = vld [vmem:[#allocation18 + $0x1e8] sm:$0xff]
    %v5486 = vld [vmem:[#allocation18 + $0x1f0] sm:$0xff]
    %v5487 = vld [vmem:[#allocation18 + $0x1f8] sm:$0xff]
    %v5488 = vld [vmem:[#allocation18 + $0x200] sm:$0xff]
    %v5489 = vld [vmem:[#allocation18 + $0x208] sm:$0xff]
    %v5490 = vld [vmem:[#allocation18 + $0x210] sm:$0xff]
    %v5491 = vld [vmem:[#allocation18 + $0x218] sm:$0xff]
    %v5492 = vld [vmem:[#allocation18 + $0x220] sm:$0xff]
    %v5493 = vld [vmem:[#allocation18 + $0x228] sm:$0xff]
    %v5494 = vld [vmem:[#allocation18 + $0x230] sm:$0xff]
    %v5495 = vld [vmem:[#allocation18 + $0x238] sm:$0xff]
    %v5496 = vld [vmem:[#allocation18 + $0x240] sm:$0xff]
    %v5497 = vld [vmem:[#allocation18 + $0x248] sm:$0xff]
    %v5498 = vld [vmem:[#allocation18 + $0x250] sm:$0xff]
    %v5499 = vld [vmem:[#allocation18 + $0x258] sm:$0xff]
    %v5500 = vld [vmem:[#allocation18 + $0x260] sm:$0xff]
    %v5501 = vld [vmem:[#allocation18 + $0x268] sm:$0xff]
    %v5502 = vld [vmem:[#allocation18 + $0x270] sm:$0xff]
    %v5503 = vld [vmem:[#allocation18 + $0x278] sm:$0xff]
    %v5504 = vld [vmem:[#allocation18 + $0x280] sm:$0xff]
    %v5505 = vld [vmem:[#allocation18 + $0x288] sm:$0xff]
    %v5506 = vld [vmem:[#allocation18 + $0x290] sm:$0xff]
    %v5507 = vld [vmem:[#allocation18 + $0x298] sm:$0xff]
    %v5508 = vld [vmem:[#allocation18 + $0x2a0] sm:$0xff]
    %v5509 = vld [vmem:[#allocation18 + $0x2a8] sm:$0xff]
    %v5510 = vld [vmem:[#allocation18 + $0x2b0] sm:$0xff]
    %v5511 = vld [vmem:[#allocation18 + $0x2b8] sm:$0xff]
    %v5512 = vld [vmem:[#allocation18 + $0x2c0] sm:$0xff]
    %v5513 = vld [vmem:[#allocation18 + $0x2c8] sm:$0xff]
    %v5514 = vld [vmem:[#allocation18 + $0x2d0] sm:$0xff]
    %v5515 = vld [vmem:[#allocation18 + $0x2d8] sm:$0xff]
    %v5516 = vld [vmem:[#allocation18 + $0x2e0] sm:$0xff]
    %v5517 = vld [vmem:[#allocation18 + $0x2e8] sm:$0xff]
    %v5518 = vld [vmem:[#allocation18 + $0x2f0] sm:$0xff]
    %v5519 = vld [vmem:[#allocation18 + $0x2f8] sm:$0xff]
    %v5520 = vld [vmem:[#allocation18 + $0x300] sm:$0xff]
    %v5521 = vld [vmem:[#allocation18 + $0x308] sm:$0xff]
    %v5522 = vld [vmem:[#allocation18 + $0x310] sm:$0xff]
    %v5523 = vld [vmem:[#allocation18 + $0x318] sm:$0xff]
    %v5524 = vld [vmem:[#allocation18 + $0x320] sm:$0xff]
    %v5525 = vld [vmem:[#allocation18 + $0x328] sm:$0xff]
    %v5526 = vld [vmem:[#allocation18 + $0x330] sm:$0xff]
    %v5527 = vld [vmem:[#allocation18 + $0x338] sm:$0xff]
    %v5528 = vld [vmem:[#allocation18 + $0x340] sm:$0xff]
    %v5529 = vld [vmem:[#allocation18 + $0x348] sm:$0xff]
    %v5530 = vld [vmem:[#allocation18 + $0x350] sm:$0xff]
    %v5531 = vld [vmem:[#allocation18 + $0x358] sm:$0xff]
    %v5532 = vld [vmem:[#allocation18 + $0x360] sm:$0xff]
    %v5533 = vld [vmem:[#allocation18 + $0x368] sm:$0xff]
    %v5534 = vld [vmem:[#allocation18 + $0x370] sm:$0xff]
    %v5535 = vld [vmem:[#allocation18 + $0x378] sm:$0xff]
    %v5536 = vld [vmem:[#allocation18 + $0x380] sm:$0xff]
    %v5537 = vld [vmem:[#allocation18 + $0x388] sm:$0xff]
    %v5538 = vld [vmem:[#allocation18 + $0x390] sm:$0xff]
    %v5539 = vld [vmem:[#allocation18 + $0x398] sm:$0xff]
    %v5540 = vld [vmem:[#allocation18 + $0x3a0] sm:$0xff]
    %v5541 = vld [vmem:[#allocation18 + $0x3a8] sm:$0xff]
    %v5542 = vld [vmem:[#allocation18 + $0x3b0] sm:$0xff]
    %v5543 = vld [vmem:[#allocation18 + $0x3b8] sm:$0xff]
    %v5544 = vld [vmem:[#allocation18 + $0x3c0] sm:$0xff]
    %v5545 = vld [vmem:[#allocation18 + $0x3c8] sm:$0xff]
    %v5546 = vld [vmem:[#allocation18 + $0x3d0] sm:$0xff]
    %v5547 = vld [vmem:[#allocation18 + $0x3d8] sm:$0xff]
    %v5548 = vld [vmem:[#allocation18 + $0x3e0] sm:$0xff]
    %v5549 = vld [vmem:[#allocation18 + $0x3e8] sm:$0xff]
    %v5550 = vld [vmem:[#allocation18 + $0x3f0] sm:$0xff]
    %v5551 = vld [vmem:[#allocation18 + $0x3f8] sm:$0xff]
    %v5552 = vld [vmem:[#allocation18 + $0x400] sm:$0xff]
    %v5553 = vld [vmem:[#allocation18 + $0x408] sm:$0xff]
    %v5554 = vld [vmem:[#allocation18 + $0x410] sm:$0xff]
    %v5555 = vld [vmem:[#allocation18 + $0x418] sm:$0xff]
    %v5556 = vld [vmem:[#allocation18 + $0x420] sm:$0xff]
    %v5557 = vld [vmem:[#allocation18 + $0x428] sm:$0xff]
    %v5558 = vld [vmem:[#allocation18 + $0x430] sm:$0xff]
    %v5559 = vld [vmem:[#allocation18 + $0x438] sm:$0xff]
    %v5560 = vld [vmem:[#allocation18 + $0x440] sm:$0xff]
    %v5561 = vld [vmem:[#allocation18 + $0x448] sm:$0xff]
    %v5562 = vld [vmem:[#allocation18 + $0x450] sm:$0xff]
    %v5563 = vld [vmem:[#allocation18 + $0x458] sm:$0xff]
    %v5564 = vld [vmem:[#allocation18 + $0x460] sm:$0xff]
    %v5565 = vld [vmem:[#allocation18 + $0x468] sm:$0xff]
    %v5566 = vld [vmem:[#allocation18 + $0x470] sm:$0xff]
    %v5567 = vld [vmem:[#allocation18 + $0x478] sm:$0xff]
    %v5568 = vld [vmem:[#allocation18 + $0x480] sm:$0xff]
    %v5569 = vld [vmem:[#allocation18 + $0x488] sm:$0xff]
    %v5570 = vld [vmem:[#allocation18 + $0x490] sm:$0xff]
    %v5571 = vld [vmem:[#allocation18 + $0x498] sm:$0xff]
    %v5572 = vld [vmem:[#allocation18 + $0x4a0] sm:$0xff]
    %v5573 = vld [vmem:[#allocation18 + $0x4a8] sm:$0xff]
    %v5574 = vld [vmem:[#allocation18 + $0x4b0] sm:$0xff]
    %v5575 = vld [vmem:[#allocation18 + $0x4b8] sm:$0xff]
    %v5576 = vld [vmem:[#allocation18 + $0x4c0] sm:$0xff]
    %v5577 = vld [vmem:[#allocation18 + $0x4c8] sm:$0xff]
    %v5578 = vld [vmem:[#allocation18 + $0x4d0] sm:$0xff]
    %v5579 = vld [vmem:[#allocation18 + $0x4d8] sm:$0xff]
    %v5580 = vld [vmem:[#allocation18 + $0x4e0] sm:$0xff]
    %v5581 = vld [vmem:[#allocation18 + $0x4e8] sm:$0xff]
    %v5582 = vld [vmem:[#allocation18 + $0x4f0] sm:$0xff]
    %v5583 = vld [vmem:[#allocation18 + $0x4f8] sm:$0xff]
    %v5584 = vld [vmem:[#allocation18 + $0x500] sm:$0xff]
    %v5585 = vld [vmem:[#allocation18 + $0x508] sm:$0xff]
    %v5586 = vld [vmem:[#allocation18 + $0x510] sm:$0xff]
    %v5587 = vld [vmem:[#allocation18 + $0x518] sm:$0xff]
    %v5588 = vld [vmem:[#allocation18 + $0x520] sm:$0xff]
    %v5589 = vld [vmem:[#allocation18 + $0x528] sm:$0xff]
    %v5590 = vld [vmem:[#allocation18 + $0x530] sm:$0xff]
    %v5591 = vld [vmem:[#allocation18 + $0x538] sm:$0xff]
    %v5592 = vld [vmem:[#allocation18 + $0x540] sm:$0xff]
    %v5593 = vld [vmem:[#allocation18 + $0x548] sm:$0xff]
    %v5594 = vld [vmem:[#allocation18 + $0x550] sm:$0xff]
    %v5595 = vld [vmem:[#allocation18 + $0x558] sm:$0xff]
    %v5596 = vld [vmem:[#allocation18 + $0x560] sm:$0xff]
    %v5597 = vld [vmem:[#allocation18 + $0x568] sm:$0xff]
    %v5598 = vld [vmem:[#allocation18 + $0x570] sm:$0xff]
    %v5599 = vld [vmem:[#allocation18 + $0x578] sm:$0xff]
    %v5600 = vld [vmem:[#allocation18 + $0x580] sm:$0xff]
    %v5601 = vld [vmem:[#allocation18 + $0x588] sm:$0xff]
    %v5602 = vld [vmem:[#allocation18 + $0x590] sm:$0xff]
    %v5603 = vld [vmem:[#allocation18 + $0x598] sm:$0xff]
    %v5604 = vld [vmem:[#allocation18 + $0x5a0] sm:$0xff]
    %v5605 = vld [vmem:[#allocation18 + $0x5a8] sm:$0xff]
    %v5606 = vld [vmem:[#allocation18 + $0x5b0] sm:$0xff]
    %v5607 = vld [vmem:[#allocation18 + $0x5b8] sm:$0xff]
    %v5608 = vld [vmem:[#allocation18 + $0x5c0] sm:$0xff]
    %v5609 = vld [vmem:[#allocation18 + $0x5c8] sm:$0xff]
    %v5610 = vld [vmem:[#allocation18 + $0x5d0] sm:$0xff]
    %v5611 = vld [vmem:[#allocation18 + $0x5d8] sm:$0xff]
    %v5612 = vld [vmem:[#allocation18 + $0x5e0] sm:$0xff]
    %v5613 = vld [vmem:[#allocation18 + $0x5e8] sm:$0xff]
    %v5614 = vld [vmem:[#allocation18 + $0x5f0] sm:$0xff]
    %v5615 = vld [vmem:[#allocation18 + $0x5f8] sm:$0xff]
    %v5808 = vunpack.c.l.b16 %v5424
    %v5809 = vunpack.c.h.b16 %v5424
    %v5810 = vunpack.c.l.b16 %v5425
    %v5811 = vunpack.c.h.b16 %v5425
    %v5812 = vunpack.c.l.b16 %v5426
    %v5813 = vunpack.c.h.b16 %v5426
    %v5814 = vunpack.c.l.b16 %v5427
    %v5815 = vunpack.c.h.b16 %v5427
    %v5816 = vunpack.c.l.b16 %v5428
    %v5817 = vunpack.c.h.b16 %v5428
    %v5818 = vunpack.c.l.b16 %v5429
    %v5819 = vunpack.c.h.b16 %v5429
    %v5820 = vunpack.c.l.b16 %v5430
    %v5821 = vunpack.c.h.b16 %v5430
    %v5822 = vunpack.c.l.b16 %v5431
    %v5823 = vunpack.c.h.b16 %v5431
    %v5824 = vunpack.c.l.b16 %v5432
    %v5825 = vunpack.c.h.b16 %v5432
    %v5826 = vunpack.c.l.b16 %v5433
    %v5827 = vunpack.c.h.b16 %v5433
    %v5828 = vunpack.c.l.b16 %v5434
    %v5829 = vunpack.c.h.b16 %v5434
    %v5830 = vunpack.c.l.b16 %v5435
    %v5831 = vunpack.c.h.b16 %v5435
    %v5832 = vunpack.c.l.b16 %v5436
    %v5833 = vunpack.c.h.b16 %v5436
    %v5834 = vunpack.c.l.b16 %v5437
    %v5835 = vunpack.c.h.b16 %v5437
    %v5836 = vunpack.c.l.b16 %v5438
    %v5837 = vunpack.c.h.b16 %v5438
    %v5838 = vunpack.c.l.b16 %v5439
    %v5839 = vunpack.c.h.b16 %v5439
    %v5840 = vunpack.c.l.b16 %v5440
    %v5841 = vunpack.c.h.b16 %v5440
    %v5842 = vunpack.c.l.b16 %v5441
    %v5843 = vunpack.c.h.b16 %v5441
    %v5844 = vunpack.c.l.b16 %v5442
    %v5845 = vunpack.c.h.b16 %v5442
    %v5846 = vunpack.c.l.b16 %v5443
    %v5847 = vunpack.c.h.b16 %v5443
    %v5848 = vunpack.c.l.b16 %v5444
    %v5849 = vunpack.c.h.b16 %v5444
    %v5850 = vunpack.c.l.b16 %v5445
    %v5851 = vunpack.c.h.b16 %v5445
    %v5852 = vunpack.c.l.b16 %v5446
    %v5853 = vunpack.c.h.b16 %v5446
    %v5854 = vunpack.c.l.b16 %v5447
    %v5855 = vunpack.c.h.b16 %v5447
    %v5856 = vunpack.c.l.b16 %v5448
    %v5857 = vunpack.c.h.b16 %v5448
    %v5858 = vunpack.c.l.b16 %v5449
    %v5859 = vunpack.c.h.b16 %v5449
    %v5860 = vunpack.c.l.b16 %v5450
    %v5861 = vunpack.c.h.b16 %v5450
    %v5862 = vunpack.c.l.b16 %v5451
    %v5863 = vunpack.c.h.b16 %v5451
    %v5864 = vunpack.c.l.b16 %v5452
    %v5865 = vunpack.c.h.b16 %v5452
    %v5866 = vunpack.c.l.b16 %v5453
    %v5867 = vunpack.c.h.b16 %v5453
    %v5868 = vunpack.c.l.b16 %v5454
    %v5869 = vunpack.c.h.b16 %v5454
    %v5870 = vunpack.c.l.b16 %v5455
    %v5871 = vunpack.c.h.b16 %v5455
    %v5872 = vunpack.c.l.b16 %v5456
    %v5873 = vunpack.c.h.b16 %v5456
    %v5874 = vunpack.c.l.b16 %v5457
    %v5875 = vunpack.c.h.b16 %v5457
    %v5876 = vunpack.c.l.b16 %v5458
    %v5877 = vunpack.c.h.b16 %v5458
    %v5878 = vunpack.c.l.b16 %v5459
    %v5879 = vunpack.c.h.b16 %v5459
    %v5880 = vunpack.c.l.b16 %v5460
    %v5881 = vunpack.c.h.b16 %v5460
    %v5882 = vunpack.c.l.b16 %v5461
    %v5883 = vunpack.c.h.b16 %v5461
    %v5884 = vunpack.c.l.b16 %v5462
    %v5885 = vunpack.c.h.b16 %v5462
    %v5886 = vunpack.c.l.b16 %v5463
    %v5887 = vunpack.c.h.b16 %v5463
    %v5888 = vunpack.c.l.b16 %v5464
    %v5889 = vunpack.c.h.b16 %v5464
    %v5890 = vunpack.c.l.b16 %v5465
    %v5891 = vunpack.c.h.b16 %v5465
    %v5892 = vunpack.c.l.b16 %v5466
    %v5893 = vunpack.c.h.b16 %v5466
    %v5894 = vunpack.c.l.b16 %v5467
    %v5895 = vunpack.c.h.b16 %v5467
    %v5896 = vunpack.c.l.b16 %v5468
    %v5897 = vunpack.c.h.b16 %v5468
    %v5898 = vunpack.c.l.b16 %v5469
    %v5899 = vunpack.c.h.b16 %v5469
    %v5900 = vunpack.c.l.b16 %v5470
    %v5901 = vunpack.c.h.b16 %v5470
    %v5902 = vunpack.c.l.b16 %v5471
    %v5903 = vunpack.c.h.b16 %v5471
    %v5904 = vunpack.c.l.b16 %v5472
    %v5905 = vunpack.c.h.b16 %v5472
    %v5906 = vunpack.c.l.b16 %v5473
    %v5907 = vunpack.c.h.b16 %v5473
    %v5908 = vunpack.c.l.b16 %v5474
    %v5909 = vunpack.c.h.b16 %v5474
    %v5910 = vunpack.c.l.b16 %v5475
    %v5911 = vunpack.c.h.b16 %v5475
    %v5912 = vunpack.c.l.b16 %v5476
    %v5913 = vunpack.c.h.b16 %v5476
    %v5914 = vunpack.c.l.b16 %v5477
    %v5915 = vunpack.c.h.b16 %v5477
    %v5916 = vunpack.c.l.b16 %v5478
    %v5917 = vunpack.c.h.b16 %v5478
    %v5918 = vunpack.c.l.b16 %v5479
    %v5919 = vunpack.c.h.b16 %v5479
    %v5920 = vunpack.c.l.b16 %v5480
    %v5921 = vunpack.c.h.b16 %v5480
    %v5922 = vunpack.c.l.b16 %v5481
    %v5923 = vunpack.c.h.b16 %v5481
    %v5924 = vunpack.c.l.b16 %v5482
    %v5925 = vunpack.c.h.b16 %v5482
    %v5926 = vunpack.c.l.b16 %v5483
    %v5927 = vunpack.c.h.b16 %v5483
    %v5928 = vunpack.c.l.b16 %v5484
    %v5929 = vunpack.c.h.b16 %v5484
    %v5930 = vunpack.c.l.b16 %v5485
    %v5931 = vunpack.c.h.b16 %v5485
    %v5932 = vunpack.c.l.b16 %v5486
    %v5933 = vunpack.c.h.b16 %v5486
    %v5934 = vunpack.c.l.b16 %v5487
    %v5935 = vunpack.c.h.b16 %v5487
    %v5936 = vunpack.c.l.b16 %v5488
    %v5937 = vunpack.c.h.b16 %v5488
    %v5938 = vunpack.c.l.b16 %v5489
    %v5939 = vunpack.c.h.b16 %v5489
    %v5940 = vunpack.c.l.b16 %v5490
    %v5941 = vunpack.c.h.b16 %v5490
    %v5942 = vunpack.c.l.b16 %v5491
    %v5943 = vunpack.c.h.b16 %v5491
    %v5944 = vunpack.c.l.b16 %v5492
    %v5945 = vunpack.c.h.b16 %v5492
    %v5946 = vunpack.c.l.b16 %v5493
    %v5947 = vunpack.c.h.b16 %v5493
    %v5948 = vunpack.c.l.b16 %v5494
    %v5949 = vunpack.c.h.b16 %v5494
    %v5950 = vunpack.c.l.b16 %v5495
    %v5951 = vunpack.c.h.b16 %v5495
    %v5952 = vunpack.c.l.b16 %v5496
    %v5953 = vunpack.c.h.b16 %v5496
    %v5954 = vunpack.c.l.b16 %v5497
    %v5955 = vunpack.c.h.b16 %v5497
    %v5956 = vunpack.c.l.b16 %v5498
    %v5957 = vunpack.c.h.b16 %v5498
    %v5958 = vunpack.c.l.b16 %v5499
    %v5959 = vunpack.c.h.b16 %v5499
    %v5960 = vunpack.c.l.b16 %v5500
    %v5961 = vunpack.c.h.b16 %v5500
    %v5962 = vunpack.c.l.b16 %v5501
    %v5963 = vunpack.c.h.b16 %v5501
    %v5964 = vunpack.c.l.b16 %v5502
    %v5965 = vunpack.c.h.b16 %v5502
    %v5966 = vunpack.c.l.b16 %v5503
    %v5967 = vunpack.c.h.b16 %v5503
    %v5968 = vunpack.c.l.b16 %v5504
    %v5969 = vunpack.c.h.b16 %v5504
    %v5970 = vunpack.c.l.b16 %v5505
    %v5971 = vunpack.c.h.b16 %v5505
    %v5972 = vunpack.c.l.b16 %v5506
    %v5973 = vunpack.c.h.b16 %v5506
    %v5974 = vunpack.c.l.b16 %v5507
    %v5975 = vunpack.c.h.b16 %v5507
    %v5976 = vunpack.c.l.b16 %v5508
    %v5977 = vunpack.c.h.b16 %v5508
    %v5978 = vunpack.c.l.b16 %v5509
    %v5979 = vunpack.c.h.b16 %v5509
    %v5980 = vunpack.c.l.b16 %v5510
    %v5981 = vunpack.c.h.b16 %v5510
    %v5982 = vunpack.c.l.b16 %v5511
    %v5983 = vunpack.c.h.b16 %v5511
    %v5984 = vunpack.c.l.b16 %v5512
    %v5985 = vunpack.c.h.b16 %v5512
    %v5986 = vunpack.c.l.b16 %v5513
    %v5987 = vunpack.c.h.b16 %v5513
    %v5988 = vunpack.c.l.b16 %v5514
    %v5989 = vunpack.c.h.b16 %v5514
    %v5990 = vunpack.c.l.b16 %v5515
    %v5991 = vunpack.c.h.b16 %v5515
    %v5992 = vunpack.c.l.b16 %v5516
    %v5993 = vunpack.c.h.b16 %v5516
    %v5994 = vunpack.c.l.b16 %v5517
    %v5995 = vunpack.c.h.b16 %v5517
    %v5996 = vunpack.c.l.b16 %v5518
    %v5997 = vunpack.c.h.b16 %v5518
    %v5998 = vunpack.c.l.b16 %v5519
    %v5999 = vunpack.c.h.b16 %v5519
    %v6000 = vunpack.c.l.b16 %v5520
    %v6001 = vunpack.c.h.b16 %v5520
    %v6002 = vunpack.c.l.b16 %v5521
    %v6003 = vunpack.c.h.b16 %v5521
    %v6004 = vunpack.c.l.b16 %v5522
    %v6005 = vunpack.c.h.b16 %v5522
    %v6006 = vunpack.c.l.b16 %v5523
    %v6007 = vunpack.c.h.b16 %v5523
    %v6008 = vunpack.c.l.b16 %v5524
    %v6009 = vunpack.c.h.b16 %v5524
    %v6010 = vunpack.c.l.b16 %v5525
    %v6011 = vunpack.c.h.b16 %v5525
    %v6012 = vunpack.c.l.b16 %v5526
    %v6013 = vunpack.c.h.b16 %v5526
    %v6014 = vunpack.c.l.b16 %v5527
    %v6015 = vunpack.c.h.b16 %v5527
    %v6016 = vunpack.c.l.b16 %v5528
    %v6017 = vunpack.c.h.b16 %v5528
    %v6018 = vunpack.c.l.b16 %v5529
    %v6019 = vunpack.c.h.b16 %v5529
    %v6020 = vunpack.c.l.b16 %v5530
    %v6021 = vunpack.c.h.b16 %v5530
    %v6022 = vunpack.c.l.b16 %v5531
    %v6023 = vunpack.c.h.b16 %v5531
    %v6024 = vunpack.c.l.b16 %v5532
    %v6025 = vunpack.c.h.b16 %v5532
    %v6026 = vunpack.c.l.b16 %v5533
    %v6027 = vunpack.c.h.b16 %v5533
    %v6028 = vunpack.c.l.b16 %v5534
    %v6029 = vunpack.c.h.b16 %v5534
    %v6030 = vunpack.c.l.b16 %v5535
    %v6031 = vunpack.c.h.b16 %v5535
    %v6032 = vunpack.c.l.b16 %v5536
    %v6033 = vunpack.c.h.b16 %v5536
    %v6034 = vunpack.c.l.b16 %v5537
    %v6035 = vunpack.c.h.b16 %v5537
    %v6036 = vunpack.c.l.b16 %v5538
    %v6037 = vunpack.c.h.b16 %v5538
    %v6038 = vunpack.c.l.b16 %v5539
    %v6039 = vunpack.c.h.b16 %v5539
    %v6040 = vunpack.c.l.b16 %v5540
    %v6041 = vunpack.c.h.b16 %v5540
    %v6042 = vunpack.c.l.b16 %v5541
    %v6043 = vunpack.c.h.b16 %v5541
    %v6044 = vunpack.c.l.b16 %v5542
    %v6045 = vunpack.c.h.b16 %v5542
    %v6046 = vunpack.c.l.b16 %v5543
    %v6047 = vunpack.c.h.b16 %v5543
    %v6048 = vunpack.c.l.b16 %v5544
    %v6049 = vunpack.c.h.b16 %v5544
    %v6050 = vunpack.c.l.b16 %v5545
    %v6051 = vunpack.c.h.b16 %v5545
    %v6052 = vunpack.c.l.b16 %v5546
    %v6053 = vunpack.c.h.b16 %v5546
    %v6054 = vunpack.c.l.b16 %v5547
    %v6055 = vunpack.c.h.b16 %v5547
    %v6056 = vunpack.c.l.b16 %v5548
    %v6057 = vunpack.c.h.b16 %v5548
    %v6058 = vunpack.c.l.b16 %v5549
    %v6059 = vunpack.c.h.b16 %v5549
    %v6060 = vunpack.c.l.b16 %v5550
    %v6061 = vunpack.c.h.b16 %v5550
    %v6062 = vunpack.c.l.b16 %v5551
    %v6063 = vunpack.c.h.b16 %v5551
    %v6064 = vunpack.c.l.b16 %v5552
    %v6065 = vunpack.c.h.b16 %v5552
    %v6066 = vunpack.c.l.b16 %v5553
    %v6067 = vunpack.c.h.b16 %v5553
    %v6068 = vunpack.c.l.b16 %v5554
    %v6069 = vunpack.c.h.b16 %v5554
    %v6070 = vunpack.c.l.b16 %v5555
    %v6071 = vunpack.c.h.b16 %v5555
    %v6072 = vunpack.c.l.b16 %v5556
    %v6073 = vunpack.c.h.b16 %v5556
    %v6074 = vunpack.c.l.b16 %v5557
    %v6075 = vunpack.c.h.b16 %v5557
    %v6076 = vunpack.c.l.b16 %v5558
    %v6077 = vunpack.c.h.b16 %v5558
    %v6078 = vunpack.c.l.b16 %v5559
    %v6079 = vunpack.c.h.b16 %v5559
    %v6080 = vunpack.c.l.b16 %v5560
    %v6081 = vunpack.c.h.b16 %v5560
    %v6082 = vunpack.c.l.b16 %v5561
    %v6083 = vunpack.c.h.b16 %v5561
    %v6084 = vunpack.c.l.b16 %v5562
    %v6085 = vunpack.c.h.b16 %v5562
    %v6086 = vunpack.c.l.b16 %v5563
    %v6087 = vunpack.c.h.b16 %v5563
    %v6088 = vunpack.c.l.b16 %v5564
    %v6089 = vunpack.c.h.b16 %v5564
    %v6090 = vunpack.c.l.b16 %v5565
    %v6091 = vunpack.c.h.b16 %v5565
    %v6092 = vunpack.c.l.b16 %v5566
    %v6093 = vunpack.c.h.b16 %v5566
    %v6094 = vunpack.c.l.b16 %v5567
    %v6095 = vunpack.c.h.b16 %v5567
    %v6096 = vunpack.c.l.b16 %v5568
    %v6097 = vunpack.c.h.b16 %v5568
    %v6098 = vunpack.c.l.b16 %v5569
    %v6099 = vunpack.c.h.b16 %v5569
    %v6100 = vunpack.c.l.b16 %v5570
    %v6101 = vunpack.c.h.b16 %v5570
    %v6102 = vunpack.c.l.b16 %v5571
    %v6103 = vunpack.c.h.b16 %v5571
    %v6104 = vunpack.c.l.b16 %v5572
    %v6105 = vunpack.c.h.b16 %v5572
    %v6106 = vunpack.c.l.b16 %v5573
    %v6107 = vunpack.c.h.b16 %v5573
    %v6108 = vunpack.c.l.b16 %v5574
    %v6109 = vunpack.c.h.b16 %v5574
    %v6110 = vunpack.c.l.b16 %v5575
    %v6111 = vunpack.c.h.b16 %v5575
    %v6112 = vunpack.c.l.b16 %v5576
    %v6113 = vunpack.c.h.b16 %v5576
    %v6114 = vunpack.c.l.b16 %v5577
    %v6115 = vunpack.c.h.b16 %v5577
    %v6116 = vunpack.c.l.b16 %v5578
    %v6117 = vunpack.c.h.b16 %v5578
    %v6118 = vunpack.c.l.b16 %v5579
    %v6119 = vunpack.c.h.b16 %v5579
    %v6120 = vunpack.c.l.b16 %v5580
    %v6121 = vunpack.c.h.b16 %v5580
    %v6122 = vunpack.c.l.b16 %v5581
    %v6123 = vunpack.c.h.b16 %v5581
    %v6124 = vunpack.c.l.b16 %v5582
    %v6125 = vunpack.c.h.b16 %v5582
    %v6126 = vunpack.c.l.b16 %v5583
    %v6127 = vunpack.c.h.b16 %v5583
    %v6128 = vunpack.c.l.b16 %v5584
    %v6129 = vunpack.c.h.b16 %v5584
    %v6130 = vunpack.c.l.b16 %v5585
    %v6131 = vunpack.c.h.b16 %v5585
    %v6132 = vunpack.c.l.b16 %v5586
    %v6133 = vunpack.c.h.b16 %v5586
    %v6134 = vunpack.c.l.b16 %v5587
    %v6135 = vunpack.c.h.b16 %v5587
    %v6136 = vunpack.c.l.b16 %v5588
    %v6137 = vunpack.c.h.b16 %v5588
    %v6138 = vunpack.c.l.b16 %v5589
    %v6139 = vunpack.c.h.b16 %v5589
    %v6140 = vunpack.c.l.b16 %v5590
    %v6141 = vunpack.c.h.b16 %v5590
    %v6142 = vunpack.c.l.b16 %v5591
    %v6143 = vunpack.c.h.b16 %v5591
    %v6144 = vunpack.c.l.b16 %v5592
    %v6145 = vunpack.c.h.b16 %v5592
    %v6146 = vunpack.c.l.b16 %v5593
    %v6147 = vunpack.c.h.b16 %v5593
    %v6148 = vunpack.c.l.b16 %v5594
    %v6149 = vunpack.c.h.b16 %v5594
    %v6150 = vunpack.c.l.b16 %v5595
    %v6151 = vunpack.c.h.b16 %v5595
    %v6152 = vunpack.c.l.b16 %v5596
    %v6153 = vunpack.c.h.b16 %v5596
    %v6154 = vunpack.c.l.b16 %v5597
    %v6155 = vunpack.c.h.b16 %v5597
    %v6156 = vunpack.c.l.b16 %v5598
    %v6157 = vunpack.c.h.b16 %v5598
    %v6158 = vunpack.c.l.b16 %v5599
    %v6159 = vunpack.c.h.b16 %v5599
    %v6160 = vunpack.c.l.b16 %v5600
    %v6161 = vunpack.c.h.b16 %v5600
    %v6162 = vunpack.c.l.b16 %v5601
    %v6163 = vunpack.c.h.b16 %v5601
    %v6164 = vunpack.c.l.b16 %v5602
    %v6165 = vunpack.c.h.b16 %v5602
    %v6166 = vunpack.c.l.b16 %v5603
    %v6167 = vunpack.c.h.b16 %v5603
    %v6168 = vunpack.c.l.b16 %v5604
    %v6169 = vunpack.c.h.b16 %v5604
    %v6170 = vunpack.c.l.b16 %v5605
    %v6171 = vunpack.c.h.b16 %v5605
    %v6172 = vunpack.c.l.b16 %v5606
    %v6173 = vunpack.c.h.b16 %v5606
    %v6174 = vunpack.c.l.b16 %v5607
    %v6175 = vunpack.c.h.b16 %v5607
    %v6176 = vunpack.c.l.b16 %v5608
    %v6177 = vunpack.c.h.b16 %v5608
    %v6178 = vunpack.c.l.b16 %v5609
    %v6179 = vunpack.c.h.b16 %v5609
    %v6180 = vunpack.c.l.b16 %v5610
    %v6181 = vunpack.c.h.b16 %v5610
    %v6182 = vunpack.c.l.b16 %v5611
    %v6183 = vunpack.c.h.b16 %v5611
    %v6184 = vunpack.c.l.b16 %v5612
    %v6185 = vunpack.c.h.b16 %v5612
    %v6186 = vunpack.c.l.b16 %v5613
    %v6187 = vunpack.c.h.b16 %v5613
    %v6188 = vunpack.c.l.b16 %v5614
    %v6189 = vunpack.c.h.b16 %v5614
    %v6190 = vunpack.c.l.b16 %v5615
    %v6191 = vunpack.c.h.b16 %v5615
    %v6192 = vpack.c.b16 %v5812, %v5808
    %v6193 = vpack.c.b16 %v5813, %v5809
    %v6194 = vpack.c.b16 %v5814, %v5810
    %v6195 = vpack.c.b16 %v5815, %v5811
    %v6196 = vpack.c.b16 %v5820, %v5816
    %v6197 = vpack.c.b16 %v5821, %v5817
    %v6198 = vpack.c.b16 %v5822, %v5818
    %v6199 = vpack.c.b16 %v5823, %v5819
    %v6200 = vpack.c.b16 %v5828, %v5824
    %v6201 = vpack.c.b16 %v5829, %v5825
    %v6202 = vpack.c.b16 %v5830, %v5826
    %v6203 = vpack.c.b16 %v5831, %v5827
    %v6204 = vpack.c.b16 %v5836, %v5832
    %v6205 = vpack.c.b16 %v5837, %v5833
    %v6206 = vpack.c.b16 %v5838, %v5834
    %v6207 = vpack.c.b16 %v5839, %v5835
    %v6208 = vpack.c.b16 %v5844, %v5840
    %v6209 = vpack.c.b16 %v5845, %v5841
    %v6210 = vpack.c.b16 %v5846, %v5842
    %v6211 = vpack.c.b16 %v5847, %v5843
    %v6212 = vpack.c.b16 %v5852, %v5848
    %v6213 = vpack.c.b16 %v5853, %v5849
    %v6214 = vpack.c.b16 %v5854, %v5850
    %v6215 = vpack.c.b16 %v5855, %v5851
    %v6216 = vpack.c.b16 %v5860, %v5856
    %v6217 = vpack.c.b16 %v5861, %v5857
    %v6218 = vpack.c.b16 %v5862, %v5858
    %v6219 = vpack.c.b16 %v5863, %v5859
    %v6220 = vpack.c.b16 %v5868, %v5864
    %v6221 = vpack.c.b16 %v5869, %v5865
    %v6222 = vpack.c.b16 %v5870, %v5866
    %v6223 = vpack.c.b16 %v5871, %v5867
    %v6224 = vpack.c.b16 %v5876, %v5872
    %v6225 = vpack.c.b16 %v5877, %v5873
    %v6226 = vpack.c.b16 %v5878, %v5874
    %v6227 = vpack.c.b16 %v5879, %v5875
    %v6228 = vpack.c.b16 %v5884, %v5880
    %v6229 = vpack.c.b16 %v5885, %v5881
    %v6230 = vpack.c.b16 %v5886, %v5882
    %v6231 = vpack.c.b16 %v5887, %v5883
    %v6232 = vpack.c.b16 %v5892, %v5888
    %v6233 = vpack.c.b16 %v5893, %v5889
    %v6234 = vpack.c.b16 %v5894, %v5890
    %v6235 = vpack.c.b16 %v5895, %v5891
    %v6236 = vpack.c.b16 %v5900, %v5896
    %v6237 = vpack.c.b16 %v5901, %v5897
    %v6238 = vpack.c.b16 %v5902, %v5898
    %v6239 = vpack.c.b16 %v5903, %v5899
    %v6240 = vpack.c.b16 %v5908, %v5904
    %v6241 = vpack.c.b16 %v5909, %v5905
    %v6242 = vpack.c.b16 %v5910, %v5906
    %v6243 = vpack.c.b16 %v5911, %v5907
    %v6244 = vpack.c.b16 %v5916, %v5912
    %v6245 = vpack.c.b16 %v5917, %v5913
    %v6246 = vpack.c.b16 %v5918, %v5914
    %v6247 = vpack.c.b16 %v5919, %v5915
    %v6248 = vpack.c.b16 %v5924, %v5920
    %v6249 = vpack.c.b16 %v5925, %v5921
    %v6250 = vpack.c.b16 %v5926, %v5922
    %v6251 = vpack.c.b16 %v5927, %v5923
    %v6252 = vpack.c.b16 %v5932, %v5928
    %v6253 = vpack.c.b16 %v5933, %v5929
    %v6254 = vpack.c.b16 %v5934, %v5930
    %v6255 = vpack.c.b16 %v5935, %v5931
    %v6256 = vpack.c.b16 %v5940, %v5936
    %v6257 = vpack.c.b16 %v5941, %v5937
    %v6258 = vpack.c.b16 %v5942, %v5938
    %v6259 = vpack.c.b16 %v5943, %v5939
    %v6260 = vpack.c.b16 %v5948, %v5944
    %v6261 = vpack.c.b16 %v5949, %v5945
    %v6262 = vpack.c.b16 %v5950, %v5946
    %v6263 = vpack.c.b16 %v5951, %v5947
    %v6264 = vpack.c.b16 %v5956, %v5952
    %v6265 = vpack.c.b16 %v5957, %v5953
    %v6266 = vpack.c.b16 %v5958, %v5954
    %v6267 = vpack.c.b16 %v5959, %v5955
    %v6268 = vpack.c.b16 %v5964, %v5960
    %v6269 = vpack.c.b16 %v5965, %v5961
    %v6270 = vpack.c.b16 %v5966, %v5962
    %v6271 = vpack.c.b16 %v5967, %v5963
    %v6272 = vpack.c.b16 %v5972, %v5968
    %v6273 = vpack.c.b16 %v5973, %v5969
    %v6274 = vpack.c.b16 %v5974, %v5970
    %v6275 = vpack.c.b16 %v5975, %v5971
    %v6276 = vpack.c.b16 %v5980, %v5976
    %v6277 = vpack.c.b16 %v5981, %v5977
    %v6278 = vpack.c.b16 %v5982, %v5978
    %v6279 = vpack.c.b16 %v5983, %v5979
    %v6280 = vpack.c.b16 %v5988, %v5984
    %v6281 = vpack.c.b16 %v5989, %v5985
    %v6282 = vpack.c.b16 %v5990, %v5986
    %v6283 = vpack.c.b16 %v5991, %v5987
    %v6284 = vpack.c.b16 %v5996, %v5992
    %v6285 = vpack.c.b16 %v5997, %v5993
    %v6286 = vpack.c.b16 %v5998, %v5994
    %v6287 = vpack.c.b16 %v5999, %v5995
    %v6288 = vpack.c.b16 %v6004, %v6000
    %v6289 = vpack.c.b16 %v6005, %v6001
    %v6290 = vpack.c.b16 %v6006, %v6002
    %v6291 = vpack.c.b16 %v6007, %v6003
    %v6292 = vpack.c.b16 %v6012, %v6008
    %v6293 = vpack.c.b16 %v6013, %v6009
    %v6294 = vpack.c.b16 %v6014, %v6010
    %v6295 = vpack.c.b16 %v6015, %v6011
    %v6296 = vpack.c.b16 %v6020, %v6016
    %v6297 = vpack.c.b16 %v6021, %v6017
    %v6298 = vpack.c.b16 %v6022, %v6018
    %v6299 = vpack.c.b16 %v6023, %v6019
    %v6300 = vpack.c.b16 %v6028, %v6024
    %v6301 = vpack.c.b16 %v6029, %v6025
    %v6302 = vpack.c.b16 %v6030, %v6026
    %v6303 = vpack.c.b16 %v6031, %v6027
    %v6304 = vpack.c.b16 %v6036, %v6032
    %v6305 = vpack.c.b16 %v6037, %v6033
    %v6306 = vpack.c.b16 %v6038, %v6034
    %v6307 = vpack.c.b16 %v6039, %v6035
    %v6308 = vpack.c.b16 %v6044, %v6040
    %v6309 = vpack.c.b16 %v6045, %v6041
    %v6310 = vpack.c.b16 %v6046, %v6042
    %v6311 = vpack.c.b16 %v6047, %v6043
    %v6312 = vpack.c.b16 %v6052, %v6048
    %v6313 = vpack.c.b16 %v6053, %v6049
    %v6314 = vpack.c.b16 %v6054, %v6050
    %v6315 = vpack.c.b16 %v6055, %v6051
    %v6316 = vpack.c.b16 %v6060, %v6056
    %v6317 = vpack.c.b16 %v6061, %v6057
    %v6318 = vpack.c.b16 %v6062, %v6058
    %v6319 = vpack.c.b16 %v6063, %v6059
    %v6320 = vpack.c.b16 %v6068, %v6064
    %v6321 = vpack.c.b16 %v6069, %v6065
    %v6322 = vpack.c.b16 %v6070, %v6066
    %v6323 = vpack.c.b16 %v6071, %v6067
    %v6324 = vpack.c.b16 %v6076, %v6072
    %v6325 = vpack.c.b16 %v6077, %v6073
    %v6326 = vpack.c.b16 %v6078, %v6074
    %v6327 = vpack.c.b16 %v6079, %v6075
    %v6328 = vpack.c.b16 %v6084, %v6080
    %v6329 = vpack.c.b16 %v6085, %v6081
    %v6330 = vpack.c.b16 %v6086, %v6082
    %v6331 = vpack.c.b16 %v6087, %v6083
    %v6332 = vpack.c.b16 %v6092, %v6088
    %v6333 = vpack.c.b16 %v6093, %v6089
    %v6334 = vpack.c.b16 %v6094, %v6090
    %v6335 = vpack.c.b16 %v6095, %v6091
    %v6336 = vpack.c.b16 %v6100, %v6096
    %v6337 = vpack.c.b16 %v6101, %v6097
    %v6338 = vpack.c.b16 %v6102, %v6098
    %v6339 = vpack.c.b16 %v6103, %v6099
    %v6340 = vpack.c.b16 %v6108, %v6104
    %v6341 = vpack.c.b16 %v6109, %v6105
    %v6342 = vpack.c.b16 %v6110, %v6106
    %v6343 = vpack.c.b16 %v6111, %v6107
    %v6344 = vpack.c.b16 %v6116, %v6112
    %v6345 = vpack.c.b16 %v6117, %v6113
    %v6346 = vpack.c.b16 %v6118, %v6114
    %v6347 = vpack.c.b16 %v6119, %v6115
    %v6348 = vpack.c.b16 %v6124, %v6120
    %v6349 = vpack.c.b16 %v6125, %v6121
    %v6350 = vpack.c.b16 %v6126, %v6122
    %v6351 = vpack.c.b16 %v6127, %v6123
    %v6352 = vpack.c.b16 %v6132, %v6128
    %v6353 = vpack.c.b16 %v6133, %v6129
    %v6354 = vpack.c.b16 %v6134, %v6130
    %v6355 = vpack.c.b16 %v6135, %v6131
    %v6356 = vpack.c.b16 %v6140, %v6136
    %v6357 = vpack.c.b16 %v6141, %v6137
    %v6358 = vpack.c.b16 %v6142, %v6138
    %v6359 = vpack.c.b16 %v6143, %v6139
    %v6360 = vpack.c.b16 %v6148, %v6144
    %v6361 = vpack.c.b16 %v6149, %v6145
    %v6362 = vpack.c.b16 %v6150, %v6146
    %v6363 = vpack.c.b16 %v6151, %v6147
    %v6364 = vpack.c.b16 %v6156, %v6152
    %v6365 = vpack.c.b16 %v6157, %v6153
    %v6366 = vpack.c.b16 %v6158, %v6154
    %v6367 = vpack.c.b16 %v6159, %v6155
    %v6368 = vpack.c.b16 %v6164, %v6160
    %v6369 = vpack.c.b16 %v6165, %v6161
    %v6370 = vpack.c.b16 %v6166, %v6162
    %v6371 = vpack.c.b16 %v6167, %v6163
    %v6372 = vpack.c.b16 %v6172, %v6168
    %v6373 = vpack.c.b16 %v6173, %v6169
    %v6374 = vpack.c.b16 %v6174, %v6170
    %v6375 = vpack.c.b16 %v6175, %v6171
    %v6376 = vpack.c.b16 %v6180, %v6176
    %v6377 = vpack.c.b16 %v6181, %v6177
    %v6378 = vpack.c.b16 %v6182, %v6178
    %v6379 = vpack.c.b16 %v6183, %v6179
    %v6380 = vpack.c.b16 %v6188, %v6184
    %v6381 = vpack.c.b16 %v6189, %v6185
    %v6382 = vpack.c.b16 %v6190, %v6186
    %v6383 = vpack.c.b16 %v6191, %v6187
    %6576 = vmatprep.subr.bf16.mxu0 %v6193
    %6577 = vmatpush1.bf16.msra.mxu0 %v6192
    %6578 = vmatprep.subr.bf16.mxu0 %v6197
    %6579 = vmatpush1.bf16.msra.mxu0 %v6196
    %6580 = vmatprep.subr.bf16.mxu0 %v6201
    %6581 = vmatpush1.bf16.msra.mxu0 %v6200
    %6582 = vmatprep.subr.bf16.mxu0 %v6205
    %6583 = vmatpush1.bf16.msra.mxu0 %v6204
    %6584 = vmatprep.subr.bf16.mxu0 %v6209
    %6585 = vmatpush1.bf16.msra.mxu0 %v6208
    %6586 = vmatprep.subr.bf16.mxu0 %v6213
    %6587 = vmatpush1.bf16.msra.mxu0 %v6212
    %6588 = vmatprep.subr.bf16.mxu0 %v6217
    %6589 = vmatpush1.bf16.msra.mxu0 %v6216
    %6590 = vmatprep.subr.bf16.mxu0 %v6221
    %6591 = vmatpush1.bf16.msra.mxu0 %v6220
    %6592 = vmatprep.subr.bf16.mxu0 %v6225
    %6593 = vmatpush1.bf16.msra.mxu0 %v6224
    %6594 = vmatprep.subr.bf16.mxu0 %v6229
    %6595 = vmatpush1.bf16.msra.mxu0 %v6228
    %6596 = vmatprep.subr.bf16.mxu0 %v6233
    %6597 = vmatpush1.bf16.msra.mxu0 %v6232
    %6598 = vmatprep.subr.bf16.mxu0 %v6237
    %6599 = vmatpush1.bf16.msra.mxu0 %v6236
    %6600 = vmatprep.subr.bf16.mxu0 %v6241
    %6601 = vmatpush1.bf16.msra.mxu0 %v6240
    %6602 = vmatprep.subr.bf16.mxu0 %v6245
    %6603 = vmatpush1.bf16.msra.mxu0 %v6244
    %6604 = vmatprep.subr.bf16.mxu0 %v6249
    %6605 = vmatpush1.bf16.msra.mxu0 %v6248
    %6606 = vmatprep.subr.bf16.mxu0 %v6253
    %6607 = vmatpush1.bf16.msra.mxu0 %v6252
    %6608 = vmatprep.mubr.bf16.mxu0 %v5419
    %6609 = vmatmul.mubr.bf16.gmra.mrb[0].mxu0 %v5418
    %v6610 = vpop.f32.mrb[0].mxu0
    %v6611 = vadd.f32 0.0, %v6610
    %v6612 = vpop.f32.mrb[0].mxu0
    %v6613 = vadd.f32 0.0, %v6612
    %v6614 = vpop.f32.mrb[0].mxu0
    %v6615 = vpop.f32.mrb[0].mxu0
    %6616 = vdwg.mxu0
    %6617 = vmatprep.subr.bf16.mxu0 %v6257
    %6618 = vmatpush1.bf16.msra.mxu0 %v6256
    %6619 = vmatprep.subr.bf16.mxu0 %v6261
    %6620 = vmatpush1.bf16.msra.mxu0 %v6260
    %6621 = vmatprep.subr.bf16.mxu0 %v6265
    %6622 = vmatpush1.bf16.msra.mxu0 %v6264
    %6623 = vmatprep.subr.bf16.mxu0 %v6269
    %6624 = vmatpush1.bf16.msra.mxu0 %v6268
    %6625 = vmatprep.subr.bf16.mxu0 %v6273
    %6626 = vmatpush1.bf16.msra.mxu0 %v6272
    %6627 = vmatprep.subr.bf16.mxu0 %v6277
    %6628 = vmatpush1.bf16.msra.mxu0 %v6276
    %6629 = vmatprep.subr.bf16.mxu0 %v6281
    %6630 = vmatpush1.bf16.msra.mxu0 %v6280
    %6631 = vmatprep.subr.bf16.mxu0 %v6285
    %6632 = vmatpush1.bf16.msra.mxu0 %v6284
    %6633 = vmatprep.subr.bf16.mxu0 %v6289
    %6634 = vmatpush1.bf16.msra.mxu0 %v6288
    %6635 = vmatprep.subr.bf16.mxu0 %v6293
    %6636 = vmatpush1.bf16.msra.mxu0 %v6292
    %6637 = vmatprep.subr.bf16.mxu0 %v6297
    %6638 = vmatpush1.bf16.msra.mxu0 %v6296
    %6639 = vmatprep.subr.bf16.mxu0 %v6301
    %6640 = vmatpush1.bf16.msra.mxu0 %v6300
    %6641 = vmatprep.subr.bf16.mxu0 %v6305
    %6642 = vmatpush1.bf16.msra.mxu0 %v6304
    %6643 = vmatprep.subr.bf16.mxu0 %v6309
    %6644 = vmatpush1.bf16.msra.mxu0 %v6308
    %6645 = vmatprep.subr.bf16.mxu0 %v6313
    %6646 = vmatpush1.bf16.msra.mxu0 %v6312
    %6647 = vmatprep.subr.bf16.mxu0 %v6317
    %6648 = vmatpush1.bf16.msra.mxu0 %v6316
    %6649 = vmatprep.mubr.bf16.mxu0 %v5421
    %6650 = vmatmul.mubr.bf16.gmra.mrb[0].mxu0 %v5420
    %v6651 = vpop.f32.mrb[0].mxu0
    %v6652 = vadd.f32 %v6611, %v6651
    %v6653 = vpop.f32.mrb[0].mxu0
    %v6654 = vadd.f32 %v6613, %v6653
    %v6655 = vpop.f32.mrb[0].mxu0
    %v6656 = vpop.f32.mrb[0].mxu0
    %6657 = vdwg.mxu0
    %6658 = vmatprep.subr.bf16.mxu0 %v6321
    %6659 = vmatpush1.bf16.msra.mxu0 %v6320
    %6660 = vmatprep.subr.bf16.mxu0 %v6325
    %6661 = vmatpush1.bf16.msra.mxu0 %v6324
    %6662 = vmatprep.subr.bf16.mxu0 %v6329
    %6663 = vmatpush1.bf16.msra.mxu0 %v6328
    %6664 = vmatprep.subr.bf16.mxu0 %v6333
    %6665 = vmatpush1.bf16.msra.mxu0 %v6332
    %6666 = vmatprep.subr.bf16.mxu0 %v6337
    %6667 = vmatpush1.bf16.msra.mxu0 %v6336
    %6668 = vmatprep.subr.bf16.mxu0 %v6341
    %6669 = vmatpush1.bf16.msra.mxu0 %v6340
    %6670 = vmatprep.subr.bf16.mxu0 %v6345
    %6671 = vmatpush1.bf16.msra.mxu0 %v6344
    %6672 = vmatprep.subr.bf16.mxu0 %v6349
    %6673 = vmatpush1.bf16.msra.mxu0 %v6348
    %6674 = vmatprep.subr.bf16.mxu0 %v6353
    %6675 = vmatpush1.bf16.msra.mxu0 %v6352
    %6676 = vmatprep.subr.bf16.mxu0 %v6357
    %6677 = vmatpush1.bf16.msra.mxu0 %v6356
    %6678 = vmatprep.subr.bf16.mxu0 %v6361
    %6679 = vmatpush1.bf16.msra.mxu0 %v6360
    %6680 = vmatprep.subr.bf16.mxu0 %v6365
    %6681 = vmatpush1.bf16.msra.mxu0 %v6364
    %6682 = vmatprep.subr.bf16.mxu0 %v6369
    %6683 = vmatpush1.bf16.msra.mxu0 %v6368
    %6684 = vmatprep.subr.bf16.mxu0 %v6373
    %6685 = vmatpush1.bf16.msra.mxu0 %v6372
    %6686 = vmatprep.subr.bf16.mxu0 %v6377
    %6687 = vmatpush1.bf16.msra.mxu0 %v6376
    %6688 = vmatprep.subr.bf16.mxu0 %v6381
    %6689 = vmatpush1.bf16.msra.mxu0 %v6380
    %6690 = vmatprep.mubr.bf16.mxu0 %v5423
    %6691 = vmatmul.mubr.bf16.gmra.mrb[0].mxu0 %v5422
    %v6692 = vpop.f32.mrb[0].mxu0
    %v6693 = vadd.f32 %v6652, %v6692
    %v6694 = vpop.f32.mrb[0].mxu0
    %v6695 = vadd.f32 %v6654, %v6694
    %v6696 = vpop.f32.mrb[0].mxu0
    %v6697 = vpop.f32.mrb[0].mxu0
    %6698 = vdwg.mxu0
    %6699 = vmatprep.subr.bf16.mxu0 %v6195
    %6700 = vmatpush1.bf16.msra.mxu0 %v6194
    %6701 = vmatprep.subr.bf16.mxu0 %v6199
    %6702 = vmatpush1.bf16.msra.mxu0 %v6198
    %6703 = vmatprep.subr.bf16.mxu0 %v6203
    %6704 = vmatpush1.bf16.msra.mxu0 %v6202
    %6705 = vmatprep.subr.bf16.mxu0 %v6207
    %6706 = vmatpush1.bf16.msra.mxu0 %v6206
    %6707 = vmatprep.subr.bf16.mxu0 %v6211
    %6708 = vmatpush1.bf16.msra.mxu0 %v6210
    %6709 = vmatprep.subr.bf16.mxu0 %v6215
    %6710 = vmatpush1.bf16.msra.mxu0 %v6214
    %6711 = vmatprep.subr.bf16.mxu0 %v6219
    %6712 = vmatpush1.bf16.msra.mxu0 %v6218
    %6713 = vmatprep.subr.bf16.mxu0 %v6223
    %6714 = vmatpush1.bf16.msra.mxu0 %v6222
    %6715 = vmatprep.subr.bf16.mxu0 %v6227
    %6716 = vmatpush1.bf16.msra.mxu0 %v6226
    %6717 = vmatprep.subr.bf16.mxu0 %v6231
    %6718 = vmatpush1.bf16.msra.mxu0 %v6230
    %6719 = vmatprep.subr.bf16.mxu0 %v6235
    %6720 = vmatpush1.bf16.msra.mxu0 %v6234
    %6721 = vmatprep.subr.bf16.mxu0 %v6239
    %6722 = vmatpush1.bf16.msra.mxu0 %v6238
    %6723 = vmatprep.subr.bf16.mxu0 %v6243
    %6724 = vmatpush1.bf16.msra.mxu0 %v6242
    %6725 = vmatprep.subr.bf16.mxu0 %v6247
    %6726 = vmatpush1.bf16.msra.mxu0 %v6246
    %6727 = vmatprep.subr.bf16.mxu0 %v6251
    %6728 = vmatpush1.bf16.msra.mxu0 %v6250
    %6729 = vmatprep.subr.bf16.mxu0 %v6255
    %6730 = vmatpush1.bf16.msra.mxu0 %v6254
    %6731 = vmatprep.mubr.bf16.mxu0 %v5419
    %6732 = vmatmul.mubr.bf16.gmra.mrb[0].mxu0 %v5418
    %v6733 = vpop.f32.mrb[0].mxu0
    %v6734 = vadd.f32 0.0, %v6733
    %v6735 = vpop.f32.mrb[0].mxu0
    %v6736 = vadd.f32 0.0, %v6735
    %v6737 = vpop.f32.mrb[0].mxu0
    %v6738 = vpop.f32.mrb[0].mxu0
    %6739 = vdwg.mxu0
    %6740 = vmatprep.subr.bf16.mxu0 %v6259
    %6741 = vmatpush1.bf16.msra.mxu0 %v6258
    %6742 = vmatprep.subr.bf16.mxu0 %v6263
    %6743 = vmatpush1.bf16.msra.mxu0 %v6262
    %6744 = vmatprep.subr.bf16.mxu0 %v6267
    %6745 = vmatpush1.bf16.msra.mxu0 %v6266
    %6746 = vmatprep.subr.bf16.mxu0 %v6271
    %6747 = vmatpush1.bf16.msra.mxu0 %v6270
    %6748 = vmatprep.subr.bf16.mxu0 %v6275
    %6749 = vmatpush1.bf16.msra.mxu0 %v6274
    %6750 = vmatprep.subr.bf16.mxu0 %v6279
    %6751 = vmatpush1.bf16.msra.mxu0 %v6278
    %6752 = vmatprep.subr.bf16.mxu0 %v6283
    %6753 = vmatpush1.bf16.msra.mxu0 %v6282
    %6754 = vmatprep.subr.bf16.mxu0 %v6287
    %6755 = vmatpush1.bf16.msra.mxu0 %v6286
    %6756 = vmatprep.subr.bf16.mxu0 %v6291
    %6757 = vmatpush1.bf16.msra.mxu0 %v6290
    %6758 = vmatprep.subr.bf16.mxu0 %v6295
    %6759 = vmatpush1.bf16.msra.mxu0 %v6294
    %6760 = vmatprep.subr.bf16.mxu0 %v6299
    %6761 = vmatpush1.bf16.msra.mxu0 %v6298
    %6762 = vmatprep.subr.bf16.mxu0 %v6303
    %6763 = vmatpush1.bf16.msra.mxu0 %v6302
    %6764 = vmatprep.subr.bf16.mxu0 %v6307
    %6765 = vmatpush1.bf16.msra.mxu0 %v6306
    %6766 = vmatprep.subr.bf16.mxu0 %v6311
    %6767 = vmatpush1.bf16.msra.mxu0 %v6310
    %6768 = vmatprep.subr.bf16.mxu0 %v6315
    %6769 = vmatpush1.bf16.msra.mxu0 %v6314
    %6770 = vmatprep.subr.bf16.mxu0 %v6319
    %6771 = vmatpush1.bf16.msra.mxu0 %v6318
    %6772 = vmatprep.mubr.bf16.mxu0 %v5421
    %6773 = vmatmul.mubr.bf16.gmra.mrb[0].mxu0 %v5420
    %v6774 = vpop.f32.mrb[0].mxu0
    %v6775 = vadd.f32 %v6734, %v6774
    %v6776 = vpop.f32.mrb[0].mxu0
    %v6777 = vadd.f32 %v6736, %v6776
    %v6778 = vpop.f32.mrb[0].mxu0
    %v6779 = vpop.f32.mrb[0].mxu0
    %6780 = vdwg.mxu0
    %6781 = vmatprep.subr.bf16.mxu0 %v6323
    %6782 = vmatpush1.bf16.msra.mxu0 %v6322
    %6783 = vmatprep.subr.bf16.mxu0 %v6327
    %6784 = vmatpush1.bf16.msra.mxu0 %v6326
    %6785 = vmatprep.subr.bf16.mxu0 %v6331
    %6786 = vmatpush1.bf16.msra.mxu0 %v6330
    %6787 = vmatprep.subr.bf16.mxu0 %v6335
    %6788 = vmatpush1.bf16.msra.mxu0 %v6334
    %6789 = vmatprep.subr.bf16.mxu0 %v6339
    %6790 = vmatpush1.bf16.msra.mxu0 %v6338
    %6791 = vmatprep.subr.bf16.mxu0 %v6343
    %6792 = vmatpush1.bf16.msra.mxu0 %v6342
    %6793 = vmatprep.subr.bf16.mxu0 %v6347
    %6794 = vmatpush1.bf16.msra.mxu0 %v6346
    %6795 = vmatprep.subr.bf16.mxu0 %v6351
    %6796 = vmatpush1.bf16.msra.mxu0 %v6350
    %6797 = vmatprep.subr.bf16.mxu0 %v6355
    %6798 = vmatpush1.bf16.msra.mxu0 %v6354
    %6799 = vmatprep.subr.bf16.mxu0 %v6359
    %6800 = vmatpush1.bf16.msra.mxu0 %v6358
    %6801 = vmatprep.subr.bf16.mxu0 %v6363
    %6802 = vmatpush1.bf16.msra.mxu0 %v6362
    %6803 = vmatprep.subr.bf16.mxu0 %v6367
    %6804 = vmatpush1.bf16.msra.mxu0 %v6366
    %6805 = vmatprep.subr.bf16.mxu0 %v6371
    %6806 = vmatpush1.bf16.msra.mxu0 %v6370
    %6807 = vmatprep.subr.bf16.mxu0 %v6375
    %6808 = vmatpush1.bf16.msra.mxu0 %v6374
    %6809 = vmatprep.subr.bf16.mxu0 %v6379
    %6810 = vmatpush1.bf16.msra.mxu0 %v6378
    %6811 = vmatprep.subr.bf16.mxu0 %v6383
    %6812 = vmatpush1.bf16.msra.mxu0 %v6382
    %6813 = vmatprep.mubr.bf16.mxu0 %v5423
    %6814 = vmatmul.mubr.bf16.gmra.mrb[0].mxu0 %v5422
    %v6815 = vpop.f32.mrb[0].mxu0
    %v6816 = vadd.f32 %v6775, %v6815
    %v6817 = vpop.f32.mrb[0].mxu0
    %v6818 = vadd.f32 %v6777, %v6817
    %v6819 = vpop.f32.mrb[0].mxu0
    %v6820 = vpop.f32.mrb[0].mxu0
    %6821 = vdwg.mxu0
    %v7014 = vunpack.c.l.b16 %v5089
    %v7015 = vunpack.c.h.b16 %v5089
    %v7016 = vunpack.c.l.b16 %v5090
    %v7017 = vunpack.c.h.b16 %v5090
    %v7018 = vunpack.c.l.b16 %v5091
    %v7019 = vunpack.c.h.b16 %v5091
    %v7020 = vunpack.c.l.b16 %v5092
    %v7021 = vunpack.c.h.b16 %v5092
    %v7022 = vunpack.c.l.b16 %v5093
    %v7023 = vunpack.c.h.b16 %v5093
    %v7024 = vunpack.c.l.b16 %v5094
    %v7025 = vunpack.c.h.b16 %v5094
    %v7026 = vunpack.c.l.b16 %v5095
    %v7027 = vunpack.c.h.b16 %v5095
    %v7028 = vunpack.c.l.b16 %v5096
    %v7029 = vunpack.c.h.b16 %v5096
    %v7030 = vunpack.c.l.b16 %v5097
    %v7031 = vunpack.c.h.b16 %v5097
    %v7032 = vunpack.c.l.b16 %v5098
    %v7033 = vunpack.c.h.b16 %v5098
    %v7034 = vunpack.c.l.b16 %v5099
    %v7035 = vunpack.c.h.b16 %v5099
    %v7036 = vunpack.c.l.b16 %v5100
    %v7037 = vunpack.c.h.b16 %v5100
    %v7038 = vunpack.c.l.b16 %v5101
    %v7039 = vunpack.c.h.b16 %v5101
    %v7040 = vunpack.c.l.b16 %v5102
    %v7041 = vunpack.c.h.b16 %v5102
    %v7042 = vunpack.c.l.b16 %v5103
    %v7043 = vunpack.c.h.b16 %v5103
    %v7044 = vunpack.c.l.b16 %v5104
    %v7045 = vunpack.c.h.b16 %v5104
    %v7046 = vunpack.c.l.b16 %v5105
    %v7047 = vunpack.c.h.b16 %v5105
    %v7048 = vunpack.c.l.b16 %v5106
    %v7049 = vunpack.c.h.b16 %v5106
    %v7050 = vunpack.c.l.b16 %v5107
    %v7051 = vunpack.c.h.b16 %v5107
    %v7052 = vunpack.c.l.b16 %v5108
    %v7053 = vunpack.c.h.b16 %v5108
    %v7054 = vunpack.c.l.b16 %v5109
    %v7055 = vunpack.c.h.b16 %v5109
    %v7056 = vunpack.c.l.b16 %v5110
    %v7057 = vunpack.c.h.b16 %v5110
    %v7058 = vunpack.c.l.b16 %v5111
    %v7059 = vunpack.c.h.b16 %v5111
    %v7060 = vunpack.c.l.b16 %v5112
    %v7061 = vunpack.c.h.b16 %v5112
    %v7062 = vunpack.c.l.b16 %v5113
    %v7063 = vunpack.c.h.b16 %v5113
    %v7064 = vunpack.c.l.b16 %v5114
    %v7065 = vunpack.c.h.b16 %v5114
    %v7066 = vunpack.c.l.b16 %v5115
    %v7067 = vunpack.c.h.b16 %v5115
    %v7068 = vunpack.c.l.b16 %v5116
    %v7069 = vunpack.c.h.b16 %v5116
    %v7070 = vunpack.c.l.b16 %v5117
    %v7071 = vunpack.c.h.b16 %v5117
    %v7072 = vunpack.c.l.b16 %v5118
    %v7073 = vunpack.c.h.b16 %v5118
    %v7074 = vunpack.c.l.b16 %v5119
    %v7075 = vunpack.c.h.b16 %v5119
    %v7076 = vunpack.c.l.b16 %v5120
    %v7077 = vunpack.c.h.b16 %v5120
    %v7078 = vunpack.c.l.b16 %v5121
    %v7079 = vunpack.c.h.b16 %v5121
    %v7080 = vunpack.c.l.b16 %v5122
    %v7081 = vunpack.c.h.b16 %v5122
    %v7082 = vunpack.c.l.b16 %v5123
    %v7083 = vunpack.c.h.b16 %v5123
    %v7084 = vunpack.c.l.b16 %v5124
    %v7085 = vunpack.c.h.b16 %v5124
    %v7086 = vunpack.c.l.b16 %v5125
    %v7087 = vunpack.c.h.b16 %v5125
    %v7088 = vunpack.c.l.b16 %v5126
    %v7089 = vunpack.c.h.b16 %v5126
    %v7090 = vunpack.c.l.b16 %v5127
    %v7091 = vunpack.c.h.b16 %v5127
    %v7092 = vunpack.c.l.b16 %v5128
    %v7093 = vunpack.c.h.b16 %v5128
    %v7094 = vunpack.c.l.b16 %v5129
    %v7095 = vunpack.c.h.b16 %v5129
    %v7096 = vunpack.c.l.b16 %v5130
    %v7097 = vunpack.c.h.b16 %v5130
    %v7098 = vunpack.c.l.b16 %v5131
    %v7099 = vunpack.c.h.b16 %v5131
    %v7100 = vunpack.c.l.b16 %v5132
    %v7101 = vunpack.c.h.b16 %v5132
    %v7102 = vunpack.c.l.b16 %v5133
    %v7103 = vunpack.c.h.b16 %v5133
    %v7104 = vunpack.c.l.b16 %v5134
    %v7105 = vunpack.c.h.b16 %v5134
    %v7106 = vunpack.c.l.b16 %v5135
    %v7107 = vunpack.c.h.b16 %v5135
    %v7108 = vunpack.c.l.b16 %v5136
    %v7109 = vunpack.c.h.b16 %v5136
    %v7110 = vunpack.c.l.b16 %v5137
    %v7111 = vunpack.c.h.b16 %v5137
    %v7112 = vunpack.c.l.b16 %v5138
    %v7113 = vunpack.c.h.b16 %v5138
    %v7114 = vunpack.c.l.b16 %v5139
    %v7115 = vunpack.c.h.b16 %v5139
    %v7116 = vunpack.c.l.b16 %v5140
    %v7117 = vunpack.c.h.b16 %v5140
    %v7118 = vunpack.c.l.b16 %v5141
    %v7119 = vunpack.c.h.b16 %v5141
    %v7120 = vunpack.c.l.b16 %v5142
    %v7121 = vunpack.c.h.b16 %v5142
    %v7122 = vunpack.c.l.b16 %v5143
    %v7123 = vunpack.c.h.b16 %v5143
    %v7124 = vunpack.c.l.b16 %v5144
    %v7125 = vunpack.c.h.b16 %v5144
    %v7126 = vunpack.c.l.b16 %v5145
    %v7127 = vunpack.c.h.b16 %v5145
    %v7128 = vunpack.c.l.b16 %v5146
    %v7129 = vunpack.c.h.b16 %v5146
    %v7130 = vunpack.c.l.b16 %v5147
    %v7131 = vunpack.c.h.b16 %v5147
    %v7132 = vunpack.c.l.b16 %v5148
    %v7133 = vunpack.c.h.b16 %v5148
    %v7134 = vunpack.c.l.b16 %v5149
    %v7135 = vunpack.c.h.b16 %v5149
    %v7136 = vunpack.c.l.b16 %v5150
    %v7137 = vunpack.c.h.b16 %v5150
    %v7138 = vunpack.c.l.b16 %v5151
    %v7139 = vunpack.c.h.b16 %v5151
    %v7140 = vunpack.c.l.b16 %v5152
    %v7141 = vunpack.c.h.b16 %v5152
    %v7142 = vunpack.c.l.b16 %v5153
    %v7143 = vunpack.c.h.b16 %v5153
    %v7144 = vunpack.c.l.b16 %v5154
    %v7145 = vunpack.c.h.b16 %v5154
    %v7146 = vunpack.c.l.b16 %v5155
    %v7147 = vunpack.c.h.b16 %v5155
    %v7148 = vunpack.c.l.b16 %v5156
    %v7149 = vunpack.c.h.b16 %v5156
    %v7150 = vunpack.c.l.b16 %v5157
    %v7151 = vunpack.c.h.b16 %v5157
    %v7152 = vunpack.c.l.b16 %v5158
    %v7153 = vunpack.c.h.b16 %v5158
    %v7154 = vunpack.c.l.b16 %v5159
    %v7155 = vunpack.c.h.b16 %v5159
    %v7156 = vunpack.c.l.b16 %v5160
    %v7157 = vunpack.c.h.b16 %v5160
    %v7158 = vunpack.c.l.b16 %v5161
    %v7159 = vunpack.c.h.b16 %v5161
    %v7160 = vunpack.c.l.b16 %v5162
    %v7161 = vunpack.c.h.b16 %v5162
    %v7162 = vunpack.c.l.b16 %v5163
    %v7163 = vunpack.c.h.b16 %v5163
    %v7164 = vunpack.c.l.b16 %v5164
    %v7165 = vunpack.c.h.b16 %v5164
    %v7166 = vunpack.c.l.b16 %v5165
    %v7167 = vunpack.c.h.b16 %v5165
    %v7168 = vunpack.c.l.b16 %v5166
    %v7169 = vunpack.c.h.b16 %v5166
    %v7170 = vunpack.c.l.b16 %v5167
    %v7171 = vunpack.c.h.b16 %v5167
    %v7172 = vunpack.c.l.b16 %v5168
    %v7173 = vunpack.c.h.b16 %v5168
    %v7174 = vunpack.c.l.b16 %v5169
    %v7175 = vunpack.c.h.b16 %v5169
    %v7176 = vunpack.c.l.b16 %v5170
    %v7177 = vunpack.c.h.b16 %v5170
    %v7178 = vunpack.c.l.b16 %v5171
    %v7179 = vunpack.c.h.b16 %v5171
    %v7180 = vunpack.c.l.b16 %v5172
    %v7181 = vunpack.c.h.b16 %v5172
    %v7182 = vunpack.c.l.b16 %v5173
    %v7183 = vunpack.c.h.b16 %v5173
    %v7184 = vunpack.c.l.b16 %v5174
    %v7185 = vunpack.c.h.b16 %v5174
    %v7186 = vunpack.c.l.b16 %v5175
    %v7187 = vunpack.c.h.b16 %v5175
    %v7188 = vunpack.c.l.b16 %v5176
    %v7189 = vunpack.c.h.b16 %v5176
    %v7190 = vunpack.c.l.b16 %v5177
    %v7191 = vunpack.c.h.b16 %v5177
    %v7192 = vunpack.c.l.b16 %v5178
    %v7193 = vunpack.c.h.b16 %v5178
    %v7194 = vunpack.c.l.b16 %v5179
    %v7195 = vunpack.c.h.b16 %v5179
    %v7196 = vunpack.c.l.b16 %v5180
    %v7197 = vunpack.c.h.b16 %v5180
    %v7198 = vunpack.c.l.b16 %v5181
    %v7199 = vunpack.c.h.b16 %v5181
    %v7200 = vunpack.c.l.b16 %v5182
    %v7201 = vunpack.c.h.b16 %v5182
    %v7202 = vunpack.c.l.b16 %v5183
    %v7203 = vunpack.c.h.b16 %v5183
    %v7204 = vunpack.c.l.b16 %v5184
    %v7205 = vunpack.c.h.b16 %v5184
    %v7206 = vunpack.c.l.b16 %v5185
    %v7207 = vunpack.c.h.b16 %v5185
    %v7208 = vunpack.c.l.b16 %v5186
    %v7209 = vunpack.c.h.b16 %v5186
    %v7210 = vunpack.c.l.b16 %v5187
    %v7211 = vunpack.c.h.b16 %v5187
    %v7212 = vunpack.c.l.b16 %v5188
    %v7213 = vunpack.c.h.b16 %v5188
    %v7214 = vunpack.c.l.b16 %v5189
    %v7215 = vunpack.c.h.b16 %v5189
    %v7216 = vunpack.c.l.b16 %v5190
    %v7217 = vunpack.c.h.b16 %v5190
    %v7218 = vunpack.c.l.b16 %v5191
    %v7219 = vunpack.c.h.b16 %v5191
    %v7220 = vunpack.c.l.b16 %v5192
    %v7221 = vunpack.c.h.b16 %v5192
    %v7222 = vunpack.c.l.b16 %v5193
    %v7223 = vunpack.c.h.b16 %v5193
    %v7224 = vunpack.c.l.b16 %v5194
    %v7225 = vunpack.c.h.b16 %v5194
    %v7226 = vunpack.c.l.b16 %v5195
    %v7227 = vunpack.c.h.b16 %v5195
    %v7228 = vunpack.c.l.b16 %v5196
    %v7229 = vunpack.c.h.b16 %v5196
    %v7230 = vunpack.c.l.b16 %v5197
    %v7231 = vunpack.c.h.b16 %v5197
    %v7232 = vunpack.c.l.b16 %v5198
    %v7233 = vunpack.c.h.b16 %v5198
    %v7234 = vunpack.c.l.b16 %v5199
    %v7235 = vunpack.c.h.b16 %v5199
    %v7236 = vunpack.c.l.b16 %v5200
    %v7237 = vunpack.c.h.b16 %v5200
    %v7238 = vunpack.c.l.b16 %v5201
    %v7239 = vunpack.c.h.b16 %v5201
    %v7240 = vunpack.c.l.b16 %v5202
    %v7241 = vunpack.c.h.b16 %v5202
    %v7242 = vunpack.c.l.b16 %v5203
    %v7243 = vunpack.c.h.b16 %v5203
    %v7244 = vunpack.c.l.b16 %v5204
    %v7245 = vunpack.c.h.b16 %v5204
    %v7246 = vunpack.c.l.b16 %v5205
    %v7247 = vunpack.c.h.b16 %v5205
    %v7248 = vunpack.c.l.b16 %v5206
    %v7249 = vunpack.c.h.b16 %v5206
    %v7250 = vunpack.c.l.b16 %v5207
    %v7251 = vunpack.c.h.b16 %v5207
    %v7252 = vunpack.c.l.b16 %v5208
    %v7253 = vunpack.c.h.b16 %v5208
    %v7254 = vunpack.c.l.b16 %v5209
    %v7255 = vunpack.c.h.b16 %v5209
    %v7256 = vunpack.c.l.b16 %v5210
    %v7257 = vunpack.c.h.b16 %v5210
    %v7258 = vunpack.c.l.b16 %v5211
    %v7259 = vunpack.c.h.b16 %v5211
    %v7260 = vunpack.c.l.b16 %v5212
    %v7261 = vunpack.c.h.b16 %v5212
    %v7262 = vunpack.c.l.b16 %v5213
    %v7263 = vunpack.c.h.b16 %v5213
    %v7264 = vunpack.c.l.b16 %v5214
    %v7265 = vunpack.c.h.b16 %v5214
    %v7266 = vunpack.c.l.b16 %v5215
    %v7267 = vunpack.c.h.b16 %v5215
    %v7268 = vunpack.c.l.b16 %v5216
    %v7269 = vunpack.c.h.b16 %v5216
    %v7270 = vunpack.c.l.b16 %v5217
    %v7271 = vunpack.c.h.b16 %v5217
    %v7272 = vunpack.c.l.b16 %v5218
    %v7273 = vunpack.c.h.b16 %v5218
    %v7274 = vunpack.c.l.b16 %v5219
    %v7275 = vunpack.c.h.b16 %v5219
    %v7276 = vunpack.c.l.b16 %v5220
    %v7277 = vunpack.c.h.b16 %v5220
    %v7278 = vunpack.c.l.b16 %v5221
    %v7279 = vunpack.c.h.b16 %v5221
    %v7280 = vunpack.c.l.b16 %v5222
    %v7281 = vunpack.c.h.b16 %v5222
    %v7282 = vunpack.c.l.b16 %v5223
    %v7283 = vunpack.c.h.b16 %v5223
    %v7284 = vunpack.c.l.b16 %v5224
    %v7285 = vunpack.c.h.b16 %v5224
    %v7286 = vunpack.c.l.b16 %v5225
    %v7287 = vunpack.c.h.b16 %v5225
    %v7288 = vunpack.c.l.b16 %v5226
    %v7289 = vunpack.c.h.b16 %v5226
    %v7290 = vunpack.c.l.b16 %v5227
    %v7291 = vunpack.c.h.b16 %v5227
    %v7292 = vunpack.c.l.b16 %v5228
    %v7293 = vunpack.c.h.b16 %v5228
    %v7294 = vunpack.c.l.b16 %v5229
    %v7295 = vunpack.c.h.b16 %v5229
    %v7296 = vunpack.c.l.b16 %v5230
    %v7297 = vunpack.c.h.b16 %v5230
    %v7298 = vunpack.c.l.b16 %v5231
    %v7299 = vunpack.c.h.b16 %v5231
    %v7300 = vunpack.c.l.b16 %v5232
    %v7301 = vunpack.c.h.b16 %v5232
    %v7302 = vunpack.c.l.b16 %v5233
    %v7303 = vunpack.c.h.b16 %v5233
    %v7304 = vunpack.c.l.b16 %v5234
    %v7305 = vunpack.c.h.b16 %v5234
    %v7306 = vunpack.c.l.b16 %v5235
    %v7307 = vunpack.c.h.b16 %v5235
    %v7308 = vunpack.c.l.b16 %v5236
    %v7309 = vunpack.c.h.b16 %v5236
    %v7310 = vunpack.c.l.b16 %v5237
    %v7311 = vunpack.c.h.b16 %v5237
    %v7312 = vunpack.c.l.b16 %v5238
    %v7313 = vunpack.c.h.b16 %v5238
    %v7314 = vunpack.c.l.b16 %v5239
    %v7315 = vunpack.c.h.b16 %v5239
    %v7316 = vunpack.c.l.b16 %v5240
    %v7317 = vunpack.c.h.b16 %v5240
    %v7318 = vunpack.c.l.b16 %v5241
    %v7319 = vunpack.c.h.b16 %v5241
    %v7320 = vunpack.c.l.b16 %v5242
    %v7321 = vunpack.c.h.b16 %v5242
    %v7322 = vunpack.c.l.b16 %v5243
    %v7323 = vunpack.c.h.b16 %v5243
    %v7324 = vunpack.c.l.b16 %v5244
    %v7325 = vunpack.c.h.b16 %v5244
    %v7326 = vunpack.c.l.b16 %v5245
    %v7327 = vunpack.c.h.b16 %v5245
    %v7328 = vunpack.c.l.b16 %v5246
    %v7329 = vunpack.c.h.b16 %v5246
    %v7330 = vunpack.c.l.b16 %v5247
    %v7331 = vunpack.c.h.b16 %v5247
    %v7332 = vunpack.c.l.b16 %v5248
    %v7333 = vunpack.c.h.b16 %v5248
    %v7334 = vunpack.c.l.b16 %v5249
    %v7335 = vunpack.c.h.b16 %v5249
    %v7336 = vunpack.c.l.b16 %v5250
    %v7337 = vunpack.c.h.b16 %v5250
    %v7338 = vunpack.c.l.b16 %v5251
    %v7339 = vunpack.c.h.b16 %v5251
    %v7340 = vunpack.c.l.b16 %v5252
    %v7341 = vunpack.c.h.b16 %v5252
    %v7342 = vunpack.c.l.b16 %v5253
    %v7343 = vunpack.c.h.b16 %v5253
    %v7344 = vunpack.c.l.b16 %v5254
    %v7345 = vunpack.c.h.b16 %v5254
    %v7346 = vunpack.c.l.b16 %v5255
    %v7347 = vunpack.c.h.b16 %v5255
    %v7348 = vunpack.c.l.b16 %v5256
    %v7349 = vunpack.c.h.b16 %v5256
    %v7350 = vunpack.c.l.b16 %v5257
    %v7351 = vunpack.c.h.b16 %v5257
    %v7352 = vunpack.c.l.b16 %v5258
    %v7353 = vunpack.c.h.b16 %v5258
    %v7354 = vunpack.c.l.b16 %v5259
    %v7355 = vunpack.c.h.b16 %v5259
    %v7356 = vunpack.c.l.b16 %v5260
    %v7357 = vunpack.c.h.b16 %v5260
    %v7358 = vunpack.c.l.b16 %v5261
    %v7359 = vunpack.c.h.b16 %v5261
    %v7360 = vunpack.c.l.b16 %v5262
    %v7361 = vunpack.c.h.b16 %v5262
    %v7362 = vunpack.c.l.b16 %v5263
    %v7363 = vunpack.c.h.b16 %v5263
    %v7364 = vunpack.c.l.b16 %v5264
    %v7365 = vunpack.c.h.b16 %v5264
    %v7366 = vunpack.c.l.b16 %v5265
    %v7367 = vunpack.c.h.b16 %v5265
    %v7368 = vunpack.c.l.b16 %v5266
    %v7369 = vunpack.c.h.b16 %v5266
    %v7370 = vunpack.c.l.b16 %v5267
    %v7371 = vunpack.c.h.b16 %v5267
    %v7372 = vunpack.c.l.b16 %v5268
    %v7373 = vunpack.c.h.b16 %v5268
    %v7374 = vunpack.c.l.b16 %v5269
    %v7375 = vunpack.c.h.b16 %v5269
    %v7376 = vunpack.c.l.b16 %v5270
    %v7377 = vunpack.c.h.b16 %v5270
    %v7378 = vunpack.c.l.b16 %v5271
    %v7379 = vunpack.c.h.b16 %v5271
    %v7380 = vunpack.c.l.b16 %v5272
    %v7381 = vunpack.c.h.b16 %v5272
    %v7382 = vunpack.c.l.b16 %v5273
    %v7383 = vunpack.c.h.b16 %v5273
    %v7384 = vunpack.c.l.b16 %v5274
    %v7385 = vunpack.c.h.b16 %v5274
    %v7386 = vunpack.c.l.b16 %v5275
    %v7387 = vunpack.c.h.b16 %v5275
    %v7388 = vunpack.c.l.b16 %v5276
    %v7389 = vunpack.c.h.b16 %v5276
    %v7390 = vunpack.c.l.b16 %v5277
    %v7391 = vunpack.c.h.b16 %v5277
    %v7392 = vunpack.c.l.b16 %v5278
    %v7393 = vunpack.c.h.b16 %v5278
    %v7394 = vunpack.c.l.b16 %v5279
    %v7395 = vunpack.c.h.b16 %v5279
    %v7396 = vunpack.c.l.b16 %v5280
    %v7397 = vunpack.c.h.b16 %v5280
    %v7398 = vpack.c.b16 %v7018, %v7014
    %v7399 = vpack.c.b16 %v7019, %v7015
    %v7400 = vpack.c.b16 %v7020, %v7016
    %v7401 = vpack.c.b16 %v7021, %v7017
    %v7402 = vpack.c.b16 %v7026, %v7022
    %v7403 = vpack.c.b16 %v7027, %v7023
    %v7404 = vpack.c.b16 %v7028, %v7024
    %v7405 = vpack.c.b16 %v7029, %v7025
    %v7406 = vpack.c.b16 %v7034, %v7030
    %v7407 = vpack.c.b16 %v7035, %v7031
    %v7408 = vpack.c.b16 %v7036, %v7032
    %v7409 = vpack.c.b16 %v7037, %v7033
    %v7410 = vpack.c.b16 %v7042, %v7038
    %v7411 = vpack.c.b16 %v7043, %v7039
    %v7412 = vpack.c.b16 %v7044, %v7040
    %v7413 = vpack.c.b16 %v7045, %v7041
    %v7414 = vpack.c.b16 %v7050, %v7046
    %v7415 = vpack.c.b16 %v7051, %v7047
    %v7416 = vpack.c.b16 %v7052, %v7048
    %v7417 = vpack.c.b16 %v7053, %v7049
    %v7418 = vpack.c.b16 %v7058, %v7054
    %v7419 = vpack.c.b16 %v7059, %v7055
    %v7420 = vpack.c.b16 %v7060, %v7056
    %v7421 = vpack.c.b16 %v7061, %v7057
    %v7422 = vpack.c.b16 %v7066, %v7062
    %v7423 = vpack.c.b16 %v7067, %v7063
    %v7424 = vpack.c.b16 %v7068, %v7064
    %v7425 = vpack.c.b16 %v7069, %v7065
    %v7426 = vpack.c.b16 %v7074, %v7070
    %v7427 = vpack.c.b16 %v7075, %v7071
    %v7428 = vpack.c.b16 %v7076, %v7072
    %v7429 = vpack.c.b16 %v7077, %v7073
    %v7430 = vpack.c.b16 %v7082, %v7078
    %v7431 = vpack.c.b16 %v7083, %v7079
    %v7432 = vpack.c.b16 %v7084, %v7080
    %v7433 = vpack.c.b16 %v7085, %v7081
    %v7434 = vpack.c.b16 %v7090, %v7086
    %v7435 = vpack.c.b16 %v7091, %v7087
    %v7436 = vpack.c.b16 %v7092, %v7088
    %v7437 = vpack.c.b16 %v7093, %v7089
    %v7438 = vpack.c.b16 %v7098, %v7094
    %v7439 = vpack.c.b16 %v7099, %v7095
    %v7440 = vpack.c.b16 %v7100, %v7096
    %v7441 = vpack.c.b16 %v7101, %v7097
    %v7442 = vpack.c.b16 %v7106, %v7102
    %v7443 = vpack.c.b16 %v7107, %v7103
    %v7444 = vpack.c.b16 %v7108, %v7104
    %v7445 = vpack.c.b16 %v7109, %v7105
    %v7446 = vpack.c.b16 %v7114, %v7110
    %v7447 = vpack.c.b16 %v7115, %v7111
    %v7448 = vpack.c.b16 %v7116, %v7112
    %v7449 = vpack.c.b16 %v7117, %v7113
    %v7450 = vpack.c.b16 %v7122, %v7118
    %v7451 = vpack.c.b16 %v7123, %v7119
    %v7452 = vpack.c.b16 %v7124, %v7120
    %v7453 = vpack.c.b16 %v7125, %v7121
    %v7454 = vpack.c.b16 %v7130, %v7126
    %v7455 = vpack.c.b16 %v7131, %v7127
    %v7456 = vpack.c.b16 %v7132, %v7128
    %v7457 = vpack.c.b16 %v7133, %v7129
    %v7458 = vpack.c.b16 %v7138, %v7134
    %v7459 = vpack.c.b16 %v7139, %v7135
    %v7460 = vpack.c.b16 %v7140, %v7136
    %v7461 = vpack.c.b16 %v7141, %v7137
    %v7462 = vpack.c.b16 %v7146, %v7142
    %v7463 = vpack.c.b16 %v7147, %v7143
    %v7464 = vpack.c.b16 %v7148, %v7144
    %v7465 = vpack.c.b16 %v7149, %v7145
    %v7466 = vpack.c.b16 %v7154, %v7150
    %v7467 = vpack.c.b16 %v7155, %v7151
    %v7468 = vpack.c.b16 %v7156, %v7152
    %v7469 = vpack.c.b16 %v7157, %v7153
    %v7470 = vpack.c.b16 %v7162, %v7158
    %v7471 = vpack.c.b16 %v7163, %v7159
    %v7472 = vpack.c.b16 %v7164, %v7160
    %v7473 = vpack.c.b16 %v7165, %v7161
    %v7474 = vpack.c.b16 %v7170, %v7166
    %v7475 = vpack.c.b16 %v7171, %v7167
    %v7476 = vpack.c.b16 %v7172, %v7168
    %v7477 = vpack.c.b16 %v7173, %v7169
    %v7478 = vpack.c.b16 %v7178, %v7174
    %v7479 = vpack.c.b16 %v7179, %v7175
    %v7480 = vpack.c.b16 %v7180, %v7176
    %v7481 = vpack.c.b16 %v7181, %v7177
    %v7482 = vpack.c.b16 %v7186, %v7182
    %v7483 = vpack.c.b16 %v7187, %v7183
    %v7484 = vpack.c.b16 %v7188, %v7184
    %v7485 = vpack.c.b16 %v7189, %v7185
    %v7486 = vpack.c.b16 %v7194, %v7190
    %v7487 = vpack.c.b16 %v7195, %v7191
    %v7488 = vpack.c.b16 %v7196, %v7192
    %v7489 = vpack.c.b16 %v7197, %v7193
    %v7490 = vpack.c.b16 %v7202, %v7198
    %v7491 = vpack.c.b16 %v7203, %v7199
    %v7492 = vpack.c.b16 %v7204, %v7200
    %v7493 = vpack.c.b16 %v7205, %v7201
    %v7494 = vpack.c.b16 %v7210, %v7206
    %v7495 = vpack.c.b16 %v7211, %v7207
    %v7496 = vpack.c.b16 %v7212, %v7208
    %v7497 = vpack.c.b16 %v7213, %v7209
    %v7498 = vpack.c.b16 %v7218, %v7214
    %v7499 = vpack.c.b16 %v7219, %v7215
    %v7500 = vpack.c.b16 %v7220, %v7216
    %v7501 = vpack.c.b16 %v7221, %v7217
    %v7502 = vpack.c.b16 %v7226, %v7222
    %v7503 = vpack.c.b16 %v7227, %v7223
    %v7504 = vpack.c.b16 %v7228, %v7224
    %v7505 = vpack.c.b16 %v7229, %v7225
    %v7506 = vpack.c.b16 %v7234, %v7230
    %v7507 = vpack.c.b16 %v7235, %v7231
    %v7508 = vpack.c.b16 %v7236, %v7232
    %v7509 = vpack.c.b16 %v7237, %v7233
    %v7510 = vpack.c.b16 %v7242, %v7238
    %v7511 = vpack.c.b16 %v7243, %v7239
    %v7512 = vpack.c.b16 %v7244, %v7240
    %v7513 = vpack.c.b16 %v7245, %v7241
    %v7514 = vpack.c.b16 %v7250, %v7246
    %v7515 = vpack.c.b16 %v7251, %v7247
    %v7516 = vpack.c.b16 %v7252, %v7248
    %v7517 = vpack.c.b16 %v7253, %v7249
    %v7518 = vpack.c.b16 %v7258, %v7254
    %v7519 = vpack.c.b16 %v7259, %v7255
    %v7520 = vpack.c.b16 %v7260, %v7256
    %v7521 = vpack.c.b16 %v7261, %v7257
    %v7522 = vpack.c.b16 %v7266, %v7262
    %v7523 = vpack.c.b16 %v7267, %v7263
    %v7524 = vpack.c.b16 %v7268, %v7264
    %v7525 = vpack.c.b16 %v7269, %v7265
    %v7526 = vpack.c.b16 %v7274, %v7270
    %v7527 = vpack.c.b16 %v7275, %v7271
    %v7528 = vpack.c.b16 %v7276, %v7272
    %v7529 = vpack.c.b16 %v7277, %v7273
    %v7530 = vpack.c.b16 %v7282, %v7278
    %v7531 = vpack.c.b16 %v7283, %v7279
    %v7532 = vpack.c.b16 %v7284, %v7280
    %v7533 = vpack.c.b16 %v7285, %v7281
    %v7534 = vpack.c.b16 %v7290, %v7286
    %v7535 = vpack.c.b16 %v7291, %v7287
    %v7536 = vpack.c.b16 %v7292, %v7288
    %v7537 = vpack.c.b16 %v7293, %v7289
    %v7538 = vpack.c.b16 %v7298, %v7294
    %v7539 = vpack.c.b16 %v7299, %v7295
    %v7540 = vpack.c.b16 %v7300, %v7296
    %v7541 = vpack.c.b16 %v7301, %v7297
    %v7542 = vpack.c.b16 %v7306, %v7302
    %v7543 = vpack.c.b16 %v7307, %v7303
    %v7544 = vpack.c.b16 %v7308, %v7304
    %v7545 = vpack.c.b16 %v7309, %v7305
    %v7546 = vpack.c.b16 %v7314, %v7310
    %v7547 = vpack.c.b16 %v7315, %v7311
    %v7548 = vpack.c.b16 %v7316, %v7312
    %v7549 = vpack.c.b16 %v7317, %v7313
    %v7550 = vpack.c.b16 %v7322, %v7318
    %v7551 = vpack.c.b16 %v7323, %v7319
    %v7552 = vpack.c.b16 %v7324, %v7320
    %v7553 = vpack.c.b16 %v7325, %v7321
    %v7554 = vpack.c.b16 %v7330, %v7326
    %v7555 = vpack.c.b16 %v7331, %v7327
    %v7556 = vpack.c.b16 %v7332, %v7328
    %v7557 = vpack.c.b16 %v7333, %v7329
    %v7558 = vpack.c.b16 %v7338, %v7334
    %v7559 = vpack.c.b16 %v7339, %v7335
    %v7560 = vpack.c.b16 %v7340, %v7336
    %v7561 = vpack.c.b16 %v7341, %v7337
    %v7562 = vpack.c.b16 %v7346, %v7342
    %v7563 = vpack.c.b16 %v7347, %v7343
    %v7564 = vpack.c.b16 %v7348, %v7344
    %v7565 = vpack.c.b16 %v7349, %v7345
    %v7566 = vpack.c.b16 %v7354, %v7350
    %v7567 = vpack.c.b16 %v7355, %v7351
    %v7568 = vpack.c.b16 %v7356, %v7352
    %v7569 = vpack.c.b16 %v7357, %v7353
    %v7570 = vpack.c.b16 %v7362, %v7358
    %v7571 = vpack.c.b16 %v7363, %v7359
    %v7572 = vpack.c.b16 %v7364, %v7360
    %v7573 = vpack.c.b16 %v7365, %v7361
    %v7574 = vpack.c.b16 %v7370, %v7366
    %v7575 = vpack.c.b16 %v7371, %v7367
    %v7576 = vpack.c.b16 %v7372, %v7368
    %v7577 = vpack.c.b16 %v7373, %v7369
    %v7578 = vpack.c.b16 %v7378, %v7374
    %v7579 = vpack.c.b16 %v7379, %v7375
    %v7580 = vpack.c.b16 %v7380, %v7376
    %v7581 = vpack.c.b16 %v7381, %v7377
    %v7582 = vpack.c.b16 %v7386, %v7382
    %v7583 = vpack.c.b16 %v7387, %v7383
    %v7584 = vpack.c.b16 %v7388, %v7384
    %v7585 = vpack.c.b16 %v7389, %v7385
    %v7586 = vpack.c.b16 %v7394, %v7390
    %v7587 = vpack.c.b16 %v7395, %v7391
    %v7588 = vpack.c.b16 %v7396, %v7392
    %v7589 = vpack.c.b16 %v7397, %v7393
    %7782 = vmatprep.subr.bf16.mxu0 %v7399
    %7783 = vmatpush1.bf16.msra.mxu0 %v7398
    %7784 = vmatprep.subr.bf16.mxu0 %v7403
    %7785 = vmatpush1.bf16.msra.mxu0 %v7402
    %7786 = vmatprep.subr.bf16.mxu0 %v7407
    %7787 = vmatpush1.bf16.msra.mxu0 %v7406
    %7788 = vmatprep.subr.bf16.mxu0 %v7411
    %7789 = vmatpush1.bf16.msra.mxu0 %v7410
    %7790 = vmatprep.subr.bf16.mxu0 %v7415
    %7791 = vmatpush1.bf16.msra.mxu0 %v7414
    %7792 = vmatprep.subr.bf16.mxu0 %v7419
    %7793 = vmatpush1.bf16.msra.mxu0 %v7418
    %7794 = vmatprep.subr.bf16.mxu0 %v7423
    %7795 = vmatpush1.bf16.msra.mxu0 %v7422
    %7796 = vmatprep.subr.bf16.mxu0 %v7427
    %7797 = vmatpush1.bf16.msra.mxu0 %v7426
    %7798 = vmatprep.subr.bf16.mxu0 %v7431
    %7799 = vmatpush1.bf16.msra.mxu0 %v7430
    %7800 = vmatprep.subr.bf16.mxu0 %v7435
    %7801 = vmatpush1.bf16.msra.mxu0 %v7434
    %7802 = vmatprep.subr.bf16.mxu0 %v7439
    %7803 = vmatpush1.bf16.msra.mxu0 %v7438
    %7804 = vmatprep.subr.bf16.mxu0 %v7443
    %7805 = vmatpush1.bf16.msra.mxu0 %v7442
    %7806 = vmatprep.subr.bf16.mxu0 %v7447
    %7807 = vmatpush1.bf16.msra.mxu0 %v7446
    %7808 = vmatprep.subr.bf16.mxu0 %v7451
    %7809 = vmatpush1.bf16.msra.mxu0 %v7450
    %7810 = vmatprep.subr.bf16.mxu0 %v7455
    %7811 = vmatpush1.bf16.msra.mxu0 %v7454
    %7812 = vmatprep.subr.bf16.mxu0 %v7459
    %7813 = vmatpush1.bf16.msra.mxu0 %v7458
    %7814 = vmatprep.mubr.bf16.mxu0 %v5084
    %7815 = vmatmul.mubr.bf16.gmra.mrb[0].mxu0 %v5083
    %v7816 = vpop.f32.mrb[0].mxu0
    %v7817 = vadd.f32 %v6693, %v7816
    %v7818 = vpop.f32.mrb[0].mxu0
    %v7819 = vadd.f32 %v6695, %v7818
    %v7820 = vpop.f32.mrb[0].mxu0
    %v7821 = vpop.f32.mrb[0].mxu0
    %7822 = vdwg.mxu0
    %7823 = vmatprep.subr.bf16.mxu0 %v7463
    %7824 = vmatpush1.bf16.msra.mxu0 %v7462
    %7825 = vmatprep.subr.bf16.mxu0 %v7467
    %7826 = vmatpush1.bf16.msra.mxu0 %v7466
    %7827 = vmatprep.subr.bf16.mxu0 %v7471
    %7828 = vmatpush1.bf16.msra.mxu0 %v7470
    %7829 = vmatprep.subr.bf16.mxu0 %v7475
    %7830 = vmatpush1.bf16.msra.mxu0 %v7474
    %7831 = vmatprep.subr.bf16.mxu0 %v7479
    %7832 = vmatpush1.bf16.msra.mxu0 %v7478
    %7833 = vmatprep.subr.bf16.mxu0 %v7483
    %7834 = vmatpush1.bf16.msra.mxu0 %v7482
    %7835 = vmatprep.subr.bf16.mxu0 %v7487
    %7836 = vmatpush1.bf16.msra.mxu0 %v7486
    %7837 = vmatprep.subr.bf16.mxu0 %v7491
    %7838 = vmatpush1.bf16.msra.mxu0 %v7490
    %7839 = vmatprep.subr.bf16.mxu0 %v7495
    %7840 = vmatpush1.bf16.msra.mxu0 %v7494
    %7841 = vmatprep.subr.bf16.mxu0 %v7499
    %7842 = vmatpush1.bf16.msra.mxu0 %v7498
    %7843 = vmatprep.subr.bf16.mxu0 %v7503
    %7844 = vmatpush1.bf16.msra.mxu0 %v7502
    %7845 = vmatprep.subr.bf16.mxu0 %v7507
    %7846 = vmatpush1.bf16.msra.mxu0 %v7506
    %7847 = vmatprep.subr.bf16.mxu0 %v7511
    %7848 = vmatpush1.bf16.msra.mxu0 %v7510
    %7849 = vmatprep.subr.bf16.mxu0 %v7515
    %7850 = vmatpush1.bf16.msra.mxu0 %v7514
    %7851 = vmatprep.subr.bf16.mxu0 %v7519
    %7852 = vmatpush1.bf16.msra.mxu0 %v7518
    %7853 = vmatprep.subr.bf16.mxu0 %v7523
    %7854 = vmatpush1.bf16.msra.mxu0 %v7522
    %7855 = vmatprep.mubr.bf16.mxu0 %v5086
    %7856 = vmatmul.mubr.bf16.gmra.mrb[0].mxu0 %v5085
    %v7857 = vpop.f32.mrb[0].mxu0
    %v7858 = vadd.f32 %v7817, %v7857
    %v7859 = vpop.f32.mrb[0].mxu0
    %v7860 = vadd.f32 %v7819, %v7859
    %v7861 = vpop.f32.mrb[0].mxu0
    %v7862 = vpop.f32.mrb[0].mxu0
    %7863 = vdwg.mxu0
    %7864 = vmatprep.subr.bf16.mxu0 %v7527
    %7865 = vmatpush1.bf16.msra.mxu0 %v7526
    %7866 = vmatprep.subr.bf16.mxu0 %v7531
    %7867 = vmatpush1.bf16.msra.mxu0 %v7530
    %7868 = vmatprep.subr.bf16.mxu0 %v7535
    %7869 = vmatpush1.bf16.msra.mxu0 %v7534
    %7870 = vmatprep.subr.bf16.mxu0 %v7539
    %7871 = vmatpush1.bf16.msra.mxu0 %v7538
    %7872 = vmatprep.subr.bf16.mxu0 %v7543
    %7873 = vmatpush1.bf16.msra.mxu0 %v7542
    %7874 = vmatprep.subr.bf16.mxu0 %v7547
    %7875 = vmatpush1.bf16.msra.mxu0 %v7546
    %7876 = vmatprep.subr.bf16.mxu0 %v7551
    %7877 = vmatpush1.bf16.msra.mxu0 %v7550
    %7878 = vmatprep.subr.bf16.mxu0 %v7555
    %7879 = vmatpush1.bf16.msra.mxu0 %v7554
    %7880 = vmatprep.subr.bf16.mxu0 %v7559
    %7881 = vmatpush1.bf16.msra.mxu0 %v7558
    %7882 = vmatprep.subr.bf16.mxu0 %v7563
    %7883 = vmatpush1.bf16.msra.mxu0 %v7562
    %7884 = vmatprep.subr.bf16.mxu0 %v7567
    %7885 = vmatpush1.bf16.msra.mxu0 %v7566
    %7886 = vmatprep.subr.bf16.mxu0 %v7571
    %7887 = vmatpush1.bf16.msra.mxu0 %v7570
    %7888 = vmatprep.subr.bf16.mxu0 %v7575
    %7889 = vmatpush1.bf16.msra.mxu0 %v7574
    %7890 = vmatprep.subr.bf16.mxu0 %v7579
    %7891 = vmatpush1.bf16.msra.mxu0 %v7578
    %7892 = vmatprep.subr.bf16.mxu0 %v7583
    %7893 = vmatpush1.bf16.msra.mxu0 %v7582
    %7894 = vmatprep.subr.bf16.mxu0 %v7587
    %7895 = vmatpush1.bf16.msra.mxu0 %v7586
    %7896 = vmatprep.mubr.bf16.mxu0 %v5088
    %7897 = vmatmul.mubr.bf16.gmra.mrb[0].mxu0 %v5087
    %v7898 = vpop.f32.mrb[0].mxu0
    %v7899 = vadd.f32 %v7858, %v7898
    %v7900 = vpop.f32.mrb[0].mxu0
    %v7901 = vadd.f32 %v7860, %v7900
    %v7902 = vpop.f32.mrb[0].mxu0
    %v7903 = vpop.f32.mrb[0].mxu0
    %7904 = vdwg.mxu0
    %7905 = vmatprep.subr.bf16.mxu0 %v7401
    %7906 = vmatpush1.bf16.msra.mxu0 %v7400
    %7907 = vmatprep.subr.bf16.mxu0 %v7405
    %7908 = vmatpush1.bf16.msra.mxu0 %v7404
    %7909 = vmatprep.subr.bf16.mxu0 %v7409
    %7910 = vmatpush1.bf16.msra.mxu0 %v7408
    %7911 = vmatprep.subr.bf16.mxu0 %v7413
    %7912 = vmatpush1.bf16.msra.mxu0 %v7412
    %7913 = vmatprep.subr.bf16.mxu0 %v7417
    %7914 = vmatpush1.bf16.msra.mxu0 %v7416
    %7915 = vmatprep.subr.bf16.mxu0 %v7421
    %7916 = vmatpush1.bf16.msra.mxu0 %v7420
    %7917 = vmatprep.subr.bf16.mxu0 %v7425
    %7918 = vmatpush1.bf16.msra.mxu0 %v7424
    %7919 = vmatprep.subr.bf16.mxu0 %v7429
    %7920 = vmatpush1.bf16.msra.mxu0 %v7428
    %7921 = vmatprep.subr.bf16.mxu0 %v7433
    %7922 = vmatpush1.bf16.msra.mxu0 %v7432
    %7923 = vmatprep.subr.bf16.mxu0 %v7437
    %7924 = vmatpush1.bf16.msra.mxu0 %v7436
    %7925 = vmatprep.subr.bf16.mxu0 %v7441
    %7926 = vmatpush1.bf16.msra.mxu0 %v7440
    %7927 = vmatprep.subr.bf16.mxu0 %v7445
    %7928 = vmatpush1.bf16.msra.mxu0 %v7444
    %7929 = vmatprep.subr.bf16.mxu0 %v7449
    %7930 = vmatpush1.bf16.msra.mxu0 %v7448
    %7931 = vmatprep.subr.bf16.mxu0 %v7453
    %7932 = vmatpush1.bf16.msra.mxu0 %v7452
    %7933 = vmatprep.subr.bf16.mxu0 %v7457
    %7934 = vmatpush1.bf16.msra.mxu0 %v7456
    %7935 = vmatprep.subr.bf16.mxu0 %v7461
    %7936 = vmatpush1.bf16.msra.mxu0 %v7460
    %7937 = vmatprep.mubr.bf16.mxu0 %v5084
    %7938 = vmatmul.mubr.bf16.gmra.mrb[0].mxu0 %v5083
    %v7939 = vpop.f32.mrb[0].mxu0
    %v7940 = vadd.f32 %v6816, %v7939
    %v7941 = vpop.f32.mrb[0].mxu0
    %v7942 = vadd.f32 %v6818, %v7941
    %v7943 = vpop.f32.mrb[0].mxu0
    %v7944 = vpop.f32.mrb[0].mxu0
    %7945 = vdwg.mxu0
    %7946 = vmatprep.subr.bf16.mxu0 %v7465
    %7947 = vmatpush1.bf16.msra.mxu0 %v7464
    %7948 = vmatprep.subr.bf16.mxu0 %v7469
    %7949 = vmatpush1.bf16.msra.mxu0 %v7468
    %7950 = vmatprep.subr.bf16.mxu0 %v7473
    %7951 = vmatpush1.bf16.msra.mxu0 %v7472
    %7952 = vmatprep.subr.bf16.mxu0 %v7477
    %7953 = vmatpush1.bf16.msra.mxu0 %v7476
    %7954 = vmatprep.subr.bf16.mxu0 %v7481
    %7955 = vmatpush1.bf16.msra.mxu0 %v7480
    %7956 = vmatprep.subr.bf16.mxu0 %v7485
    %7957 = vmatpush1.bf16.msra.mxu0 %v7484
    %7958 = vmatprep.subr.bf16.mxu0 %v7489
    %7959 = vmatpush1.bf16.msra.mxu0 %v7488
    %7960 = vmatprep.subr.bf16.mxu0 %v7493
    %7961 = vmatpush1.bf16.msra.mxu0 %v7492
    %7962 = vmatprep.subr.bf16.mxu0 %v7497
    %7963 = vmatpush1.bf16.msra.mxu0 %v7496
    %7964 = vmatprep.subr.bf16.mxu0 %v7501
    %7965 = vmatpush1.bf16.msra.mxu0 %v7500
    %7966 = vmatprep.subr.bf16.mxu0 %v7505
    %7967 = vmatpush1.bf16.msra.mxu0 %v7504
    %7968 = vmatprep.subr.bf16.mxu0 %v7509
    %7969 = vmatpush1.bf16.msra.mxu0 %v7508
    %7970 = vmatprep.subr.bf16.mxu0 %v7513
    %7971 = vmatpush1.bf16.msra.mxu0 %v7512
    %7972 = vmatprep.subr.bf16.mxu0 %v7517
    %7973 = vmatpush1.bf16.msra.mxu0 %v7516
    %7974 = vmatprep.subr.bf16.mxu0 %v7521
    %7975 = vmatpush1.bf16.msra.mxu0 %v7520
    %7976 = vmatprep.subr.bf16.mxu0 %v7525
    %7977 = vmatpush1.bf16.msra.mxu0 %v7524
    %7978 = vmatprep.mubr.bf16.mxu0 %v5086
    %7979 = vmatmul.mubr.bf16.gmra.mrb[0].mxu0 %v5085
    %v7980 = vpop.f32.mrb[0].mxu0
    %v7981 = vadd.f32 %v7940, %v7980
    %v7982 = vpop.f32.mrb[0].mxu0
    %v7983 = vadd.f32 %v7942, %v7982
    %v7984 = vpop.f32.mrb[0].mxu0
    %v7985 = vpop.f32.mrb[0].mxu0
    %7986 = vdwg.mxu0
    %7987 = vmatprep.subr.bf16.mxu0 %v7529
    %7988 = vmatpush1.bf16.msra.mxu0 %v7528
    %7989 = vmatprep.subr.bf16.mxu0 %v7533
    %7990 = vmatpush1.bf16.msra.mxu0 %v7532
    %7991 = vmatprep.subr.bf16.mxu0 %v7537
    %7992 = vmatpush1.bf16.msra.mxu0 %v7536
    %7993 = vmatprep.subr.bf16.mxu0 %v7541
    %7994 = vmatpush1.bf16.msra.mxu0 %v7540
    %7995 = vmatprep.subr.bf16.mxu0 %v7545
    %7996 = vmatpush1.bf16.msra.mxu0 %v7544
    %7997 = vmatprep.subr.bf16.mxu0 %v7549
    %7998 = vmatpush1.bf16.msra.mxu0 %v7548
    %7999 = vmatprep.subr.bf16.mxu0 %v7553
    %8000 = vmatpush1.bf16.msra.mxu0 %v7552
    %8001 = vmatprep.subr.bf16.mxu0 %v7557
    %8002 = vmatpush1.bf16.msra.mxu0 %v7556
    %8003 = vmatprep.subr.bf16.mxu0 %v7561
    %8004 = vmatpush1.bf16.msra.mxu0 %v7560
    %8005 = vmatprep.subr.bf16.mxu0 %v7565
    %8006 = vmatpush1.bf16.msra.mxu0 %v7564
    %8007 = vmatprep.subr.bf16.mxu0 %v7569
    %8008 = vmatpush1.bf16.msra.mxu0 %v7568
    %8009 = vmatprep.subr.bf16.mxu0 %v7573
    %8010 = vmatpush1.bf16.msra.mxu0 %v7572
    %8011 = vmatprep.subr.bf16.mxu0 %v7577
    %8012 = vmatpush1.bf16.msra.mxu0 %v7576
    %8013 = vmatprep.subr.bf16.mxu0 %v7581
    %8014 = vmatpush1.bf16.msra.mxu0 %v7580
    %8015 = vmatprep.subr.bf16.mxu0 %v7585
    %8016 = vmatpush1.bf16.msra.mxu0 %v7584
    %8017 = vmatprep.subr.bf16.mxu0 %v7589
    %8018 = vmatpush1.bf16.msra.mxu0 %v7588
    %8019 = vmatprep.mubr.bf16.mxu0 %v5088
    %8020 = vmatmul.mubr.bf16.gmra.mrb[0].mxu0 %v5087
    %v8021 = vpop.f32.mrb[0].mxu0
    %v8022 = vadd.f32 %v7981, %v8021
    %v8023 = vpop.f32.mrb[0].mxu0
    %v8024 = vadd.f32 %v7983, %v8023
    %v8025 = vpop.f32.mrb[0].mxu0
    %v8026 = vpop.f32.mrb[0].mxu0
    %8027 = vdwg.mxu0
    %v8028 = vld [vmem:[#allocation19] ss:$4 sm:$0x3]
    %v8030 = vlaneseq
    %v8031 = vshrl.u32 %v8030, 7
    %v8032 = vsub.s32 0, %v8031
    %v8033 = vrot.slane %v8028, %v8032
    %v8034 = vlaneseq
    %v8035 = vshrl.u32 %v8034, 7
    %v8036 = vsub.s32 1, %v8035
    %v8037 = vrot.slane %v8028, %v8036
    %v8040 = vadd.f32 %v7899, %v8033
    %v8041 = vadd.f32 %v7901, %v8037
    %v8042 = vadd.f32 %v8022, %v8033
    %v8043 = vadd.f32 %v8024, %v8037
    %v8044 = vadd.f32 %v8040, %v8042
    %v8045 = vrot.slane %v8044, 4
    %v8046 = vadd.f32 %v8044, %v8045
    %v8047 = vrot.slane %v8046, 2
    %v8048 = vadd.f32 %v8046, %v8047
    %v8049 = vrot.slane %v8048, 1
    %v8050 = vadd.f32 %v8048, %v8049
    %v8051 = vadd.f32 %v8041, %v8043
    %v8052 = vrot.slane %v8051, 4
    %v8053 = vadd.f32 %v8051, %v8052
    %v8054 = vrot.slane %v8053, 2
    %v8055 = vadd.f32 %v8053, %v8054
    %v8056 = vrot.slane %v8055, 1
    %v8057 = vadd.f32 %v8055, %v8056
    %8059 = vrot.lane.b32.xlu0 %v8050, 96
    %v8060 = vpop.permute.xlu0 %8059
    %v8062 = vadd.f32 %v8050, %v8060
    %8063 = vrot.lane.b32.xlu0 %v8050, 64
    %v8064 = vpop.permute.xlu0 %8063
    %v8066 = vadd.f32 %v8062, %v8064
    %8067 = vrot.lane.b32.xlu0 %v8050, 32
    %v8068 = vpop.permute.xlu0 %8067
    %v8070 = vadd.f32 %v8066, %v8068
    %v8071 = vadd.f32 %v8070, %v8057
    %8073 = vrot.lane.b32.xlu0 %v8057, 96
    %v8074 = vpop.permute.xlu0 %8073
    %v8076 = vadd.f32 %v8071, %v8074
    %8077 = vrot.lane.b32.xlu0 %v8057, 64
    %v8078 = vpop.permute.xlu0 %8077
    %v8080 = vadd.f32 %v8076, %v8078
    %8081 = vrot.lane.b32.xlu0 %v8057, 32
    %v8082 = vpop.permute.xlu0 %8081
    %v8084 = vadd.f32 %v8080, %v8082
    %8086 = vrot.lane.b32.xlu0 %v8084, 32
    %v8087 = vpop.permute.xlu0 %8086
    %8089 = vrot.lane.b32.xlu0 %v8084, 64
    %v8090 = vpop.permute.xlu0 %8089
    %8092 = vrot.lane.b32.xlu0 %v8084, 96
    %v8093 = vpop.permute.xlu0 %8092
    %v8095 = vsel %vm279, %v8084, %v8087
    %v8096 = vsel %vm573, %v8095, %v8090
    %v8097 = vsel %vm673, %v8096, %v8093
    %v8098 = vmul.f32 %v8097, 0.0078125
    %v8099 = vlaneseq
    %v8100 = vshrl.u32 %v8099, 7
    %v8101 = vsub.s32 0, %v8100
    %v8102 = vrot.slane %v8098, %v8101
    %v8103 = vsub.f32 %v8040, %v8102
    %v8104 = vsub.f32 %v8041, %v8102
    %v8105 = vsub.f32 %v8042, %v8102
    %v8106 = vsub.f32 %v8043, %v8102
    %v8107 = vmul.f32 %v8103, %v8103
    %v8108 = vmul.f32 %v8104, %v8104
    %v8109 = vmul.f32 %v8105, %v8105
    %v8110 = vmul.f32 %v8106, %v8106
    %v8111 = vadd.f32 %v8107, %v8109
    %v8112 = vrot.slane %v8111, 4
    %v8113 = vadd.f32 %v8111, %v8112
    %v8114 = vrot.slane %v8113, 2
    %v8115 = vadd.f32 %v8113, %v8114
    %v8116 = vrot.slane %v8115, 1
    %v8117 = vadd.f32 %v8115, %v8116
    %v8118 = vadd.f32 %v8108, %v8110
    %v8119 = vrot.slane %v8118, 4
    %v8120 = vadd.f32 %v8118, %v8119
    %v8121 = vrot.slane %v8120, 2
    %v8122 = vadd.f32 %v8120, %v8121
    %v8123 = vrot.slane %v8122, 1
    %v8124 = vadd.f32 %v8122, %v8123
    %8126 = vrot.lane.b32.xlu0 %v8117, 96
    %v8127 = vpop.permute.xlu0 %8126
    %v8129 = vadd.f32 %v8117, %v8127
    %8130 = vrot.lane.b32.xlu0 %v8117, 64
    %v8131 = vpop.permute.xlu0 %8130
    %v8133 = vadd.f32 %v8129, %v8131
    %8134 = vrot.lane.b32.xlu0 %v8117, 32
    %v8135 = vpop.permute.xlu0 %8134
    %v8137 = vadd.f32 %v8133, %v8135
    %v8138 = vadd.f32 %v8137, %v8124
    %8140 = vrot.lane.b32.xlu0 %v8124, 96
    %v8141 = vpop.permute.xlu0 %8140
    %v8143 = vadd.f32 %v8138, %v8141
    %8144 = vrot.lane.b32.xlu0 %v8124, 64
    %v8145 = vpop.permute.xlu0 %8144
    %v8147 = vadd.f32 %v8143, %v8145
    %8148 = vrot.lane.b32.xlu0 %v8124, 32
    %v8149 = vpop.permute.xlu0 %8148
    %v8151 = vadd.f32 %v8147, %v8149
    %8153 = vrot.lane.b32.xlu0 %v8151, 32
    %v8154 = vpop.permute.xlu0 %8153
    %8156 = vrot.lane.b32.xlu0 %v8151, 64
    %v8157 = vpop.permute.xlu0 %8156
    %8159 = vrot.lane.b32.xlu0 %v8151, 96
    %v8160 = vpop.permute.xlu0 %8159
    %v8162 = vsel %vm279, %v8151, %v8154
    %v8163 = vsel %vm573, %v8162, %v8157
    %v8164 = vsel %vm673, %v8163, %v8160
    %v8165 = vmul.f32 %v8164, 0.0078125
    %v8166 = vadd.f32 %v8165, 1e-05
    %v8167 = vrsqrt.pop %v8166
    %v8168 = vlaneseq
    %v8169 = vshrl.u32 %v8168, 7
    %v8170 = vsub.s32 0, %v8169
    %v8171 = vrot.slane %v8167, %v8170
    %v8172 = vmul.f32 %v8103, %v8171
    %v8173 = vmul.f32 %v8104, %v8171
    %v8174 = vmul.f32 %v8105, %v8171
    %v8175 = vmul.f32 %v8106, %v8171
    %s8176 = scalar_lea.vmem [#allocation19], 1
    %v8177 = vld [vmem:[%s8176] ss:$4 sm:$0x3]
    %v8179 = vlaneseq
    %v8180 = vshrl.u32 %v8179, 7
    %v8181 = vsub.s32 0, %v8180
    %v8182 = vrot.slane %v8177, %v8181
    %v8183 = vlaneseq
    %v8184 = vshrl.u32 %v8183, 7
    %v8185 = vsub.s32 1, %v8184
    %v8186 = vrot.slane %v8177, %v8185
    %v8189 = vmul.f32 %v8172, %v8182
    %v8190 = vmul.f32 %v8173, %v8186
    %v8191 = vmul.f32 %v8174, %v8182
    %v8192 = vmul.f32 %v8175, %v8186
    %s8193 = scalar_lea.vmem [#allocation19], 2
    %v8194 = vld [vmem:[%s8193] ss:$4 sm:$0x3]
    %v8196 = vlaneseq
    %v8197 = vshrl.u32 %v8196, 7
    %v8198 = vsub.s32 0, %v8197
    %v8199 = vrot.slane %v8194, %v8198
    %v8200 = vlaneseq
    %v8201 = vshrl.u32 %v8200, 7
    %v8202 = vsub.s32 1, %v8201
    %v8203 = vrot.slane %v8194, %v8202
    %v8206 = vadd.f32 %v8189, %v8199
    %v8207 = vadd.f32 %v8190, %v8203
    %v8208 = vadd.f32 %v8191, %v8199
    %v8209 = vadd.f32 %v8192, %v8203
    %v8210 = vmax.f32 %v8206, 0.0
    %v8211 = vmax.f32 %v8207, 0.0
    %v8212 = vmax.f32 %v8208, 0.0
    %v8213 = vmax.f32 %v8209, 0.0
    %v8214 = vpack.c.bf16 %v8212, %v8210
    %v8215 = vpack.c.bf16 %v8213, %v8211
    %v8216 = vld [vmem:[%s18] sm:$0xf]
    %v8217 = vld [vmem:[%s18 + $0x4] sm:$0xf]
    %v8220 = vunpack.c.l.b16 %v8216
    %v8221 = vunpack.c.l.b16 %v8217
    %v8222 = vpack.c.b16 %v8221, %v8220
    %v8224 = vsel %vm504, %v8222, 0
    %8226 = vmatprep.subr.bf16.mxu0 %v8215
    %8227 = vmatpush1.bf16.msra.mxu0 %v8214
    %8228 = vmatprep.subr.bf16.mxu0 0
    %8229 = vmatpush1.bf16.msra.mxu0 0
    %8230 = vmatprep.subr.bf16.mxu0 0
    %8231 = vmatpush1.bf16.msra.mxu0 0
    %8232 = vmatprep.subr.bf16.mxu0 0
    %8233 = vmatpush1.bf16.msra.mxu0 0
    %8234 = vmatprep.subr.bf16.mxu0 0
    %8235 = vmatpush1.bf16.msra.mxu0 0
    %8236 = vmatprep.subr.bf16.mxu0 0
    %8237 = vmatpush1.bf16.msra.mxu0 0
    %8238 = vmatprep.subr.bf16.mxu0 0
    %8239 = vmatpush1.bf16.msra.mxu0 0
    %8240 = vmatprep.subr.bf16.mxu0 0
    %8241 = vmatpush1.bf16.msra.mxu0 0
    %8242 = vmatprep.subr.bf16.mxu0 0
    %8243 = vmatpush1.bf16.msra.mxu0 0
    %8244 = vmatprep.subr.bf16.mxu0 0
    %8245 = vmatpush1.bf16.msra.mxu0 0
    %8246 = vmatprep.subr.bf16.mxu0 0
    %8247 = vmatpush1.bf16.msra.mxu0 0
    %8248 = vmatprep.subr.bf16.mxu0 0
    %8249 = vmatpush1.bf16.msra.mxu0 0
    %8250 = vmatprep.subr.bf16.mxu0 0
    %8251 = vmatpush1.bf16.msra.mxu0 0
    %8252 = vmatprep.subr.bf16.mxu0 0
    %8253 = vmatpush1.bf16.msra.mxu0 0
    %8254 = vmatprep.subr.bf16.mxu0 0
    %8255 = vmatpush1.bf16.msra.mxu0 0
    %8256 = vmatprep.subr.bf16.mxu0 0
    %8257 = vmatpush1.bf16.msra.mxu0 0
    %8258 = vmatprep.mubr.bf16.mxu0 0
    %8259 = vmatmul.mubr.bf16.gmra.mrb[0].mxu0 %v8224
    %v8260 = vpop.f32.mrb[0].mxu0
    %v8261 = vadd.f32 0.0, %v8260
    %v8262 = vpop.f32.mrb[0].mxu0
    %v8263 = vadd.f32 0.0, %v8262
    %v8264 = vpop.f32.mrb[0].mxu0
    %v8265 = vadd.f32 0.0, %v8264
    %v8266 = vpop.f32.mrb[0].mxu0
    %v8267 = vadd.f32 0.0, %v8266
    %8268 = vdwg.mxu0
    %s8269 = scalar_lea.vmem %s18, 8
    %v8270 = vld [vmem:[%s8269] sm:$0xf]
    %v8271 = vld [vmem:[%s8269 + $0x4] sm:$0xf]
    %v8274 = vunpack.c.l.b16 %v8270
    %v8275 = vunpack.c.l.b16 %v8271
    %v8276 = vpack.c.b16 %v8275, %v8274
    %v8278 = vsel %vm504, %v8276, 0
    %8280 = vmatprep.subr.bf16.mxu0 %v8215
    %8281 = vmatpush1.bf16.msra.mxu0 %v8214
    %8282 = vmatprep.subr.bf16.mxu0 0
    %8283 = vmatpush1.bf16.msra.mxu0 0
    %8284 = vmatprep.subr.bf16.mxu0 0
    %8285 = vmatpush1.bf16.msra.mxu0 0
    %8286 = vmatprep.subr.bf16.mxu0 0
    %8287 = vmatpush1.bf16.msra.mxu0 0
    %8288 = vmatprep.subr.bf16.mxu0 0
    %8289 = vmatpush1.bf16.msra.mxu0 0
    %8290 = vmatprep.subr.bf16.mxu0 0
    %8291 = vmatpush1.bf16.msra.mxu0 0
    %8292 = vmatprep.subr.bf16.mxu0 0
    %8293 = vmatpush1.bf16.msra.mxu0 0
    %8294 = vmatprep.subr.bf16.mxu0 0
    %8295 = vmatpush1.bf16.msra.mxu0 0
    %8296 = vmatprep.subr.bf16.mxu0 0
    %8297 = vmatpush1.bf16.msra.mxu0 0
    %8298 = vmatprep.subr.bf16.mxu0 0
    %8299 = vmatpush1.bf16.msra.mxu0 0
    %8300 = vmatprep.subr.bf16.mxu0 0
    %8301 = vmatpush1.bf16.msra.mxu0 0
    %8302 = vmatprep.subr.bf16.mxu0 0
    %8303 = vmatpush1.bf16.msra.mxu0 0
    %8304 = vmatprep.subr.bf16.mxu0 0
    %8305 = vmatpush1.bf16.msra.mxu0 0
    %8306 = vmatprep.subr.bf16.mxu0 0
    %8307 = vmatpush1.bf16.msra.mxu0 0
    %8308 = vmatprep.subr.bf16.mxu0 0
    %8309 = vmatpush1.bf16.msra.mxu0 0
    %8310 = vmatprep.subr.bf16.mxu0 0
    %8311 = vmatpush1.bf16.msra.mxu0 0
    %8312 = vmatprep.mubr.bf16.mxu0 0
    %8313 = vmatmul.mubr.bf16.gmra.mrb[0].mxu0 %v8278
    %v8314 = vpop.f32.mrb[0].mxu0
    %v8315 = vadd.f32 0.0, %v8314
    %v8316 = vpop.f32.mrb[0].mxu0
    %v8317 = vadd.f32 0.0, %v8316
    %v8318 = vpop.f32.mrb[0].mxu0
    %v8319 = vadd.f32 0.0, %v8318
    %v8320 = vpop.f32.mrb[0].mxu0
    %v8321 = vadd.f32 0.0, %v8320
    %8322 = vdwg.mxu0
    %s8323 = scalar_lea.vmem %s18, 16
    %v8324 = vld [vmem:[%s8323] sm:$0xf]
    %v8325 = vld [vmem:[%s8323 + $0x4] sm:$0xf]
    %v8328 = vunpack.c.l.b16 %v8324
    %v8329 = vunpack.c.l.b16 %v8325
    %v8330 = vpack.c.b16 %v8329, %v8328
    %v8332 = vsel %vm504, %v8330, 0
    %8334 = vmatprep.subr.bf16.mxu0 %v8215
    %8335 = vmatpush1.bf16.msra.mxu0 %v8214
    %8336 = vmatprep.subr.bf16.mxu0 0
    %8337 = vmatpush1.bf16.msra.mxu0 0
    %8338 = vmatprep.subr.bf16.mxu0 0
    %8339 = vmatpush1.bf16.msra.mxu0 0
    %8340 = vmatprep.subr.bf16.mxu0 0
    %8341 = vmatpush1.bf16.msra.mxu0 0
    %8342 = vmatprep.subr.bf16.mxu0 0
    %8343 = vmatpush1.bf16.msra.mxu0 0
    %8344 = vmatprep.subr.bf16.mxu0 0
    %8345 = vmatpush1.bf16.msra.mxu0 0
    %8346 = vmatprep.subr.bf16.mxu0 0
    %8347 = vmatpush1.bf16.msra.mxu0 0
    %8348 = vmatprep.subr.bf16.mxu0 0
    %8349 = vmatpush1.bf16.msra.mxu0 0
    %8350 = vmatprep.subr.bf16.mxu0 0
    %8351 = vmatpush1.bf16.msra.mxu0 0
    %8352 = vmatprep.subr.bf16.mxu0 0
    %8353 = vmatpush1.bf16.msra.mxu0 0
    %8354 = vmatprep.subr.bf16.mxu0 0
    %8355 = vmatpush1.bf16.msra.mxu0 0
    %8356 = vmatprep.subr.bf16.mxu0 0
    %8357 = vmatpush1.bf16.msra.mxu0 0
    %8358 = vmatprep.subr.bf16.mxu0 0
    %8359 = vmatpush1.bf16.msra.mxu0 0
    %8360 = vmatprep.subr.bf16.mxu0 0
    %8361 = vmatpush1.bf16.msra.mxu0 0
    %8362 = vmatprep.subr.bf16.mxu0 0
    %8363 = vmatpush1.bf16.msra.mxu0 0
    %8364 = vmatprep.subr.bf16.mxu0 0
    %8365 = vmatpush1.bf16.msra.mxu0 0
    %8366 = vmatprep.mubr.bf16.mxu0 0
    %8367 = vmatmul.mubr.bf16.gmra.mrb[0].mxu0 %v8332
    %v8368 = vpop.f32.mrb[0].mxu0
    %v8369 = vadd.f32 0.0, %v8368
    %v8370 = vpop.f32.mrb[0].mxu0
    %v8371 = vadd.f32 0.0, %v8370
    %v8372 = vpop.f32.mrb[0].mxu0
    %v8373 = vadd.f32 0.0, %v8372
    %v8374 = vpop.f32.mrb[0].mxu0
    %v8375 = vadd.f32 0.0, %v8374
    %8376 = vdwg.mxu0
    %v8377 = vpack.c.bf16 %v8265, %v8261
    %v8378 = vpack.c.bf16 %v8267, %v8263
    %v8379 = vpack.c.bf16 %v8319, %v8315
    %v8380 = vpack.c.bf16 %v8321, %v8317
    %v8381 = vpack.c.bf16 %v8373, %v8369
    %v8382 = vpack.c.bf16 %v8375, %v8371
    %v8383 = vld [vmem:[%s20] sm:$0xf]
    %v8384 = vld [vmem:[%s20 + $0x4] sm:$0xf]
    %v8385 = vld [vmem:[%s20 + $0x8] sm:$0xf]
    %v8386 = vld [vmem:[%s20 + $0xc] sm:$0xf]
    %v8387 = vld [vmem:[%s20 + $0x10] sm:$0xf]
    %v8388 = vld [vmem:[%s20 + $0x14] sm:$0xf]
    %v8389 = vld [vmem:[%s20 + $0x18] sm:$0xf]
    %v8390 = vld [vmem:[%s20 + $0x1c] sm:$0xf]
    %v8391 = vld [vmem:[%s20 + $0x20] sm:$0xf]
    %v8392 = vld [vmem:[%s20 + $0x24] sm:$0xf]
    %v8393 = vld [vmem:[%s20 + $0x28] sm:$0xf]
    %v8394 = vld [vmem:[%s20 + $0x2c] sm:$0xf]
    %v8395 = vld [vmem:[%s20 + $0x30] sm:$0xf]
    %v8396 = vld [vmem:[%s20 + $0x34] sm:$0xf]
    %v8397 = vld [vmem:[%s20 + $0x38] sm:$0xf]
    %v8398 = vld [vmem:[%s20 + $0x3c] sm:$0xf]
    %v8399 = vld [vmem:[%s20 + $0x40] sm:$0xf]
    %v8400 = vld [vmem:[%s20 + $0x44] sm:$0xf]
    %v8401 = vld [vmem:[%s20 + $0x48] sm:$0xf]
    %v8402 = vld [vmem:[%s20 + $0x4c] sm:$0xf]
    %v8403 = vld [vmem:[%s20 + $0x50] sm:$0xf]
    %v8404 = vld [vmem:[%s20 + $0x54] sm:$0xf]
    %v8405 = vld [vmem:[%s20 + $0x58] sm:$0xf]
    %v8406 = vld [vmem:[%s20 + $0x5c] sm:$0xf]
    %v8407 = vld [vmem:[%s20 + $0x60] sm:$0xf]
    %v8408 = vld [vmem:[%s20 + $0x64] sm:$0xf]
    %v8409 = vld [vmem:[%s20 + $0x68] sm:$0xf]
    %v8410 = vld [vmem:[%s20 + $0x6c] sm:$0xf]
    %v8411 = vld [vmem:[%s20 + $0x70] sm:$0xf]
    %v8412 = vld [vmem:[%s20 + $0x74] sm:$0xf]
    %v8413 = vld [vmem:[%s20 + $0x78] sm:$0xf]
    %v8414 = vld [vmem:[%s20 + $0x7c] sm:$0xf]
    %v8415 = vld [vmem:[%s20 + $0x80] sm:$0xf]
    %v8416 = vld [vmem:[%s20 + $0x84] sm:$0xf]
    %v8417 = vld [vmem:[%s20 + $0x88] sm:$0xf]
    %v8418 = vld [vmem:[%s20 + $0x8c] sm:$0xf]
    %v8419 = vld [vmem:[%s20 + $0x90] sm:$0xf]
    %v8420 = vld [vmem:[%s20 + $0x94] sm:$0xf]
    %v8421 = vld [vmem:[%s20 + $0x98] sm:$0xf]
    %v8422 = vld [vmem:[%s20 + $0x9c] sm:$0xf]
    %v8423 = vld [vmem:[%s20 + $0xa0] sm:$0xf]
    %v8424 = vld [vmem:[%s20 + $0xa4] sm:$0xf]
    %v8425 = vld [vmem:[%s20 + $0xa8] sm:$0xf]
    %v8426 = vld [vmem:[%s20 + $0xac] sm:$0xf]
    %v8427 = vld [vmem:[%s20 + $0xb0] sm:$0xf]
    %v8428 = vld [vmem:[%s20 + $0xb4] sm:$0xf]
    %v8429 = vld [vmem:[%s20 + $0xb8] sm:$0xf]
    %v8430 = vld [vmem:[%s20 + $0xbc] sm:$0xf]
    %v8431 = vld [vmem:[%s20 + $0xc0] sm:$0xf]
    %v8432 = vld [vmem:[%s20 + $0xc4] sm:$0xf]
    %v8433 = vld [vmem:[%s20 + $0xc8] sm:$0xf]
    %v8434 = vld [vmem:[%s20 + $0xcc] sm:$0xf]
    %v8435 = vld [vmem:[%s20 + $0xd0] sm:$0xf]
    %v8436 = vld [vmem:[%s20 + $0xd4] sm:$0xf]
    %v8437 = vld [vmem:[%s20 + $0xd8] sm:$0xf]
    %v8438 = vld [vmem:[%s20 + $0xdc] sm:$0xf]
    %v8439 = vld [vmem:[%s20 + $0xe0] sm:$0xf]
    %v8440 = vld [vmem:[%s20 + $0xe4] sm:$0xf]
    %v8441 = vld [vmem:[%s20 + $0xe8] sm:$0xf]
    %v8442 = vld [vmem:[%s20 + $0xec] sm:$0xf]
    %v8443 = vld [vmem:[%s20 + $0xf0] sm:$0xf]
    %v8444 = vld [vmem:[%s20 + $0xf4] sm:$0xf]
    %v8445 = vld [vmem:[%s20 + $0xf8] sm:$0xf]
    %v8446 = vld [vmem:[%s20 + $0xfc] sm:$0xf]
    %v8447 = vld [vmem:[%s20 + $0x100] sm:$0xf]
    %v8448 = vld [vmem:[%s20 + $0x104] sm:$0xf]
    %v8449 = vld [vmem:[%s20 + $0x108] sm:$0xf]
    %v8450 = vld [vmem:[%s20 + $0x10c] sm:$0xf]
    %v8451 = vld [vmem:[%s20 + $0x110] sm:$0xf]
    %v8452 = vld [vmem:[%s20 + $0x114] sm:$0xf]
    %v8453 = vld [vmem:[%s20 + $0x118] sm:$0xf]
    %v8454 = vld [vmem:[%s20 + $0x11c] sm:$0xf]
    %v8455 = vld [vmem:[%s20 + $0x120] sm:$0xf]
    %v8456 = vld [vmem:[%s20 + $0x124] sm:$0xf]
    %v8457 = vld [vmem:[%s20 + $0x128] sm:$0xf]
    %v8458 = vld [vmem:[%s20 + $0x12c] sm:$0xf]
    %v8459 = vld [vmem:[%s20 + $0x130] sm:$0xf]
    %v8460 = vld [vmem:[%s20 + $0x134] sm:$0xf]
    %v8461 = vld [vmem:[%s20 + $0x138] sm:$0xf]
    %v8462 = vld [vmem:[%s20 + $0x13c] sm:$0xf]
    %v8463 = vld [vmem:[%s20 + $0x140] sm:$0xf]
    %v8464 = vld [vmem:[%s20 + $0x144] sm:$0xf]
    %v8465 = vld [vmem:[%s20 + $0x148] sm:$0xf]
    %v8466 = vld [vmem:[%s20 + $0x14c] sm:$0xf]
    %v8467 = vld [vmem:[%s20 + $0x150] sm:$0xf]
    %v8468 = vld [vmem:[%s20 + $0x154] sm:$0xf]
    %v8469 = vld [vmem:[%s20 + $0x158] sm:$0xf]
    %v8470 = vld [vmem:[%s20 + $0x15c] sm:$0xf]
    %v8471 = vld [vmem:[%s20 + $0x160] sm:$0xf]
    %v8472 = vld [vmem:[%s20 + $0x164] sm:$0xf]
    %v8473 = vld [vmem:[%s20 + $0x168] sm:$0xf]
    %v8474 = vld [vmem:[%s20 + $0x16c] sm:$0xf]
    %v8475 = vld [vmem:[%s20 + $0x170] sm:$0xf]
    %v8476 = vld [vmem:[%s20 + $0x174] sm:$0xf]
    %v8477 = vld [vmem:[%s20 + $0x178] sm:$0xf]
    %v8478 = vld [vmem:[%s20 + $0x17c] sm:$0xf]
    %v8479 = vld [vmem:[%s19] sm:$0xf]
    %v8480 = vld [vmem:[%s19 + $0x4] sm:$0xf]
    %v8483 = vunpack.c.l.b16 %v8479
    %v8484 = vunpack.c.l.b16 %v8480
    %v8485 = vpack.c.b16 %v8484, %v8483
    %v8487 = vsel %vm504, %v8485, 0
    %8489 = vmatprep.subr.bf16.mxu0 %v792
    %8490 = vmatpush1.bf16.msra.mxu0 %v791
    %8491 = vmatprep.subr.bf16.mxu0 0
    %8492 = vmatpush1.bf16.msra.mxu0 0
    %8493 = vmatprep.subr.bf16.mxu0 0
    %8494 = vmatpush1.bf16.msra.mxu0 0
    %8495 = vmatprep.subr.bf16.mxu0 0
    %8496 = vmatpush1.bf16.msra.mxu0 0
    %8497 = vmatprep.subr.bf16.mxu0 0
    %8498 = vmatpush1.bf16.msra.mxu0 0
    %8499 = vmatprep.subr.bf16.mxu0 0
    %8500 = vmatpush1.bf16.msra.mxu0 0
    %8501 = vmatprep.subr.bf16.mxu0 0
    %8502 = vmatpush1.bf16.msra.mxu0 0
    %8503 = vmatprep.subr.bf16.mxu0 0
    %8504 = vmatpush1.bf16.msra.mxu0 0
    %8505 = vmatprep.subr.bf16.mxu0 0
    %8506 = vmatpush1.bf16.msra.mxu0 0
    %8507 = vmatprep.subr.bf16.mxu0 0
    %8508 = vmatpush1.bf16.msra.mxu0 0
    %8509 = vmatprep.subr.bf16.mxu0 0
    %8510 = vmatpush1.bf16.msra.mxu0 0
    %8511 = vmatprep.subr.bf16.mxu0 0
    %8512 = vmatpush1.bf16.msra.mxu0 0
    %8513 = vmatprep.subr.bf16.mxu0 0
    %8514 = vmatpush1.bf16.msra.mxu0 0
    %8515 = vmatprep.subr.bf16.mxu0 0
    %8516 = vmatpush1.bf16.msra.mxu0 0
    %8517 = vmatprep.subr.bf16.mxu0 0
    %8518 = vmatpush1.bf16.msra.mxu0 0
    %8519 = vmatprep.subr.bf16.mxu0 0
    %8520 = vmatpush1.bf16.msra.mxu0 0
    %8521 = vmatprep.mubr.bf16.mxu0 0
    %8522 = vmatmul.mubr.bf16.gmra.mrb[0].mxu0 %v8487
    %v8523 = vpop.f32.mrb[0].mxu0
    %v8524 = vadd.f32 0.0, %v8523
    %v8525 = vpop.f32.mrb[0].mxu0
    %v8526 = vadd.f32 0.0, %v8525
    %v8527 = vpop.f32.mrb[0].mxu0
    %v8528 = vadd.f32 0.0, %v8527
    %v8529 = vpop.f32.mrb[0].mxu0
    %v8530 = vadd.f32 0.0, %v8529
    %8531 = vdwg.mxu0
    %s8532 = scalar_lea.vmem %s19, 8
    %v8533 = vld [vmem:[%s8532] sm:$0xf]
    %v8534 = vld [vmem:[%s8532 + $0x4] sm:$0xf]
    %v8537 = vunpack.c.l.b16 %v8533
    %v8538 = vunpack.c.l.b16 %v8534
    %v8539 = vpack.c.b16 %v8538, %v8537
    %v8541 = vsel %vm504, %v8539, 0
    %8543 = vmatprep.subr.bf16.mxu0 %v792
    %8544 = vmatpush1.bf16.msra.mxu0 %v791
    %8545 = vmatprep.subr.bf16.mxu0 0
    %8546 = vmatpush1.bf16.msra.mxu0 0
    %8547 = vmatprep.subr.bf16.mxu0 0
    %8548 = vmatpush1.bf16.msra.mxu0 0
    %8549 = vmatprep.subr.bf16.mxu0 0
    %8550 = vmatpush1.bf16.msra.mxu0 0
    %8551 = vmatprep.subr.bf16.mxu0 0
    %8552 = vmatpush1.bf16.msra.mxu0 0
    %8553 = vmatprep.subr.bf16.mxu0 0
    %8554 = vmatpush1.bf16.msra.mxu0 0
    %8555 = vmatprep.subr.bf16.mxu0 0
    %8556 = vmatpush1.bf16.msra.mxu0 0
    %8557 = vmatprep.subr.bf16.mxu0 0
    %8558 = vmatpush1.bf16.msra.mxu0 0
    %8559 = vmatprep.subr.bf16.mxu0 0
    %8560 = vmatpush1.bf16.msra.mxu0 0
    %8561 = vmatprep.subr.bf16.mxu0 0
    %8562 = vmatpush1.bf16.msra.mxu0 0
    %8563 = vmatprep.subr.bf16.mxu0 0
    %8564 = vmatpush1.bf16.msra.mxu0 0
    %8565 = vmatprep.subr.bf16.mxu0 0
    %8566 = vmatpush1.bf16.msra.mxu0 0
    %8567 = vmatprep.subr.bf16.mxu0 0
    %8568 = vmatpush1.bf16.msra.mxu0 0
    %8569 = vmatprep.subr.bf16.mxu0 0
    %8570 = vmatpush1.bf16.msra.mxu0 0
    %8571 = vmatprep.subr.bf16.mxu0 0
    %8572 = vmatpush1.bf16.msra.mxu0 0
    %8573 = vmatprep.subr.bf16.mxu0 0
    %8574 = vmatpush1.bf16.msra.mxu0 0
    %8575 = vmatprep.mubr.bf16.mxu0 0
    %8576 = vmatmul.mubr.bf16.gmra.mrb[0].mxu0 %v8541
    %v8577 = vpop.f32.mrb[0].mxu0
    %v8578 = vadd.f32 0.0, %v8577
    %v8579 = vpop.f32.mrb[0].mxu0
    %v8580 = vadd.f32 0.0, %v8579
    %v8581 = vpop.f32.mrb[0].mxu0
    %v8582 = vadd.f32 0.0, %v8581
    %v8583 = vpop.f32.mrb[0].mxu0
    %v8584 = vadd.f32 0.0, %v8583
    %8585 = vdwg.mxu0
    %s8586 = scalar_lea.vmem %s19, 16
    %v8587 = vld [vmem:[%s8586] sm:$0xf]
    %v8588 = vld [vmem:[%s8586 + $0x4] sm:$0xf]
    %v8591 = vunpack.c.l.b16 %v8587
    %v8592 = vunpack.c.l.b16 %v8588
    %v8593 = vpack.c.b16 %v8592, %v8591
    %v8595 = vsel %vm504, %v8593, 0
    %8597 = vmatprep.subr.bf16.mxu0 %v792
    %8598 = vmatpush1.bf16.msra.mxu0 %v791
    %8599 = vmatprep.subr.bf16.mxu0 0
    %8600 = vmatpush1.bf16.msra.mxu0 0
    %8601 = vmatprep.subr.bf16.mxu0 0
    %8602 = vmatpush1.bf16.msra.mxu0 0
    %8603 = vmatprep.subr.bf16.mxu0 0
    %8604 = vmatpush1.bf16.msra.mxu0 0
    %8605 = vmatprep.subr.bf16.mxu0 0
    %8606 = vmatpush1.bf16.msra.mxu0 0
    %8607 = vmatprep.subr.bf16.mxu0 0
    %8608 = vmatpush1.bf16.msra.mxu0 0
    %8609 = vmatprep.subr.bf16.mxu0 0
    %8610 = vmatpush1.bf16.msra.mxu0 0
    %8611 = vmatprep.subr.bf16.mxu0 0
    %8612 = vmatpush1.bf16.msra.mxu0 0
    %8613 = vmatprep.subr.bf16.mxu0 0
    %8614 = vmatpush1.bf16.msra.mxu0 0
    %8615 = vmatprep.subr.bf16.mxu0 0
    %8616 = vmatpush1.bf16.msra.mxu0 0
    %8617 = vmatprep.subr.bf16.mxu0 0
    %8618 = vmatpush1.bf16.msra.mxu0 0
    %8619 = vmatprep.subr.bf16.mxu0 0
    %8620 = vmatpush1.bf16.msra.mxu0 0
    %8621 = vmatprep.subr.bf16.mxu0 0
    %8622 = vmatpush1.bf16.msra.mxu0 0
    %8623 = vmatprep.subr.bf16.mxu0 0
    %8624 = vmatpush1.bf16.msra.mxu0 0
    %8625 = vmatprep.subr.bf16.mxu0 0
    %8626 = vmatpush1.bf16.msra.mxu0 0
    %8627 = vmatprep.subr.bf16.mxu0 0
    %8628 = vmatpush1.bf16.msra.mxu0 0
    %8629 = vmatprep.mubr.bf16.mxu0 0
    %8630 = vmatmul.mubr.bf16.gmra.mrb[0].mxu0 %v8595
    %v8631 = vpop.f32.mrb[0].mxu0
    %v8632 = vadd.f32 0.0, %v8631
    %v8633 = vpop.f32.mrb[0].mxu0
    %v8634 = vadd.f32 0.0, %v8633
    %v8635 = vpop.f32.mrb[0].mxu0
    %v8636 = vadd.f32 0.0, %v8635
    %v8637 = vpop.f32.mrb[0].mxu0
    %v8638 = vadd.f32 0.0, %v8637
    %8639 = vdwg.mxu0
    %v8640 = vpack.c.bf16 %v8528, %v8524
    %v8641 = vpack.c.bf16 %v8530, %v8526
    %v8642 = vpack.c.bf16 %v8582, %v8578
    %v8643 = vpack.c.bf16 %v8584, %v8580
    %v8644 = vpack.c.bf16 %v8636, %v8632
    %v8645 = vpack.c.bf16 %v8638, %v8634
    %v8646 = vld [vmem:[%s21] sm:$0xf]
    %v8647 = vld [vmem:[%s21 + $0x4] sm:$0xf]
    %v8648 = vld [vmem:[%s21 + $0x8] sm:$0xf]
    %v8649 = vld [vmem:[%s21 + $0xc] sm:$0xf]
    %v8650 = vld [vmem:[%s21 + $0x10] sm:$0xf]
    %v8651 = vld [vmem:[%s21 + $0x14] sm:$0xf]
    %v8652 = vld [vmem:[%s21 + $0x18] sm:$0xf]
    %v8653 = vld [vmem:[%s21 + $0x1c] sm:$0xf]
    %v8654 = vld [vmem:[%s21 + $0x20] sm:$0xf]
    %v8655 = vld [vmem:[%s21 + $0x24] sm:$0xf]
    %v8656 = vld [vmem:[%s21 + $0x28] sm:$0xf]
    %v8657 = vld [vmem:[%s21 + $0x2c] sm:$0xf]
    %v8658 = vld [vmem:[%s21 + $0x30] sm:$0xf]
    %v8659 = vld [vmem:[%s21 + $0x34] sm:$0xf]
    %v8660 = vld [vmem:[%s21 + $0x38] sm:$0xf]
    %v8661 = vld [vmem:[%s21 + $0x3c] sm:$0xf]
    %v8662 = vld [vmem:[%s21 + $0x40] sm:$0xf]
    %v8663 = vld [vmem:[%s21 + $0x44] sm:$0xf]
    %v8664 = vld [vmem:[%s21 + $0x48] sm:$0xf]
    %v8665 = vld [vmem:[%s21 + $0x4c] sm:$0xf]
    %v8666 = vld [vmem:[%s21 + $0x50] sm:$0xf]
    %v8667 = vld [vmem:[%s21 + $0x54] sm:$0xf]
    %v8668 = vld [vmem:[%s21 + $0x58] sm:$0xf]
    %v8669 = vld [vmem:[%s21 + $0x5c] sm:$0xf]
    %v8670 = vld [vmem:[%s21 + $0x60] sm:$0xf]
    %v8671 = vld [vmem:[%s21 + $0x64] sm:$0xf]
    %v8672 = vld [vmem:[%s21 + $0x68] sm:$0xf]
    %v8673 = vld [vmem:[%s21 + $0x6c] sm:$0xf]
    %v8674 = vld [vmem:[%s21 + $0x70] sm:$0xf]
    %v8675 = vld [vmem:[%s21 + $0x74] sm:$0xf]
    %v8676 = vld [vmem:[%s21 + $0x78] sm:$0xf]
    %v8677 = vld [vmem:[%s21 + $0x7c] sm:$0xf]
    %v8678 = vld [vmem:[%s21 + $0x80] sm:$0xf]
    %v8679 = vld [vmem:[%s21 + $0x84] sm:$0xf]
    %v8680 = vld [vmem:[%s21 + $0x88] sm:$0xf]
    %v8681 = vld [vmem:[%s21 + $0x8c] sm:$0xf]
    %v8682 = vld [vmem:[%s21 + $0x90] sm:$0xf]
    %v8683 = vld [vmem:[%s21 + $0x94] sm:$0xf]
    %v8684 = vld [vmem:[%s21 + $0x98] sm:$0xf]
    %v8685 = vld [vmem:[%s21 + $0x9c] sm:$0xf]
    %v8686 = vld [vmem:[%s21 + $0xa0] sm:$0xf]
    %v8687 = vld [vmem:[%s21 + $0xa4] sm:$0xf]
    %v8688 = vld [vmem:[%s21 + $0xa8] sm:$0xf]
    %v8689 = vld [vmem:[%s21 + $0xac] sm:$0xf]
    %v8690 = vld [vmem:[%s21 + $0xb0] sm:$0xf]
    %v8691 = vld [vmem:[%s21 + $0xb4] sm:$0xf]
    %v8692 = vld [vmem:[%s21 + $0xb8] sm:$0xf]
    %v8693 = vld [vmem:[%s21 + $0xbc] sm:$0xf]
    %v8694 = vld [vmem:[%s21 + $0xc0] sm:$0xf]
    %v8695 = vld [vmem:[%s21 + $0xc4] sm:$0xf]
    %v8696 = vld [vmem:[%s21 + $0xc8] sm:$0xf]
    %v8697 = vld [vmem:[%s21 + $0xcc] sm:$0xf]
    %v8698 = vld [vmem:[%s21 + $0xd0] sm:$0xf]
    %v8699 = vld [vmem:[%s21 + $0xd4] sm:$0xf]
    %v8700 = vld [vmem:[%s21 + $0xd8] sm:$0xf]
    %v8701 = vld [vmem:[%s21 + $0xdc] sm:$0xf]
    %v8702 = vld [vmem:[%s21 + $0xe0] sm:$0xf]
    %v8703 = vld [vmem:[%s21 + $0xe4] sm:$0xf]
    %v8704 = vld [vmem:[%s21 + $0xe8] sm:$0xf]
    %v8705 = vld [vmem:[%s21 + $0xec] sm:$0xf]
    %v8706 = vld [vmem:[%s21 + $0xf0] sm:$0xf]
    %v8707 = vld [vmem:[%s21 + $0xf4] sm:$0xf]
    %v8708 = vld [vmem:[%s21 + $0xf8] sm:$0xf]
    %v8709 = vld [vmem:[%s21 + $0xfc] sm:$0xf]
    %v8710 = vld [vmem:[%s21 + $0x100] sm:$0xf]
    %v8711 = vld [vmem:[%s21 + $0x104] sm:$0xf]
    %v8712 = vld [vmem:[%s21 + $0x108] sm:$0xf]
    %v8713 = vld [vmem:[%s21 + $0x10c] sm:$0xf]
    %v8714 = vld [vmem:[%s21 + $0x110] sm:$0xf]
    %v8715 = vld [vmem:[%s21 + $0x114] sm:$0xf]
    %v8716 = vld [vmem:[%s21 + $0x118] sm:$0xf]
    %v8717 = vld [vmem:[%s21 + $0x11c] sm:$0xf]
    %v8718 = vld [vmem:[%s21 + $0x120] sm:$0xf]
    %v8719 = vld [vmem:[%s21 + $0x124] sm:$0xf]
    %v8720 = vld [vmem:[%s21 + $0x128] sm:$0xf]
    %v8721 = vld [vmem:[%s21 + $0x12c] sm:$0xf]
    %v8722 = vld [vmem:[%s21 + $0x130] sm:$0xf]
    %v8723 = vld [vmem:[%s21 + $0x134] sm:$0xf]
    %v8724 = vld [vmem:[%s21 + $0x138] sm:$0xf]
    %v8725 = vld [vmem:[%s21 + $0x13c] sm:$0xf]
    %v8726 = vld [vmem:[%s21 + $0x140] sm:$0xf]
    %v8727 = vld [vmem:[%s21 + $0x144] sm:$0xf]
    %v8728 = vld [vmem:[%s21 + $0x148] sm:$0xf]
    %v8729 = vld [vmem:[%s21 + $0x14c] sm:$0xf]
    %v8730 = vld [vmem:[%s21 + $0x150] sm:$0xf]
    %v8731 = vld [vmem:[%s21 + $0x154] sm:$0xf]
    %v8732 = vld [vmem:[%s21 + $0x158] sm:$0xf]
    %v8733 = vld [vmem:[%s21 + $0x15c] sm:$0xf]
    %v8734 = vld [vmem:[%s21 + $0x160] sm:$0xf]
    %v8735 = vld [vmem:[%s21 + $0x164] sm:$0xf]
    %v8736 = vld [vmem:[%s21 + $0x168] sm:$0xf]
    %v8737 = vld [vmem:[%s21 + $0x16c] sm:$0xf]
    %v8738 = vld [vmem:[%s21 + $0x170] sm:$0xf]
    %v8739 = vld [vmem:[%s21 + $0x174] sm:$0xf]
    %v8740 = vld [vmem:[%s21 + $0x178] sm:$0xf]
    %v8741 = vld [vmem:[%s21 + $0x17c] sm:$0xf]
    %v8838 = vunpack.c.l.b16 %v8646
    %v8839 = vunpack.c.l.b16 %v8647
    %v8840 = vunpack.c.l.b16 %v8648
    %v8841 = vunpack.c.l.b16 %v8649
    %v8842 = vunpack.c.l.b16 %v8650
    %v8843 = vunpack.c.l.b16 %v8651
    %v8844 = vunpack.c.l.b16 %v8652
    %v8845 = vunpack.c.l.b16 %v8653
    %v8846 = vunpack.c.l.b16 %v8654
    %v8847 = vunpack.c.l.b16 %v8655
    %v8848 = vunpack.c.l.b16 %v8656
    %v8849 = vunpack.c.l.b16 %v8657
    %v8850 = vunpack.c.l.b16 %v8658
    %v8851 = vunpack.c.l.b16 %v8659
    %v8852 = vunpack.c.l.b16 %v8660
    %v8853 = vunpack.c.l.b16 %v8661
    %v8854 = vunpack.c.l.b16 %v8662
    %v8855 = vunpack.c.l.b16 %v8663
    %v8856 = vunpack.c.l.b16 %v8664
    %v8857 = vunpack.c.l.b16 %v8665
    %v8858 = vunpack.c.l.b16 %v8666
    %v8859 = vunpack.c.l.b16 %v8667
    %v8860 = vunpack.c.l.b16 %v8668
    %v8861 = vunpack.c.l.b16 %v8669
    %v8862 = vunpack.c.l.b16 %v8670
    %v8863 = vunpack.c.l.b16 %v8671
    %v8864 = vunpack.c.l.b16 %v8672
    %v8865 = vunpack.c.l.b16 %v8673
    %v8866 = vunpack.c.l.b16 %v8674
    %v8867 = vunpack.c.l.b16 %v8675
    %v8868 = vunpack.c.l.b16 %v8676
    %v8869 = vunpack.c.l.b16 %v8677
    %v8870 = vunpack.c.l.b16 %v8678
    %v8871 = vunpack.c.l.b16 %v8679
    %v8872 = vunpack.c.l.b16 %v8680
    %v8873 = vunpack.c.l.b16 %v8681
    %v8874 = vunpack.c.l.b16 %v8682
    %v8875 = vunpack.c.l.b16 %v8683
    %v8876 = vunpack.c.l.b16 %v8684
    %v8877 = vunpack.c.l.b16 %v8685
    %v8878 = vunpack.c.l.b16 %v8686
    %v8879 = vunpack.c.l.b16 %v8687
    %v8880 = vunpack.c.l.b16 %v8688
    %v8881 = vunpack.c.l.b16 %v8689
    %v8882 = vunpack.c.l.b16 %v8690
    %v8883 = vunpack.c.l.b16 %v8691
    %v8884 = vunpack.c.l.b16 %v8692
    %v8885 = vunpack.c.l.b16 %v8693
    %v8886 = vunpack.c.l.b16 %v8694
    %v8887 = vunpack.c.l.b16 %v8695
    %v8888 = vunpack.c.l.b16 %v8696
    %v8889 = vunpack.c.l.b16 %v8697
    %v8890 = vunpack.c.l.b16 %v8698
    %v8891 = vunpack.c.l.b16 %v8699
    %v8892 = vunpack.c.l.b16 %v8700
    %v8893 = vunpack.c.l.b16 %v8701
    %v8894 = vunpack.c.l.b16 %v8702
    %v8895 = vunpack.c.l.b16 %v8703
    %v8896 = vunpack.c.l.b16 %v8704
    %v8897 = vunpack.c.l.b16 %v8705
    %v8898 = vunpack.c.l.b16 %v8706
    %v8899 = vunpack.c.l.b16 %v8707
    %v8900 = vunpack.c.l.b16 %v8708
    %v8901 = vunpack.c.l.b16 %v8709
    %v8902 = vunpack.c.l.b16 %v8710
    %v8903 = vunpack.c.l.b16 %v8711
    %v8904 = vunpack.c.l.b16 %v8712
    %v8905 = vunpack.c.l.b16 %v8713
    %v8906 = vunpack.c.l.b16 %v8714
    %v8907 = vunpack.c.l.b16 %v8715
    %v8908 = vunpack.c.l.b16 %v8716
    %v8909 = vunpack.c.l.b16 %v8717
    %v8910 = vunpack.c.l.b16 %v8718
    %v8911 = vunpack.c.l.b16 %v8719
    %v8912 = vunpack.c.l.b16 %v8720
    %v8913 = vunpack.c.l.b16 %v8721
    %v8914 = vunpack.c.l.b16 %v8722
    %v8915 = vunpack.c.l.b16 %v8723
    %v8916 = vunpack.c.l.b16 %v8724
    %v8917 = vunpack.c.l.b16 %v8725
    %v8918 = vunpack.c.l.b16 %v8726
    %v8919 = vunpack.c.l.b16 %v8727
    %v8920 = vunpack.c.l.b16 %v8728
    %v8921 = vunpack.c.l.b16 %v8729
    %v8922 = vunpack.c.l.b16 %v8730
    %v8923 = vunpack.c.l.b16 %v8731
    %v8924 = vunpack.c.l.b16 %v8732
    %v8925 = vunpack.c.l.b16 %v8733
    %v8926 = vunpack.c.l.b16 %v8734
    %v8927 = vunpack.c.l.b16 %v8735
    %v8928 = vunpack.c.l.b16 %v8736
    %v8929 = vunpack.c.l.b16 %v8737
    %v8930 = vunpack.c.l.b16 %v8738
    %v8931 = vunpack.c.l.b16 %v8739
    %v8932 = vunpack.c.l.b16 %v8740
    %v8933 = vunpack.c.l.b16 %v8741
    %v8934 = vpack.c.b16 %v8839, %v8838
    %v8935 = vpack.c.b16 %v8841, %v8840
    %v8936 = vpack.c.b16 %v8843, %v8842
    %v8937 = vpack.c.b16 %v8845, %v8844
    %v8938 = vpack.c.b16 %v8847, %v8846
    %v8939 = vpack.c.b16 %v8849, %v8848
    %v8940 = vpack.c.b16 %v8851, %v8850
    %v8941 = vpack.c.b16 %v8853, %v8852
    %v8942 = vpack.c.b16 %v8855, %v8854
    %v8943 = vpack.c.b16 %v8857, %v8856
    %v8944 = vpack.c.b16 %v8859, %v8858
    %v8945 = vpack.c.b16 %v8861, %v8860
    %v8946 = vpack.c.b16 %v8863, %v8862
    %v8947 = vpack.c.b16 %v8865, %v8864
    %v8948 = vpack.c.b16 %v8867, %v8866
    %v8949 = vpack.c.b16 %v8869, %v8868
    %v8950 = vpack.c.b16 %v8871, %v8870
    %v8951 = vpack.c.b16 %v8873, %v8872
    %v8952 = vpack.c.b16 %v8875, %v8874
    %v8953 = vpack.c.b16 %v8877, %v8876
    %v8954 = vpack.c.b16 %v8879, %v8878
    %v8955 = vpack.c.b16 %v8881, %v8880
    %v8956 = vpack.c.b16 %v8883, %v8882
    %v8957 = vpack.c.b16 %v8885, %v8884
    %v8958 = vpack.c.b16 %v8887, %v8886
    %v8959 = vpack.c.b16 %v8889, %v8888
    %v8960 = vpack.c.b16 %v8891, %v8890
    %v8961 = vpack.c.b16 %v8893, %v8892
    %v8962 = vpack.c.b16 %v8895, %v8894
    %v8963 = vpack.c.b16 %v8897, %v8896
    %v8964 = vpack.c.b16 %v8899, %v8898
    %v8965 = vpack.c.b16 %v8901, %v8900
    %v8966 = vpack.c.b16 %v8903, %v8902
    %v8967 = vpack.c.b16 %v8905, %v8904
    %v8968 = vpack.c.b16 %v8907, %v8906
    %v8969 = vpack.c.b16 %v8909, %v8908
    %v8970 = vpack.c.b16 %v8911, %v8910
    %v8971 = vpack.c.b16 %v8913, %v8912
    %v8972 = vpack.c.b16 %v8915, %v8914
    %v8973 = vpack.c.b16 %v8917, %v8916
    %v8974 = vpack.c.b16 %v8919, %v8918
    %v8975 = vpack.c.b16 %v8921, %v8920
    %v8976 = vpack.c.b16 %v8923, %v8922
    %v8977 = vpack.c.b16 %v8925, %v8924
    %v8978 = vpack.c.b16 %v8927, %v8926
    %v8979 = vpack.c.b16 %v8929, %v8928
    %v8980 = vpack.c.b16 %v8931, %v8930
    %v8981 = vpack.c.b16 %v8933, %v8932
    %9030 = vmatprep.subr.bf16.mxu0 0
    %9031 = vmatpush1.bf16.msra.mxu0 %v8934
    %9032 = vmatprep.subr.bf16.mxu0 0
    %9033 = vmatpush1.bf16.msra.mxu0 %v8935
    %9034 = vmatprep.subr.bf16.mxu0 0
    %9035 = vmatpush1.bf16.msra.mxu0 %v8936
    %9036 = vmatprep.subr.bf16.mxu0 0
    %9037 = vmatpush1.bf16.msra.mxu0 %v8937
    %9038 = vmatprep.subr.bf16.mxu0 0
    %9039 = vmatpush1.bf16.msra.mxu0 %v8938
    %9040 = vmatprep.subr.bf16.mxu0 0
    %9041 = vmatpush1.bf16.msra.mxu0 %v8939
    %9042 = vmatprep.subr.bf16.mxu0 0
    %9043 = vmatpush1.bf16.msra.mxu0 %v8940
    %9044 = vmatprep.subr.bf16.mxu0 0
    %9045 = vmatpush1.bf16.msra.mxu0 %v8941
    %9046 = vmatprep.subr.bf16.mxu0 0
    %9047 = vmatpush1.bf16.msra.mxu0 %v8942
    %9048 = vmatprep.subr.bf16.mxu0 0
    %9049 = vmatpush1.bf16.msra.mxu0 %v8943
    %9050 = vmatprep.subr.bf16.mxu0 0
    %9051 = vmatpush1.bf16.msra.mxu0 %v8944
    %9052 = vmatprep.subr.bf16.mxu0 0
    %9053 = vmatpush1.bf16.msra.mxu0 %v8945
    %9054 = vmatprep.subr.bf16.mxu0 0
    %9055 = vmatpush1.bf16.msra.mxu0 %v8946
    %9056 = vmatprep.subr.bf16.mxu0 0
    %9057 = vmatpush1.bf16.msra.mxu0 %v8947
    %9058 = vmatprep.subr.bf16.mxu0 0
    %9059 = vmatpush1.bf16.msra.mxu0 %v8948
    %9060 = vmatprep.subr.bf16.mxu0 0
    %9061 = vmatpush1.bf16.msra.mxu0 %v8949
    %9062 = vmatprep.mubr.bf16.mxu0 %v8641
    %9063 = vmatmul.mubr.bf16.gmra.mrb[0].mxu0 %v8640
    %v9064 = vpop.f32.mrb[0].mxu0
    %v9065 = vadd.f32 0.0, %v9064
    %v9066 = vpop.f32.mrb[0].mxu0
    %v9067 = vpop.f32.mrb[0].mxu0
    %v9068 = vadd.f32 0.0, %v9067
    %v9069 = vpop.f32.mrb[0].mxu0
    %9070 = vdwg.mxu0
    %9071 = vmatprep.subr.bf16.mxu0 0
    %9072 = vmatpush1.bf16.msra.mxu0 %v8950
    %9073 = vmatprep.subr.bf16.mxu0 0
    %9074 = vmatpush1.bf16.msra.mxu0 %v8951
    %9075 = vmatprep.subr.bf16.mxu0 0
    %9076 = vmatpush1.bf16.msra.mxu0 %v8952
    %9077 = vmatprep.subr.bf16.mxu0 0
    %9078 = vmatpush1.bf16.msra.mxu0 %v8953
    %9079 = vmatprep.subr.bf16.mxu0 0
    %9080 = vmatpush1.bf16.msra.mxu0 %v8954
    %9081 = vmatprep.subr.bf16.mxu0 0
    %9082 = vmatpush1.bf16.msra.mxu0 %v8955
    %9083 = vmatprep.subr.bf16.mxu0 0
    %9084 = vmatpush1.bf16.msra.mxu0 %v8956
    %9085 = vmatprep.subr.bf16.mxu0 0
    %9086 = vmatpush1.bf16.msra.mxu0 %v8957
    %9087 = vmatprep.subr.bf16.mxu0 0
    %9088 = vmatpush1.bf16.msra.mxu0 %v8958
    %9089 = vmatprep.subr.bf16.mxu0 0
    %9090 = vmatpush1.bf16.msra.mxu0 %v8959
    %9091 = vmatprep.subr.bf16.mxu0 0
    %9092 = vmatpush1.bf16.msra.mxu0 %v8960
    %9093 = vmatprep.subr.bf16.mxu0 0
    %9094 = vmatpush1.bf16.msra.mxu0 %v8961
    %9095 = vmatprep.subr.bf16.mxu0 0
    %9096 = vmatpush1.bf16.msra.mxu0 %v8962
    %9097 = vmatprep.subr.bf16.mxu0 0
    %9098 = vmatpush1.bf16.msra.mxu0 %v8963
    %9099 = vmatprep.subr.bf16.mxu0 0
    %9100 = vmatpush1.bf16.msra.mxu0 %v8964
    %9101 = vmatprep.subr.bf16.mxu0 0
    %9102 = vmatpush1.bf16.msra.mxu0 %v8965
    %9103 = vmatprep.mubr.bf16.mxu0 %v8643
    %9104 = vmatmul.mubr.bf16.gmra.mrb[0].mxu0 %v8642
    %v9105 = vpop.f32.mrb[0].mxu0
    %v9106 = vadd.f32 %v9065, %v9105
    %v9107 = vpop.f32.mrb[0].mxu0
    %v9108 = vpop.f32.mrb[0].mxu0
    %v9109 = vadd.f32 %v9068, %v9108
    %v9110 = vpop.f32.mrb[0].mxu0
    %9111 = vdwg.mxu0
    %9112 = vmatprep.subr.bf16.mxu0 0
    %9113 = vmatpush1.bf16.msra.mxu0 %v8966
    %9114 = vmatprep.subr.bf16.mxu0 0
    %9115 = vmatpush1.bf16.msra.mxu0 %v8967
    %9116 = vmatprep.subr.bf16.mxu0 0
    %9117 = vmatpush1.bf16.msra.mxu0 %v8968
    %9118 = vmatprep.subr.bf16.mxu0 0
    %9119 = vmatpush1.bf16.msra.mxu0 %v8969
    %9120 = vmatprep.subr.bf16.mxu0 0
    %9121 = vmatpush1.bf16.msra.mxu0 %v8970
    %9122 = vmatprep.subr.bf16.mxu0 0
    %9123 = vmatpush1.bf16.msra.mxu0 %v8971
    %9124 = vmatprep.subr.bf16.mxu0 0
    %9125 = vmatpush1.bf16.msra.mxu0 %v8972
    %9126 = vmatprep.subr.bf16.mxu0 0
    %9127 = vmatpush1.bf16.msra.mxu0 %v8973
    %9128 = vmatprep.subr.bf16.mxu0 0
    %9129 = vmatpush1.bf16.msra.mxu0 %v8974
    %9130 = vmatprep.subr.bf16.mxu0 0
    %9131 = vmatpush1.bf16.msra.mxu0 %v8975
    %9132 = vmatprep.subr.bf16.mxu0 0
    %9133 = vmatpush1.bf16.msra.mxu0 %v8976
    %9134 = vmatprep.subr.bf16.mxu0 0
    %9135 = vmatpush1.bf16.msra.mxu0 %v8977
    %9136 = vmatprep.subr.bf16.mxu0 0
    %9137 = vmatpush1.bf16.msra.mxu0 %v8978
    %9138 = vmatprep.subr.bf16.mxu0 0
    %9139 = vmatpush1.bf16.msra.mxu0 %v8979
    %9140 = vmatprep.subr.bf16.mxu0 0
    %9141 = vmatpush1.bf16.msra.mxu0 %v8980
    %9142 = vmatprep.subr.bf16.mxu0 0
    %9143 = vmatpush1.bf16.msra.mxu0 %v8981
    %9144 = vmatprep.mubr.bf16.mxu0 %v8645
    %9145 = vmatmul.mubr.bf16.gmra.mrb[0].mxu0 %v8644
    %v9146 = vpop.f32.mrb[0].mxu0
    %v9147 = vadd.f32 %v9106, %v9146
    %v9148 = vpop.f32.mrb[0].mxu0
    %v9149 = vpop.f32.mrb[0].mxu0
    %v9150 = vadd.f32 %v9109, %v9149
    %v9151 = vpop.f32.mrb[0].mxu0
    %9152 = vdwg.mxu0
    %v9249 = vunpack.c.l.b16 %v8383
    %v9250 = vunpack.c.l.b16 %v8384
    %v9251 = vunpack.c.l.b16 %v8385
    %v9252 = vunpack.c.l.b16 %v8386
    %v9253 = vunpack.c.l.b16 %v8387
    %v9254 = vunpack.c.l.b16 %v8388
    %v9255 = vunpack.c.l.b16 %v8389
    %v9256 = vunpack.c.l.b16 %v8390
    %v9257 = vunpack.c.l.b16 %v8391
    %v9258 = vunpack.c.l.b16 %v8392
    %v9259 = vunpack.c.l.b16 %v8393
    %v9260 = vunpack.c.l.b16 %v8394
    %v9261 = vunpack.c.l.b16 %v8395
    %v9262 = vunpack.c.l.b16 %v8396
    %v9263 = vunpack.c.l.b16 %v8397
    %v9264 = vunpack.c.l.b16 %v8398
    %v9265 = vunpack.c.l.b16 %v8399
    %v9266 = vunpack.c.l.b16 %v8400
    %v9267 = vunpack.c.l.b16 %v8401
    %v9268 = vunpack.c.l.b16 %v8402
    %v9269 = vunpack.c.l.b16 %v8403
    %v9270 = vunpack.c.l.b16 %v8404
    %v9271 = vunpack.c.l.b16 %v8405
    %v9272 = vunpack.c.l.b16 %v8406
    %v9273 = vunpack.c.l.b16 %v8407
    %v9274 = vunpack.c.l.b16 %v8408
    %v9275 = vunpack.c.l.b16 %v8409
    %v9276 = vunpack.c.l.b16 %v8410
    %v9277 = vunpack.c.l.b16 %v8411
    %v9278 = vunpack.c.l.b16 %v8412
    %v9279 = vunpack.c.l.b16 %v8413
    %v9280 = vunpack.c.l.b16 %v8414
    %v9281 = vunpack.c.l.b16 %v8415
    %v9282 = vunpack.c.l.b16 %v8416
    %v9283 = vunpack.c.l.b16 %v8417
    %v9284 = vunpack.c.l.b16 %v8418
    %v9285 = vunpack.c.l.b16 %v8419
    %v9286 = vunpack.c.l.b16 %v8420
    %v9287 = vunpack.c.l.b16 %v8421
    %v9288 = vunpack.c.l.b16 %v8422
    %v9289 = vunpack.c.l.b16 %v8423
    %v9290 = vunpack.c.l.b16 %v8424
    %v9291 = vunpack.c.l.b16 %v8425
    %v9292 = vunpack.c.l.b16 %v8426
    %v9293 = vunpack.c.l.b16 %v8427
    %v9294 = vunpack.c.l.b16 %v8428
    %v9295 = vunpack.c.l.b16 %v8429
    %v9296 = vunpack.c.l.b16 %v8430
    %v9297 = vunpack.c.l.b16 %v8431
    %v9298 = vunpack.c.l.b16 %v8432
    %v9299 = vunpack.c.l.b16 %v8433
    %v9300 = vunpack.c.l.b16 %v8434
    %v9301 = vunpack.c.l.b16 %v8435
    %v9302 = vunpack.c.l.b16 %v8436
    %v9303 = vunpack.c.l.b16 %v8437
    %v9304 = vunpack.c.l.b16 %v8438
    %v9305 = vunpack.c.l.b16 %v8439
    %v9306 = vunpack.c.l.b16 %v8440
    %v9307 = vunpack.c.l.b16 %v8441
    %v9308 = vunpack.c.l.b16 %v8442
    %v9309 = vunpack.c.l.b16 %v8443
    %v9310 = vunpack.c.l.b16 %v8444
    %v9311 = vunpack.c.l.b16 %v8445
    %v9312 = vunpack.c.l.b16 %v8446
    %v9313 = vunpack.c.l.b16 %v8447
    %v9314 = vunpack.c.l.b16 %v8448
    %v9315 = vunpack.c.l.b16 %v8449
    %v9316 = vunpack.c.l.b16 %v8450
    %v9317 = vunpack.c.l.b16 %v8451
    %v9318 = vunpack.c.l.b16 %v8452
    %v9319 = vunpack.c.l.b16 %v8453
    %v9320 = vunpack.c.l.b16 %v8454
    %v9321 = vunpack.c.l.b16 %v8455
    %v9322 = vunpack.c.l.b16 %v8456
    %v9323 = vunpack.c.l.b16 %v8457
    %v9324 = vunpack.c.l.b16 %v8458
    %v9325 = vunpack.c.l.b16 %v8459
    %v9326 = vunpack.c.l.b16 %v8460
    %v9327 = vunpack.c.l.b16 %v8461
    %v9328 = vunpack.c.l.b16 %v8462
    %v9329 = vunpack.c.l.b16 %v8463
    %v9330 = vunpack.c.l.b16 %v8464
    %v9331 = vunpack.c.l.b16 %v8465
    %v9332 = vunpack.c.l.b16 %v8466
    %v9333 = vunpack.c.l.b16 %v8467
    %v9334 = vunpack.c.l.b16 %v8468
    %v9335 = vunpack.c.l.b16 %v8469
    %v9336 = vunpack.c.l.b16 %v8470
    %v9337 = vunpack.c.l.b16 %v8471
    %v9338 = vunpack.c.l.b16 %v8472
    %v9339 = vunpack.c.l.b16 %v8473
    %v9340 = vunpack.c.l.b16 %v8474
    %v9341 = vunpack.c.l.b16 %v8475
    %v9342 = vunpack.c.l.b16 %v8476
    %v9343 = vunpack.c.l.b16 %v8477
    %v9344 = vunpack.c.l.b16 %v8478
    %v9345 = vpack.c.b16 %v9250, %v9249
    %v9346 = vpack.c.b16 %v9252, %v9251
    %v9347 = vpack.c.b16 %v9254, %v9253
    %v9348 = vpack.c.b16 %v9256, %v9255
    %v9349 = vpack.c.b16 %v9258, %v9257
    %v9350 = vpack.c.b16 %v9260, %v9259
    %v9351 = vpack.c.b16 %v9262, %v9261
    %v9352 = vpack.c.b16 %v9264, %v9263
    %v9353 = vpack.c.b16 %v9266, %v9265
    %v9354 = vpack.c.b16 %v9268, %v9267
    %v9355 = vpack.c.b16 %v9270, %v9269
    %v9356 = vpack.c.b16 %v9272, %v9271
    %v9357 = vpack.c.b16 %v9274, %v9273
    %v9358 = vpack.c.b16 %v9276, %v9275
    %v9359 = vpack.c.b16 %v9278, %v9277
    %v9360 = vpack.c.b16 %v9280, %v9279
    %v9361 = vpack.c.b16 %v9282, %v9281
    %v9362 = vpack.c.b16 %v9284, %v9283
    %v9363 = vpack.c.b16 %v9286, %v9285
    %v9364 = vpack.c.b16 %v9288, %v9287
    %v9365 = vpack.c.b16 %v9290, %v9289
    %v9366 = vpack.c.b16 %v9292, %v9291
    %v9367 = vpack.c.b16 %v9294, %v9293
    %v9368 = vpack.c.b16 %v9296, %v9295
    %v9369 = vpack.c.b16 %v9298, %v9297
    %v9370 = vpack.c.b16 %v9300, %v9299
    %v9371 = vpack.c.b16 %v9302, %v9301
    %v9372 = vpack.c.b16 %v9304, %v9303
    %v9373 = vpack.c.b16 %v9306, %v9305
    %v9374 = vpack.c.b16 %v9308, %v9307
    %v9375 = vpack.c.b16 %v9310, %v9309
    %v9376 = vpack.c.b16 %v9312, %v9311
    %v9377 = vpack.c.b16 %v9314, %v9313
    %v9378 = vpack.c.b16 %v9316, %v9315
    %v9379 = vpack.c.b16 %v9318, %v9317
    %v9380 = vpack.c.b16 %v9320, %v9319
    %v9381 = vpack.c.b16 %v9322, %v9321
    %v9382 = vpack.c.b16 %v9324, %v9323
    %v9383 = vpack.c.b16 %v9326, %v9325
    %v9384 = vpack.c.b16 %v9328, %v9327
    %v9385 = vpack.c.b16 %v9330, %v9329
    %v9386 = vpack.c.b16 %v9332, %v9331
    %v9387 = vpack.c.b16 %v9334, %v9333
    %v9388 = vpack.c.b16 %v9336, %v9335
    %v9389 = vpack.c.b16 %v9338, %v9337
    %v9390 = vpack.c.b16 %v9340, %v9339
    %v9391 = vpack.c.b16 %v9342, %v9341
    %v9392 = vpack.c.b16 %v9344, %v9343
    %9441 = vmatprep.subr.bf16.mxu0 0
    %9442 = vmatpush1.bf16.msra.mxu0 %v9345
    %9443 = vmatprep.subr.bf16.mxu0 0
    %9444 = vmatpush1.bf16.msra.mxu0 %v9346
    %9445 = vmatprep.subr.bf16.mxu0 0
    %9446 = vmatpush1.bf16.msra.mxu0 %v9347
    %9447 = vmatprep.subr.bf16.mxu0 0
    %9448 = vmatpush1.bf16.msra.mxu0 %v9348
    %9449 = vmatprep.subr.bf16.mxu0 0
    %9450 = vmatpush1.bf16.msra.mxu0 %v9349
    %9451 = vmatprep.subr.bf16.mxu0 0
    %9452 = vmatpush1.bf16.msra.mxu0 %v9350
    %9453 = vmatprep.subr.bf16.mxu0 0
    %9454 = vmatpush1.bf16.msra.mxu0 %v9351
    %9455 = vmatprep.subr.bf16.mxu0 0
    %9456 = vmatpush1.bf16.msra.mxu0 %v9352
    %9457 = vmatprep.subr.bf16.mxu0 0
    %9458 = vmatpush1.bf16.msra.mxu0 %v9353
    %9459 = vmatprep.subr.bf16.mxu0 0
    %9460 = vmatpush1.bf16.msra.mxu0 %v9354
    %9461 = vmatprep.subr.bf16.mxu0 0
    %9462 = vmatpush1.bf16.msra.mxu0 %v9355
    %9463 = vmatprep.subr.bf16.mxu0 0
    %9464 = vmatpush1.bf16.msra.mxu0 %v9356
    %9465 = vmatprep.subr.bf16.mxu0 0
    %9466 = vmatpush1.bf16.msra.mxu0 %v9357
    %9467 = vmatprep.subr.bf16.mxu0 0
    %9468 = vmatpush1.bf16.msra.mxu0 %v9358
    %9469 = vmatprep.subr.bf16.mxu0 0
    %9470 = vmatpush1.bf16.msra.mxu0 %v9359
    %9471 = vmatprep.subr.bf16.mxu0 0
    %9472 = vmatpush1.bf16.msra.mxu0 %v9360
    %9473 = vmatprep.mubr.bf16.mxu0 %v8378
    %9474 = vmatmul.mubr.bf16.gmra.mrb[0].mxu0 %v8377
    %v9475 = vpop.f32.mrb[0].mxu0
    %v9476 = vadd.f32 %v9147, %v9475
    %v9477 = vpop.f32.mrb[0].mxu0
    %v9478 = vpop.f32.mrb[0].mxu0
    %v9479 = vadd.f32 %v9150, %v9478
    %v9480 = vpop.f32.mrb[0].mxu0
    %9481 = vdwg.mxu0
    %9482 = vmatprep.subr.bf16.mxu0 0
    %9483 = vmatpush1.bf16.msra.mxu0 %v9361
    %9484 = vmatprep.subr.bf16.mxu0 0
    %9485 = vmatpush1.bf16.msra.mxu0 %v9362
    %9486 = vmatprep.subr.bf16.mxu0 0
    %9487 = vmatpush1.bf16.msra.mxu0 %v9363
    %9488 = vmatprep.subr.bf16.mxu0 0
    %9489 = vmatpush1.bf16.msra.mxu0 %v9364
    %9490 = vmatprep.subr.bf16.mxu0 0
    %9491 = vmatpush1.bf16.msra.mxu0 %v9365
    %9492 = vmatprep.subr.bf16.mxu0 0
    %9493 = vmatpush1.bf16.msra.mxu0 %v9366
    %9494 = vmatprep.subr.bf16.mxu0 0
    %9495 = vmatpush1.bf16.msra.mxu0 %v9367
    %9496 = vmatprep.subr.bf16.mxu0 0
    %9497 = vmatpush1.bf16.msra.mxu0 %v9368
    %9498 = vmatprep.subr.bf16.mxu0 0
    %9499 = vmatpush1.bf16.msra.mxu0 %v9369
    %9500 = vmatprep.subr.bf16.mxu0 0
    %9501 = vmatpush1.bf16.msra.mxu0 %v9370
    %9502 = vmatprep.subr.bf16.mxu0 0
    %9503 = vmatpush1.bf16.msra.mxu0 %v9371
    %9504 = vmatprep.subr.bf16.mxu0 0
    %9505 = vmatpush1.bf16.msra.mxu0 %v9372
    %9506 = vmatprep.subr.bf16.mxu0 0
    %9507 = vmatpush1.bf16.msra.mxu0 %v9373
    %9508 = vmatprep.subr.bf16.mxu0 0
    %9509 = vmatpush1.bf16.msra.mxu0 %v9374
    %9510 = vmatprep.subr.bf16.mxu0 0
    %9511 = vmatpush1.bf16.msra.mxu0 %v9375
    %9512 = vmatprep.subr.bf16.mxu0 0
    %9513 = vmatpush1.bf16.msra.mxu0 %v9376
    %9514 = vmatprep.mubr.bf16.mxu0 %v8380
    %9515 = vmatmul.mubr.bf16.gmra.mrb[0].mxu0 %v8379
    %v9516 = vpop.f32.mrb[0].mxu0
    %v9517 = vadd.f32 %v9476, %v9516
    %v9518 = vpop.f32.mrb[0].mxu0
    %v9519 = vpop.f32.mrb[0].mxu0
    %v9520 = vadd.f32 %v9479, %v9519
    %v9521 = vpop.f32.mrb[0].mxu0
    %9522 = vdwg.mxu0
    %9523 = vmatprep.subr.bf16.mxu0 0
    %9524 = vmatpush1.bf16.msra.mxu0 %v9377
    %9525 = vmatprep.subr.bf16.mxu0 0
    %9526 = vmatpush1.bf16.msra.mxu0 %v9378
    %9527 = vmatprep.subr.bf16.mxu0 0
    %9528 = vmatpush1.bf16.msra.mxu0 %v9379
    %9529 = vmatprep.subr.bf16.mxu0 0
    %9530 = vmatpush1.bf16.msra.mxu0 %v9380
    %9531 = vmatprep.subr.bf16.mxu0 0
    %9532 = vmatpush1.bf16.msra.mxu0 %v9381
    %9533 = vmatprep.subr.bf16.mxu0 0
    %9534 = vmatpush1.bf16.msra.mxu0 %v9382
    %9535 = vmatprep.subr.bf16.mxu0 0
    %9536 = vmatpush1.bf16.msra.mxu0 %v9383
    %9537 = vmatprep.subr.bf16.mxu0 0
    %9538 = vmatpush1.bf16.msra.mxu0 %v9384
    %9539 = vmatprep.subr.bf16.mxu0 0
    %9540 = vmatpush1.bf16.msra.mxu0 %v9385
    %9541 = vmatprep.subr.bf16.mxu0 0
    %9542 = vmatpush1.bf16.msra.mxu0 %v9386
    %9543 = vmatprep.subr.bf16.mxu0 0
    %9544 = vmatpush1.bf16.msra.mxu0 %v9387
    %9545 = vmatprep.subr.bf16.mxu0 0
    %9546 = vmatpush1.bf16.msra.mxu0 %v9388
    %9547 = vmatprep.subr.bf16.mxu0 0
    %9548 = vmatpush1.bf16.msra.mxu0 %v9389
    %9549 = vmatprep.subr.bf16.mxu0 0
    %9550 = vmatpush1.bf16.msra.mxu0 %v9390
    %9551 = vmatprep.subr.bf16.mxu0 0
    %9552 = vmatpush1.bf16.msra.mxu0 %v9391
    %9553 = vmatprep.subr.bf16.mxu0 0
    %9554 = vmatpush1.bf16.msra.mxu0 %v9392
    %9555 = vmatprep.mubr.bf16.mxu0 %v8382
    %9556 = vmatmul.mubr.bf16.gmra.mrb[0].mxu0 %v8381
    %v9557 = vpop.f32.mrb[0].mxu0
    %v9558 = vadd.f32 %v9517, %v9557
    %v9559 = vpop.f32.mrb[0].mxu0
    %v9560 = vpop.f32.mrb[0].mxu0
    %v9561 = vadd.f32 %v9520, %v9560
    %v9562 = vpop.f32.mrb[0].mxu0
    %9563 = vdwg.mxu0
    %9566 = vrot.lane.b32.xlu0 %v9558, 96
    %v9567 = vpop.permute.xlu0 %9566
    %9568 = vrot.lane.b32.xlu0 %v9561, 96
    %v9569 = vpop.permute.xlu0 %9568
    %v9572 = vld [vmem:[#allocation21] sm:$0x1]
    %v9574 = vlaneseq
    %v9575 = vshrl.u32 %v9574, 7
    %v9576 = vsub.s32 0, %v9575
    %v9577 = vrot.slane %v9572, %v9576
    %v9579 = vadd.f32 %v9558, %v9577
    %v9580 = vadd.f32 %v9561, %v9577
    %v9581 = vadd.f32 %v9567, %v9577
    %v9582 = vadd.f32 %v9569, %v9577
    %v9583 = vpack.c.bf16 %v9580, %v9579
    %v9584 = vpack.c.bf16 %v9582, %v9581
    %v9585 = vld [vmem:[%s23] sm:$0xf]
    %v9586 = vld [vmem:[%s23 + $0x4] sm:$0xf]
    %v9587 = vld [vmem:[%s23 + $0x8] sm:$0xf]
    %v9588 = vld [vmem:[%s23 + $0xc] sm:$0xf]
    %v9593 = vunpack.c.l.b16 %v9585
    %v9594 = vunpack.c.l.b16 %v9586
    %v9595 = vunpack.c.l.b16 %v9587
    %v9596 = vunpack.c.l.b16 %v9588
    %v9597 = vpack.c.b16 %v9594, %v9593
    %v9598 = vpack.c.b16 %v9596, %v9595
    %v9600 = vsel %vm279, %v9597, 0
    %v9603 = vsel %vm279, %v9598, 0
    %9605 = vmatprep.subr.bf16.mxu0 0
    %9606 = vmatpush1.bf16.msra.mxu0 %v9583
    %9607 = vmatprep.subr.bf16.mxu0 0
    %9608 = vmatpush1.bf16.msra.mxu0 %v9584
    %9609 = vmatprep.subr.bf16.mxu0 0
    %9610 = vmatpush1.bf16.msra.mxu0 0
    %9611 = vmatprep.subr.bf16.mxu0 0
    %9612 = vmatpush1.bf16.msra.mxu0 0
    %9613 = vmatprep.subr.bf16.mxu0 0
    %9614 = vmatpush1.bf16.msra.mxu0 0
    %9615 = vmatprep.subr.bf16.mxu0 0
    %9616 = vmatpush1.bf16.msra.mxu0 0
    %9617 = vmatprep.subr.bf16.mxu0 0
    %9618 = vmatpush1.bf16.msra.mxu0 0
    %9619 = vmatprep.subr.bf16.mxu0 0
    %9620 = vmatpush1.bf16.msra.mxu0 0
    %9621 = vmatprep.subr.bf16.mxu0 0
    %9622 = vmatpush1.bf16.msra.mxu0 0
    %9623 = vmatprep.subr.bf16.mxu0 0
    %9624 = vmatpush1.bf16.msra.mxu0 0
    %9625 = vmatprep.subr.bf16.mxu0 0
    %9626 = vmatpush1.bf16.msra.mxu0 0
    %9627 = vmatprep.subr.bf16.mxu0 0
    %9628 = vmatpush1.bf16.msra.mxu0 0
    %9629 = vmatprep.subr.bf16.mxu0 0
    %9630 = vmatpush1.bf16.msra.mxu0 0
    %9631 = vmatprep.subr.bf16.mxu0 0
    %9632 = vmatpush1.bf16.msra.mxu0 0
    %9633 = vmatprep.subr.bf16.mxu0 0
    %9634 = vmatpush1.bf16.msra.mxu0 0
    %9635 = vmatprep.subr.bf16.mxu0 0
    %9636 = vmatpush1.bf16.msra.mxu0 0
    %9637 = vmatprep.mubr.bf16.mxu0 0
    %9638 = vmatmul.mubr.bf16.gmra.mrb[0].mxu0 %v9600
    %v9639 = vpop.f32.mrb[0].mxu0
    %v9640 = vadd.f32 0.0, %v9639
    %v9641 = vpop.f32.mrb[0].mxu0
    %v9642 = vpop.f32.mrb[0].mxu0
    %v9643 = vadd.f32 0.0, %v9642
    %v9644 = vpop.f32.mrb[0].mxu0
    %9645 = vmatprep.mubr.bf16.mxu0 0
    %9646 = vmatmul.mubr.bf16.gmra.mrb[0].mxu0 %v9603
    %v9647 = vpop.f32.mrb[0].mxu0
    %v9648 = vadd.f32 0.0, %v9647
    %v9649 = vpop.f32.mrb[0].mxu0
    %v9650 = vpop.f32.mrb[0].mxu0
    %v9651 = vadd.f32 0.0, %v9650
    %v9652 = vpop.f32.mrb[0].mxu0
    %9653 = vdwg.mxu0
    %s9654 = scalar_lea.vmem %s23, 16
    %v9655 = vld [vmem:[%s9654] sm:$0xf]
    %v9656 = vld [vmem:[%s9654 + $0x4] sm:$0xf]
    %v9657 = vld [vmem:[%s9654 + $0x8] sm:$0xf]
    %v9658 = vld [vmem:[%s9654 + $0xc] sm:$0xf]
    %v9663 = vunpack.c.l.b16 %v9655
    %v9664 = vunpack.c.l.b16 %v9656
    %v9665 = vunpack.c.l.b16 %v9657
    %v9666 = vunpack.c.l.b16 %v9658
    %v9667 = vpack.c.b16 %v9664, %v9663
    %v9668 = vpack.c.b16 %v9666, %v9665
    %v9670 = vsel %vm279, %v9667, 0
    %v9673 = vsel %vm279, %v9668, 0
    %9675 = vmatprep.subr.bf16.mxu0 0
    %9676 = vmatpush1.bf16.msra.mxu0 %v9583
    %9677 = vmatprep.subr.bf16.mxu0 0
    %9678 = vmatpush1.bf16.msra.mxu0 %v9584
    %9679 = vmatprep.subr.bf16.mxu0 0
    %9680 = vmatpush1.bf16.msra.mxu0 0
    %9681 = vmatprep.subr.bf16.mxu0 0
    %9682 = vmatpush1.bf16.msra.mxu0 0
    %9683 = vmatprep.subr.bf16.mxu0 0
    %9684 = vmatpush1.bf16.msra.mxu0 0
    %9685 = vmatprep.subr.bf16.mxu0 0
    %9686 = vmatpush1.bf16.msra.mxu0 0
    %9687 = vmatprep.subr.bf16.mxu0 0
    %9688 = vmatpush1.bf16.msra.mxu0 0
    %9689 = vmatprep.subr.bf16.mxu0 0
    %9690 = vmatpush1.bf16.msra.mxu0 0
    %9691 = vmatprep.subr.bf16.mxu0 0
    %9692 = vmatpush1.bf16.msra.mxu0 0
    %9693 = vmatprep.subr.bf16.mxu0 0
    %9694 = vmatpush1.bf16.msra.mxu0 0
    %9695 = vmatprep.subr.bf16.mxu0 0
    %9696 = vmatpush1.bf16.msra.mxu0 0
    %9697 = vmatprep.subr.bf16.mxu0 0
    %9698 = vmatpush1.bf16.msra.mxu0 0
    %9699 = vmatprep.subr.bf16.mxu0 0
    %9700 = vmatpush1.bf16.msra.mxu0 0
    %9701 = vmatprep.subr.bf16.mxu0 0
    %9702 = vmatpush1.bf16.msra.mxu0 0
    %9703 = vmatprep.subr.bf16.mxu0 0
    %9704 = vmatpush1.bf16.msra.mxu0 0
    %9705 = vmatprep.subr.bf16.mxu0 0
    %9706 = vmatpush1.bf16.msra.mxu0 0
    %9707 = vmatprep.mubr.bf16.mxu0 0
    %9708 = vmatmul.mubr.bf16.gmra.mrb[0].mxu0 %v9670
    %v9709 = vpop.f32.mrb[0].mxu0
    %v9710 = vadd.f32 0.0, %v9709
    %v9711 = vpop.f32.mrb[0].mxu0
    %v9712 = vpop.f32.mrb[0].mxu0
    %v9713 = vadd.f32 0.0, %v9712
    %v9714 = vpop.f32.mrb[0].mxu0
    %9715 = vmatprep.mubr.bf16.mxu0 0
    %9716 = vmatmul.mubr.bf16.gmra.mrb[0].mxu0 %v9673
    %v9717 = vpop.f32.mrb[0].mxu0
    %v9718 = vadd.f32 0.0, %v9717
    %v9719 = vpop.f32.mrb[0].mxu0
    %v9720 = vpop.f32.mrb[0].mxu0
    %v9721 = vadd.f32 0.0, %v9720
    %v9722 = vpop.f32.mrb[0].mxu0
    %9723 = vdwg.mxu0
    %s9724 = scalar_lea.vmem %s23, 32
    %v9725 = vld [vmem:[%s9724] sm:$0xf]
    %v9726 = vld [vmem:[%s9724 + $0x4] sm:$0xf]
    %v9727 = vld [vmem:[%s9724 + $0x8] sm:$0xf]
    %v9728 = vld [vmem:[%s9724 + $0xc] sm:$0xf]
    %v9733 = vunpack.c.l.b16 %v9725
    %v9734 = vunpack.c.l.b16 %v9726
    %v9735 = vunpack.c.l.b16 %v9727
    %v9736 = vunpack.c.l.b16 %v9728
    %v9737 = vpack.c.b16 %v9734, %v9733
    %v9738 = vpack.c.b16 %v9736, %v9735
    %v9740 = vsel %vm279, %v9737, 0
    %v9743 = vsel %vm279, %v9738, 0
    %9745 = vmatprep.subr.bf16.mxu0 0
    %9746 = vmatpush1.bf16.msra.mxu0 %v9583
    %9747 = vmatprep.subr.bf16.mxu0 0
    %9748 = vmatpush1.bf16.msra.mxu0 %v9584
    %9749 = vmatprep.subr.bf16.mxu0 0
    %9750 = vmatpush1.bf16.msra.mxu0 0
    %9751 = vmatprep.subr.bf16.mxu0 0
    %9752 = vmatpush1.bf16.msra.mxu0 0
    %9753 = vmatprep.subr.bf16.mxu0 0
    %9754 = vmatpush1.bf16.msra.mxu0 0
    %9755 = vmatprep.subr.bf16.mxu0 0
    %9756 = vmatpush1.bf16.msra.mxu0 0
    %9757 = vmatprep.subr.bf16.mxu0 0
    %9758 = vmatpush1.bf16.msra.mxu0 0
    %9759 = vmatprep.subr.bf16.mxu0 0
    %9760 = vmatpush1.bf16.msra.mxu0 0
    %9761 = vmatprep.subr.bf16.mxu0 0
    %9762 = vmatpush1.bf16.msra.mxu0 0
    %9763 = vmatprep.subr.bf16.mxu0 0
    %9764 = vmatpush1.bf16.msra.mxu0 0
    %9765 = vmatprep.subr.bf16.mxu0 0
    %9766 = vmatpush1.bf16.msra.mxu0 0
    %9767 = vmatprep.subr.bf16.mxu0 0
    %9768 = vmatpush1.bf16.msra.mxu0 0
    %9769 = vmatprep.subr.bf16.mxu0 0
    %9770 = vmatpush1.bf16.msra.mxu0 0
    %9771 = vmatprep.subr.bf16.mxu0 0
    %9772 = vmatpush1.bf16.msra.mxu0 0
    %9773 = vmatprep.subr.bf16.mxu0 0
    %9774 = vmatpush1.bf16.msra.mxu0 0
    %9775 = vmatprep.subr.bf16.mxu0 0
    %9776 = vmatpush1.bf16.msra.mxu0 0
    %9777 = vmatprep.mubr.bf16.mxu0 0
    %9778 = vmatmul.mubr.bf16.gmra.mrb[0].mxu0 %v9740
    %v9779 = vpop.f32.mrb[0].mxu0
    %v9780 = vadd.f32 0.0, %v9779
    %v9781 = vpop.f32.mrb[0].mxu0
    %v9782 = vpop.f32.mrb[0].mxu0
    %v9783 = vadd.f32 0.0, %v9782
    %v9784 = vpop.f32.mrb[0].mxu0
    %9785 = vmatprep.mubr.bf16.mxu0 0
    %9786 = vmatmul.mubr.bf16.gmra.mrb[0].mxu0 %v9743
    %v9787 = vpop.f32.mrb[0].mxu0
    %v9788 = vadd.f32 0.0, %v9787
    %v9789 = vpop.f32.mrb[0].mxu0
    %v9790 = vpop.f32.mrb[0].mxu0
    %v9791 = vadd.f32 0.0, %v9790
    %v9792 = vpop.f32.mrb[0].mxu0
    %9793 = vdwg.mxu0
    %9798 = vrot.lane.b32.xlu0 %v9710, 32
    %v9799 = vpop.permute.xlu0 %9798
    %9800 = vrot.lane.b32.xlu0 %v9713, 32
    %v9801 = vpop.permute.xlu0 %9800
    %9802 = vrot.lane.b32.xlu0 %v9718, 32
    %v9803 = vpop.permute.xlu0 %9802
    %9804 = vrot.lane.b32.xlu0 %v9721, 32
    %v9805 = vpop.permute.xlu0 %9804
    %9814 = vrot.lane.b32.xlu0 %v9780, 64
    %v9815 = vpop.permute.xlu0 %9814
    %9816 = vrot.lane.b32.xlu0 %v9783, 64
    %v9817 = vpop.permute.xlu0 %9816
    %9818 = vrot.lane.b32.xlu0 %v9788, 64
    %v9819 = vpop.permute.xlu0 %9818
    %9820 = vrot.lane.b32.xlu0 %v9791, 64
    %v9821 = vpop.permute.xlu0 %9820
    %v9826 = vsel %vm279, %v9640, %v9799
    %v9827 = vsel %vm279, %v9643, %v9801
    %v9828 = vsel %vm279, %v9648, %v9803
    %v9829 = vsel %vm279, %v9651, %v9805
    %v9830 = vsel %vm573, %v9826, %v9815
    %v9831 = vsel %vm573, %v9827, %v9817
    %v9832 = vsel %vm573, %v9828, %v9819
    %v9833 = vsel %vm573, %v9829, %v9821
    %v9834 = vpack.c.bf16 %v9831, %v9830
    %v9835 = vpack.c.bf16 %v9833, %v9832
    %v9836 = vld [vmem:[%s25] sm:$0xf]
    %v9837 = vld [vmem:[%s25 + $0x4] sm:$0xf]
    %v9838 = vld [vmem:[%s25 + $0x8] sm:$0xf]
    %v9839 = vld [vmem:[%s25 + $0xc] sm:$0xf]
    %v9840 = vld [vmem:[%s25 + $0x10] sm:$0xf]
    %v9841 = vld [vmem:[%s25 + $0x14] sm:$0xf]
    %v9842 = vld [vmem:[%s25 + $0x18] sm:$0xf]
    %v9843 = vld [vmem:[%s25 + $0x1c] sm:$0xf]
    %v9844 = vld [vmem:[%s25 + $0x20] sm:$0xf]
    %v9845 = vld [vmem:[%s25 + $0x24] sm:$0xf]
    %v9846 = vld [vmem:[%s25 + $0x28] sm:$0xf]
    %v9847 = vld [vmem:[%s25 + $0x2c] sm:$0xf]
    %v9848 = vld [vmem:[%s24] sm:$0xf]
    %v9849 = vld [vmem:[%s24 + $0x4] sm:$0xf]
    %v9850 = vld [vmem:[%s24 + $0x8] sm:$0xf]
    %v9851 = vld [vmem:[%s24 + $0xc] sm:$0xf]
    %v9856 = vunpack.c.l.b16 %v9848
    %v9857 = vunpack.c.l.b16 %v9849
    %v9858 = vunpack.c.l.b16 %v9850
    %v9859 = vunpack.c.l.b16 %v9851
    %v9860 = vpack.c.b16 %v9857, %v9856
    %v9861 = vpack.c.b16 %v9859, %v9858
    %v9863 = vsel %vm279, %v9860, 0
    %v9866 = vsel %vm279, %v9861, 0
    %9868 = vmatprep.subr.bf16.mxu0 0
    %9869 = vmatpush1.bf16.msra.mxu0 %v270
    %9870 = vmatprep.subr.bf16.mxu0 0
    %9871 = vmatpush1.bf16.msra.mxu0 %v271
    %9872 = vmatprep.subr.bf16.mxu0 0
    %9873 = vmatpush1.bf16.msra.mxu0 0
    %9874 = vmatprep.subr.bf16.mxu0 0
    %9875 = vmatpush1.bf16.msra.mxu0 0
    %9876 = vmatprep.subr.bf16.mxu0 0
    %9877 = vmatpush1.bf16.msra.mxu0 0
    %9878 = vmatprep.subr.bf16.mxu0 0
    %9879 = vmatpush1.bf16.msra.mxu0 0
    %9880 = vmatprep.subr.bf16.mxu0 0
    %9881 = vmatpush1.bf16.msra.mxu0 0
    %9882 = vmatprep.subr.bf16.mxu0 0
    %9883 = vmatpush1.bf16.msra.mxu0 0
    %9884 = vmatprep.subr.bf16.mxu0 0
    %9885 = vmatpush1.bf16.msra.mxu0 0
    %9886 = vmatprep.subr.bf16.mxu0 0
    %9887 = vmatpush1.bf16.msra.mxu0 0
    %9888 = vmatprep.subr.bf16.mxu0 0
    %9889 = vmatpush1.bf16.msra.mxu0 0
    %9890 = vmatprep.subr.bf16.mxu0 0
    %9891 = vmatpush1.bf16.msra.mxu0 0
    %9892 = vmatprep.subr.bf16.mxu0 0
    %9893 = vmatpush1.bf16.msra.mxu0 0
    %9894 = vmatprep.subr.bf16.mxu0 0
    %9895 = vmatpush1.bf16.msra.mxu0 0
    %9896 = vmatprep.subr.bf16.mxu0 0
    %9897 = vmatpush1.bf16.msra.mxu0 0
    %9898 = vmatprep.subr.bf16.mxu0 0
    %9899 = vmatpush1.bf16.msra.mxu0 0
    %9900 = vmatprep.mubr.bf16.mxu0 0
    %9901 = vmatmul.mubr.bf16.gmra.mrb[0].mxu0 %v9863
    %v9902 = vpop.f32.mrb[0].mxu0
    %v9903 = vadd.f32 0.0, %v9902
    %v9904 = vpop.f32.mrb[0].mxu0
    %v9905 = vpop.f32.mrb[0].mxu0
    %v9906 = vadd.f32 0.0, %v9905
    %v9907 = vpop.f32.mrb[0].mxu0
    %9908 = vmatprep.mubr.bf16.mxu0 0
    %9909 = vmatmul.mubr.bf16.gmra.mrb[0].mxu0 %v9866
    %v9910 = vpop.f32.mrb[0].mxu0
    %v9911 = vadd.f32 0.0, %v9910
    %v9912 = vpop.f32.mrb[0].mxu0
    %v9913 = vpop.f32.mrb[0].mxu0
    %v9914 = vadd.f32 0.0, %v9913
    %v9915 = vpop.f32.mrb[0].mxu0
    %9916 = vdwg.mxu0
    %s9917 = scalar_lea.vmem %s24, 16
    %v9918 = vld [vmem:[%s9917] sm:$0xf]
    %v9919 = vld [vmem:[%s9917 + $0x4] sm:$0xf]
    %v9920 = vld [vmem:[%s9917 + $0x8] sm:$0xf]
    %v9921 = vld [vmem:[%s9917 + $0xc] sm:$0xf]
    %v9926 = vunpack.c.l.b16 %v9918
    %v9927 = vunpack.c.l.b16 %v9919
    %v9928 = vunpack.c.l.b16 %v9920
    %v9929 = vunpack.c.l.b16 %v9921
    %v9930 = vpack.c.b16 %v9927, %v9926
    %v9931 = vpack.c.b16 %v9929, %v9928
    %v9933 = vsel %vm279, %v9930, 0
    %v9936 = vsel %vm279, %v9931, 0
    %9938 = vmatprep.subr.bf16.mxu0 0
    %9939 = vmatpush1.bf16.msra.mxu0 %v270
    %9940 = vmatprep.subr.bf16.mxu0 0
    %9941 = vmatpush1.bf16.msra.mxu0 %v271
    %9942 = vmatprep.subr.bf16.mxu0 0
    %9943 = vmatpush1.bf16.msra.mxu0 0
    %9944 = vmatprep.subr.bf16.mxu0 0
    %9945 = vmatpush1.bf16.msra.mxu0 0
    %9946 = vmatprep.subr.bf16.mxu0 0
    %9947 = vmatpush1.bf16.msra.mxu0 0
    %9948 = vmatprep.subr.bf16.mxu0 0
    %9949 = vmatpush1.bf16.msra.mxu0 0
    %9950 = vmatprep.subr.bf16.mxu0 0
    %9951 = vmatpush1.bf16.msra.mxu0 0
    %9952 = vmatprep.subr.bf16.mxu0 0
    %9953 = vmatpush1.bf16.msra.mxu0 0
    %9954 = vmatprep.subr.bf16.mxu0 0
    %9955 = vmatpush1.bf16.msra.mxu0 0
    %9956 = vmatprep.subr.bf16.mxu0 0
    %9957 = vmatpush1.bf16.msra.mxu0 0
    %9958 = vmatprep.subr.bf16.mxu0 0
    %9959 = vmatpush1.bf16.msra.mxu0 0
    %9960 = vmatprep.subr.bf16.mxu0 0
    %9961 = vmatpush1.bf16.msra.mxu0 0
    %9962 = vmatprep.subr.bf16.mxu0 0
    %9963 = vmatpush1.bf16.msra.mxu0 0
    %9964 = vmatprep.subr.bf16.mxu0 0
    %9965 = vmatpush1.bf16.msra.mxu0 0
    %9966 = vmatprep.subr.bf16.mxu0 0
    %9967 = vmatpush1.bf16.msra.mxu0 0
    %9968 = vmatprep.subr.bf16.mxu0 0
    %9969 = vmatpush1.bf16.msra.mxu0 0
    %9970 = vmatprep.mubr.bf16.mxu0 0
    %9971 = vmatmul.mubr.bf16.gmra.mrb[0].mxu0 %v9933
    %v9972 = vpop.f32.mrb[0].mxu0
    %v9973 = vadd.f32 0.0, %v9972
    %v9974 = vpop.f32.mrb[0].mxu0
    %v9975 = vpop.f32.mrb[0].mxu0
    %v9976 = vadd.f32 0.0, %v9975
    %v9977 = vpop.f32.mrb[0].mxu0
    %9978 = vmatprep.mubr.bf16.mxu0 0
    %9979 = vmatmul.mubr.bf16.gmra.mrb[0].mxu0 %v9936
    %v9980 = vpop.f32.mrb[0].mxu0
    %v9981 = vadd.f32 0.0, %v9980
    %v9982 = vpop.f32.mrb[0].mxu0
    %v9983 = vpop.f32.mrb[0].mxu0
    %v9984 = vadd.f32 0.0, %v9983
    %v9985 = vpop.f32.mrb[0].mxu0
    %9986 = vdwg.mxu0
    %s9987 = scalar_lea.vmem %s24, 32
    %v9988 = vld [vmem:[%s9987] sm:$0xf]
    %v9989 = vld [vmem:[%s9987 + $0x4] sm:$0xf]
    %v9990 = vld [vmem:[%s9987 + $0x8] sm:$0xf]
    %v9991 = vld [vmem:[%s9987 + $0xc] sm:$0xf]
    %v9996 = vunpack.c.l.b16 %v9988
    %v9997 = vunpack.c.l.b16 %v9989
    %v9998 = vunpack.c.l.b16 %v9990
    %v9999 = vunpack.c.l.b16 %v9991
    %v10000 = vpack.c.b16 %v9997, %v9996
    %v10001 = vpack.c.b16 %v9999, %v9998
    %v10003 = vsel %vm279, %v10000, 0
    %v10006 = vsel %vm279, %v10001, 0
    %10008 = vmatprep.subr.bf16.mxu0 0
    %10009 = vmatpush1.bf16.msra.mxu0 %v270
    %10010 = vmatprep.subr.bf16.mxu0 0
    %10011 = vmatpush1.bf16.msra.mxu0 %v271
    %10012 = vmatprep.subr.bf16.mxu0 0
    %10013 = vmatpush1.bf16.msra.mxu0 0
    %10014 = vmatprep.subr.bf16.mxu0 0
    %10015 = vmatpush1.bf16.msra.mxu0 0
    %10016 = vmatprep.subr.bf16.mxu0 0
    %10017 = vmatpush1.bf16.msra.mxu0 0
    %10018 = vmatprep.subr.bf16.mxu0 0
    %10019 = vmatpush1.bf16.msra.mxu0 0
    %10020 = vmatprep.subr.bf16.mxu0 0
    %10021 = vmatpush1.bf16.msra.mxu0 0
    %10022 = vmatprep.subr.bf16.mxu0 0
    %10023 = vmatpush1.bf16.msra.mxu0 0
    %10024 = vmatprep.subr.bf16.mxu0 0
    %10025 = vmatpush1.bf16.msra.mxu0 0
    %10026 = vmatprep.subr.bf16.mxu0 0
    %10027 = vmatpush1.bf16.msra.mxu0 0
    %10028 = vmatprep.subr.bf16.mxu0 0
    %10029 = vmatpush1.bf16.msra.mxu0 0
    %10030 = vmatprep.subr.bf16.mxu0 0
    %10031 = vmatpush1.bf16.msra.mxu0 0
    %10032 = vmatprep.subr.bf16.mxu0 0
    %10033 = vmatpush1.bf16.msra.mxu0 0
    %10034 = vmatprep.subr.bf16.mxu0 0
    %10035 = vmatpush1.bf16.msra.mxu0 0
    %10036 = vmatprep.subr.bf16.mxu0 0
    %10037 = vmatpush1.bf16.msra.mxu0 0
    %10038 = vmatprep.subr.bf16.mxu0 0
    %10039 = vmatpush1.bf16.msra.mxu0 0
    %10040 = vmatprep.mubr.bf16.mxu0 0
    %10041 = vmatmul.mubr.bf16.gmra.mrb[0].mxu0 %v10003
    %v10042 = vpop.f32.mrb[0].mxu0
    %v10043 = vadd.f32 0.0, %v10042
    %v10044 = vpop.f32.mrb[0].mxu0
    %v10045 = vpop.f32.mrb[0].mxu0
    %v10046 = vadd.f32 0.0, %v10045
    %v10047 = vpop.f32.mrb[0].mxu0
    %10048 = vmatprep.mubr.bf16.mxu0 0
    %10049 = vmatmul.mubr.bf16.gmra.mrb[0].mxu0 %v10006
    %v10050 = vpop.f32.mrb[0].mxu0
    %v10051 = vadd.f32 0.0, %v10050
    %v10052 = vpop.f32.mrb[0].mxu0
    %v10053 = vpop.f32.mrb[0].mxu0
    %v10054 = vadd.f32 0.0, %v10053
    %v10055 = vpop.f32.mrb[0].mxu0
    %10056 = vdwg.mxu0
    %10061 = vrot.lane.b32.xlu0 %v9973, 16
    %v10062 = vpop.permute.xlu0 %10061
    %10063 = vrot.lane.b32.xlu0 %v9976, 16
    %v10064 = vpop.permute.xlu0 %10063
    %10065 = vrot.lane.b32.xlu0 %v9981, 16
    %v10066 = vpop.permute.xlu0 %10065
    %10067 = vrot.lane.b32.xlu0 %v9984, 16
    %v10068 = vpop.permute.xlu0 %10067
    %10077 = vrot.lane.b32.xlu0 %v10043, 32
    %v10078 = vpop.permute.xlu0 %10077
    %10079 = vrot.lane.b32.xlu0 %v10046, 32
    %v10080 = vpop.permute.xlu0 %10079
    %10081 = vrot.lane.b32.xlu0 %v10051, 32
    %v10082 = vpop.permute.xlu0 %10081
    %10083 = vrot.lane.b32.xlu0 %v10054, 32
    %v10084 = vpop.permute.xlu0 %10083
    %v10089 = vsel %vm504, %v9903, %v10062
    %v10090 = vsel %vm504, %v9906, %v10064
    %v10091 = vsel %vm504, %v9911, %v10066
    %v10092 = vsel %vm504, %v9914, %v10068
    %v10093 = vsel %vm279, %v10089, %v10078
    %v10094 = vsel %vm279, %v10090, %v10080
    %v10095 = vsel %vm279, %v10091, %v10082
    %v10096 = vsel %vm279, %v10092, %v10084
    %v10097 = vpack.c.bf16 %v10094, %v10093
    %v10098 = vpack.c.bf16 %v10096, %v10095
    %v10099 = vld [vmem:[%s26] sm:$0xf]
    %v10100 = vld [vmem:[%s26 + $0x4] sm:$0xf]
    %v10101 = vld [vmem:[%s26 + $0x8] sm:$0xf]
    %v10102 = vld [vmem:[%s26 + $0xc] sm:$0xf]
    %v10103 = vld [vmem:[%s26 + $0x10] sm:$0xf]
    %v10104 = vld [vmem:[%s26 + $0x14] sm:$0xf]
    %v10111 = vunpack.c.l.b16 %v10099
    %v10112 = vunpack.c.l.b16 %v10100
    %v10113 = vunpack.c.l.b16 %v10101
    %v10114 = vunpack.c.l.b16 %v10102
    %v10115 = vunpack.c.l.b16 %v10103
    %v10116 = vunpack.c.l.b16 %v10104
    %v10117 = vpack.c.b16 %v10112, %v10111
    %v10118 = vpack.c.b16 %v10114, %v10113
    %v10119 = vpack.c.b16 %v10116, %v10115
    %v10124 = vsel %vm509, %v10097, 0
    %v10127 = vsel %vm509, %v10098, 0
    %10129 = vmatprep.subr.bf16.mxu0 0
    %10130 = vmatpush1.bf16.msra.mxu0 %v10117
    %10131 = vmatprep.subr.bf16.mxu0 0
    %10132 = vmatpush1.bf16.msra.mxu0 %v10118
    %10133 = vmatprep.subr.bf16.mxu0 0
    %10134 = vmatpush1.bf16.msra.mxu0 %v10119
    %10135 = vmatprep.subr.bf16.mxu0 0
    %10136 = vmatpush1.bf16.msra.mxu0 0
    %10137 = vmatprep.subr.bf16.mxu0 0
    %10138 = vmatpush1.bf16.msra.mxu0 0
    %10139 = vmatprep.subr.bf16.mxu0 0
    %10140 = vmatpush1.bf16.msra.mxu0 0
    %10141 = vmatprep.subr.bf16.mxu0 0
    %10142 = vmatpush1.bf16.msra.mxu0 0
    %10143 = vmatprep.subr.bf16.mxu0 0
    %10144 = vmatpush1.bf16.msra.mxu0 0
    %10145 = vmatprep.subr.bf16.mxu0 0
    %10146 = vmatpush1.bf16.msra.mxu0 0
    %10147 = vmatprep.subr.bf16.mxu0 0
    %10148 = vmatpush1.bf16.msra.mxu0 0
    %10149 = vmatprep.subr.bf16.mxu0 0
    %10150 = vmatpush1.bf16.msra.mxu0 0
    %10151 = vmatprep.subr.bf16.mxu0 0
    %10152 = vmatpush1.bf16.msra.mxu0 0
    %10153 = vmatprep.subr.bf16.mxu0 0
    %10154 = vmatpush1.bf16.msra.mxu0 0
    %10155 = vmatprep.subr.bf16.mxu0 0
    %10156 = vmatpush1.bf16.msra.mxu0 0
    %10157 = vmatprep.subr.bf16.mxu0 0
    %10158 = vmatpush1.bf16.msra.mxu0 0
    %10159 = vmatprep.subr.bf16.mxu0 0
    %10160 = vmatpush1.bf16.msra.mxu0 0
    %10161 = vmatprep.mubr.bf16.mxu0 0
    %10162 = vmatmul.mubr.bf16.gmra.mrb[0].mxu0 %v10124
    %v10163 = vpop.f32.mrb[0].mxu0
    %v10164 = vadd.f32 0.0, %v10163
    %v10165 = vpop.f32.mrb[0].mxu0
    %v10166 = vpop.f32.mrb[0].mxu0
    %v10167 = vadd.f32 0.0, %v10166
    %v10168 = vpop.f32.mrb[0].mxu0
    %10169 = vmatprep.mubr.bf16.mxu0 0
    %10170 = vmatmul.mubr.bf16.gmra.mrb[0].mxu0 %v10127
    %v10171 = vpop.f32.mrb[0].mxu0
    %v10172 = vadd.f32 0.0, %v10171
    %v10173 = vpop.f32.mrb[0].mxu0
    %v10174 = vpop.f32.mrb[0].mxu0
    %v10175 = vadd.f32 0.0, %v10174
    %v10176 = vpop.f32.mrb[0].mxu0
    %10177 = vdwg.mxu0
    %v10190 = vunpack.c.l.b16 %v9836
    %v10191 = vunpack.c.l.b16 %v9837
    %v10192 = vunpack.c.l.b16 %v9838
    %v10193 = vunpack.c.l.b16 %v9839
    %v10194 = vunpack.c.l.b16 %v9840
    %v10195 = vunpack.c.l.b16 %v9841
    %v10196 = vunpack.c.l.b16 %v9842
    %v10197 = vunpack.c.l.b16 %v9843
    %v10198 = vunpack.c.l.b16 %v9844
    %v10199 = vunpack.c.l.b16 %v9845
    %v10200 = vunpack.c.l.b16 %v9846
    %v10201 = vunpack.c.l.b16 %v9847
    %v10202 = vpack.c.b16 %v10191, %v10190
    %v10203 = vpack.c.b16 %v10193, %v10192
    %v10204 = vpack.c.b16 %v10195, %v10194
    %v10205 = vpack.c.b16 %v10197, %v10196
    %v10206 = vpack.c.b16 %v10199, %v10198
    %v10207 = vpack.c.b16 %v10201, %v10200
    %v10215 = vsel %vm673, %v9834, 0
    %v10218 = vsel %vm673, %v9835, 0
    %10220 = vmatprep.subr.bf16.mxu0 0
    %10221 = vmatpush1.bf16.msra.mxu0 %v10202
    %10222 = vmatprep.subr.bf16.mxu0 0
    %10223 = vmatpush1.bf16.msra.mxu0 %v10203
    %10224 = vmatprep.subr.bf16.mxu0 0
    %10225 = vmatpush1.bf16.msra.mxu0 %v10204
    %10226 = vmatprep.subr.bf16.mxu0 0
    %10227 = vmatpush1.bf16.msra.mxu0 %v10205
    %10228 = vmatprep.subr.bf16.mxu0 0
    %10229 = vmatpush1.bf16.msra.mxu0 %v10206
    %10230 = vmatprep.subr.bf16.mxu0 0
    %10231 = vmatpush1.bf16.msra.mxu0 %v10207
    %10232 = vmatprep.subr.bf16.mxu0 0
    %10233 = vmatpush1.bf16.msra.mxu0 0
    %10234 = vmatprep.subr.bf16.mxu0 0
    %10235 = vmatpush1.bf16.msra.mxu0 0
    %10236 = vmatprep.subr.bf16.mxu0 0
    %10237 = vmatpush1.bf16.msra.mxu0 0
    %10238 = vmatprep.subr.bf16.mxu0 0
    %10239 = vmatpush1.bf16.msra.mxu0 0
    %10240 = vmatprep.subr.bf16.mxu0 0
    %10241 = vmatpush1.bf16.msra.mxu0 0
    %10242 = vmatprep.subr.bf16.mxu0 0
    %10243 = vmatpush1.bf16.msra.mxu0 0
    %10244 = vmatprep.subr.bf16.mxu0 0
    %10245 = vmatpush1.bf16.msra.mxu0 0
    %10246 = vmatprep.subr.bf16.mxu0 0
    %10247 = vmatpush1.bf16.msra.mxu0 0
    %10248 = vmatprep.subr.bf16.mxu0 0
    %10249 = vmatpush1.bf16.msra.mxu0 0
    %10250 = vmatprep.subr.bf16.mxu0 0
    %10251 = vmatpush1.bf16.msra.mxu0 0
    %10252 = vmatprep.mubr.bf16.mxu0 0
    %10253 = vmatmul.mubr.bf16.gmra.mrb[0].mxu0 %v10215
    %v10254 = vpop.f32.mrb[0].mxu0
    %v10255 = vadd.f32 %v10164, %v10254
    %v10256 = vpop.f32.mrb[0].mxu0
    %v10257 = vpop.f32.mrb[0].mxu0
    %v10258 = vadd.f32 %v10167, %v10257
    %v10259 = vpop.f32.mrb[0].mxu0
    %10260 = vmatprep.mubr.bf16.mxu0 0
    %10261 = vmatmul.mubr.bf16.gmra.mrb[0].mxu0 %v10218
    %v10262 = vpop.f32.mrb[0].mxu0
    %v10263 = vadd.f32 %v10172, %v10262
    %v10264 = vpop.f32.mrb[0].mxu0
    %v10265 = vpop.f32.mrb[0].mxu0
    %v10266 = vadd.f32 %v10175, %v10265
    %v10267 = vpop.f32.mrb[0].mxu0
    %10268 = vdwg.mxu0
    %v10269 = vld [vmem:[#allocation22] sm:$0x1]
    %v10271 = vlaneseq
    %v10272 = vshrl.u32 %v10271, 7
    %v10273 = vsub.s32 0, %v10272
    %v10274 = vrot.slane %v10269, %v10273
    %v10276 = vadd.f32 %v10255, %v10274
    %v10277 = vadd.f32 %v10258, %v10274
    %v10278 = vadd.f32 %v10263, %v10274
    %v10279 = vadd.f32 %v10266, %v10274
    %10280 = vst.msk [vmem:[%s28] sm:$0xff] %vm279, %v10276
    %10281 = vst.msk [vmem:[%s28 + $0x8] sm:$0xff] %vm279, %v10277
    %10282 = vst.msk [vmem:[%s28 + $0x10] sm:$0xff] %vm279, %v10278
    %10283 = vst.msk [vmem:[%s28 + $0x18] sm:$0xff] %vm279, %v10279
    // Predicated region
    $region170: #{unet_forward.1} parent=1 // pred_check
      _
    $region171: #{unet_forward.1} parent=1 // pred_check_branch
      %10285 = sbr.rel (0) target = $region173
    $region172: #{unet_forward.1} parent=1 // pred_region
      _
    $region173: #{unet_forward.1} parent=1 // pred_fallthru
      _
    // Predicated region
    $region174: #{unet_forward.1} parent=1 // pred_check
      _
    $region175: #{unet_forward.1} parent=1 // pred_check_branch
      %10287 = sbr.rel (0) target = $region177
    $region176: #{unet_forward.1} parent=1 // pred_region
      _
    $region177: #{unet_forward.1} parent=1 // pred_fallthru
      _
    %10288 = vsyncpa [#allocation3], 1
    %10289 = vsyncpa [#allocation5], 1
    %10290 = vsyncpa [#allocation8], 1
    %10291 = vsyncpa [#allocation11], 1
    %10292 = vsyncpa [#allocation14], 1
    %10293 = vsyncpa [#allocation17], 1
    %10294 = vsyncpa [#allocation20], 1
    %10295 = vsyncpa [#allocation23], 1

</llo_original>
